<compile_context>
chip_gen: v7x
topology: tpu7x:2x2x1
jax: 0.10.0
libtpu: 0.0.40
codegen_flags: <defaults>
</compile_context>

<pallas_src>
import math

import jax
import jax.numpy as jnp
import numpy as np
from jax.experimental import pallas as pl
from jax.experimental.pallas import tpu as pltpu

# ----------------------------- static sizes ---------------------------------
L_IN = 331            # input length -> 32*73 = 2336 flattened features
K1, C1 = 8, 16        # conv1
K2, C2 = 16, 32       # conv2
LP1 = (L_IN - K1 + 1) // 4                      # = 81, per-phase conv1 / pool1 length
LP2 = ((L_IN - K1 + 1) // 2 - K2 + 1) // 2      # = 73, pool2 length
FLAT = LP2 * C2                                 # = 2336
PH_LEN = [(L_IN + 3 - r) // 4 for r in range(4)]   # [83, 83, 83, 82]
H1, H2, NOUT = 512, 256, 3


def _elu(x):
    # ELU(alpha=1): x if x > 0 else exp(x) - 1   (exp has a guaranteed Mosaic lowering)
    return jnp.where(x > 0, x, jnp.exp(jnp.minimum(x, 0.0)) - 1.0)


# --------------------------- kernel A: conv stack ----------------------------

def conv_pool_kernel(x0_ref, x1_ref, x2_ref, x3_ref,
                     w1_ref, b1_ref, w2_ref, b2_ref, o_ref):
    """Per-batch-element: conv1+BN+ELU, pool1, conv2+BN+ELU, pool2 -> (73, 32)."""
    w1 = w1_ref[...]          # (8, 16)  f32  (BN1 scale folded in)
    b1 = b1_ref[...]          # (1, 16)  f32
    w2 = w2_ref[...]          # (16, 16, 32) bf16 (BN2 scale folded in)
    b2 = b2_ref[...]          # (1, 32)  f32

    # Hoisted lane-broadcast of the 4 input phases: (len_r, 1) -> (len_r, 16).
    ones_c1 = jnp.ones((1, C1), jnp.float32)
    xb = [x0_ref[...] * ones_c1, x1_ref[...] * ones_c1,
          x2_ref[...] * ones_c1, x3_ref[...] * ones_c1]

    # ---- conv1 (1->16, k=8) + BN + ELU, computed in 4 length phases (VPU) ----
    acts = []
    for r in range(4):
        acc = jnp.zeros((LP1, C1), jnp.float32)
        for k in range(K1):
            q, s = divmod(r + k, 4)               # x[4i + r + k] == phase_s[i + q]
            acc = acc + xb[s][q:q + LP1, :] * w1[k:k + 1, :]
        acts.append(_elu(acc + b1))

    # ---- maxpool1 (k=2, s=2): phase pairs (0,1) and (2,3) ----
    p1e = jnp.maximum(acts[0], acts[1])           # pool1 output, even positions (81, 16)
    p1o = jnp.maximum(acts[2], acts[3])           # pool1 output, odd positions  (81, 16)

    # ---- conv2 (16->32, k=16) + BN + ELU, two output phases (MXU) ----
    def conv2_phase(taps):
        acc = jnp.zeros((LP2, C2), jnp.float32)
        for k, (src, off) in enumerate(taps):
            lhs = src[off:off + LP2, :].astype(jnp.bfloat16)
            acc = acc + jnp.dot(lhs, w2[k], preferred_element_type=jnp.float32)
        return _elu(acc + b2)

    # even conv2 output 2j: tap k reads pool1[2j+k]
    taps_e = [((p1e, k // 2) if k % 2 == 0 else (p1o, k // 2)) for k in range(K2)]
    # odd  conv2 output 2j+1: tap k reads pool1[2j+1+k]
    taps_o = [((p1o, k // 2) if k % 2 == 0 else (p1e, k // 2 + 1)) for k in range(K2)]

    # ---- maxpool2 (k=2, s=2): max of the two conv2 phases ----
    o_ref[...] = jnp.maximum(conv2_phase(taps_e), conv2_phase(taps_o))


def conv_pool_call(x0, x1, x2, x3, p):
    B = x0.shape[0]

    def xspec(n):
        return pl.BlockSpec((None, n, 1), lambda b: (b, 0, 0))

    def wspec(shape):
        nd = len(shape)
        return pl.BlockSpec(shape, lambda b, _nd=nd: (0,) * _nd)

    return pl.pallas_call(
        conv_pool_kernel,
        out_shape=jax.ShapeDtypeStruct((B, LP2, C2), jnp.float32),
        grid=(B,),
        in_specs=[xspec(PH_LEN[0]), xspec(PH_LEN[1]), xspec(PH_LEN[2]), xspec(PH_LEN[3]),
                  wspec((K1, C1)), wspec((1, C1)),
                  wspec((K2, C1, C2)), wspec((1, C2))],
        out_specs=pl.BlockSpec((None, LP2, C2), lambda b: (b, 0, 0)),
        compiler_params=pltpu.CompilerParams(dimension_semantics=("parallel",)),
    )(x0, x1, x2, x3, p["w1"], p["b1"], p["w2"], p["b2"])


# --------------------------- kernel B: MLP head -------------------------------

def mlp_kernel(flat_ref, wl1_ref, b3_ref, wl2_ref, b4_ref, wout_ref, bout_ref, o_ref):
    h = flat_ref[...].astype(jnp.bfloat16)
    h = _elu(jnp.dot(h, wl1_ref[...], preferred_element_type=jnp.float32) + b3_ref[...])
    h = _elu(jnp.dot(h.astype(jnp.bfloat16), wl2_ref[...],
                     preferred_element_type=jnp.float32) + b4_ref[...])
    o_ref[...] = jnp.dot(h.astype(jnp.bfloat16), wout_ref[...],
                         preferred_element_type=jnp.float32) + bout_ref[...]


def mlp_call(flat, p):
    B = flat.shape[0]
    vmem = pl.BlockSpec(memory_space=pltpu.MemorySpace.VMEM)
    return pl.pallas_call(
        mlp_kernel,
        out_shape=jax.ShapeDtypeStruct((B, NOUT), jnp.float32),
        in_specs=[vmem] * 7,
        out_specs=vmem,
    )(flat, p["wl1"], p["b3"], p["wl2"], p["b4"], p["wout"], p["bout"])


# ----------------------------- parameters ------------------------------------

def init_params(key):
    """kaiming_normal(fan_in, relu) weights, zero biases, eval-mode BN folded.

    BN (gamma=1, beta=0, mean=0, var=1, eps=1e-5) folds to a per-channel scale
    1/sqrt(1+eps) on the weight columns; shifts stay as (zero) biases.
    Big matmul weights are stored in bf16 (MXU-native, half the HBM traffic).
    """
    ks = jax.random.split(key, 5)

    def kaiming(k, shape, fan_in):
        return jax.random.normal(k, shape, jnp.float32) * np.float32(math.sqrt(2.0 / fan_in))

    bn_scale = np.float32(1.0 / math.sqrt(1.0 + 1e-5))
    p = {}
    p["w1"] = kaiming(ks[0], (K1, C1), K1) * bn_scale                                   # Conv1d(1,16,8), f32 (VPU)
    p["b1"] = jnp.zeros((1, C1), jnp.float32)
    p["w2"] = (kaiming(ks[1], (K2, C1, C2), C1 * K2) * bn_scale).astype(jnp.bfloat16)   # Conv1d(16,32,16)
    p["b2"] = jnp.zeros((1, C2), jnp.float32)
    p["wl1"] = (kaiming(ks[2], (FLAT, H1), FLAT) * bn_scale).astype(jnp.bfloat16)       # Linear(2336,512)
    p["b3"] = jnp.zeros((1, H1), jnp.float32)
    p["wl2"] = (kaiming(ks[3], (H1, H2), H1) * bn_scale).astype(jnp.bfloat16)           # Linear(512,256)
    p["b4"] = jnp.zeros((1, H2), jnp.float32)
    p["wout"] = kaiming(ks[4], (H2, NOUT), H2).astype(jnp.bfloat16)                     # Linear(256,3)
    p["bout"] = jnp.zeros((1, NOUT), jnp.float32)
    return p


# ------------------------------- forward -------------------------------------

def spectranet_forward(x, p):
    """x: (B, 331) float32 -> logits (B, 3)."""
    B, L = x.shape
    assert L == L_IN
    # Polyphase split (mod 4) so no strided access is ever needed in-kernel.
    x0 = x[:, 0::4][:, :, None]
    x1 = x[:, 1::4][:, :, None]
    x2 = x[:, 2::4][:, :, None]
    x3 = x[:, 3::4][:, :, None]
    p2 = conv_pool_call(x0, x1, x2, x3, p)       # (B, 73, 32)
    flat = p2.reshape(B, FLAT)                   # free reshape, matches wl1 row order
    return mlp_call(flat, p)                     # (B, 3)


# ----------------------- reference (straightforward JAX) ----------------------

def spectranet_reference(x, p):
    B, _ = x.shape

    # conv1 (1->16, k=8) as shifted FMAs in f32 + folded BN + ELU (same op order
    # as the kernel -> bit-identical up to f32 rounding noise).
    lout1 = L_IN - K1 + 1
    y1 = jnp.zeros((B, lout1, C1), jnp.float32)
    for k in range(K1):
        y1 = y1 + x[:, k:k + lout1, None] * p["w1"][k][None, None, :]
    y1 = _elu(y1 + p["b1"][None])                                   # (B, 324, 16)
    # maxpool1
    P1 = lout1 // 2
    y1 = jnp.maximum(y1[:, 0:2 * P1:2, :], y1[:, 1:2 * P1:2, :])    # (B, 162, 16)
    # conv2 as per-tap bf16 matmuls with f32 accumulation (same policy/order as kernel)
    lout2 = y1.shape[1] - K2 + 1
    y2 = jnp.zeros((B, lout2, C2), jnp.float32)
    for k in range(K2):
        y2 = y2 + jnp.einsum("blc,cn->bln",
                             y1[:, k:k + lout2, :].astype(jnp.bfloat16), p["w2"][k],
                             preferred_element_type=jnp.float32)
    y2 = _elu(y2 + p["b2"][None])                                   # (B, 147, 32)
    # maxpool2
    P2 = lout2 // 2
    y2 = jnp.maximum(y2[:, 0:2 * P2:2, :], y2[:, 1:2 * P2:2, :])    # (B, 73, 32)
    flat = y2.reshape(B, -1)                                        # (t, c) order == wl1 rows
    h1 = _elu(jnp.dot(flat.astype(jnp.bfloat16), p["wl1"],
                      preferred_element_type=jnp.float32) + p["b3"])
    h2 = _elu(jnp.dot(h1.astype(jnp.bfloat16), p["wl2"],
                      preferred_element_type=jnp.float32) + p["b4"])
    return jnp.dot(h2.astype(jnp.bfloat16), p["wout"],
                   preferred_element_type=jnp.float32) + p["bout"]


# --------------------------------- main ---------------------------------------

if __name__ == "__main__":
    key = jax.random.PRNGKey(0)
    k_param, k_x = jax.random.split(key)

    B = 2
    params = init_params(k_param)
    x = jax.random.normal(k_x, (B, L_IN), jnp.float32)

    fwd = jax.jit(spectranet_forward)
    out = jax.block_until_ready(fwd(x, params))

    ref = jax.block_until_ready(spectranet_reference(x, params))
    np.testing.assert_allclose(np.asarray(out), np.asarray(ref), rtol=2e-3, atol=2e-3)
    assert out.shape == (B, NOUT) and np.all(np.isfinite(np.asarray(out)))

    print("KERNEL_OK")
</pallas_src>

<mosaic_0001>
module attributes {stable_mosaic.version = 11 : i64} {
  func.func @conv_pool_kernel(%arg0: i32, %arg1: memref<1x83x1xf32, #tpu.memory_space<vmem>>, %arg2: memref<1x83x1xf32, #tpu.memory_space<vmem>>, %arg3: memref<1x83x1xf32, #tpu.memory_space<vmem>>, %arg4: memref<1x82x1xf32, #tpu.memory_space<vmem>>, %arg5: memref<8x16xf32, #tpu.memory_space<vmem>>, %arg6: memref<1x16xf32, #tpu.memory_space<vmem>>, %arg7: memref<16x16x32xbf16, #tpu.memory_space<vmem>>, %arg8: memref<1x32xf32, #tpu.memory_space<vmem>>, %arg9: memref<1x73x32xf32, #tpu.memory_space<vmem>>) attributes {dimension_semantics = [#tpu.dimension_semantics<parallel>], iteration_bounds = array<i64: 2>, scalar_prefetch = 0 : i64, scratch_operands = 0 : i64, tpu.core_type = #tpu.core_type<tc>, window_params = [{transform_indices = @transform_0, window_bounds = array<i64: 1, 83, 1>}, {transform_indices = @transform_1, window_bounds = array<i64: 1, 83, 1>}, {transform_indices = @transform_2, window_bounds = array<i64: 1, 83, 1>}, {transform_indices = @transform_3, window_bounds = array<i64: 1, 82, 1>}, {pipeline_mode = #tpu.pipeline_mode<synchronous>, transform_indices = @transform_4, window_bounds = array<i64: 8, 16>}, {pipeline_mode = #tpu.pipeline_mode<synchronous>, transform_indices = @transform_5, window_bounds = array<i64: 1, 16>}, {pipeline_mode = #tpu.pipeline_mode<synchronous>, transform_indices = @transform_6, window_bounds = array<i64: 16, 16, 32>}, {pipeline_mode = #tpu.pipeline_mode<synchronous>, transform_indices = @transform_7, window_bounds = array<i64: 1, 32>}, {transform_indices = @transform_8, window_bounds = array<i64: 1, 73, 32>}]} {
    %c0 = arith.constant 0 : index
    %c0_0 = arith.constant 0 : index
    %0 = vector.load %arg5[%c0, %c0_0] : memref<8x16xf32, #tpu.memory_space<vmem>>, vector<8x16xf32>
    %c0_1 = arith.constant 0 : index
    %c0_2 = arith.constant 0 : index
    %1 = vector.load %arg6[%c0_1, %c0_2] : memref<1x16xf32, #tpu.memory_space<vmem>>, vector<1x16xf32>
    %c0_3 = arith.constant 0 : index
    %c0_4 = arith.constant 0 : index
    %c0_5 = arith.constant 0 : index
    %2 = vector.load %arg7[%c0_3, %c0_4, %c0_5] : memref<16x16x32xbf16, #tpu.memory_space<vmem>>, vector<16x16x32xbf16>
    %c0_6 = arith.constant 0 : index
    %c0_7 = arith.constant 0 : index
    %3 = vector.load %arg8[%c0_6, %c0_7] : memref<1x32xf32, #tpu.memory_space<vmem>>, vector<1x32xf32>
    %cst = arith.constant 1.000000e+00 : f32
    %4 = vector.broadcast %cst : f32 to vector<1x16xf32>
    %c0_8 = arith.constant 0 : index
    %c0_9 = arith.constant 0 : index
    %c0_10 = arith.constant 0 : index
    %5 = vector.load %arg1[%c0_8, %c0_9, %c0_10] : memref<1x83x1xf32, #tpu.memory_space<vmem>>, vector<1x83x1xf32>
    %6 = vector.shape_cast %5 : vector<1x83x1xf32> to vector<83x1xf32>
    %7 = vector.broadcast %6 : vector<83x1xf32> to vector<83x16xf32>
    %8 = vector.broadcast %4 : vector<1x16xf32> to vector<83x16xf32>
    %9 = arith.mulf %7, %8 : vector<83x16xf32>
    %c0_11 = arith.constant 0 : index
    %c0_12 = arith.constant 0 : index
    %c0_13 = arith.constant 0 : index
    %10 = vector.load %arg2[%c0_11, %c0_12, %c0_13] : memref<1x83x1xf32, #tpu.memory_space<vmem>>, vector<1x83x1xf32>
    %11 = vector.shape_cast %10 : vector<1x83x1xf32> to vector<83x1xf32>
    %12 = vector.broadcast %11 : vector<83x1xf32> to vector<83x16xf32>
    %13 = vector.broadcast %4 : vector<1x16xf32> to vector<83x16xf32>
    %14 = arith.mulf %12, %13 : vector<83x16xf32>
    %c0_14 = arith.constant 0 : index
    %c0_15 = arith.constant 0 : index
    %c0_16 = arith.constant 0 : index
    %15 = vector.load %arg3[%c0_14, %c0_15, %c0_16] : memref<1x83x1xf32, #tpu.memory_space<vmem>>, vector<1x83x1xf32>
    %16 = vector.shape_cast %15 : vector<1x83x1xf32> to vector<83x1xf32>
    %17 = vector.broadcast %16 : vector<83x1xf32> to vector<83x16xf32>
    %18 = vector.broadcast %4 : vector<1x16xf32> to vector<83x16xf32>
    %19 = arith.mulf %17, %18 : vector<83x16xf32>
    %c0_17 = arith.constant 0 : index
    %c0_18 = arith.constant 0 : index
    %c0_19 = arith.constant 0 : index
    %20 = vector.load %arg4[%c0_17, %c0_18, %c0_19] : memref<1x82x1xf32, #tpu.memory_space<vmem>>, vector<1x82x1xf32>
    %21 = vector.shape_cast %20 : vector<1x82x1xf32> to vector<82x1xf32>
    %22 = vector.broadcast %21 : vector<82x1xf32> to vector<82x16xf32>
    %23 = vector.broadcast %4 : vector<1x16xf32> to vector<82x16xf32>
    %24 = arith.mulf %22, %23 : vector<82x16xf32>
    %cst_20 = arith.constant 0.000000e+00 : f32
    %25 = vector.broadcast %cst_20 : f32 to vector<81x16xf32>
    %26 = vector.extract_strided_slice %9 {offsets = [0, 0], sizes = [81, 16], strides = [1, 1]} : vector<83x16xf32> to vector<81x16xf32>
    %27 = vector.extract_strided_slice %0 {offsets = [0, 0], sizes = [1, 16], strides = [1, 1]} : vector<8x16xf32> to vector<1x16xf32>
    %28 = vector.broadcast %27 : vector<1x16xf32> to vector<81x16xf32>
    %29 = arith.mulf %26, %28 : vector<81x16xf32>
    %30 = arith.addf %25, %29 : vector<81x16xf32>
    %31 = vector.extract_strided_slice %14 {offsets = [0, 0], sizes = [81, 16], strides = [1, 1]} : vector<83x16xf32> to vector<81x16xf32>
    %32 = vector.extract_strided_slice %0 {offsets = [1, 0], sizes = [1, 16], strides = [1, 1]} : vector<8x16xf32> to vector<1x16xf32>
    %33 = vector.broadcast %32 : vector<1x16xf32> to vector<81x16xf32>
    %34 = arith.mulf %31, %33 : vector<81x16xf32>
    %35 = arith.addf %30, %34 : vector<81x16xf32>
    %36 = vector.extract_strided_slice %19 {offsets = [0, 0], sizes = [81, 16], strides = [1, 1]} : vector<83x16xf32> to vector<81x16xf32>
    %37 = vector.extract_strided_slice %0 {offsets = [2, 0], sizes = [1, 16], strides = [1, 1]} : vector<8x16xf32> to vector<1x16xf32>
    %38 = vector.broadcast %37 : vector<1x16xf32> to vector<81x16xf32>
    %39 = arith.mulf %36, %38 : vector<81x16xf32>
    %40 = arith.addf %35, %39 : vector<81x16xf32>
    %41 = vector.extract_strided_slice %24 {offsets = [0, 0], sizes = [81, 16], strides = [1, 1]} : vector<82x16xf32> to vector<81x16xf32>
    %42 = vector.extract_strided_slice %0 {offsets = [3, 0], sizes = [1, 16], strides = [1, 1]} : vector<8x16xf32> to vector<1x16xf32>
    %43 = vector.broadcast %42 : vector<1x16xf32> to vector<81x16xf32>
    %44 = arith.mulf %41, %43 : vector<81x16xf32>
    %45 = arith.addf %40, %44 : vector<81x16xf32>
    %46 = vector.extract_strided_slice %9 {offsets = [1, 0], sizes = [81, 16], strides = [1, 1]} : vector<83x16xf32> to vector<81x16xf32>
    %47 = vector.extract_strided_slice %0 {offsets = [4, 0], sizes = [1, 16], strides = [1, 1]} : vector<8x16xf32> to vector<1x16xf32>
    %48 = vector.broadcast %47 : vector<1x16xf32> to vector<81x16xf32>
    %49 = arith.mulf %46, %48 : vector<81x16xf32>
    %50 = arith.addf %45, %49 : vector<81x16xf32>
    %51 = vector.extract_strided_slice %14 {offsets = [1, 0], sizes = [81, 16], strides = [1, 1]} : vector<83x16xf32> to vector<81x16xf32>
    %52 = vector.extract_strided_slice %0 {offsets = [5, 0], sizes = [1, 16], strides = [1, 1]} : vector<8x16xf32> to vector<1x16xf32>
    %53 = vector.broadcast %52 : vector<1x16xf32> to vector<81x16xf32>
    %54 = arith.mulf %51, %53 : vector<81x16xf32>
    %55 = arith.addf %50, %54 : vector<81x16xf32>
    %56 = vector.extract_strided_slice %19 {offsets = [1, 0], sizes = [81, 16], strides = [1, 1]} : vector<83x16xf32> to vector<81x16xf32>
    %57 = vector.extract_strided_slice %0 {offsets = [6, 0], sizes = [1, 16], strides = [1, 1]} : vector<8x16xf32> to vector<1x16xf32>
    %58 = vector.broadcast %57 : vector<1x16xf32> to vector<81x16xf32>
    %59 = arith.mulf %56, %58 : vector<81x16xf32>
    %60 = arith.addf %55, %59 : vector<81x16xf32>
    %61 = vector.extract_strided_slice %24 {offsets = [1, 0], sizes = [81, 16], strides = [1, 1]} : vector<82x16xf32> to vector<81x16xf32>
    %62 = vector.extract_strided_slice %0 {offsets = [7, 0], sizes = [1, 16], strides = [1, 1]} : vector<8x16xf32> to vector<1x16xf32>
    %63 = vector.broadcast %62 : vector<1x16xf32> to vector<81x16xf32>
    %64 = arith.mulf %61, %63 : vector<81x16xf32>
    %65 = arith.addf %60, %64 : vector<81x16xf32>
    %66 = vector.broadcast %1 : vector<1x16xf32> to vector<81x16xf32>
    %67 = arith.addf %65, %66 : vector<81x16xf32>
    %cst_21 = arith.constant 0.000000e+00 : f32
    %68 = vector.broadcast %cst_21 : f32 to vector<81x16xf32>
    %69 = arith.cmpf ogt, %67, %68 : vector<81x16xf32>
    %cst_22 = arith.constant 0.000000e+00 : f32
    %70 = vector.broadcast %cst_22 : f32 to vector<81x16xf32>
    %71 = arith.minimumf %67, %70 : vector<81x16xf32>
    %72 = math.exp %71 : vector<81x16xf32>
    %cst_23 = arith.constant 1.000000e+00 : f32
    %73 = vector.broadcast %cst_23 : f32 to vector<81x16xf32>
    %74 = arith.subf %72, %73 : vector<81x16xf32>
    %75 = arith.select %69, %67, %74 : vector<81x16xi1>, vector<81x16xf32>
    %cst_24 = arith.constant 0.000000e+00 : f32
    %76 = vector.broadcast %cst_24 : f32 to vector<81x16xf32>
    %77 = vector.extract_strided_slice %14 {offsets = [0, 0], sizes = [81, 16], strides = [1, 1]} : vector<83x16xf32> to vector<81x16xf32>
    %78 = vector.extract_strided_slice %0 {offsets = [0, 0], sizes = [1, 16], strides = [1, 1]} : vector<8x16xf32> to vector<1x16xf32>
    %79 = vector.broadcast %78 : vector<1x16xf32> to vector<81x16xf32>
    %80 = arith.mulf %77, %79 : vector<81x16xf32>
    %81 = arith.addf %76, %80 : vector<81x16xf32>
    %82 = vector.extract_strided_slice %19 {offsets = [0, 0], sizes = [81, 16], strides = [1, 1]} : vector<83x16xf32> to vector<81x16xf32>
    %83 = vector.extract_strided_slice %0 {offsets = [1, 0], sizes = [1, 16], strides = [1, 1]} : vector<8x16xf32> to vector<1x16xf32>
    %84 = vector.broadcast %83 : vector<1x16xf32> to vector<81x16xf32>
    %85 = arith.mulf %82, %84 : vector<81x16xf32>
    %86 = arith.addf %81, %85 : vector<81x16xf32>
    %87 = vector.extract_strided_slice %24 {offsets = [0, 0], sizes = [81, 16], strides = [1, 1]} : vector<82x16xf32> to vector<81x16xf32>
    %88 = vector.extract_strided_slice %0 {offsets = [2, 0], sizes = [1, 16], strides = [1, 1]} : vector<8x16xf32> to vector<1x16xf32>
    %89 = vector.broadcast %88 : vector<1x16xf32> to vector<81x16xf32>
    %90 = arith.mulf %87, %89 : vector<81x16xf32>
    %91 = arith.addf %86, %90 : vector<81x16xf32>
    %92 = vector.extract_strided_slice %9 {offsets = [1, 0], sizes = [81, 16], strides = [1, 1]} : vector<83x16xf32> to vector<81x16xf32>
    %93 = vector.extract_strided_slice %0 {offsets = [3, 0], sizes = [1, 16], strides = [1, 1]} : vector<8x16xf32> to vector<1x16xf32>
    %94 = vector.broadcast %93 : vector<1x16xf32> to vector<81x16xf32>
    %95 = arith.mulf %92, %94 : vector<81x16xf32>
    %96 = arith.addf %91, %95 : vector<81x16xf32>
    %97 = vector.extract_strided_slice %14 {offsets = [1, 0], sizes = [81, 16], strides = [1, 1]} : vector<83x16xf32> to vector<81x16xf32>
    %98 = vector.extract_strided_slice %0 {offsets = [4, 0], sizes = [1, 16], strides = [1, 1]} : vector<8x16xf32> to vector<1x16xf32>
    %99 = vector.broadcast %98 : vector<1x16xf32> to vector<81x16xf32>
    %100 = arith.mulf %97, %99 : vector<81x16xf32>
    %101 = arith.addf %96, %100 : vector<81x16xf32>
    %102 = vector.extract_strided_slice %19 {offsets = [1, 0], sizes = [81, 16], strides = [1, 1]} : vector<83x16xf32> to vector<81x16xf32>
    %103 = vector.extract_strided_slice %0 {offsets = [5, 0], sizes = [1, 16], strides = [1, 1]} : vector<8x16xf32> to vector<1x16xf32>
    %104 = vector.broadcast %103 : vector<1x16xf32> to vector<81x16xf32>
    %105 = arith.mulf %102, %104 : vector<81x16xf32>
    %106 = arith.addf %101, %105 : vector<81x16xf32>
    %107 = vector.extract_strided_slice %24 {offsets = [1, 0], sizes = [81, 16], strides = [1, 1]} : vector<82x16xf32> to vector<81x16xf32>
    %108 = vector.extract_strided_slice %0 {offsets = [6, 0], sizes = [1, 16], strides = [1, 1]} : vector<8x16xf32> to vector<1x16xf32>
    %109 = vector.broadcast %108 : vector<1x16xf32> to vector<81x16xf32>
    %110 = arith.mulf %107, %109 : vector<81x16xf32>
    %111 = arith.addf %106, %110 : vector<81x16xf32>
    %112 = vector.extract_strided_slice %9 {offsets = [2, 0], sizes = [81, 16], strides = [1, 1]} : vector<83x16xf32> to vector<81x16xf32>
    %113 = vector.extract_strided_slice %0 {offsets = [7, 0], sizes = [1, 16], strides = [1, 1]} : vector<8x16xf32> to vector<1x16xf32>
    %114 = vector.broadcast %113 : vector<1x16xf32> to vector<81x16xf32>
    %115 = arith.mulf %112, %114 : vector<81x16xf32>
    %116 = arith.addf %111, %115 : vector<81x16xf32>
    %117 = vector.broadcast %1 : vector<1x16xf32> to vector<81x16xf32>
    %118 = arith.addf %116, %117 : vector<81x16xf32>
    %cst_25 = arith.constant 0.000000e+00 : f32
    %119 = vector.broadcast %cst_25 : f32 to vector<81x16xf32>
    %120 = arith.cmpf ogt, %118, %119 : vector<81x16xf32>
    %cst_26 = arith.constant 0.000000e+00 : f32
    %121 = vector.broadcast %cst_26 : f32 to vector<81x16xf32>
    %122 = arith.minimumf %118, %121 : vector<81x16xf32>
    %123 = math.exp %122 : vector<81x16xf32>
    %cst_27 = arith.constant 1.000000e+00 : f32
    %124 = vector.broadcast %cst_27 : f32 to vector<81x16xf32>
    %125 = arith.subf %123, %124 : vector<81x16xf32>
    %126 = arith.select %120, %118, %125 : vector<81x16xi1>, vector<81x16xf32>
    %cst_28 = arith.constant 0.000000e+00 : f32
    %127 = vector.broadcast %cst_28 : f32 to vector<81x16xf32>
    %128 = vector.extract_strided_slice %19 {offsets = [0, 0], sizes = [81, 16], strides = [1, 1]} : vector<83x16xf32> to vector<81x16xf32>
    %129 = vector.extract_strided_slice %0 {offsets = [0, 0], sizes = [1, 16], strides = [1, 1]} : vector<8x16xf32> to vector<1x16xf32>
    %130 = vector.broadcast %129 : vector<1x16xf32> to vector<81x16xf32>
    %131 = arith.mulf %128, %130 : vector<81x16xf32>
    %132 = arith.addf %127, %131 : vector<81x16xf32>
    %133 = vector.extract_strided_slice %24 {offsets = [0, 0], sizes = [81, 16], strides = [1, 1]} : vector<82x16xf32> to vector<81x16xf32>
    %134 = vector.extract_strided_slice %0 {offsets = [1, 0], sizes = [1, 16], strides = [1, 1]} : vector<8x16xf32> to vector<1x16xf32>
    %135 = vector.broadcast %134 : vector<1x16xf32> to vector<81x16xf32>
    %136 = arith.mulf %133, %135 : vector<81x16xf32>
    %137 = arith.addf %132, %136 : vector<81x16xf32>
    %138 = vector.extract_strided_slice %9 {offsets = [1, 0], sizes = [81, 16], strides = [1, 1]} : vector<83x16xf32> to vector<81x16xf32>
    %139 = vector.extract_strided_slice %0 {offsets = [2, 0], sizes = [1, 16], strides = [1, 1]} : vector<8x16xf32> to vector<1x16xf32>
    %140 = vector.broadcast %139 : vector<1x16xf32> to vector<81x16xf32>
    %141 = arith.mulf %138, %140 : vector<81x16xf32>
    %142 = arith.addf %137, %141 : vector<81x16xf32>
    %143 = vector.extract_strided_slice %14 {offsets = [1, 0], sizes = [81, 16], strides = [1, 1]} : vector<83x16xf32> to vector<81x16xf32>
    %144 = vector.extract_strided_slice %0 {offsets = [3, 0], sizes = [1, 16], strides = [1, 1]} : vector<8x16xf32> to vector<1x16xf32>
    %145 = vector.broadcast %144 : vector<1x16xf32> to vector<81x16xf32>
    %146 = arith.mulf %143, %145 : vector<81x16xf32>
    %147 = arith.addf %142, %146 : vector<81x16xf32>
    %148 = vector.extract_strided_slice %19 {offsets = [1, 0], sizes = [81, 16], strides = [1, 1]} : vector<83x16xf32> to vector<81x16xf32>
    %149 = vector.extract_strided_slice %0 {offsets = [4, 0], sizes = [1, 16], strides = [1, 1]} : vector<8x16xf32> to vector<1x16xf32>
    %150 = vector.broadcast %149 : vector<1x16xf32> to vector<81x16xf32>
    %151 = arith.mulf %148, %150 : vector<81x16xf32>
    %152 = arith.addf %147, %151 : vector<81x16xf32>
    %153 = vector.extract_strided_slice %24 {offsets = [1, 0], sizes = [81, 16], strides = [1, 1]} : vector<82x16xf32> to vector<81x16xf32>
    %154 = vector.extract_strided_slice %0 {offsets = [5, 0], sizes = [1, 16], strides = [1, 1]} : vector<8x16xf32> to vector<1x16xf32>
    %155 = vector.broadcast %154 : vector<1x16xf32> to vector<81x16xf32>
    %156 = arith.mulf %153, %155 : vector<81x16xf32>
    %157 = arith.addf %152, %156 : vector<81x16xf32>
    %158 = vector.extract_strided_slice %9 {offsets = [2, 0], sizes = [81, 16], strides = [1, 1]} : vector<83x16xf32> to vector<81x16xf32>
    %159 = vector.extract_strided_slice %0 {offsets = [6, 0], sizes = [1, 16], strides = [1, 1]} : vector<8x16xf32> to vector<1x16xf32>
    %160 = vector.broadcast %159 : vector<1x16xf32> to vector<81x16xf32>
    %161 = arith.mulf %158, %160 : vector<81x16xf32>
    %162 = arith.addf %157, %161 : vector<81x16xf32>
    %163 = vector.extract_strided_slice %14 {offsets = [2, 0], sizes = [81, 16], strides = [1, 1]} : vector<83x16xf32> to vector<81x16xf32>
    %164 = vector.extract_strided_slice %0 {offsets = [7, 0], sizes = [1, 16], strides = [1, 1]} : vector<8x16xf32> to vector<1x16xf32>
    %165 = vector.broadcast %164 : vector<1x16xf32> to vector<81x16xf32>
    %166 = arith.mulf %163, %165 : vector<81x16xf32>
    %167 = arith.addf %162, %166 : vector<81x16xf32>
    %168 = vector.broadcast %1 : vector<1x16xf32> to vector<81x16xf32>
    %169 = arith.addf %167, %168 : vector<81x16xf32>
    %cst_29 = arith.constant 0.000000e+00 : f32
    %170 = vector.broadcast %cst_29 : f32 to vector<81x16xf32>
    %171 = arith.cmpf ogt, %169, %170 : vector<81x16xf32>
    %cst_30 = arith.constant 0.000000e+00 : f32
    %172 = vector.broadcast %cst_30 : f32 to vector<81x16xf32>
    %173 = arith.minimumf %169, %172 : vector<81x16xf32>
    %174 = math.exp %173 : vector<81x16xf32>
    %cst_31 = arith.constant 1.000000e+00 : f32
    %175 = vector.broadcast %cst_31 : f32 to vector<81x16xf32>
    %176 = arith.subf %174, %175 : vector<81x16xf32>
    %177 = arith.select %171, %169, %176 : vector<81x16xi1>, vector<81x16xf32>
    %cst_32 = arith.constant 0.000000e+00 : f32
    %178 = vector.broadcast %cst_32 : f32 to vector<81x16xf32>
    %179 = vector.extract_strided_slice %24 {offsets = [0, 0], sizes = [81, 16], strides = [1, 1]} : vector<82x16xf32> to vector<81x16xf32>
    %180 = vector.extract_strided_slice %0 {offsets = [0, 0], sizes = [1, 16], strides = [1, 1]} : vector<8x16xf32> to vector<1x16xf32>
    %181 = vector.broadcast %180 : vector<1x16xf32> to vector<81x16xf32>
    %182 = arith.mulf %179, %181 : vector<81x16xf32>
    %183 = arith.addf %178, %182 : vector<81x16xf32>
    %184 = vector.extract_strided_slice %9 {offsets = [1, 0], sizes = [81, 16], strides = [1, 1]} : vector<83x16xf32> to vector<81x16xf32>
    %185 = vector.extract_strided_slice %0 {offsets = [1, 0], sizes = [1, 16], strides = [1, 1]} : vector<8x16xf32> to vector<1x16xf32>
    %186 = vector.broadcast %185 : vector<1x16xf32> to vector<81x16xf32>
    %187 = arith.mulf %184, %186 : vector<81x16xf32>
    %188 = arith.addf %183, %187 : vector<81x16xf32>
    %189 = vector.extract_strided_slice %14 {offsets = [1, 0], sizes = [81, 16], strides = [1, 1]} : vector<83x16xf32> to vector<81x16xf32>
    %190 = vector.extract_strided_slice %0 {offsets = [2, 0], sizes = [1, 16], strides = [1, 1]} : vector<8x16xf32> to vector<1x16xf32>
    %191 = vector.broadcast %190 : vector<1x16xf32> to vector<81x16xf32>
    %192 = arith.mulf %189, %191 : vector<81x16xf32>
    %193 = arith.addf %188, %192 : vector<81x16xf32>
    %194 = vector.extract_strided_slice %19 {offsets = [1, 0], sizes = [81, 16], strides = [1, 1]} : vector<83x16xf32> to vector<81x16xf32>
    %195 = vector.extract_strided_slice %0 {offsets = [3, 0], sizes = [1, 16], strides = [1, 1]} : vector<8x16xf32> to vector<1x16xf32>
    %196 = vector.broadcast %195 : vector<1x16xf32> to vector<81x16xf32>
    %197 = arith.mulf %194, %196 : vector<81x16xf32>
    %198 = arith.addf %193, %197 : vector<81x16xf32>
    %199 = vector.extract_strided_slice %24 {offsets = [1, 0], sizes = [81, 16], strides = [1, 1]} : vector<82x16xf32> to vector<81x16xf32>
    %200 = vector.extract_strided_slice %0 {offsets = [4, 0], sizes = [1, 16], strides = [1, 1]} : vector<8x16xf32> to vector<1x16xf32>
    %201 = vector.broadcast %200 : vector<1x16xf32> to vector<81x16xf32>
    %202 = arith.mulf %199, %201 : vector<81x16xf32>
    %203 = arith.addf %198, %202 : vector<81x16xf32>
    %204 = vector.extract_strided_slice %9 {offsets = [2, 0], sizes = [81, 16], strides = [1, 1]} : vector<83x16xf32> to vector<81x16xf32>
    %205 = vector.extract_strided_slice %0 {offsets = [5, 0], sizes = [1, 16], strides = [1, 1]} : vector<8x16xf32> to vector<1x16xf32>
    %206 = vector.broadcast %205 : vector<1x16xf32> to vector<81x16xf32>
    %207 = arith.mulf %204, %206 : vector<81x16xf32>
    %208 = arith.addf %203, %207 : vector<81x16xf32>
    %209 = vector.extract_strided_slice %14 {offsets = [2, 0], sizes = [81, 16], strides = [1, 1]} : vector<83x16xf32> to vector<81x16xf32>
    %210 = vector.extract_strided_slice %0 {offsets = [6, 0], sizes = [1, 16], strides = [1, 1]} : vector<8x16xf32> to vector<1x16xf32>
    %211 = vector.broadcast %210 : vector<1x16xf32> to vector<81x16xf32>
    %212 = arith.mulf %209, %211 : vector<81x16xf32>
    %213 = arith.addf %208, %212 : vector<81x16xf32>
    %214 = vector.extract_strided_slice %19 {offsets = [2, 0], sizes = [81, 16], strides = [1, 1]} : vector<83x16xf32> to vector<81x16xf32>
    %215 = vector.extract_strided_slice %0 {offsets = [7, 0], sizes = [1, 16], strides = [1, 1]} : vector<8x16xf32> to vector<1x16xf32>
    %216 = vector.broadcast %215 : vector<1x16xf32> to vector<81x16xf32>
    %217 = arith.mulf %214, %216 : vector<81x16xf32>
    %218 = arith.addf %213, %217 : vector<81x16xf32>
    %219 = vector.broadcast %1 : vector<1x16xf32> to vector<81x16xf32>
    %220 = arith.addf %218, %219 : vector<81x16xf32>
    %cst_33 = arith.constant 0.000000e+00 : f32
    %221 = vector.broadcast %cst_33 : f32 to vector<81x16xf32>
    %222 = arith.cmpf ogt, %220, %221 : vector<81x16xf32>
    %cst_34 = arith.constant 0.000000e+00 : f32
    %223 = vector.broadcast %cst_34 : f32 to vector<81x16xf32>
    %224 = arith.minimumf %220, %223 : vector<81x16xf32>
    %225 = math.exp %224 : vector<81x16xf32>
    %cst_35 = arith.constant 1.000000e+00 : f32
    %226 = vector.broadcast %cst_35 : f32 to vector<81x16xf32>
    %227 = arith.subf %225, %226 : vector<81x16xf32>
    %228 = arith.select %222, %220, %227 : vector<81x16xi1>, vector<81x16xf32>
    %229 = arith.maximumf %75, %126 : vector<81x16xf32>
    %230 = arith.maximumf %177, %228 : vector<81x16xf32>
    %cst_36 = arith.constant 0.000000e+00 : f32
    %231 = vector.broadcast %cst_36 : f32 to vector<73x32xf32>
    %232 = vector.extract_strided_slice %229 {offsets = [0, 0], sizes = [73, 16], strides = [1, 1]} : vector<81x16xf32> to vector<73x16xf32>
    %233 = arith.truncf %232 : vector<73x16xf32> to vector<73x16xbf16>
    %234 = vector.extract_strided_slice %2 {offsets = [0, 0, 0], sizes = [1, 16, 32], strides = [1, 1, 1]} : vector<16x16x32xbf16> to vector<1x16x32xbf16>
    %235 = vector.shape_cast %234 : vector<1x16x32xbf16> to vector<16x32xbf16>
    %cst_37 = arith.constant dense<0.000000e+00> : vector<73x32xf32>
    %236 = tpu.matmul %233, %235, %cst_37 {dimension_numbers = #tpu.dot_dimension_numbers<[1], [0], [0], [1], [0, 0, 1, 1], [], []>} : vector<73x16xbf16>, vector<16x32xbf16>, vector<73x32xf32> -> vector<73x32xf32>
    %237 = arith.addf %231, %236 : vector<73x32xf32>
    %238 = vector.extract_strided_slice %230 {offsets = [0, 0], sizes = [73, 16], strides = [1, 1]} : vector<81x16xf32> to vector<73x16xf32>
    %239 = arith.truncf %238 : vector<73x16xf32> to vector<73x16xbf16>
    %240 = vector.extract_strided_slice %2 {offsets = [1, 0, 0], sizes = [1, 16, 32], strides = [1, 1, 1]} : vector<16x16x32xbf16> to vector<1x16x32xbf16>
    %241 = vector.shape_cast %240 : vector<1x16x32xbf16> to vector<16x32xbf16>
    %cst_38 = arith.constant dense<0.000000e+00> : vector<73x32xf32>
    %242 = tpu.matmul %239, %241, %cst_38 {dimension_numbers = #tpu.dot_dimension_numbers<[1], [0], [0], [1], [0, 0, 1, 1], [], []>} : vector<73x16xbf16>, vector<16x32xbf16>, vector<73x32xf32> -> vector<73x32xf32>
    %243 = arith.addf %237, %242 : vector<73x32xf32>
    %244 = vector.extract_strided_slice %229 {offsets = [1, 0], sizes = [73, 16], strides = [1, 1]} : vector<81x16xf32> to vector<73x16xf32>
    %245 = arith.truncf %244 : vector<73x16xf32> to vector<73x16xbf16>
    %246 = vector.extract_strided_slice %2 {offsets = [2, 0, 0], sizes = [1, 16, 32], strides = [1, 1, 1]} : vector<16x16x32xbf16> to vector<1x16x32xbf16>
    %247 = vector.shape_cast %246 : vector<1x16x32xbf16> to vector<16x32xbf16>
    %cst_39 = arith.constant dense<0.000000e+00> : vector<73x32xf32>
    %248 = tpu.matmul %245, %247, %cst_39 {dimension_numbers = #tpu.dot_dimension_numbers<[1], [0], [0], [1], [0, 0, 1, 1], [], []>} : vector<73x16xbf16>, vector<16x32xbf16>, vector<73x32xf32> -> vector<73x32xf32>
    %249 = arith.addf %243, %248 : vector<73x32xf32>
    %250 = vector.extract_strided_slice %230 {offsets = [1, 0], sizes = [73, 16], strides = [1, 1]} : vector<81x16xf32> to vector<73x16xf32>
    %251 = arith.truncf %250 : vector<73x16xf32> to vector<73x16xbf16>
    %252 = vector.extract_strided_slice %2 {offsets = [3, 0, 0], sizes = [1, 16, 32], strides = [1, 1, 1]} : vector<16x16x32xbf16> to vector<1x16x32xbf16>
    %253 = vector.shape_cast %252 : vector<1x16x32xbf16> to vector<16x32xbf16>
    %cst_40 = arith.constant dense<0.000000e+00> : vector<73x32xf32>
    %254 = tpu.matmul %251, %253, %cst_40 {dimension_numbers = #tpu.dot_dimension_numbers<[1], [0], [0], [1], [0, 0, 1, 1], [], []>} : vector<73x16xbf16>, vector<16x32xbf16>, vector<73x32xf32> -> vector<73x32xf32>
    %255 = arith.addf %249, %254 : vector<73x32xf32>
    %256 = vector.extract_strided_slice %229 {offsets = [2, 0], sizes = [73, 16], strides = [1, 1]} : vector<81x16xf32> to vector<73x16xf32>
    %257 = arith.truncf %256 : vector<73x16xf32> to vector<73x16xbf16>
    %258 = vector.extract_strided_slice %2 {offsets = [4, 0, 0], sizes = [1, 16, 32], strides = [1, 1, 1]} : vector<16x16x32xbf16> to vector<1x16x32xbf16>
    %259 = vector.shape_cast %258 : vector<1x16x32xbf16> to vector<16x32xbf16>
    %cst_41 = arith.constant dense<0.000000e+00> : vector<73x32xf32>
    %260 = tpu.matmul %257, %259, %cst_41 {dimension_numbers = #tpu.dot_dimension_numbers<[1], [0], [0], [1], [0, 0, 1, 1], [], []>} : vector<73x16xbf16>, vector<16x32xbf16>, vector<73x32xf32> -> vector<73x32xf32>
    %261 = arith.addf %255, %260 : vector<73x32xf32>
    %262 = vector.extract_strided_slice %230 {offsets = [2, 0], sizes = [73, 16], strides = [1, 1]} : vector<81x16xf32> to vector<73x16xf32>
    %263 = arith.truncf %262 : vector<73x16xf32> to vector<73x16xbf16>
    %264 = vector.extract_strided_slice %2 {offsets = [5, 0, 0], sizes = [1, 16, 32], strides = [1, 1, 1]} : vector<16x16x32xbf16> to vector<1x16x32xbf16>
    %265 = vector.shape_cast %264 : vector<1x16x32xbf16> to vector<16x32xbf16>
    %cst_42 = arith.constant dense<0.000000e+00> : vector<73x32xf32>
    %266 = tpu.matmul %263, %265, %cst_42 {dimension_numbers = #tpu.dot_dimension_numbers<[1], [0], [0], [1], [0, 0, 1, 1], [], []>} : vector<73x16xbf16>, vector<16x32xbf16>, vector<73x32xf32> -> vector<73x32xf32>
    %267 = arith.addf %261, %266 : vector<73x32xf32>
    %268 = vector.extract_strided_slice %229 {offsets = [3, 0], sizes = [73, 16], strides = [1, 1]} : vector<81x16xf32> to vector<73x16xf32>
    %269 = arith.truncf %268 : vector<73x16xf32> to vector<73x16xbf16>
    %270 = vector.extract_strided_slice %2 {offsets = [6, 0, 0], sizes = [1, 16, 32], strides = [1, 1, 1]} : vector<16x16x32xbf16> to vector<1x16x32xbf16>
    %271 = vector.shape_cast %270 : vector<1x16x32xbf16> to vector<16x32xbf16>
    %cst_43 = arith.constant dense<0.000000e+00> : vector<73x32xf32>
    %272 = tpu.matmul %269, %271, %cst_43 {dimension_numbers = #tpu.dot_dimension_numbers<[1], [0], [0], [1], [0, 0, 1, 1], [], []>} : vector<73x16xbf16>, vector<16x32xbf16>, vector<73x32xf32> -> vector<73x32xf32>
    %273 = arith.addf %267, %272 : vector<73x32xf32>
    %274 = vector.extract_strided_slice %230 {offsets = [3, 0], sizes = [73, 16], strides = [1, 1]} : vector<81x16xf32> to vector<73x16xf32>
    %275 = arith.truncf %274 : vector<73x16xf32> to vector<73x16xbf16>
    %276 = vector.extract_strided_slice %2 {offsets = [7, 0, 0], sizes = [1, 16, 32], strides = [1, 1, 1]} : vector<16x16x32xbf16> to vector<1x16x32xbf16>
    %277 = vector.shape_cast %276 : vector<1x16x32xbf16> to vector<16x32xbf16>
    %cst_44 = arith.constant dense<0.000000e+00> : vector<73x32xf32>
    %278 = tpu.matmul %275, %277, %cst_44 {dimension_numbers = #tpu.dot_dimension_numbers<[1], [0], [0], [1], [0, 0, 1, 1], [], []>} : vector<73x16xbf16>, vector<16x32xbf16>, vector<73x32xf32> -> vector<73x32xf32>
    %279 = arith.addf %273, %278 : vector<73x32xf32>
    %280 = vector.extract_strided_slice %229 {offsets = [4, 0], sizes = [73, 16], strides = [1, 1]} : vector<81x16xf32> to vector<73x16xf32>
    %281 = arith.truncf %280 : vector<73x16xf32> to vector<73x16xbf16>
    %282 = vector.extract_strided_slice %2 {offsets = [8, 0, 0], sizes = [1, 16, 32], strides = [1, 1, 1]} : vector<16x16x32xbf16> to vector<1x16x32xbf16>
    %283 = vector.shape_cast %282 : vector<1x16x32xbf16> to vector<16x32xbf16>
    %cst_45 = arith.constant dense<0.000000e+00> : vector<73x32xf32>
    %284 = tpu.matmul %281, %283, %cst_45 {dimension_numbers = #tpu.dot_dimension_numbers<[1], [0], [0], [1], [0, 0, 1, 1], [], []>} : vector<73x16xbf16>, vector<16x32xbf16>, vector<73x32xf32> -> vector<73x32xf32>
    %285 = arith.addf %279, %284 : vector<73x32xf32>
    %286 = vector.extract_strided_slice %230 {offsets = [4, 0], sizes = [73, 16], strides = [1, 1]} : vector<81x16xf32> to vector<73x16xf32>
    %287 = arith.truncf %286 : vector<73x16xf32> to vector<73x16xbf16>
    %288 = vector.extract_strided_slice %2 {offsets = [9, 0, 0], sizes = [1, 16, 32], strides = [1, 1, 1]} : vector<16x16x32xbf16> to vector<1x16x32xbf16>
    %289 = vector.shape_cast %288 : vector<1x16x32xbf16> to vector<16x32xbf16>
    %cst_46 = arith.constant dense<0.000000e+00> : vector<73x32xf32>
    %290 = tpu.matmul %287, %289, %cst_46 {dimension_numbers = #tpu.dot_dimension_numbers<[1], [0], [0], [1], [0, 0, 1, 1], [], []>} : vector<73x16xbf16>, vector<16x32xbf16>, vector<73x32xf32> -> vector<73x32xf32>
    %291 = arith.addf %285, %290 : vector<73x32xf32>
    %292 = vector.extract_strided_slice %229 {offsets = [5, 0], sizes = [73, 16], strides = [1, 1]} : vector<81x16xf32> to vector<73x16xf32>
    %293 = arith.truncf %292 : vector<73x16xf32> to vector<73x16xbf16>
    %294 = vector.extract_strided_slice %2 {offsets = [10, 0, 0], sizes = [1, 16, 32], strides = [1, 1, 1]} : vector<16x16x32xbf16> to vector<1x16x32xbf16>
    %295 = vector.shape_cast %294 : vector<1x16x32xbf16> to vector<16x32xbf16>
    %cst_47 = arith.constant dense<0.000000e+00> : vector<73x32xf32>
    %296 = tpu.matmul %293, %295, %cst_47 {dimension_numbers = #tpu.dot_dimension_numbers<[1], [0], [0], [1], [0, 0, 1, 1], [], []>} : vector<73x16xbf16>, vector<16x32xbf16>, vector<73x32xf32> -> vector<73x32xf32>
    %297 = arith.addf %291, %296 : vector<73x32xf32>
    %298 = vector.extract_strided_slice %230 {offsets = [5, 0], sizes = [73, 16], strides = [1, 1]} : vector<81x16xf32> to vector<73x16xf32>
    %299 = arith.truncf %298 : vector<73x16xf32> to vector<73x16xbf16>
    %300 = vector.extract_strided_slice %2 {offsets = [11, 0, 0], sizes = [1, 16, 32], strides = [1, 1, 1]} : vector<16x16x32xbf16> to vector<1x16x32xbf16>
    %301 = vector.shape_cast %300 : vector<1x16x32xbf16> to vector<16x32xbf16>
    %cst_48 = arith.constant dense<0.000000e+00> : vector<73x32xf32>
    %302 = tpu.matmul %299, %301, %cst_48 {dimension_numbers = #tpu.dot_dimension_numbers<[1], [0], [0], [1], [0, 0, 1, 1], [], []>} : vector<73x16xbf16>, vector<16x32xbf16>, vector<73x32xf32> -> vector<73x32xf32>
    %303 = arith.addf %297, %302 : vector<73x32xf32>
    %304 = vector.extract_strided_slice %229 {offsets = [6, 0], sizes = [73, 16], strides = [1, 1]} : vector<81x16xf32> to vector<73x16xf32>
    %305 = arith.truncf %304 : vector<73x16xf32> to vector<73x16xbf16>
    %306 = vector.extract_strided_slice %2 {offsets = [12, 0, 0], sizes = [1, 16, 32], strides = [1, 1, 1]} : vector<16x16x32xbf16> to vector<1x16x32xbf16>
    %307 = vector.shape_cast %306 : vector<1x16x32xbf16> to vector<16x32xbf16>
    %cst_49 = arith.constant dense<0.000000e+00> : vector<73x32xf32>
    %308 = tpu.matmul %305, %307, %cst_49 {dimension_numbers = #tpu.dot_dimension_numbers<[1], [0], [0], [1], [0, 0, 1, 1], [], []>} : vector<73x16xbf16>, vector<16x32xbf16>, vector<73x32xf32> -> vector<73x32xf32>
    %309 = arith.addf %303, %308 : vector<73x32xf32>
    %310 = vector.extract_strided_slice %230 {offsets = [6, 0], sizes = [73, 16], strides = [1, 1]} : vector<81x16xf32> to vector<73x16xf32>
    %311 = arith.truncf %310 : vector<73x16xf32> to vector<73x16xbf16>
    %312 = vector.extract_strided_slice %2 {offsets = [13, 0, 0], sizes = [1, 16, 32], strides = [1, 1, 1]} : vector<16x16x32xbf16> to vector<1x16x32xbf16>
    %313 = vector.shape_cast %312 : vector<1x16x32xbf16> to vector<16x32xbf16>
    %cst_50 = arith.constant dense<0.000000e+00> : vector<73x32xf32>
    %314 = tpu.matmul %311, %313, %cst_50 {dimension_numbers = #tpu.dot_dimension_numbers<[1], [0], [0], [1], [0, 0, 1, 1], [], []>} : vector<73x16xbf16>, vector<16x32xbf16>, vector<73x32xf32> -> vector<73x32xf32>
    %315 = arith.addf %309, %314 : vector<73x32xf32>
    %316 = vector.extract_strided_slice %229 {offsets = [7, 0], sizes = [73, 16], strides = [1, 1]} : vector<81x16xf32> to vector<73x16xf32>
    %317 = arith.truncf %316 : vector<73x16xf32> to vector<73x16xbf16>
    %318 = vector.extract_strided_slice %2 {offsets = [14, 0, 0], sizes = [1, 16, 32], strides = [1, 1, 1]} : vector<16x16x32xbf16> to vector<1x16x32xbf16>
    %319 = vector.shape_cast %318 : vector<1x16x32xbf16> to vector<16x32xbf16>
    %cst_51 = arith.constant dense<0.000000e+00> : vector<73x32xf32>
    %320 = tpu.matmul %317, %319, %cst_51 {dimension_numbers = #tpu.dot_dimension_numbers<[1], [0], [0], [1], [0, 0, 1, 1], [], []>} : vector<73x16xbf16>, vector<16x32xbf16>, vector<73x32xf32> -> vector<73x32xf32>
    %321 = arith.addf %315, %320 : vector<73x32xf32>
    %322 = vector.extract_strided_slice %230 {offsets = [7, 0], sizes = [73, 16], strides = [1, 1]} : vector<81x16xf32> to vector<73x16xf32>
    %323 = arith.truncf %322 : vector<73x16xf32> to vector<73x16xbf16>
    %324 = vector.extract_strided_slice %2 {offsets = [15, 0, 0], sizes = [1, 16, 32], strides = [1, 1, 1]} : vector<16x16x32xbf16> to vector<1x16x32xbf16>
    %325 = vector.shape_cast %324 : vector<1x16x32xbf16> to vector<16x32xbf16>
    %cst_52 = arith.constant dense<0.000000e+00> : vector<73x32xf32>
    %326 = tpu.matmul %323, %325, %cst_52 {dimension_numbers = #tpu.dot_dimension_numbers<[1], [0], [0], [1], [0, 0, 1, 1], [], []>} : vector<73x16xbf16>, vector<16x32xbf16>, vector<73x32xf32> -> vector<73x32xf32>
    %327 = arith.addf %321, %326 : vector<73x32xf32>
    %328 = vector.broadcast %3 : vector<1x32xf32> to vector<73x32xf32>
    %329 = arith.addf %327, %328 : vector<73x32xf32>
    %cst_53 = arith.constant 0.000000e+00 : f32
    %330 = vector.broadcast %cst_53 : f32 to vector<73x32xf32>
    %331 = arith.cmpf ogt, %329, %330 : vector<73x32xf32>
    %cst_54 = arith.constant 0.000000e+00 : f32
    %332 = vector.broadcast %cst_54 : f32 to vector<73x32xf32>
    %333 = arith.minimumf %329, %332 : vector<73x32xf32>
    %334 = math.exp %333 : vector<73x32xf32>
    %cst_55 = arith.constant 1.000000e+00 : f32
    %335 = vector.broadcast %cst_55 : f32 to vector<73x32xf32>
    %336 = arith.subf %334, %335 : vector<73x32xf32>
    %337 = arith.select %331, %329, %336 : vector<73x32xi1>, vector<73x32xf32>
    %cst_56 = arith.constant 0.000000e+00 : f32
    %338 = vector.broadcast %cst_56 : f32 to vector<73x32xf32>
    %339 = vector.extract_strided_slice %230 {offsets = [0, 0], sizes = [73, 16], strides = [1, 1]} : vector<81x16xf32> to vector<73x16xf32>
    %340 = arith.truncf %339 : vector<73x16xf32> to vector<73x16xbf16>
    %341 = vector.extract_strided_slice %2 {offsets = [0, 0, 0], sizes = [1, 16, 32], strides = [1, 1, 1]} : vector<16x16x32xbf16> to vector<1x16x32xbf16>
    %342 = vector.shape_cast %341 : vector<1x16x32xbf16> to vector<16x32xbf16>
    %cst_57 = arith.constant dense<0.000000e+00> : vector<73x32xf32>
    %343 = tpu.matmul %340, %342, %cst_57 {dimension_numbers = #tpu.dot_dimension_numbers<[1], [0], [0], [1], [0, 0, 1, 1], [], []>} : vector<73x16xbf16>, vector<16x32xbf16>, vector<73x32xf32> -> vector<73x32xf32>
    %344 = arith.addf %338, %343 : vector<73x32xf32>
    %345 = vector.extract_strided_slice %229 {offsets = [1, 0], sizes = [73, 16], strides = [1, 1]} : vector<81x16xf32> to vector<73x16xf32>
    %346 = arith.truncf %345 : vector<73x16xf32> to vector<73x16xbf16>
    %347 = vector.extract_strided_slice %2 {offsets = [1, 0, 0], sizes = [1, 16, 32], strides = [1, 1, 1]} : vector<16x16x32xbf16> to vector<1x16x32xbf16>
    %348 = vector.shape_cast %347 : vector<1x16x32xbf16> to vector<16x32xbf16>
    %cst_58 = arith.constant dense<0.000000e+00> : vector<73x32xf32>
    %349 = tpu.matmul %346, %348, %cst_58 {dimension_numbers = #tpu.dot_dimension_numbers<[1], [0], [0], [1], [0, 0, 1, 1], [], []>} : vector<73x16xbf16>, vector<16x32xbf16>, vector<73x32xf32> -> vector<73x32xf32>
    %350 = arith.addf %344, %349 : vector<73x32xf32>
    %351 = vector.extract_strided_slice %230 {offsets = [1, 0], sizes = [73, 16], strides = [1, 1]} : vector<81x16xf32> to vector<73x16xf32>
    %352 = arith.truncf %351 : vector<73x16xf32> to vector<73x16xbf16>
    %353 = vector.extract_strided_slice %2 {offsets = [2, 0, 0], sizes = [1, 16, 32], strides = [1, 1, 1]} : vector<16x16x32xbf16> to vector<1x16x32xbf16>
    %354 = vector.shape_cast %353 : vector<1x16x32xbf16> to vector<16x32xbf16>
    %cst_59 = arith.constant dense<0.000000e+00> : vector<73x32xf32>
    %355 = tpu.matmul %352, %354, %cst_59 {dimension_numbers = #tpu.dot_dimension_numbers<[1], [0], [0], [1], [0, 0, 1, 1], [], []>} : vector<73x16xbf16>, vector<16x32xbf16>, vector<73x32xf32> -> vector<73x32xf32>
    %356 = arith.addf %350, %355 : vector<73x32xf32>
    %357 = vector.extract_strided_slice %229 {offsets = [2, 0], sizes = [73, 16], strides = [1, 1]} : vector<81x16xf32> to vector<73x16xf32>
    %358 = arith.truncf %357 : vector<73x16xf32> to vector<73x16xbf16>
    %359 = vector.extract_strided_slice %2 {offsets = [3, 0, 0], sizes = [1, 16, 32], strides = [1, 1, 1]} : vector<16x16x32xbf16> to vector<1x16x32xbf16>
    %360 = vector.shape_cast %359 : vector<1x16x32xbf16> to vector<16x32xbf16>
    %cst_60 = arith.constant dense<0.000000e+00> : vector<73x32xf32>
    %361 = tpu.matmul %358, %360, %cst_60 {dimension_numbers = #tpu.dot_dimension_numbers<[1], [0], [0], [1], [0, 0, 1, 1], [], []>} : vector<73x16xbf16>, vector<16x32xbf16>, vector<73x32xf32> -> vector<73x32xf32>
    %362 = arith.addf %356, %361 : vector<73x32xf32>
    %363 = vector.extract_strided_slice %230 {offsets = [2, 0], sizes = [73, 16], strides = [1, 1]} : vector<81x16xf32> to vector<73x16xf32>
    %364 = arith.truncf %363 : vector<73x16xf32> to vector<73x16xbf16>
    %365 = vector.extract_strided_slice %2 {offsets = [4, 0, 0], sizes = [1, 16, 32], strides = [1, 1, 1]} : vector<16x16x32xbf16> to vector<1x16x32xbf16>
    %366 = vector.shape_cast %365 : vector<1x16x32xbf16> to vector<16x32xbf16>
    %cst_61 = arith.constant dense<0.000000e+00> : vector<73x32xf32>
    %367 = tpu.matmul %364, %366, %cst_61 {dimension_numbers = #tpu.dot_dimension_numbers<[1], [0], [0], [1], [0, 0, 1, 1], [], []>} : vector<73x16xbf16>, vector<16x32xbf16>, vector<73x32xf32> -> vector<73x32xf32>
    %368 = arith.addf %362, %367 : vector<73x32xf32>
    %369 = vector.extract_strided_slice %229 {offsets = [3, 0], sizes = [73, 16], strides = [1, 1]} : vector<81x16xf32> to vector<73x16xf32>
    %370 = arith.truncf %369 : vector<73x16xf32> to vector<73x16xbf16>
    %371 = vector.extract_strided_slice %2 {offsets = [5, 0, 0], sizes = [1, 16, 32], strides = [1, 1, 1]} : vector<16x16x32xbf16> to vector<1x16x32xbf16>
    %372 = vector.shape_cast %371 : vector<1x16x32xbf16> to vector<16x32xbf16>
    %cst_62 = arith.constant dense<0.000000e+00> : vector<73x32xf32>
    %373 = tpu.matmul %370, %372, %cst_62 {dimension_numbers = #tpu.dot_dimension_numbers<[1], [0], [0], [1], [0, 0, 1, 1], [], []>} : vector<73x16xbf16>, vector<16x32xbf16>, vector<73x32xf32> -> vector<73x32xf32>
    %374 = arith.addf %368, %373 : vector<73x32xf32>
    %375 = vector.extract_strided_slice %230 {offsets = [3, 0], sizes = [73, 16], strides = [1, 1]} : vector<81x16xf32> to vector<73x16xf32>
    %376 = arith.truncf %375 : vector<73x16xf32> to vector<73x16xbf16>
    %377 = vector.extract_strided_slice %2 {offsets = [6, 0, 0], sizes = [1, 16, 32], strides = [1, 1, 1]} : vector<16x16x32xbf16> to vector<1x16x32xbf16>
    %378 = vector.shape_cast %377 : vector<1x16x32xbf16> to vector<16x32xbf16>
    %cst_63 = arith.constant dense<0.000000e+00> : vector<73x32xf32>
    %379 = tpu.matmul %376, %378, %cst_63 {dimension_numbers = #tpu.dot_dimension_numbers<[1], [0], [0], [1], [0, 0, 1, 1], [], []>} : vector<73x16xbf16>, vector<16x32xbf16>, vector<73x32xf32> -> vector<73x32xf32>
    %380 = arith.addf %374, %379 : vector<73x32xf32>
    %381 = vector.extract_strided_slice %229 {offsets = [4, 0], sizes = [73, 16], strides = [1, 1]} : vector<81x16xf32> to vector<73x16xf32>
    %382 = arith.truncf %381 : vector<73x16xf32> to vector<73x16xbf16>
    %383 = vector.extract_strided_slice %2 {offsets = [7, 0, 0], sizes = [1, 16, 32], strides = [1, 1, 1]} : vector<16x16x32xbf16> to vector<1x16x32xbf16>
    %384 = vector.shape_cast %383 : vector<1x16x32xbf16> to vector<16x32xbf16>
    %cst_64 = arith.constant dense<0.000000e+00> : vector<73x32xf32>
    %385 = tpu.matmul %382, %384, %cst_64 {dimension_numbers = #tpu.dot_dimension_numbers<[1], [0], [0], [1], [0, 0, 1, 1], [], []>} : vector<73x16xbf16>, vector<16x32xbf16>, vector<73x32xf32> -> vector<73x32xf32>
    %386 = arith.addf %380, %385 : vector<73x32xf32>
    %387 = vector.extract_strided_slice %230 {offsets = [4, 0], sizes = [73, 16], strides = [1, 1]} : vector<81x16xf32> to vector<73x16xf32>
    %388 = arith.truncf %387 : vector<73x16xf32> to vector<73x16xbf16>
    %389 = vector.extract_strided_slice %2 {offsets = [8, 0, 0], sizes = [1, 16, 32], strides = [1, 1, 1]} : vector<16x16x32xbf16> to vector<1x16x32xbf16>
    %390 = vector.shape_cast %389 : vector<1x16x32xbf16> to vector<16x32xbf16>
    %cst_65 = arith.constant dense<0.000000e+00> : vector<73x32xf32>
    %391 = tpu.matmul %388, %390, %cst_65 {dimension_numbers = #tpu.dot_dimension_numbers<[1], [0], [0], [1], [0, 0, 1, 1], [], []>} : vector<73x16xbf16>, vector<16x32xbf16>, vector<73x32xf32> -> vector<73x32xf32>
    %392 = arith.addf %386, %391 : vector<73x32xf32>
    %393 = vector.extract_strided_slice %229 {offsets = [5, 0], sizes = [73, 16], strides = [1, 1]} : vector<81x16xf32> to vector<73x16xf32>
    %394 = arith.truncf %393 : vector<73x16xf32> to vector<73x16xbf16>
    %395 = vector.extract_strided_slice %2 {offsets = [9, 0, 0], sizes = [1, 16, 32], strides = [1, 1, 1]} : vector<16x16x32xbf16> to vector<1x16x32xbf16>
    %396 = vector.shape_cast %395 : vector<1x16x32xbf16> to vector<16x32xbf16>
    %cst_66 = arith.constant dense<0.000000e+00> : vector<73x32xf32>
    %397 = tpu.matmul %394, %396, %cst_66 {dimension_numbers = #tpu.dot_dimension_numbers<[1], [0], [0], [1], [0, 0, 1, 1], [], []>} : vector<73x16xbf16>, vector<16x32xbf16>, vector<73x32xf32> -> vector<73x32xf32>
    %398 = arith.addf %392, %397 : vector<73x32xf32>
    %399 = vector.extract_strided_slice %230 {offsets = [5, 0], sizes = [73, 16], strides = [1, 1]} : vector<81x16xf32> to vector<73x16xf32>
    %400 = arith.truncf %399 : vector<73x16xf32> to vector<73x16xbf16>
    %401 = vector.extract_strided_slice %2 {offsets = [10, 0, 0], sizes = [1, 16, 32], strides = [1, 1, 1]} : vector<16x16x32xbf16> to vector<1x16x32xbf16>
    %402 = vector.shape_cast %401 : vector<1x16x32xbf16> to vector<16x32xbf16>
    %cst_67 = arith.constant dense<0.000000e+00> : vector<73x32xf32>
    %403 = tpu.matmul %400, %402, %cst_67 {dimension_numbers = #tpu.dot_dimension_numbers<[1], [0], [0], [1], [0, 0, 1, 1], [], []>} : vector<73x16xbf16>, vector<16x32xbf16>, vector<73x32xf32> -> vector<73x32xf32>
    %404 = arith.addf %398, %403 : vector<73x32xf32>
    %405 = vector.extract_strided_slice %229 {offsets = [6, 0], sizes = [73, 16], strides = [1, 1]} : vector<81x16xf32> to vector<73x16xf32>
    %406 = arith.truncf %405 : vector<73x16xf32> to vector<73x16xbf16>
    %407 = vector.extract_strided_slice %2 {offsets = [11, 0, 0], sizes = [1, 16, 32], strides = [1, 1, 1]} : vector<16x16x32xbf16> to vector<1x16x32xbf16>
    %408 = vector.shape_cast %407 : vector<1x16x32xbf16> to vector<16x32xbf16>
    %cst_68 = arith.constant dense<0.000000e+00> : vector<73x32xf32>
    %409 = tpu.matmul %406, %408, %cst_68 {dimension_numbers = #tpu.dot_dimension_numbers<[1], [0], [0], [1], [0, 0, 1, 1], [], []>} : vector<73x16xbf16>, vector<16x32xbf16>, vector<73x32xf32> -> vector<73x32xf32>
    %410 = arith.addf %404, %409 : vector<73x32xf32>
    %411 = vector.extract_strided_slice %230 {offsets = [6, 0], sizes = [73, 16], strides = [1, 1]} : vector<81x16xf32> to vector<73x16xf32>
    %412 = arith.truncf %411 : vector<73x16xf32> to vector<73x16xbf16>
    %413 = vector.extract_strided_slice %2 {offsets = [12, 0, 0], sizes = [1, 16, 32], strides = [1, 1, 1]} : vector<16x16x32xbf16> to vector<1x16x32xbf16>
    %414 = vector.shape_cast %413 : vector<1x16x32xbf16> to vector<16x32xbf16>
    %cst_69 = arith.constant dense<0.000000e+00> : vector<73x32xf32>
    %415 = tpu.matmul %412, %414, %cst_69 {dimension_numbers = #tpu.dot_dimension_numbers<[1], [0], [0], [1], [0, 0, 1, 1], [], []>} : vector<73x16xbf16>, vector<16x32xbf16>, vector<73x32xf32> -> vector<73x32xf32>
    %416 = arith.addf %410, %415 : vector<73x32xf32>
    %417 = vector.extract_strided_slice %229 {offsets = [7, 0], sizes = [73, 16], strides = [1, 1]} : vector<81x16xf32> to vector<73x16xf32>
    %418 = arith.truncf %417 : vector<73x16xf32> to vector<73x16xbf16>
    %419 = vector.extract_strided_slice %2 {offsets = [13, 0, 0], sizes = [1, 16, 32], strides = [1, 1, 1]} : vector<16x16x32xbf16> to vector<1x16x32xbf16>
    %420 = vector.shape_cast %419 : vector<1x16x32xbf16> to vector<16x32xbf16>
    %cst_70 = arith.constant dense<0.000000e+00> : vector<73x32xf32>
    %421 = tpu.matmul %418, %420, %cst_70 {dimension_numbers = #tpu.dot_dimension_numbers<[1], [0], [0], [1], [0, 0, 1, 1], [], []>} : vector<73x16xbf16>, vector<16x32xbf16>, vector<73x32xf32> -> vector<73x32xf32>
    %422 = arith.addf %416, %421 : vector<73x32xf32>
    %423 = vector.extract_strided_slice %230 {offsets = [7, 0], sizes = [73, 16], strides = [1, 1]} : vector<81x16xf32> to vector<73x16xf32>
    %424 = arith.truncf %423 : vector<73x16xf32> to vector<73x16xbf16>
    %425 = vector.extract_strided_slice %2 {offsets = [14, 0, 0], sizes = [1, 16, 32], strides = [1, 1, 1]} : vector<16x16x32xbf16> to vector<1x16x32xbf16>
    %426 = vector.shape_cast %425 : vector<1x16x32xbf16> to vector<16x32xbf16>
    %cst_71 = arith.constant dense<0.000000e+00> : vector<73x32xf32>
    %427 = tpu.matmul %424, %426, %cst_71 {dimension_numbers = #tpu.dot_dimension_numbers<[1], [0], [0], [1], [0, 0, 1, 1], [], []>} : vector<73x16xbf16>, vector<16x32xbf16>, vector<73x32xf32> -> vector<73x32xf32>
    %428 = arith.addf %422, %427 : vector<73x32xf32>
    %429 = vector.extract_strided_slice %229 {offsets = [8, 0], sizes = [73, 16], strides = [1, 1]} : vector<81x16xf32> to vector<73x16xf32>
    %430 = arith.truncf %429 : vector<73x16xf32> to vector<73x16xbf16>
    %431 = vector.extract_strided_slice %2 {offsets = [15, 0, 0], sizes = [1, 16, 32], strides = [1, 1, 1]} : vector<16x16x32xbf16> to vector<1x16x32xbf16>
    %432 = vector.shape_cast %431 : vector<1x16x32xbf16> to vector<16x32xbf16>
    %cst_72 = arith.constant dense<0.000000e+00> : vector<73x32xf32>
    %433 = tpu.matmul %430, %432, %cst_72 {dimension_numbers = #tpu.dot_dimension_numbers<[1], [0], [0], [1], [0, 0, 1, 1], [], []>} : vector<73x16xbf16>, vector<16x32xbf16>, vector<73x32xf32> -> vector<73x32xf32>
    %434 = arith.addf %428, %433 : vector<73x32xf32>
    %435 = vector.broadcast %3 : vector<1x32xf32> to vector<73x32xf32>
    %436 = arith.addf %434, %435 : vector<73x32xf32>
    %cst_73 = arith.constant 0.000000e+00 : f32
    %437 = vector.broadcast %cst_73 : f32 to vector<73x32xf32>
    %438 = arith.cmpf ogt, %436, %437 : vector<73x32xf32>
    %cst_74 = arith.constant 0.000000e+00 : f32
    %439 = vector.broadcast %cst_74 : f32 to vector<73x32xf32>
    %440 = arith.minimumf %436, %439 : vector<73x32xf32>
    %441 = math.exp %440 : vector<73x32xf32>
    %cst_75 = arith.constant 1.000000e+00 : f32
    %442 = vector.broadcast %cst_75 : f32 to vector<73x32xf32>
    %443 = arith.subf %441, %442 : vector<73x32xf32>
    %444 = arith.select %438, %436, %443 : vector<73x32xi1>, vector<73x32xf32>
    %445 = arith.maximumf %337, %444 : vector<73x32xf32>
    %c0_76 = arith.constant 0 : index
    %c0_77 = arith.constant 0 : index
    %c0_78 = arith.constant 0 : index
    %446 = vector.load %arg9[%c0_76, %c0_77, %c0_78] : memref<1x73x32xf32, #tpu.memory_space<vmem>>, vector<1x73x32xf32>
    %447 = vector.shape_cast %446 : vector<1x73x32xf32> to vector<73x32xf32>
    %448 = vector.shape_cast %445 : vector<73x32xf32> to vector<1x73x32xf32>
    tpu.vector_store %arg9[%c0_76, %c0_77, %c0_78], %448 {strides = array<i32>} : memref<1x73x32xf32, #tpu.memory_space<vmem>>, vector<1x73x32xf32>,
    return
  }
  func.func @transform_0(%arg0: i32) -> (i32, i32, i32) {
    %c0_i32 = arith.constant 0 : i32
    %c0_i32_0 = arith.constant 0 : i32
    %c0_i32_1 = arith.constant 0 : i32
    return %arg0, %c0_i32, %c0_i32_0 : i32, i32, i32
  }
  func.func @transform_1(%arg0: i32) -> (i32, i32, i32) {
    %c0_i32 = arith.constant 0 : i32
    %c0_i32_0 = arith.constant 0 : i32
    %c0_i32_1 = arith.constant 0 : i32
    return %arg0, %c0_i32, %c0_i32_0 : i32, i32, i32
  }
  func.func @transform_2(%arg0: i32) -> (i32, i32, i32) {
    %c0_i32 = arith.constant 0 : i32
    %c0_i32_0 = arith.constant 0 : i32
    %c0_i32_1 = arith.constant 0 : i32
    return %arg0, %c0_i32, %c0_i32_0 : i32, i32, i32
  }
  func.func @transform_3(%arg0: i32) -> (i32, i32, i32) {
    %c0_i32 = arith.constant 0 : i32
    %c0_i32_0 = arith.constant 0 : i32
    %c0_i32_1 = arith.constant 0 : i32
    return %arg0, %c0_i32, %c0_i32_0 : i32, i32, i32
  }
  func.func @transform_4(%arg0: i32) -> (i32, i32) {
    %c0_i32 = arith.constant 0 : i32
    %c0_i32_0 = arith.constant 0 : i32
    %c0_i32_1 = arith.constant 0 : i32
    return %c0_i32, %c0_i32_0 : i32, i32
  }
  func.func @transform_5(%arg0: i32) -> (i32, i32) {
    %c0_i32 = arith.constant 0 : i32
    %c0_i32_0 = arith.constant 0 : i32
    %c0_i32_1 = arith.constant 0 : i32
    return %c0_i32, %c0_i32_0 : i32, i32
  }
  func.func @transform_6(%arg0: i32) -> (i32, i32, i32) {
    %c0_i32 = arith.constant 0 : i32
    %c0_i32_0 = arith.constant 0 : i32
    %c0_i32_1 = arith.constant 0 : i32
    %c0_i32_2 = arith.constant 0 : i32
    return %c0_i32, %c0_i32_0, %c0_i32_1 : i32, i32, i32
  }
  func.func @transform_7(%arg0: i32) -> (i32, i32) {
    %c0_i32 = arith.constant 0 : i32
    %c0_i32_0 = arith.constant 0 : i32
    %c0_i32_1 = arith.constant 0 : i32
    return %c0_i32, %c0_i32_0 : i32, i32
  }
  func.func @transform_8(%arg0: i32) -> (i32, i32, i32) {
    %c0_i32 = arith.constant 0 : i32
    %c0_i32_0 = arith.constant 0 : i32
    %c0_i32_1 = arith.constant 0 : i32
    return %arg0, %c0_i32, %c0_i32_0 : i32, i32, i32
  }
}

module attributes {stable_mosaic.version = 11 : i64} {
  func.func @mlp_kernel(%arg0: memref<2x2336xf32, #tpu.memory_space<vmem>>, %arg1: memref<2336x512xbf16, #tpu.memory_space<vmem>>, %arg2: memref<1x512xf32, #tpu.memory_space<vmem>>, %arg3: memref<512x256xbf16, #tpu.memory_space<vmem>>, %arg4: memref<1x256xf32, #tpu.memory_space<vmem>>, %arg5: memref<256x3xbf16, #tpu.memory_space<vmem>>, %arg6: memref<1x3xf32, #tpu.memory_space<vmem>>, %arg7: memref<2x3xf32, #tpu.memory_space<vmem>>) attributes {dimension_semantics = [], scalar_prefetch = 0 : i64, scratch_operands = 0 : i64, tpu.core_type = #tpu.core_type<tc>} {
    %c0 = arith.constant 0 : index
    %c0_0 = arith.constant 0 : index
    %0 = vector.load %arg0[%c0, %c0_0] : memref<2x2336xf32, #tpu.memory_space<vmem>>, vector<2x2336xf32>
    %1 = arith.truncf %0 : vector<2x2336xf32> to vector<2x2336xbf16>
    %c0_1 = arith.constant 0 : index
    %c0_2 = arith.constant 0 : index
    %2 = vector.load %arg1[%c0_1, %c0_2] : memref<2336x512xbf16, #tpu.memory_space<vmem>>, vector<2336x512xbf16>
    %cst = arith.constant dense<0.000000e+00> : vector<2x512xf32>
    %3 = tpu.matmul %1, %2, %cst {dimension_numbers = #tpu.dot_dimension_numbers<[1], [0], [0], [1], [0, 0, 1, 1], [], []>} : vector<2x2336xbf16>, vector<2336x512xbf16>, vector<2x512xf32> -> vector<2x512xf32>
    %c0_3 = arith.constant 0 : index
    %c0_4 = arith.constant 0 : index
    %4 = vector.load %arg2[%c0_3, %c0_4] : memref<1x512xf32, #tpu.memory_space<vmem>>, vector<1x512xf32>
    %5 = vector.broadcast %4 : vector<1x512xf32> to vector<2x512xf32>
    %6 = arith.addf %3, %5 : vector<2x512xf32>
    %cst_5 = arith.constant 0.000000e+00 : f32
    %7 = vector.broadcast %cst_5 : f32 to vector<2x512xf32>
    %8 = arith.cmpf ogt, %6, %7 : vector<2x512xf32>
    %cst_6 = arith.constant 0.000000e+00 : f32
    %9 = vector.broadcast %cst_6 : f32 to vector<2x512xf32>
    %10 = arith.minimumf %6, %9 : vector<2x512xf32>
    %11 = math.exp %10 : vector<2x512xf32>
    %cst_7 = arith.constant 1.000000e+00 : f32
    %12 = vector.broadcast %cst_7 : f32 to vector<2x512xf32>
    %13 = arith.subf %11, %12 : vector<2x512xf32>
    %14 = arith.select %8, %6, %13 : vector<2x512xi1>, vector<2x512xf32>
    %15 = arith.truncf %14 : vector<2x512xf32> to vector<2x512xbf16>
    %c0_8 = arith.constant 0 : index
    %c0_9 = arith.constant 0 : index
    %16 = vector.load %arg3[%c0_8, %c0_9] : memref<512x256xbf16, #tpu.memory_space<vmem>>, vector<512x256xbf16>
    %cst_10 = arith.constant dense<0.000000e+00> : vector<2x256xf32>
    %17 = tpu.matmul %15, %16, %cst_10 {dimension_numbers = #tpu.dot_dimension_numbers<[1], [0], [0], [1], [0, 0, 1, 1], [], []>} : vector<2x512xbf16>, vector<512x256xbf16>, vector<2x256xf32> -> vector<2x256xf32>
    %c0_11 = arith.constant 0 : index
    %c0_12 = arith.constant 0 : index
    %18 = vector.load %arg4[%c0_11, %c0_12] : memref<1x256xf32, #tpu.memory_space<vmem>>, vector<1x256xf32>
    %19 = vector.broadcast %18 : vector<1x256xf32> to vector<2x256xf32>
    %20 = arith.addf %17, %19 : vector<2x256xf32>
    %cst_13 = arith.constant 0.000000e+00 : f32
    %21 = vector.broadcast %cst_13 : f32 to vector<2x256xf32>
    %22 = arith.cmpf ogt, %20, %21 : vector<2x256xf32>
    %cst_14 = arith.constant 0.000000e+00 : f32
    %23 = vector.broadcast %cst_14 : f32 to vector<2x256xf32>
    %24 = arith.minimumf %20, %23 : vector<2x256xf32>
    %25 = math.exp %24 : vector<2x256xf32>
    %cst_15 = arith.constant 1.000000e+00 : f32
    %26 = vector.broadcast %cst_15 : f32 to vector<2x256xf32>
    %27 = arith.subf %25, %26 : vector<2x256xf32>
    %28 = arith.select %22, %20, %27 : vector<2x256xi1>, vector<2x256xf32>
    %29 = arith.truncf %28 : vector<2x256xf32> to vector<2x256xbf16>
    %c0_16 = arith.constant 0 : index
    %c0_17 = arith.constant 0 : index
    %30 = vector.load %arg5[%c0_16, %c0_17] : memref<256x3xbf16, #tpu.memory_space<vmem>>, vector<256x3xbf16>
    %cst_18 = arith.constant dense<0.000000e+00> : vector<2x3xf32>
    %31 = tpu.matmul %29, %30, %cst_18 {dimension_numbers = #tpu.dot_dimension_numbers<[1], [0], [0], [1], [0, 0, 1, 1], [], []>} : vector<2x256xbf16>, vector<256x3xbf16>, vector<2x3xf32> -> vector<2x3xf32>
    %c0_19 = arith.constant 0 : index
    %c0_20 = arith.constant 0 : index
    %32 = vector.load %arg6[%c0_19, %c0_20] : memref<1x3xf32, #tpu.memory_space<vmem>>, vector<1x3xf32>
    %33 = vector.broadcast %32 : vector<1x3xf32> to vector<2x3xf32>
    %34 = arith.addf %31, %33 : vector<2x3xf32>
    %c0_21 = arith.constant 0 : index
    %c0_22 = arith.constant 0 : index
    %35 = vector.load %arg7[%c0_21, %c0_22] : memref<2x3xf32, #tpu.memory_space<vmem>>, vector<2x3xf32>
    tpu.vector_store %arg7[%c0_21, %c0_22], %34 {strides = array<i32>} : memref<2x3xf32, #tpu.memory_space<vmem>>, vector<2x3xf32>,
    return
  }
}

</mosaic_0001>

<llo_original>
// kernel: spectranet_forward.2
$region0: #{spectranet_forward.2}
  #allocation0 [shape = 'u32[]', space=smem, size = 0x4, offset = 0x4, fixed_abs, tag = 'smem constant byte address 0x4 - core index']
  #allocation1 [shape = 'u32[144,128]{1,0:T(1,128)}', space=vmem, size = 0x12000, scoped, tag = 'internal scratch']
  %s0 = inlined_call_operand.vmem [shape: f32[2,83,1], index: 0, kind: input, shape index: {}]
  %s1 = inlined_call_operand.vmem [shape: f32[2,83,1], index: 1, kind: input, shape index: {}]
  %s2 = inlined_call_operand.vmem [shape: f32[2,83,1], index: 2, kind: input, shape index: {}]
  %s3 = inlined_call_operand.vmem [shape: f32[2,82,1], index: 3, kind: input, shape index: {}]
  %s4 = inlined_call_operand.hbm [shape: f32[8,16], index: 4, kind: input, shape index: {}]
  %s5 = inlined_call_operand.hbm [shape: f32[1,16], index: 5, kind: input, shape index: {}]
  %s6 = inlined_call_operand.hbm [shape: bf16[16,16,32], index: 6, kind: input, shape index: {}]
  %s7 = inlined_call_operand.hbm [shape: f32[1,32], index: 7, kind: input, shape index: {}]
  %s8 = inlined_call_operand.vmem [shape: f32[2,73,32], index: 8, kind: output, shape index: {}]
  %s9 = sld [smem:[#allocation0]]
  $region81: #{spectranet_forward.2} parent=0
    _
  %s11 = ssub.s32 1, %s9
  %s12 = scalar_select 0, %s11, %s9
  $region1: #{spectranet_forward.2} parent=0
    #allocation2 [shape = 'u8[4096]{0}', space=vmem, size = 0x1000, scoped, tag = 'input window, operand 4, single buffered']
    #allocation3 [shape = 's32[2]{0}', space=sflag, size = 0x8, scoped, tag = 'scoped memory for spectranet_forward.2']
    #allocation4 [shape = 'u8[512]{0}', space=vmem, size = 0x400, scoped, tag = 'input window, operand 5, single buffered']
    #allocation5 [shape = 's32[1]{0}', space=sflag, size = 0x4, scoped, tag = 'scoped memory for spectranet_forward.2']
    #allocation6 [shape = 'u8[65536]{0}', space=vmem, size = 0x10000, scoped, tag = 'input window, operand 6, single buffered']
    #allocation7 [shape = 'u8[512]{0}', space=vmem, size = 0x400, scoped, tag = 'input window, operand 7, single buffered']
    #allocation8 [shape = 's32[1]{0}', space=sflag, size = 0x4, scoped, tag = 'scoped memory for spectranet_forward.2']
    %13 = vsyncpa [#allocation3], 0
    %14 = vsyncpa [#allocation5], 0
    %15 = vsyncpa [#allocation8], 0
    loop: start=0, step=1, limit=4
    $region2: #{spectranet_forward.2} parent=1 // loop_pre_header
      _
    $region3: #{spectranet_forward.2} parent=1 // loop_header
      %s17 = sphi 0, %s21
      %p18 = scmp.ge.s32.totalorder %s17, 4
      %s27 = sphi 0, %s29
      %s30 = sphi 0, %s27
      %s31 = sphi 0, %s30
      %s47 = sphi 0, %s31
      %s53 = sphi 0, %s55
      %s56 = sphi 0, %s53
      %s57 = sphi 0, %s56
      %s73 = sphi 0, %s57
      %s79 = sphi 0, %s81
      %s82 = sphi 0, %s79
      %s83 = sphi 0, %s82
      %s99 = sphi 0, %s83
      %s105 = sphi 0, %s107
      %s108 = sphi 0, %s105
      %s109 = sphi 0, %s108
      %s125 = sphi 0, %s109
      %s129 = sphi 0, %s129
      %s131 = sphi 0, %s129
      %s132 = sphi 0, %s131
      %s146 = sphi 0, %s132
      %s150 = sphi 0, %s150
      %s152 = sphi 0, %s150
      %s153 = sphi 0, %s152
      %s167 = sphi 0, %s153
      %s171 = sphi 0, %s171
      %s173 = sphi 0, %s171
      %s174 = sphi 0, %s173
      %s188 = sphi 0, %s174
      %s192 = sphi 0, %s192
      %s194 = sphi 0, %s192
      %s195 = sphi 0, %s194
      %s209 = sphi 0, %s195
      %s215 = sphi 0, %s217
      %s218 = sphi 0, %s215
      %s219 = sphi 0, %s218
      %s235 = sphi 0, %s219
    $region4: #{spectranet_forward.2} parent=1 // loop_header_branch
      %20 = sbr.rel (%p18) target = $region8
    $region5: #{spectranet_forward.2} parent=1 // loop_body
      %s22 = ssub.s32 %s17, 1
      %s23 = ssub.s32 %s17, 2
      %s24 = sadd.s32 %s17, 1
      %s25 = ssub.s32 %s17, %s24
      %p26 = scmp.eq.s32.totalorder %s25, 0
      %s28 = sadd.s32 %s27, 1
      %s29 = scalar_select %p26, %s27, %s28
      %p32 = pneg %p26
      %p33 = scmp.eq.s32.totalorder %s17, 1
      %p34 = por %p32, %p33
      %p35 = scmp.ne.s32.totalorder %s27, %s30
      %p36 = scmp.eq.s32.totalorder %s17, 0
      %p37 = por %p35, %p36
      %p38 = scmp.ne.s32.totalorder %s27, %s30
      %p39 = scmp.eq.s32.totalorder %s22, 1
      %p40 = por %p38, %p39
      %p41 = scmp.ne.s32.totalorder %s30, %s31
      %p42 = scmp.eq.s32.totalorder %s22, 0
      %p43 = por %p41, %p42
      %p44 = scmp.ne.s32.totalorder %s30, %s31
      %p45 = scmp.eq.s32.totalorder %s23, 1
      %p46 = por %p44, %p45
      %p48 = scmp.ne.s32.totalorder %s31, %s47
      %p49 = scmp.eq.s32.totalorder %s23, 0
      %p50 = por %p48, %p49
      %s51 = ssub.s32 %s17, %s24
      %p52 = scmp.eq.s32.totalorder %s51, 0
      %s54 = sadd.s32 %s53, 1
      %s55 = scalar_select %p52, %s53, %s54
      %p58 = pneg %p52
      %p59 = scmp.eq.s32.totalorder %s17, 1
      %p60 = por %p58, %p59
      %p61 = scmp.ne.s32.totalorder %s53, %s56
      %p62 = scmp.eq.s32.totalorder %s17, 0
      %p63 = por %p61, %p62
      %p64 = scmp.ne.s32.totalorder %s53, %s56
      %p65 = scmp.eq.s32.totalorder %s22, 1
      %p66 = por %p64, %p65
      %p67 = scmp.ne.s32.totalorder %s56, %s57
      %p68 = scmp.eq.s32.totalorder %s22, 0
      %p69 = por %p67, %p68
      %p70 = scmp.ne.s32.totalorder %s56, %s57
      %p71 = scmp.eq.s32.totalorder %s23, 1
      %p72 = por %p70, %p71
      %p74 = scmp.ne.s32.totalorder %s57, %s73
      %p75 = scmp.eq.s32.totalorder %s23, 0
      %p76 = por %p74, %p75
      %s77 = ssub.s32 %s17, %s24
      %p78 = scmp.eq.s32.totalorder %s77, 0
      %s80 = sadd.s32 %s79, 1
      %s81 = scalar_select %p78, %s79, %s80
      %p84 = pneg %p78
      %p85 = scmp.eq.s32.totalorder %s17, 1
      %p86 = por %p84, %p85
      %p87 = scmp.ne.s32.totalorder %s79, %s82
      %p88 = scmp.eq.s32.totalorder %s17, 0
      %p89 = por %p87, %p88
      %p90 = scmp.ne.s32.totalorder %s79, %s82
      %p91 = scmp.eq.s32.totalorder %s22, 1
      %p92 = por %p90, %p91
      %p93 = scmp.ne.s32.totalorder %s82, %s83
      %p94 = scmp.eq.s32.totalorder %s22, 0
      %p95 = por %p93, %p94
      %p96 = scmp.ne.s32.totalorder %s82, %s83
      %p97 = scmp.eq.s32.totalorder %s23, 1
      %p98 = por %p96, %p97
      %p100 = scmp.ne.s32.totalorder %s83, %s99
      %p101 = scmp.eq.s32.totalorder %s23, 0
      %p102 = por %p100, %p101
      %s103 = ssub.s32 %s17, %s24
      %p104 = scmp.eq.s32.totalorder %s103, 0
      %s106 = sadd.s32 %s105, 1
      %s107 = scalar_select %p104, %s105, %s106
      %p110 = pneg %p104
      %p111 = scmp.eq.s32.totalorder %s17, 1
      %p112 = por %p110, %p111
      %p113 = scmp.ne.s32.totalorder %s105, %s108
      %p114 = scmp.eq.s32.totalorder %s17, 0
      %p115 = por %p113, %p114
      %p116 = scmp.ne.s32.totalorder %s105, %s108
      %p117 = scmp.eq.s32.totalorder %s22, 1
      %p118 = por %p116, %p117
      %p119 = scmp.ne.s32.totalorder %s108, %s109
      %p120 = scmp.eq.s32.totalorder %s22, 0
      %p121 = por %p119, %p120
      %p122 = scmp.ne.s32.totalorder %s108, %s109
      %p123 = scmp.eq.s32.totalorder %s23, 1
      %p124 = por %p122, %p123
      %p126 = scmp.ne.s32.totalorder %s109, %s125
      %p127 = scmp.eq.s32.totalorder %s23, 0
      %p128 = por %p126, %p127
      %s130 = sadd.s32 %s129, 1
      %p133 = scmp.eq.s32.totalorder %s17, 1
      %p134 = scmp.ne.s32.totalorder %s129, %s131
      %p135 = scmp.eq.s32.totalorder %s17, 0
      %p136 = por %p134, %p135
      %p137 = scmp.ne.s32.totalorder %s129, %s131
      %p138 = scmp.eq.s32.totalorder %s22, 1
      %p139 = por %p137, %p138
      %p140 = scmp.ne.s32.totalorder %s131, %s132
      %p141 = scmp.eq.s32.totalorder %s22, 0
      %p142 = por %p140, %p141
      %p143 = scmp.ne.s32.totalorder %s131, %s132
      %p144 = scmp.eq.s32.totalorder %s23, 1
      %p145 = por %p143, %p144
      %p147 = scmp.ne.s32.totalorder %s132, %s146
      %p148 = scmp.eq.s32.totalorder %s23, 0
      %p149 = por %p147, %p148
      %s151 = sadd.s32 %s150, 1
      %p154 = scmp.eq.s32.totalorder %s17, 1
      %p155 = scmp.ne.s32.totalorder %s150, %s152
      %p156 = scmp.eq.s32.totalorder %s17, 0
      %p157 = por %p155, %p156
      %p158 = scmp.ne.s32.totalorder %s150, %s152
      %p159 = scmp.eq.s32.totalorder %s22, 1
      %p160 = por %p158, %p159
      %p161 = scmp.ne.s32.totalorder %s152, %s153
      %p162 = scmp.eq.s32.totalorder %s22, 0
      %p163 = por %p161, %p162
      %p164 = scmp.ne.s32.totalorder %s152, %s153
      %p165 = scmp.eq.s32.totalorder %s23, 1
      %p166 = por %p164, %p165
      %p168 = scmp.ne.s32.totalorder %s153, %s167
      %p169 = scmp.eq.s32.totalorder %s23, 0
      %p170 = por %p168, %p169
      %s172 = sadd.s32 %s171, 1
      %p175 = scmp.eq.s32.totalorder %s17, 1
      %p176 = scmp.ne.s32.totalorder %s171, %s173
      %p177 = scmp.eq.s32.totalorder %s17, 0
      %p178 = por %p176, %p177
      %p179 = scmp.ne.s32.totalorder %s171, %s173
      %p180 = scmp.eq.s32.totalorder %s22, 1
      %p181 = por %p179, %p180
      %p182 = scmp.ne.s32.totalorder %s173, %s174
      %p183 = scmp.eq.s32.totalorder %s22, 0
      %p184 = por %p182, %p183
      %p185 = scmp.ne.s32.totalorder %s173, %s174
      %p186 = scmp.eq.s32.totalorder %s23, 1
      %p187 = por %p185, %p186
      %p189 = scmp.ne.s32.totalorder %s174, %s188
      %p190 = scmp.eq.s32.totalorder %s23, 0
      %p191 = por %p189, %p190
      %s193 = sadd.s32 %s192, 1
      %p196 = scmp.eq.s32.totalorder %s17, 1
      %p197 = scmp.ne.s32.totalorder %s192, %s194
      %p198 = scmp.eq.s32.totalorder %s17, 0
      %p199 = por %p197, %p198
      %p200 = scmp.ne.s32.totalorder %s192, %s194
      %p201 = scmp.eq.s32.totalorder %s22, 1
      %p202 = por %p200, %p201
      %p203 = scmp.ne.s32.totalorder %s194, %s195
      %p204 = scmp.eq.s32.totalorder %s22, 0
      %p205 = por %p203, %p204
      %p206 = scmp.ne.s32.totalorder %s194, %s195
      %p207 = scmp.eq.s32.totalorder %s23, 1
      %p208 = por %p206, %p207
      %p210 = scmp.ne.s32.totalorder %s195, %s209
      %p211 = scmp.eq.s32.totalorder %s23, 0
      %p212 = por %p210, %p211
      %s213 = ssub.s32 %s17, %s24
      %p214 = scmp.eq.s32.totalorder %s213, 0
      %s216 = sadd.s32 %s215, 1
      %s217 = scalar_select %p214, %s215, %s216
      %p220 = pneg %p214
      %p221 = scmp.eq.s32.totalorder %s17, 1
      %p222 = por %p220, %p221
      %p223 = scmp.ne.s32.totalorder %s215, %s218
      %p224 = scmp.eq.s32.totalorder %s17, 0
      %p225 = por %p223, %p224
      %p226 = scmp.ne.s32.totalorder %s215, %s218
      %p227 = scmp.eq.s32.totalorder %s22, 1
      %p228 = por %p226, %p227
      %p229 = scmp.ne.s32.totalorder %s218, %s219
      %p230 = scmp.eq.s32.totalorder %s22, 0
      %p231 = por %p229, %p230
      %p232 = scmp.ne.s32.totalorder %s218, %s219
      %p233 = scmp.eq.s32.totalorder %s23, 1
      %p234 = por %p232, %p233
      %p236 = scmp.ne.s32.totalorder %s219, %s235
      %p237 = scmp.eq.s32.totalorder %s23, 0
      %p238 = por %p236, %p237
      %p239 = scmp.le.s32.totalorder 1, %s17
      %p240 = scmp.lt.s32.totalorder %s17, 3
      %p241 = pnand %p239, %p240
      %p242 = pneg %p241
      // Predicated region
      $region9: #{spectranet_forward.2} parent=5 // pred_check
        _
      $region10: #{spectranet_forward.2} parent=5 // pred_check_branch
        %244 = sbr.rel (%p241) target = $region12
      $region11: #{spectranet_forward.2} parent=5 // pred_region
        %s245 = ssub.s32 %s17, 1
        // Predicated region
        $region13: #{spectranet_forward.2} parent=11 // pred_check
          %p246 = pneg %p142
        $region14: #{spectranet_forward.2} parent=11 // pred_check_branch
          %248 = sbr.rel (%p246) target = $region16
        $region15: #{spectranet_forward.2} parent=11 // pred_region
          %s250 = ssub.s32 128, 128
          %251 = vsyncadd [#allocation3], %s250
          %s253 = sshll.u32 [#allocation2], 4
          %s254 = int_to_ptr.vmem [resolvable:$true] %s253
          %256 = dma.hbm_to_vmem [thread:$0]  %s4, 128, %s254, [#allocation3]
        $region16: #{spectranet_forward.2} parent=11 // pred_fallthru
          _
        // Predicated region
        $region17: #{spectranet_forward.2} parent=11 // pred_check
          %p257 = pneg %p163
        $region18: #{spectranet_forward.2} parent=11 // pred_check_branch
          %259 = sbr.rel (%p257) target = $region20
        $region19: #{spectranet_forward.2} parent=11 // pred_region
          %s261 = ssub.s32 16, 16
          %262 = vsyncadd [#allocation5], %s261
          %s264 = sshll.u32 [#allocation4], 4
          %s265 = int_to_ptr.vmem [resolvable:$true] %s264
          %267 = dma.hbm_to_vmem [thread:$0]  %s5, 16, %s265, [#allocation5]
        $region20: #{spectranet_forward.2} parent=11 // pred_fallthru
          _
        // Predicated region
        $region21: #{spectranet_forward.2} parent=11 // pred_check
          %p268 = pneg %p184
        $region22: #{spectranet_forward.2} parent=11 // pred_check_branch
          %270 = sbr.rel (%p268) target = $region24
        $region23: #{spectranet_forward.2} parent=11 // pred_region
          %s272 = ssub.s32 2048, 2048
          %273 = vsyncadd [#allocation5], %s272
          %s274 = sshll.u32 [#allocation6], 4
          %s275 = int_to_ptr.vmem [resolvable:$true] %s274
          %280 = dma.hbm_to_vmem [thread:$0]  %s6, 2048, %s275, [#allocation5], 64, 64, 4
        $region24: #{spectranet_forward.2} parent=11 // pred_fallthru
          _
        // Predicated region
        $region25: #{spectranet_forward.2} parent=11 // pred_check
          %p281 = pneg %p205
        $region26: #{spectranet_forward.2} parent=11 // pred_check_branch
          %283 = sbr.rel (%p281) target = $region28
        $region27: #{spectranet_forward.2} parent=11 // pred_region
          %s285 = ssub.s32 16, 16
          %286 = vsyncadd [#allocation8], %s285
          %s288 = sshll.u32 [#allocation7], 4
          %s289 = int_to_ptr.vmem [resolvable:$true] %s288
          %291 = dma.hbm_to_vmem [thread:$0]  %s7, 16, %s289, [#allocation8]
        $region28: #{spectranet_forward.2} parent=11 // pred_fallthru
          _
      $region12: #{spectranet_forward.2} parent=5 // pred_fallthru
        _
      %p292 = scmp.lt.s32.totalorder %s17, 2
      // Predicated region
      $region29: #{spectranet_forward.2} parent=5 // pred_check
        %p293 = pneg %p292
      $region30: #{spectranet_forward.2} parent=5 // pred_check_branch
        %295 = sbr.rel (%p293) target = $region32
      $region31: #{spectranet_forward.2} parent=5 // pred_region
        // Predicated region
        $region33: #{spectranet_forward.2} parent=31 // pred_check
          %p296 = pneg %p37
        $region34: #{spectranet_forward.2} parent=31 // pred_check_branch
          %298 = sbr.rel (%p296) target = $region36
        $region35: #{spectranet_forward.2} parent=31 // pred_region
          %p299 = scmp.lt.s32.totalorder %s17, 1
          %s300 = scalar_select %p299, %s17, 1
          %s301 = smul.addr %s300, 11
          %s302 = smul.addr %s301, 8
          %s303 = scalar_lea.vmem %s0, %s302
        $region36: #{spectranet_forward.2} parent=31 // pred_fallthru
          _
        // Predicated region
        $region37: #{spectranet_forward.2} parent=31 // pred_check
          %p304 = pneg %p63
        $region38: #{spectranet_forward.2} parent=31 // pred_check_branch
          %306 = sbr.rel (%p304) target = $region40
        $region39: #{spectranet_forward.2} parent=31 // pred_region
          %p307 = scmp.lt.s32.totalorder %s17, 1
          %s308 = scalar_select %p307, %s17, 1
          %s309 = smul.addr %s308, 11
          %s310 = smul.addr %s309, 8
          %s311 = scalar_lea.vmem %s1, %s310
        $region40: #{spectranet_forward.2} parent=31 // pred_fallthru
          _
        // Predicated region
        $region41: #{spectranet_forward.2} parent=31 // pred_check
          %p312 = pneg %p89
        $region42: #{spectranet_forward.2} parent=31 // pred_check_branch
          %314 = sbr.rel (%p312) target = $region44
        $region43: #{spectranet_forward.2} parent=31 // pred_region
          %p315 = scmp.lt.s32.totalorder %s17, 1
          %s316 = scalar_select %p315, %s17, 1
          %s317 = smul.addr %s316, 11
          %s318 = smul.addr %s317, 8
          %s319 = scalar_lea.vmem %s2, %s318
        $region44: #{spectranet_forward.2} parent=31 // pred_fallthru
          _
        // Predicated region
        $region45: #{spectranet_forward.2} parent=31 // pred_check
          %p320 = pneg %p115
        $region46: #{spectranet_forward.2} parent=31 // pred_check_branch
          %322 = sbr.rel (%p320) target = $region48
        $region47: #{spectranet_forward.2} parent=31 // pred_region
          %p323 = scmp.lt.s32.totalorder %s17, 1
          %s324 = scalar_select %p323, %s17, 1
          %s325 = smul.addr %s324, 11
          %s326 = smul.addr %s325, 8
          %s327 = scalar_lea.vmem %s3, %s326
        $region48: #{spectranet_forward.2} parent=31 // pred_fallthru
          _
      $region32: #{spectranet_forward.2} parent=5 // pred_fallthru
        _
      %p328 = scmp.le.s32.totalorder 1, %s17
      %p329 = scmp.lt.s32.totalorder %s17, 3
      %p330 = pnand %p328, %p329
      %p331 = pneg %p330
      // Predicated region
      $region49: #{spectranet_forward.2} parent=5 // pred_check
        _
      $region50: #{spectranet_forward.2} parent=5 // pred_check_branch
        %333 = sbr.rel (%p330) target = $region52
      $region51: #{spectranet_forward.2} parent=5 // pred_region
        %s334 = ssub.s32 %s17, 1
        // Predicated region
        $region53: #{spectranet_forward.2} parent=51 // pred_check
          %p335 = pneg %p142
        $region54: #{spectranet_forward.2} parent=51 // pred_check_branch
          %337 = sbr.rel (%p335) target = $region56
        $region55: #{spectranet_forward.2} parent=51 // pred_region
          %338 = dma.done [#allocation3], 128
        $region56: #{spectranet_forward.2} parent=51 // pred_fallthru
          _
        // Predicated region
        $region57: #{spectranet_forward.2} parent=51 // pred_check
          %p339 = pneg %p163
        $region58: #{spectranet_forward.2} parent=51 // pred_check_branch
          %341 = sbr.rel (%p339) target = $region60
        $region59: #{spectranet_forward.2} parent=51 // pred_region
          %342 = dma.done [#allocation5], 16
        $region60: #{spectranet_forward.2} parent=51 // pred_fallthru
          _
        // Predicated region
        $region61: #{spectranet_forward.2} parent=51 // pred_check
          %p343 = pneg %p184
        $region62: #{spectranet_forward.2} parent=51 // pred_check_branch
          %345 = sbr.rel (%p343) target = $region64
        $region63: #{spectranet_forward.2} parent=51 // pred_region
          %346 = dma.done [#allocation5], 2048
        $region64: #{spectranet_forward.2} parent=51 // pred_fallthru
          _
        // Predicated region
        $region65: #{spectranet_forward.2} parent=51 // pred_check
          %p347 = pneg %p205
        $region66: #{spectranet_forward.2} parent=51 // pred_check_branch
          %349 = sbr.rel (%p347) target = $region68
        $region67: #{spectranet_forward.2} parent=51 // pred_region
          %350 = dma.done [#allocation8], 16
        $region68: #{spectranet_forward.2} parent=51 // pred_fallthru
          _
        %p351 = scmp.lt.s32.totalorder %s22, 1
        %s352 = scalar_select %p351, %s22, 1
        %s353 = smul.addr %s352, 11
        %s354 = smul.addr %s353, 8
        %s355 = scalar_lea.vmem %s0, %s354
        %p356 = pneg %p43
        %p357 = pneg %p40
        %p358 = scmp.lt.s32.totalorder %s22, 1
        %s359 = scalar_select %p358, %s22, 1
        %s360 = smul.addr %s359, 11
        %s361 = smul.addr %s360, 8
        %s362 = scalar_lea.vmem %s1, %s361
        %p363 = pneg %p69
        %p364 = pneg %p66
        %p365 = scmp.lt.s32.totalorder %s22, 1
        %s366 = scalar_select %p365, %s22, 1
        %s367 = smul.addr %s366, 11
        %s368 = smul.addr %s367, 8
        %s369 = scalar_lea.vmem %s2, %s368
        %p370 = pneg %p95
        %p371 = pneg %p92
        %p372 = scmp.lt.s32.totalorder %s22, 1
        %s373 = scalar_select %p372, %s22, 1
        %s374 = smul.addr %s373, 11
        %s375 = smul.addr %s374, 8
        %s376 = scalar_lea.vmem %s3, %s375
        %p377 = pneg %p121
        %p378 = pneg %p118
        %p379 = pneg %p142
        %p380 = pneg %p139
        %p381 = pneg %p163
        %p382 = pneg %p160
        %p383 = pneg %p184
        %p384 = pneg %p181
        %p385 = pneg %p205
        %p386 = pneg %p202
        %p387 = pneg %p231
        %p388 = pneg %p228
        %p389 = scmp.lt.s32.totalorder %s22, 1
        %s390 = scalar_select %p389, %s22, 1
        %s391 = smul.addr %s390, 10
        %s392 = smul.addr %s391, 8
        %s393 = scalar_lea.vmem %s8, %s392
        %p394 = scmp.lt.s32.totalorder %s22, 1
        %s395 = scalar_select %p394, %s22, 1
        %s396 = smul.addr %s395, 11
        %s397 = smul.addr %s396, 8
        %s398 = scalar_lea.vmem %s0, %s397
        %p399 = scmp.lt.s32.totalorder %s22, 1
        %s400 = scalar_select %p399, %s22, 1
        %s401 = smul.addr %s400, 11
        %s402 = smul.addr %s401, 8
        %s403 = scalar_lea.vmem %s1, %s402
        %p404 = scmp.lt.s32.totalorder %s22, 1
        %s405 = scalar_select %p404, %s22, 1
        %s406 = smul.addr %s405, 11
        %s407 = smul.addr %s406, 8
        %s408 = scalar_lea.vmem %s2, %s407
        %p409 = scmp.lt.s32.totalorder %s22, 1
        %s410 = scalar_select %p409, %s22, 1
        %s411 = smul.addr %s410, 11
        %s412 = smul.addr %s411, 8
        %s413 = scalar_lea.vmem %s3, %s412
        %p414 = scmp.lt.s32.totalorder %s22, 1
        %s415 = scalar_select %p414, %s22, 1
        %s416 = smul.addr %s415, 10
        %s417 = smul.addr %s416, 8
        %s418 = scalar_lea.vmem %s8, %s417
        %v420 = vld [vmem:[#allocation2] sm:$0xff]
        %v421 = vld [vmem:[#allocation4] sm:$0x1]
        %v422 = vld [vmem:[#allocation6] sm:$0xf]
        %v423 = vld [vmem:[#allocation6 + $0x4] sm:$0xf]
        %v424 = vld [vmem:[#allocation6 + $0x8] sm:$0xf]
        %v425 = vld [vmem:[#allocation6 + $0xc] sm:$0xf]
        %v426 = vld [vmem:[#allocation6 + $0x10] sm:$0xf]
        %v427 = vld [vmem:[#allocation6 + $0x14] sm:$0xf]
        %v428 = vld [vmem:[#allocation6 + $0x18] sm:$0xf]
        %v429 = vld [vmem:[#allocation6 + $0x1c] sm:$0xf]
        %v430 = vld [vmem:[#allocation6 + $0x20] sm:$0xf]
        %v431 = vld [vmem:[#allocation6 + $0x24] sm:$0xf]
        %v432 = vld [vmem:[#allocation6 + $0x28] sm:$0xf]
        %v433 = vld [vmem:[#allocation6 + $0x2c] sm:$0xf]
        %v434 = vld [vmem:[#allocation6 + $0x30] sm:$0xf]
        %v435 = vld [vmem:[#allocation6 + $0x34] sm:$0xf]
        %v436 = vld [vmem:[#allocation6 + $0x38] sm:$0xf]
        %v437 = vld [vmem:[#allocation6 + $0x3c] sm:$0xf]
        %v438 = vld [vmem:[#allocation6 + $0x40] sm:$0xf]
        %v439 = vld [vmem:[#allocation6 + $0x44] sm:$0xf]
        %v440 = vld [vmem:[#allocation6 + $0x48] sm:$0xf]
        %v441 = vld [vmem:[#allocation6 + $0x4c] sm:$0xf]
        %v442 = vld [vmem:[#allocation6 + $0x50] sm:$0xf]
        %v443 = vld [vmem:[#allocation6 + $0x54] sm:$0xf]
        %v444 = vld [vmem:[#allocation6 + $0x58] sm:$0xf]
        %v445 = vld [vmem:[#allocation6 + $0x5c] sm:$0xf]
        %v446 = vld [vmem:[#allocation6 + $0x60] sm:$0xf]
        %v447 = vld [vmem:[#allocation6 + $0x64] sm:$0xf]
        %v448 = vld [vmem:[#allocation6 + $0x68] sm:$0xf]
        %v449 = vld [vmem:[#allocation6 + $0x6c] sm:$0xf]
        %v450 = vld [vmem:[#allocation6 + $0x70] sm:$0xf]
        %v451 = vld [vmem:[#allocation6 + $0x74] sm:$0xf]
        %v452 = vld [vmem:[#allocation6 + $0x78] sm:$0xf]
        %v453 = vld [vmem:[#allocation6 + $0x7c] sm:$0xf]
        %v454 = vld [vmem:[#allocation7] sm:$0x1]
        %v455 = vld [vmem:[%s398] sm:$0xff]
        %v456 = vld [vmem:[%s398 + $0x8] sm:$0xff]
        %v457 = vld [vmem:[%s398 + $0x10] sm:$0xff]
        %v458 = vld [vmem:[%s398 + $0x18] sm:$0xff]
        %v459 = vld [vmem:[%s398 + $0x20] sm:$0xff]
        %v460 = vld [vmem:[%s398 + $0x28] sm:$0xff]
        %v461 = vld [vmem:[%s398 + $0x30] sm:$0xff]
        %v462 = vld [vmem:[%s398 + $0x38] sm:$0xff]
        %v463 = vld [vmem:[%s398 + $0x40] sm:$0xff]
        %v464 = vld [vmem:[%s398 + $0x48] sm:$0xff]
        %v465 = vld [vmem:[%s398 + $0x50] sm:$0x7]
        %v466 = vld [vmem:[%s403] sm:$0xff]
        %v467 = vld [vmem:[%s403 + $0x8] sm:$0xff]
        %v468 = vld [vmem:[%s403 + $0x10] sm:$0xff]
        %v469 = vld [vmem:[%s403 + $0x18] sm:$0xff]
        %v470 = vld [vmem:[%s403 + $0x20] sm:$0xff]
        %v471 = vld [vmem:[%s403 + $0x28] sm:$0xff]
        %v472 = vld [vmem:[%s403 + $0x30] sm:$0xff]
        %v473 = vld [vmem:[%s403 + $0x38] sm:$0xff]
        %v474 = vld [vmem:[%s403 + $0x40] sm:$0xff]
        %v475 = vld [vmem:[%s403 + $0x48] sm:$0xff]
        %v476 = vld [vmem:[%s403 + $0x50] sm:$0x7]
        %v477 = vld [vmem:[%s408] sm:$0xff]
        %v478 = vld [vmem:[%s408 + $0x8] sm:$0xff]
        %v479 = vld [vmem:[%s408 + $0x10] sm:$0xff]
        %v480 = vld [vmem:[%s408 + $0x18] sm:$0xff]
        %v481 = vld [vmem:[%s408 + $0x20] sm:$0xff]
        %v482 = vld [vmem:[%s408 + $0x28] sm:$0xff]
        %v483 = vld [vmem:[%s408 + $0x30] sm:$0xff]
        %v484 = vld [vmem:[%s408 + $0x38] sm:$0xff]
        %v485 = vld [vmem:[%s408 + $0x40] sm:$0xff]
        %v486 = vld [vmem:[%s408 + $0x48] sm:$0xff]
        %v487 = vld [vmem:[%s408 + $0x50] sm:$0x7]
        %v488 = vld [vmem:[%s413] sm:$0xff]
        %v489 = vld [vmem:[%s413 + $0x8] sm:$0xff]
        %v490 = vld [vmem:[%s413 + $0x10] sm:$0xff]
        %v491 = vld [vmem:[%s413 + $0x18] sm:$0xff]
        %v492 = vld [vmem:[%s413 + $0x20] sm:$0xff]
        %v493 = vld [vmem:[%s413 + $0x28] sm:$0xff]
        %v494 = vld [vmem:[%s413 + $0x30] sm:$0xff]
        %v495 = vld [vmem:[%s413 + $0x38] sm:$0xff]
        %v496 = vld [vmem:[%s413 + $0x40] sm:$0xff]
        %v497 = vld [vmem:[%s413 + $0x48] sm:$0xff]
        %v498 = vld [vmem:[%s413 + $0x50] sm:$0x3]
        %500 = vset.pattern.permute.xlu0 0
        %501 = vperm.xlu0 %500, %v455
        %v502 = vpop.permute.xlu0 %501
        %505 = vset.pattern.permute.xlu0 0
        %506 = vperm.xlu0 %505, %v456
        %v507 = vpop.permute.xlu0 %506
        %510 = vset.pattern.permute.xlu0 0
        %511 = vperm.xlu0 %510, %v457
        %v512 = vpop.permute.xlu0 %511
        %515 = vset.pattern.permute.xlu0 0
        %516 = vperm.xlu0 %515, %v458
        %v517 = vpop.permute.xlu0 %516
        %520 = vset.pattern.permute.xlu0 0
        %521 = vperm.xlu0 %520, %v459
        %v522 = vpop.permute.xlu0 %521
        %525 = vset.pattern.permute.xlu0 0
        %526 = vperm.xlu0 %525, %v460
        %v527 = vpop.permute.xlu0 %526
        %530 = vset.pattern.permute.xlu0 0
        %531 = vperm.xlu0 %530, %v461
        %v532 = vpop.permute.xlu0 %531
        %535 = vset.pattern.permute.xlu0 0
        %536 = vperm.xlu0 %535, %v462
        %v537 = vpop.permute.xlu0 %536
        %540 = vset.pattern.permute.xlu0 0
        %541 = vperm.xlu0 %540, %v463
        %v542 = vpop.permute.xlu0 %541
        %545 = vset.pattern.permute.xlu0 0
        %546 = vperm.xlu0 %545, %v464
        %v547 = vpop.permute.xlu0 %546
        %550 = vset.pattern.permute.xlu0 0
        %551 = vperm.xlu0 %550, %v465
        %v552 = vpop.permute.xlu0 %551
        %v554 = vlaneseq
        %v555 = vshrl.u32 %v554, 7
        %v556 = vsub.s32 0, %v555
        %v557 = vrot.slane %v420, %v556
        %v558 = vmul.f32 %v502, %v557
        %v559 = vmul.f32 %v507, %v557
        %v560 = vmul.f32 %v512, %v557
        %v561 = vmul.f32 %v517, %v557
        %v562 = vmul.f32 %v522, %v557
        %v563 = vmul.f32 %v527, %v557
        %v564 = vmul.f32 %v532, %v557
        %v565 = vmul.f32 %v537, %v557
        %v566 = vmul.f32 %v542, %v557
        %v567 = vmul.f32 %v547, %v557
        %v568 = vmul.f32 %v552, %v557
        %v569 = vadd.f32 %v558, 0.0
        %v570 = vadd.f32 %v559, 0.0
        %v571 = vadd.f32 %v560, 0.0
        %v572 = vadd.f32 %v561, 0.0
        %v573 = vadd.f32 %v562, 0.0
        %v574 = vadd.f32 %v563, 0.0
        %v575 = vadd.f32 %v564, 0.0
        %v576 = vadd.f32 %v565, 0.0
        %v577 = vadd.f32 %v566, 0.0
        %v578 = vadd.f32 %v567, 0.0
        %v579 = vadd.f32 %v568, 0.0
        %581 = vset.pattern.permute.xlu0 0
        %582 = vperm.xlu0 %581, %v466
        %v583 = vpop.permute.xlu0 %582
        %586 = vset.pattern.permute.xlu0 0
        %587 = vperm.xlu0 %586, %v467
        %v588 = vpop.permute.xlu0 %587
        %591 = vset.pattern.permute.xlu0 0
        %592 = vperm.xlu0 %591, %v468
        %v593 = vpop.permute.xlu0 %592
        %596 = vset.pattern.permute.xlu0 0
        %597 = vperm.xlu0 %596, %v469
        %v598 = vpop.permute.xlu0 %597
        %601 = vset.pattern.permute.xlu0 0
        %602 = vperm.xlu0 %601, %v470
        %v603 = vpop.permute.xlu0 %602
        %606 = vset.pattern.permute.xlu0 0
        %607 = vperm.xlu0 %606, %v471
        %v608 = vpop.permute.xlu0 %607
        %611 = vset.pattern.permute.xlu0 0
        %612 = vperm.xlu0 %611, %v472
        %v613 = vpop.permute.xlu0 %612
        %616 = vset.pattern.permute.xlu0 0
        %617 = vperm.xlu0 %616, %v473
        %v618 = vpop.permute.xlu0 %617
        %621 = vset.pattern.permute.xlu0 0
        %622 = vperm.xlu0 %621, %v474
        %v623 = vpop.permute.xlu0 %622
        %626 = vset.pattern.permute.xlu0 0
        %627 = vperm.xlu0 %626, %v475
        %v628 = vpop.permute.xlu0 %627
        %631 = vset.pattern.permute.xlu0 0
        %632 = vperm.xlu0 %631, %v476
        %v633 = vpop.permute.xlu0 %632
        %v635 = vlaneseq
        %v636 = vshrl.u32 %v635, 7
        %v637 = vsub.s32 1, %v636
        %v638 = vrot.slane %v420, %v637
        %v639 = vmul.f32 %v583, %v638
        %v640 = vmul.f32 %v588, %v638
        %v641 = vmul.f32 %v593, %v638
        %v642 = vmul.f32 %v598, %v638
        %v643 = vmul.f32 %v603, %v638
        %v644 = vmul.f32 %v608, %v638
        %v645 = vmul.f32 %v613, %v638
        %v646 = vmul.f32 %v618, %v638
        %v647 = vmul.f32 %v623, %v638
        %v648 = vmul.f32 %v628, %v638
        %v649 = vmul.f32 %v633, %v638
        %v650 = vadd.f32 %v569, %v639
        %v651 = vadd.f32 %v570, %v640
        %v652 = vadd.f32 %v571, %v641
        %v653 = vadd.f32 %v572, %v642
        %v654 = vadd.f32 %v573, %v643
        %v655 = vadd.f32 %v574, %v644
        %v656 = vadd.f32 %v575, %v645
        %v657 = vadd.f32 %v576, %v646
        %v658 = vadd.f32 %v577, %v647
        %v659 = vadd.f32 %v578, %v648
        %v660 = vadd.f32 %v579, %v649
        %662 = vset.pattern.permute.xlu0 0
        %663 = vperm.xlu0 %662, %v477
        %v664 = vpop.permute.xlu0 %663
        %667 = vset.pattern.permute.xlu0 0
        %668 = vperm.xlu0 %667, %v478
        %v669 = vpop.permute.xlu0 %668
        %672 = vset.pattern.permute.xlu0 0
        %673 = vperm.xlu0 %672, %v479
        %v674 = vpop.permute.xlu0 %673
        %677 = vset.pattern.permute.xlu0 0
        %678 = vperm.xlu0 %677, %v480
        %v679 = vpop.permute.xlu0 %678
        %682 = vset.pattern.permute.xlu0 0
        %683 = vperm.xlu0 %682, %v481
        %v684 = vpop.permute.xlu0 %683
        %687 = vset.pattern.permute.xlu0 0
        %688 = vperm.xlu0 %687, %v482
        %v689 = vpop.permute.xlu0 %688
        %692 = vset.pattern.permute.xlu0 0
        %693 = vperm.xlu0 %692, %v483
        %v694 = vpop.permute.xlu0 %693
        %697 = vset.pattern.permute.xlu0 0
        %698 = vperm.xlu0 %697, %v484
        %v699 = vpop.permute.xlu0 %698
        %702 = vset.pattern.permute.xlu0 0
        %703 = vperm.xlu0 %702, %v485
        %v704 = vpop.permute.xlu0 %703
        %707 = vset.pattern.permute.xlu0 0
        %708 = vperm.xlu0 %707, %v486
        %v709 = vpop.permute.xlu0 %708
        %712 = vset.pattern.permute.xlu0 0
        %713 = vperm.xlu0 %712, %v487
        %v714 = vpop.permute.xlu0 %713
        %v716 = vlaneseq
        %v717 = vshrl.u32 %v716, 7
        %v718 = vsub.s32 2, %v717
        %v719 = vrot.slane %v420, %v718
        %v720 = vmul.f32 %v664, %v719
        %v721 = vmul.f32 %v669, %v719
        %v722 = vmul.f32 %v674, %v719
        %v723 = vmul.f32 %v679, %v719
        %v724 = vmul.f32 %v684, %v719
        %v725 = vmul.f32 %v689, %v719
        %v726 = vmul.f32 %v694, %v719
        %v727 = vmul.f32 %v699, %v719
        %v728 = vmul.f32 %v704, %v719
        %v729 = vmul.f32 %v709, %v719
        %v730 = vmul.f32 %v714, %v719
        %v731 = vadd.f32 %v650, %v720
        %v732 = vadd.f32 %v651, %v721
        %v733 = vadd.f32 %v652, %v722
        %v734 = vadd.f32 %v653, %v723
        %v735 = vadd.f32 %v654, %v724
        %v736 = vadd.f32 %v655, %v725
        %v737 = vadd.f32 %v656, %v726
        %v738 = vadd.f32 %v657, %v727
        %v739 = vadd.f32 %v658, %v728
        %v740 = vadd.f32 %v659, %v729
        %v741 = vadd.f32 %v660, %v730
        %743 = vset.pattern.permute.xlu0 0
        %744 = vperm.xlu0 %743, %v488
        %v745 = vpop.permute.xlu0 %744
        %748 = vset.pattern.permute.xlu0 0
        %749 = vperm.xlu0 %748, %v489
        %v750 = vpop.permute.xlu0 %749
        %753 = vset.pattern.permute.xlu0 0
        %754 = vperm.xlu0 %753, %v490
        %v755 = vpop.permute.xlu0 %754
        %758 = vset.pattern.permute.xlu0 0
        %759 = vperm.xlu0 %758, %v491
        %v760 = vpop.permute.xlu0 %759
        %763 = vset.pattern.permute.xlu0 0
        %764 = vperm.xlu0 %763, %v492
        %v765 = vpop.permute.xlu0 %764
        %768 = vset.pattern.permute.xlu0 0
        %769 = vperm.xlu0 %768, %v493
        %v770 = vpop.permute.xlu0 %769
        %773 = vset.pattern.permute.xlu0 0
        %774 = vperm.xlu0 %773, %v494
        %v775 = vpop.permute.xlu0 %774
        %778 = vset.pattern.permute.xlu0 0
        %779 = vperm.xlu0 %778, %v495
        %v780 = vpop.permute.xlu0 %779
        %783 = vset.pattern.permute.xlu0 0
        %784 = vperm.xlu0 %783, %v496
        %v785 = vpop.permute.xlu0 %784
        %788 = vset.pattern.permute.xlu0 0
        %789 = vperm.xlu0 %788, %v497
        %v790 = vpop.permute.xlu0 %789
        %793 = vset.pattern.permute.xlu0 0
        %794 = vperm.xlu0 %793, %v498
        %v795 = vpop.permute.xlu0 %794
        %v797 = vlaneseq
        %v798 = vshrl.u32 %v797, 7
        %v799 = vsub.s32 3, %v798
        %v800 = vrot.slane %v420, %v799
        %v801 = vmul.f32 %v745, %v800
        %v802 = vmul.f32 %v750, %v800
        %v803 = vmul.f32 %v755, %v800
        %v804 = vmul.f32 %v760, %v800
        %v805 = vmul.f32 %v765, %v800
        %v806 = vmul.f32 %v770, %v800
        %v807 = vmul.f32 %v775, %v800
        %v808 = vmul.f32 %v780, %v800
        %v809 = vmul.f32 %v785, %v800
        %v810 = vmul.f32 %v790, %v800
        %v811 = vmul.f32 %v795, %v800
        %v812 = vadd.f32 %v731, %v801
        %v813 = vadd.f32 %v732, %v802
        %v814 = vadd.f32 %v733, %v803
        %v815 = vadd.f32 %v734, %v804
        %v816 = vadd.f32 %v735, %v805
        %v817 = vadd.f32 %v736, %v806
        %v818 = vadd.f32 %v737, %v807
        %v819 = vadd.f32 %v738, %v808
        %v820 = vadd.f32 %v739, %v809
        %v821 = vadd.f32 %v740, %v810
        %v822 = vadd.f32 %v741, %v811
        %v823 = vlaneseq
        %v824 = vshrl.u32 %v823, 7
        %v825 = vsub.s32 4, %v824
        %v826 = vrot.slane %v420, %v825
        %v827 = vmul.f32 %v502, %v826
        %v828 = vmul.f32 %v507, %v826
        %v829 = vmul.f32 %v512, %v826
        %v830 = vmul.f32 %v517, %v826
        %v831 = vmul.f32 %v522, %v826
        %v832 = vmul.f32 %v527, %v826
        %v833 = vmul.f32 %v532, %v826
        %v834 = vmul.f32 %v537, %v826
        %v835 = vmul.f32 %v542, %v826
        %v836 = vmul.f32 %v547, %v826
        %v837 = vmul.f32 %v552, %v826
        %vm849 = vcmask 1046528
        %v850 = vrot.slane %v827, 1
        %v851 = vrot.slane %v828, 1
        %v852 = vsel %vm849, %v850, %v851
        %v853 = vrot.slane %v829, 1
        %v854 = vsel %vm849, %v851, %v853
        %v855 = vrot.slane %v830, 1
        %v856 = vsel %vm849, %v853, %v855
        %v857 = vrot.slane %v831, 1
        %v858 = vsel %vm849, %v855, %v857
        %v859 = vrot.slane %v832, 1
        %v860 = vsel %vm849, %v857, %v859
        %v861 = vrot.slane %v833, 1
        %v862 = vsel %vm849, %v859, %v861
        %v863 = vrot.slane %v834, 1
        %v864 = vsel %vm849, %v861, %v863
        %v865 = vrot.slane %v835, 1
        %v866 = vsel %vm849, %v863, %v865
        %v867 = vrot.slane %v836, 1
        %v868 = vsel %vm849, %v865, %v867
        %v869 = vrot.slane %v837, 1
        %v870 = vsel %vm849, %v867, %v869
        %v882 = vadd.f32 %v812, %v852
        %v883 = vadd.f32 %v813, %v854
        %v884 = vadd.f32 %v814, %v856
        %v885 = vadd.f32 %v815, %v858
        %v886 = vadd.f32 %v816, %v860
        %v887 = vadd.f32 %v817, %v862
        %v888 = vadd.f32 %v818, %v864
        %v889 = vadd.f32 %v819, %v866
        %v890 = vadd.f32 %v820, %v868
        %v891 = vadd.f32 %v821, %v870
        %v892 = vadd.f32 %v822, %v869
        %v893 = vlaneseq
        %v894 = vshrl.u32 %v893, 7
        %v895 = vsub.s32 5, %v894
        %v896 = vrot.slane %v420, %v895
        %v897 = vmul.f32 %v583, %v896
        %v898 = vmul.f32 %v588, %v896
        %v899 = vmul.f32 %v593, %v896
        %v900 = vmul.f32 %v598, %v896
        %v901 = vmul.f32 %v603, %v896
        %v902 = vmul.f32 %v608, %v896
        %v903 = vmul.f32 %v613, %v896
        %v904 = vmul.f32 %v618, %v896
        %v905 = vmul.f32 %v623, %v896
        %v906 = vmul.f32 %v628, %v896
        %v907 = vmul.f32 %v633, %v896
        %v919 = vrot.slane %v897, 1
        %v920 = vrot.slane %v898, 1
        %v921 = vsel %vm849, %v919, %v920
        %v922 = vrot.slane %v899, 1
        %v923 = vsel %vm849, %v920, %v922
        %v924 = vrot.slane %v900, 1
        %v925 = vsel %vm849, %v922, %v924
        %v926 = vrot.slane %v901, 1
        %v927 = vsel %vm849, %v924, %v926
        %v928 = vrot.slane %v902, 1
        %v929 = vsel %vm849, %v926, %v928
        %v930 = vrot.slane %v903, 1
        %v931 = vsel %vm849, %v928, %v930
        %v932 = vrot.slane %v904, 1
        %v933 = vsel %vm849, %v930, %v932
        %v934 = vrot.slane %v905, 1
        %v935 = vsel %vm849, %v932, %v934
        %v936 = vrot.slane %v906, 1
        %v937 = vsel %vm849, %v934, %v936
        %v938 = vrot.slane %v907, 1
        %v939 = vsel %vm849, %v936, %v938
        %v951 = vadd.f32 %v882, %v921
        %v952 = vadd.f32 %v883, %v923
        %v953 = vadd.f32 %v884, %v925
        %v954 = vadd.f32 %v885, %v927
        %v955 = vadd.f32 %v886, %v929
        %v956 = vadd.f32 %v887, %v931
        %v957 = vadd.f32 %v888, %v933
        %v958 = vadd.f32 %v889, %v935
        %v959 = vadd.f32 %v890, %v937
        %v960 = vadd.f32 %v891, %v939
        %v961 = vadd.f32 %v892, %v938
        %v962 = vlaneseq
        %v963 = vshrl.u32 %v962, 7
        %v964 = vsub.s32 6, %v963
        %v965 = vrot.slane %v420, %v964
        %v966 = vmul.f32 %v664, %v965
        %v967 = vmul.f32 %v669, %v965
        %v968 = vmul.f32 %v674, %v965
        %v969 = vmul.f32 %v679, %v965
        %v970 = vmul.f32 %v684, %v965
        %v971 = vmul.f32 %v689, %v965
        %v972 = vmul.f32 %v694, %v965
        %v973 = vmul.f32 %v699, %v965
        %v974 = vmul.f32 %v704, %v965
        %v975 = vmul.f32 %v709, %v965
        %v976 = vmul.f32 %v714, %v965
        %v988 = vrot.slane %v966, 1
        %v989 = vrot.slane %v967, 1
        %v990 = vsel %vm849, %v988, %v989
        %v991 = vrot.slane %v968, 1
        %v992 = vsel %vm849, %v989, %v991
        %v993 = vrot.slane %v969, 1
        %v994 = vsel %vm849, %v991, %v993
        %v995 = vrot.slane %v970, 1
        %v996 = vsel %vm849, %v993, %v995
        %v997 = vrot.slane %v971, 1
        %v998 = vsel %vm849, %v995, %v997
        %v999 = vrot.slane %v972, 1
        %v1000 = vsel %vm849, %v997, %v999
        %v1001 = vrot.slane %v973, 1
        %v1002 = vsel %vm849, %v999, %v1001
        %v1003 = vrot.slane %v974, 1
        %v1004 = vsel %vm849, %v1001, %v1003
        %v1005 = vrot.slane %v975, 1
        %v1006 = vsel %vm849, %v1003, %v1005
        %v1007 = vrot.slane %v976, 1
        %v1008 = vsel %vm849, %v1005, %v1007
        %v1020 = vadd.f32 %v951, %v990
        %v1021 = vadd.f32 %v952, %v992
        %v1022 = vadd.f32 %v953, %v994
        %v1023 = vadd.f32 %v954, %v996
        %v1024 = vadd.f32 %v955, %v998
        %v1025 = vadd.f32 %v956, %v1000
        %v1026 = vadd.f32 %v957, %v1002
        %v1027 = vadd.f32 %v958, %v1004
        %v1028 = vadd.f32 %v959, %v1006
        %v1029 = vadd.f32 %v960, %v1008
        %v1030 = vadd.f32 %v961, %v1007
        %v1031 = vlaneseq
        %v1032 = vshrl.u32 %v1031, 7
        %v1033 = vsub.s32 7, %v1032
        %v1034 = vrot.slane %v420, %v1033
        %v1035 = vmul.f32 %v745, %v1034
        %v1036 = vmul.f32 %v750, %v1034
        %v1037 = vmul.f32 %v755, %v1034
        %v1038 = vmul.f32 %v760, %v1034
        %v1039 = vmul.f32 %v765, %v1034
        %v1040 = vmul.f32 %v770, %v1034
        %v1041 = vmul.f32 %v775, %v1034
        %v1042 = vmul.f32 %v780, %v1034
        %v1043 = vmul.f32 %v785, %v1034
        %v1044 = vmul.f32 %v790, %v1034
        %v1045 = vmul.f32 %v795, %v1034
        %v1057 = vrot.slane %v1035, 1
        %v1058 = vrot.slane %v1036, 1
        %v1059 = vsel %vm849, %v1057, %v1058
        %v1060 = vrot.slane %v1037, 1
        %v1061 = vsel %vm849, %v1058, %v1060
        %v1062 = vrot.slane %v1038, 1
        %v1063 = vsel %vm849, %v1060, %v1062
        %v1064 = vrot.slane %v1039, 1
        %v1065 = vsel %vm849, %v1062, %v1064
        %v1066 = vrot.slane %v1040, 1
        %v1067 = vsel %vm849, %v1064, %v1066
        %v1068 = vrot.slane %v1041, 1
        %v1069 = vsel %vm849, %v1066, %v1068
        %v1070 = vrot.slane %v1042, 1
        %v1071 = vsel %vm849, %v1068, %v1070
        %v1072 = vrot.slane %v1043, 1
        %v1073 = vsel %vm849, %v1070, %v1072
        %v1074 = vrot.slane %v1044, 1
        %v1075 = vsel %vm849, %v1072, %v1074
        %v1076 = vrot.slane %v1045, 1
        %v1077 = vsel %vm849, %v1074, %v1076
        %v1089 = vadd.f32 %v1020, %v1059
        %v1090 = vadd.f32 %v1021, %v1061
        %v1091 = vadd.f32 %v1022, %v1063
        %v1092 = vadd.f32 %v1023, %v1065
        %v1093 = vadd.f32 %v1024, %v1067
        %v1094 = vadd.f32 %v1025, %v1069
        %v1095 = vadd.f32 %v1026, %v1071
        %v1096 = vadd.f32 %v1027, %v1073
        %v1097 = vadd.f32 %v1028, %v1075
        %v1098 = vadd.f32 %v1029, %v1077
        %v1099 = vadd.f32 %v1030, %v1076
        %v1101 = vlaneseq
        %v1102 = vshrl.u32 %v1101, 7
        %v1103 = vsub.s32 0, %v1102
        %v1104 = vrot.slane %v421, %v1103
        %v1106 = vadd.f32 %v1089, %v1104
        %v1107 = vadd.f32 %v1090, %v1104
        %v1108 = vadd.f32 %v1091, %v1104
        %v1109 = vadd.f32 %v1092, %v1104
        %v1110 = vadd.f32 %v1093, %v1104
        %v1111 = vadd.f32 %v1094, %v1104
        %v1112 = vadd.f32 %v1095, %v1104
        %v1113 = vadd.f32 %v1096, %v1104
        %v1114 = vadd.f32 %v1097, %v1104
        %v1115 = vadd.f32 %v1098, %v1104
        %v1116 = vadd.f32 %v1099, %v1104
        %vm1117 = vcmp.gt.f32.partialorder %v1106, 0.0
        %vm1118 = vcmp.gt.f32.partialorder %v1107, 0.0
        %vm1119 = vcmp.gt.f32.partialorder %v1108, 0.0
        %vm1120 = vcmp.gt.f32.partialorder %v1109, 0.0
        %vm1121 = vcmp.gt.f32.partialorder %v1110, 0.0
        %vm1122 = vcmp.gt.f32.partialorder %v1111, 0.0
        %vm1123 = vcmp.gt.f32.partialorder %v1112, 0.0
        %vm1124 = vcmp.gt.f32.partialorder %v1113, 0.0
        %vm1125 = vcmp.gt.f32.partialorder %v1114, 0.0
        %vm1126 = vcmp.gt.f32.partialorder %v1115, 0.0
        %vm1127 = vcmp.gt.f32.partialorder %v1116, 0.0
        %v1128 = vmin.f32 %v1106, 0.0
        %v1129 = vmin.f32 %v1107, 0.0
        %v1130 = vmin.f32 %v1108, 0.0
        %v1131 = vmin.f32 %v1109, 0.0
        %v1132 = vmin.f32 %v1110, 0.0
        %v1133 = vmin.f32 %v1111, 0.0
        %v1134 = vmin.f32 %v1112, 0.0
        %v1135 = vmin.f32 %v1113, 0.0
        %v1136 = vmin.f32 %v1114, 0.0
        %v1137 = vmin.f32 %v1115, 0.0
        %v1138 = vmin.f32 %v1116, 0.0
        %v1139 = vmul.f32 %v1128, 1.442695
        %v1140 = vpow.pop %v1139
        %v1141 = vmul.f32 %v1129, 1.442695
        %v1142 = vpow.pop %v1141
        %v1143 = vmul.f32 %v1130, 1.442695
        %v1144 = vpow.pop %v1143
        %v1145 = vmul.f32 %v1131, 1.442695
        %v1146 = vpow.pop %v1145
        %v1147 = vmul.f32 %v1132, 1.442695
        %v1148 = vpow.pop %v1147
        %v1149 = vmul.f32 %v1133, 1.442695
        %v1150 = vpow.pop %v1149
        %v1151 = vmul.f32 %v1134, 1.442695
        %v1152 = vpow.pop %v1151
        %v1153 = vmul.f32 %v1135, 1.442695
        %v1154 = vpow.pop %v1153
        %v1155 = vmul.f32 %v1136, 1.442695
        %v1156 = vpow.pop %v1155
        %v1157 = vmul.f32 %v1137, 1.442695
        %v1158 = vpow.pop %v1157
        %v1159 = vmul.f32 %v1138, 1.442695
        %v1160 = vpow.pop %v1159
        %v1161 = vsub.f32 %v1140, 1.0
        %v1162 = vsub.f32 %v1142, 1.0
        %v1163 = vsub.f32 %v1144, 1.0
        %v1164 = vsub.f32 %v1146, 1.0
        %v1165 = vsub.f32 %v1148, 1.0
        %v1166 = vsub.f32 %v1150, 1.0
        %v1167 = vsub.f32 %v1152, 1.0
        %v1168 = vsub.f32 %v1154, 1.0
        %v1169 = vsub.f32 %v1156, 1.0
        %v1170 = vsub.f32 %v1158, 1.0
        %v1171 = vsub.f32 %v1160, 1.0
        %v1172 = vsel %vm1117, %v1106, %v1161
        %v1173 = vsel %vm1118, %v1107, %v1162
        %v1174 = vsel %vm1119, %v1108, %v1163
        %v1175 = vsel %vm1120, %v1109, %v1164
        %v1176 = vsel %vm1121, %v1110, %v1165
        %v1177 = vsel %vm1122, %v1111, %v1166
        %v1178 = vsel %vm1123, %v1112, %v1167
        %v1179 = vsel %vm1124, %v1113, %v1168
        %v1180 = vsel %vm1125, %v1114, %v1169
        %v1181 = vsel %vm1126, %v1115, %v1170
        %v1182 = vsel %vm1127, %v1116, %v1171
        %v1183 = vmul.f32 %v583, %v557
        %v1184 = vmul.f32 %v588, %v557
        %v1185 = vmul.f32 %v593, %v557
        %v1186 = vmul.f32 %v598, %v557
        %v1187 = vmul.f32 %v603, %v557
        %v1188 = vmul.f32 %v608, %v557
        %v1189 = vmul.f32 %v613, %v557
        %v1190 = vmul.f32 %v618, %v557
        %v1191 = vmul.f32 %v623, %v557
        %v1192 = vmul.f32 %v628, %v557
        %v1193 = vmul.f32 %v633, %v557
        %v1194 = vadd.f32 %v1183, 0.0
        %v1195 = vadd.f32 %v1184, 0.0
        %v1196 = vadd.f32 %v1185, 0.0
        %v1197 = vadd.f32 %v1186, 0.0
        %v1198 = vadd.f32 %v1187, 0.0
        %v1199 = vadd.f32 %v1188, 0.0
        %v1200 = vadd.f32 %v1189, 0.0
        %v1201 = vadd.f32 %v1190, 0.0
        %v1202 = vadd.f32 %v1191, 0.0
        %v1203 = vadd.f32 %v1192, 0.0
        %v1204 = vadd.f32 %v1193, 0.0
        %v1205 = vmul.f32 %v664, %v638
        %v1206 = vmul.f32 %v669, %v638
        %v1207 = vmul.f32 %v674, %v638
        %v1208 = vmul.f32 %v679, %v638
        %v1209 = vmul.f32 %v684, %v638
        %v1210 = vmul.f32 %v689, %v638
        %v1211 = vmul.f32 %v694, %v638
        %v1212 = vmul.f32 %v699, %v638
        %v1213 = vmul.f32 %v704, %v638
        %v1214 = vmul.f32 %v709, %v638
        %v1215 = vmul.f32 %v714, %v638
        %v1216 = vadd.f32 %v1194, %v1205
        %v1217 = vadd.f32 %v1195, %v1206
        %v1218 = vadd.f32 %v1196, %v1207
        %v1219 = vadd.f32 %v1197, %v1208
        %v1220 = vadd.f32 %v1198, %v1209
        %v1221 = vadd.f32 %v1199, %v1210
        %v1222 = vadd.f32 %v1200, %v1211
        %v1223 = vadd.f32 %v1201, %v1212
        %v1224 = vadd.f32 %v1202, %v1213
        %v1225 = vadd.f32 %v1203, %v1214
        %v1226 = vadd.f32 %v1204, %v1215
        %v1227 = vmul.f32 %v745, %v719
        %v1228 = vmul.f32 %v750, %v719
        %v1229 = vmul.f32 %v755, %v719
        %v1230 = vmul.f32 %v760, %v719
        %v1231 = vmul.f32 %v765, %v719
        %v1232 = vmul.f32 %v770, %v719
        %v1233 = vmul.f32 %v775, %v719
        %v1234 = vmul.f32 %v780, %v719
        %v1235 = vmul.f32 %v785, %v719
        %v1236 = vmul.f32 %v790, %v719
        %v1237 = vmul.f32 %v795, %v719
        %v1238 = vadd.f32 %v1216, %v1227
        %v1239 = vadd.f32 %v1217, %v1228
        %v1240 = vadd.f32 %v1218, %v1229
        %v1241 = vadd.f32 %v1219, %v1230
        %v1242 = vadd.f32 %v1220, %v1231
        %v1243 = vadd.f32 %v1221, %v1232
        %v1244 = vadd.f32 %v1222, %v1233
        %v1245 = vadd.f32 %v1223, %v1234
        %v1246 = vadd.f32 %v1224, %v1235
        %v1247 = vadd.f32 %v1225, %v1236
        %v1248 = vadd.f32 %v1226, %v1237
        %v1249 = vmul.f32 %v502, %v800
        %v1250 = vmul.f32 %v507, %v800
        %v1251 = vmul.f32 %v512, %v800
        %v1252 = vmul.f32 %v517, %v800
        %v1253 = vmul.f32 %v522, %v800
        %v1254 = vmul.f32 %v527, %v800
        %v1255 = vmul.f32 %v532, %v800
        %v1256 = vmul.f32 %v537, %v800
        %v1257 = vmul.f32 %v542, %v800
        %v1258 = vmul.f32 %v547, %v800
        %v1259 = vmul.f32 %v552, %v800
        %v1271 = vrot.slane %v1249, 1
        %v1272 = vrot.slane %v1250, 1
        %v1273 = vsel %vm849, %v1271, %v1272
        %v1274 = vrot.slane %v1251, 1
        %v1275 = vsel %vm849, %v1272, %v1274
        %v1276 = vrot.slane %v1252, 1
        %v1277 = vsel %vm849, %v1274, %v1276
        %v1278 = vrot.slane %v1253, 1
        %v1279 = vsel %vm849, %v1276, %v1278
        %v1280 = vrot.slane %v1254, 1
        %v1281 = vsel %vm849, %v1278, %v1280
        %v1282 = vrot.slane %v1255, 1
        %v1283 = vsel %vm849, %v1280, %v1282
        %v1284 = vrot.slane %v1256, 1
        %v1285 = vsel %vm849, %v1282, %v1284
        %v1286 = vrot.slane %v1257, 1
        %v1287 = vsel %vm849, %v1284, %v1286
        %v1288 = vrot.slane %v1258, 1
        %v1289 = vsel %vm849, %v1286, %v1288
        %v1290 = vrot.slane %v1259, 1
        %v1291 = vsel %vm849, %v1288, %v1290
        %v1303 = vadd.f32 %v1238, %v1273
        %v1304 = vadd.f32 %v1239, %v1275
        %v1305 = vadd.f32 %v1240, %v1277
        %v1306 = vadd.f32 %v1241, %v1279
        %v1307 = vadd.f32 %v1242, %v1281
        %v1308 = vadd.f32 %v1243, %v1283
        %v1309 = vadd.f32 %v1244, %v1285
        %v1310 = vadd.f32 %v1245, %v1287
        %v1311 = vadd.f32 %v1246, %v1289
        %v1312 = vadd.f32 %v1247, %v1291
        %v1313 = vadd.f32 %v1248, %v1290
        %v1314 = vmul.f32 %v583, %v826
        %v1315 = vmul.f32 %v588, %v826
        %v1316 = vmul.f32 %v593, %v826
        %v1317 = vmul.f32 %v598, %v826
        %v1318 = vmul.f32 %v603, %v826
        %v1319 = vmul.f32 %v608, %v826
        %v1320 = vmul.f32 %v613, %v826
        %v1321 = vmul.f32 %v618, %v826
        %v1322 = vmul.f32 %v623, %v826
        %v1323 = vmul.f32 %v628, %v826
        %v1324 = vmul.f32 %v633, %v826
        %v1336 = vrot.slane %v1314, 1
        %v1337 = vrot.slane %v1315, 1
        %v1338 = vsel %vm849, %v1336, %v1337
        %v1339 = vrot.slane %v1316, 1
        %v1340 = vsel %vm849, %v1337, %v1339
        %v1341 = vrot.slane %v1317, 1
        %v1342 = vsel %vm849, %v1339, %v1341
        %v1343 = vrot.slane %v1318, 1
        %v1344 = vsel %vm849, %v1341, %v1343
        %v1345 = vrot.slane %v1319, 1
        %v1346 = vsel %vm849, %v1343, %v1345
        %v1347 = vrot.slane %v1320, 1
        %v1348 = vsel %vm849, %v1345, %v1347
        %v1349 = vrot.slane %v1321, 1
        %v1350 = vsel %vm849, %v1347, %v1349
        %v1351 = vrot.slane %v1322, 1
        %v1352 = vsel %vm849, %v1349, %v1351
        %v1353 = vrot.slane %v1323, 1
        %v1354 = vsel %vm849, %v1351, %v1353
        %v1355 = vrot.slane %v1324, 1
        %v1356 = vsel %vm849, %v1353, %v1355
        %v1368 = vadd.f32 %v1303, %v1338
        %v1369 = vadd.f32 %v1304, %v1340
        %v1370 = vadd.f32 %v1305, %v1342
        %v1371 = vadd.f32 %v1306, %v1344
        %v1372 = vadd.f32 %v1307, %v1346
        %v1373 = vadd.f32 %v1308, %v1348
        %v1374 = vadd.f32 %v1309, %v1350
        %v1375 = vadd.f32 %v1310, %v1352
        %v1376 = vadd.f32 %v1311, %v1354
        %v1377 = vadd.f32 %v1312, %v1356
        %v1378 = vadd.f32 %v1313, %v1355
        %v1379 = vmul.f32 %v664, %v896
        %v1380 = vmul.f32 %v669, %v896
        %v1381 = vmul.f32 %v674, %v896
        %v1382 = vmul.f32 %v679, %v896
        %v1383 = vmul.f32 %v684, %v896
        %v1384 = vmul.f32 %v689, %v896
        %v1385 = vmul.f32 %v694, %v896
        %v1386 = vmul.f32 %v699, %v896
        %v1387 = vmul.f32 %v704, %v896
        %v1388 = vmul.f32 %v709, %v896
        %v1389 = vmul.f32 %v714, %v896
        %v1401 = vrot.slane %v1379, 1
        %v1402 = vrot.slane %v1380, 1
        %v1403 = vsel %vm849, %v1401, %v1402
        %v1404 = vrot.slane %v1381, 1
        %v1405 = vsel %vm849, %v1402, %v1404
        %v1406 = vrot.slane %v1382, 1
        %v1407 = vsel %vm849, %v1404, %v1406
        %v1408 = vrot.slane %v1383, 1
        %v1409 = vsel %vm849, %v1406, %v1408
        %v1410 = vrot.slane %v1384, 1
        %v1411 = vsel %vm849, %v1408, %v1410
        %v1412 = vrot.slane %v1385, 1
        %v1413 = vsel %vm849, %v1410, %v1412
        %v1414 = vrot.slane %v1386, 1
        %v1415 = vsel %vm849, %v1412, %v1414
        %v1416 = vrot.slane %v1387, 1
        %v1417 = vsel %vm849, %v1414, %v1416
        %v1418 = vrot.slane %v1388, 1
        %v1419 = vsel %vm849, %v1416, %v1418
        %v1420 = vrot.slane %v1389, 1
        %v1421 = vsel %vm849, %v1418, %v1420
        %v1433 = vadd.f32 %v1368, %v1403
        %v1434 = vadd.f32 %v1369, %v1405
        %v1435 = vadd.f32 %v1370, %v1407
        %v1436 = vadd.f32 %v1371, %v1409
        %v1437 = vadd.f32 %v1372, %v1411
        %v1438 = vadd.f32 %v1373, %v1413
        %v1439 = vadd.f32 %v1374, %v1415
        %v1440 = vadd.f32 %v1375, %v1417
        %v1441 = vadd.f32 %v1376, %v1419
        %v1442 = vadd.f32 %v1377, %v1421
        %v1443 = vadd.f32 %v1378, %v1420
        %v1444 = vmul.f32 %v745, %v965
        %v1445 = vmul.f32 %v750, %v965
        %v1446 = vmul.f32 %v755, %v965
        %v1447 = vmul.f32 %v760, %v965
        %v1448 = vmul.f32 %v765, %v965
        %v1449 = vmul.f32 %v770, %v965
        %v1450 = vmul.f32 %v775, %v965
        %v1451 = vmul.f32 %v780, %v965
        %v1452 = vmul.f32 %v785, %v965
        %v1453 = vmul.f32 %v790, %v965
        %v1454 = vmul.f32 %v795, %v965
        %v1466 = vrot.slane %v1444, 1
        %v1467 = vrot.slane %v1445, 1
        %v1468 = vsel %vm849, %v1466, %v1467
        %v1469 = vrot.slane %v1446, 1
        %v1470 = vsel %vm849, %v1467, %v1469
        %v1471 = vrot.slane %v1447, 1
        %v1472 = vsel %vm849, %v1469, %v1471
        %v1473 = vrot.slane %v1448, 1
        %v1474 = vsel %vm849, %v1471, %v1473
        %v1475 = vrot.slane %v1449, 1
        %v1476 = vsel %vm849, %v1473, %v1475
        %v1477 = vrot.slane %v1450, 1
        %v1478 = vsel %vm849, %v1475, %v1477
        %v1479 = vrot.slane %v1451, 1
        %v1480 = vsel %vm849, %v1477, %v1479
        %v1481 = vrot.slane %v1452, 1
        %v1482 = vsel %vm849, %v1479, %v1481
        %v1483 = vrot.slane %v1453, 1
        %v1484 = vsel %vm849, %v1481, %v1483
        %v1485 = vrot.slane %v1454, 1
        %v1486 = vsel %vm849, %v1483, %v1485
        %v1498 = vadd.f32 %v1433, %v1468
        %v1499 = vadd.f32 %v1434, %v1470
        %v1500 = vadd.f32 %v1435, %v1472
        %v1501 = vadd.f32 %v1436, %v1474
        %v1502 = vadd.f32 %v1437, %v1476
        %v1503 = vadd.f32 %v1438, %v1478
        %v1504 = vadd.f32 %v1439, %v1480
        %v1505 = vadd.f32 %v1440, %v1482
        %v1506 = vadd.f32 %v1441, %v1484
        %v1507 = vadd.f32 %v1442, %v1486
        %v1508 = vadd.f32 %v1443, %v1485
        %v1509 = vmul.f32 %v502, %v1034
        %v1510 = vmul.f32 %v507, %v1034
        %v1511 = vmul.f32 %v512, %v1034
        %v1512 = vmul.f32 %v517, %v1034
        %v1513 = vmul.f32 %v522, %v1034
        %v1514 = vmul.f32 %v527, %v1034
        %v1515 = vmul.f32 %v532, %v1034
        %v1516 = vmul.f32 %v537, %v1034
        %v1517 = vmul.f32 %v542, %v1034
        %v1518 = vmul.f32 %v547, %v1034
        %v1519 = vmul.f32 %v552, %v1034
        %vm1531 = vcmask 1045504
        %v1532 = vrot.slane %v1509, 2
        %v1533 = vrot.slane %v1510, 2
        %v1534 = vsel %vm1531, %v1532, %v1533
        %v1535 = vrot.slane %v1511, 2
        %v1536 = vsel %vm1531, %v1533, %v1535
        %v1537 = vrot.slane %v1512, 2
        %v1538 = vsel %vm1531, %v1535, %v1537
        %v1539 = vrot.slane %v1513, 2
        %v1540 = vsel %vm1531, %v1537, %v1539
        %v1541 = vrot.slane %v1514, 2
        %v1542 = vsel %vm1531, %v1539, %v1541
        %v1543 = vrot.slane %v1515, 2
        %v1544 = vsel %vm1531, %v1541, %v1543
        %v1545 = vrot.slane %v1516, 2
        %v1546 = vsel %vm1531, %v1543, %v1545
        %v1547 = vrot.slane %v1517, 2
        %v1548 = vsel %vm1531, %v1545, %v1547
        %v1549 = vrot.slane %v1518, 2
        %v1550 = vsel %vm1531, %v1547, %v1549
        %v1551 = vrot.slane %v1519, 2
        %v1552 = vsel %vm1531, %v1549, %v1551
        %v1564 = vadd.f32 %v1498, %v1534
        %v1565 = vadd.f32 %v1499, %v1536
        %v1566 = vadd.f32 %v1500, %v1538
        %v1567 = vadd.f32 %v1501, %v1540
        %v1568 = vadd.f32 %v1502, %v1542
        %v1569 = vadd.f32 %v1503, %v1544
        %v1570 = vadd.f32 %v1504, %v1546
        %v1571 = vadd.f32 %v1505, %v1548
        %v1572 = vadd.f32 %v1506, %v1550
        %v1573 = vadd.f32 %v1507, %v1552
        %v1574 = vadd.f32 %v1508, %v1551
        %v1575 = vadd.f32 %v1564, %v1104
        %v1576 = vadd.f32 %v1565, %v1104
        %v1577 = vadd.f32 %v1566, %v1104
        %v1578 = vadd.f32 %v1567, %v1104
        %v1579 = vadd.f32 %v1568, %v1104
        %v1580 = vadd.f32 %v1569, %v1104
        %v1581 = vadd.f32 %v1570, %v1104
        %v1582 = vadd.f32 %v1571, %v1104
        %v1583 = vadd.f32 %v1572, %v1104
        %v1584 = vadd.f32 %v1573, %v1104
        %v1585 = vadd.f32 %v1574, %v1104
        %vm1586 = vcmp.gt.f32.partialorder %v1575, 0.0
        %vm1587 = vcmp.gt.f32.partialorder %v1576, 0.0
        %vm1588 = vcmp.gt.f32.partialorder %v1577, 0.0
        %vm1589 = vcmp.gt.f32.partialorder %v1578, 0.0
        %vm1590 = vcmp.gt.f32.partialorder %v1579, 0.0
        %vm1591 = vcmp.gt.f32.partialorder %v1580, 0.0
        %vm1592 = vcmp.gt.f32.partialorder %v1581, 0.0
        %vm1593 = vcmp.gt.f32.partialorder %v1582, 0.0
        %vm1594 = vcmp.gt.f32.partialorder %v1583, 0.0
        %vm1595 = vcmp.gt.f32.partialorder %v1584, 0.0
        %vm1596 = vcmp.gt.f32.partialorder %v1585, 0.0
        %v1597 = vmin.f32 %v1575, 0.0
        %v1598 = vmin.f32 %v1576, 0.0
        %v1599 = vmin.f32 %v1577, 0.0
        %v1600 = vmin.f32 %v1578, 0.0
        %v1601 = vmin.f32 %v1579, 0.0
        %v1602 = vmin.f32 %v1580, 0.0
        %v1603 = vmin.f32 %v1581, 0.0
        %v1604 = vmin.f32 %v1582, 0.0
        %v1605 = vmin.f32 %v1583, 0.0
        %v1606 = vmin.f32 %v1584, 0.0
        %v1607 = vmin.f32 %v1585, 0.0
        %v1608 = vmul.f32 %v1597, 1.442695
        %v1609 = vpow.pop %v1608
        %v1610 = vmul.f32 %v1598, 1.442695
        %v1611 = vpow.pop %v1610
        %v1612 = vmul.f32 %v1599, 1.442695
        %v1613 = vpow.pop %v1612
        %v1614 = vmul.f32 %v1600, 1.442695
        %v1615 = vpow.pop %v1614
        %v1616 = vmul.f32 %v1601, 1.442695
        %v1617 = vpow.pop %v1616
        %v1618 = vmul.f32 %v1602, 1.442695
        %v1619 = vpow.pop %v1618
        %v1620 = vmul.f32 %v1603, 1.442695
        %v1621 = vpow.pop %v1620
        %v1622 = vmul.f32 %v1604, 1.442695
        %v1623 = vpow.pop %v1622
        %v1624 = vmul.f32 %v1605, 1.442695
        %v1625 = vpow.pop %v1624
        %v1626 = vmul.f32 %v1606, 1.442695
        %v1627 = vpow.pop %v1626
        %v1628 = vmul.f32 %v1607, 1.442695
        %v1629 = vpow.pop %v1628
        %v1630 = vsub.f32 %v1609, 1.0
        %v1631 = vsub.f32 %v1611, 1.0
        %v1632 = vsub.f32 %v1613, 1.0
        %v1633 = vsub.f32 %v1615, 1.0
        %v1634 = vsub.f32 %v1617, 1.0
        %v1635 = vsub.f32 %v1619, 1.0
        %v1636 = vsub.f32 %v1621, 1.0
        %v1637 = vsub.f32 %v1623, 1.0
        %v1638 = vsub.f32 %v1625, 1.0
        %v1639 = vsub.f32 %v1627, 1.0
        %v1640 = vsub.f32 %v1629, 1.0
        %v1641 = vsel %vm1586, %v1575, %v1630
        %v1642 = vsel %vm1587, %v1576, %v1631
        %v1643 = vsel %vm1588, %v1577, %v1632
        %v1644 = vsel %vm1589, %v1578, %v1633
        %v1645 = vsel %vm1590, %v1579, %v1634
        %v1646 = vsel %vm1591, %v1580, %v1635
        %v1647 = vsel %vm1592, %v1581, %v1636
        %v1648 = vsel %vm1593, %v1582, %v1637
        %v1649 = vsel %vm1594, %v1583, %v1638
        %v1650 = vsel %vm1595, %v1584, %v1639
        %v1651 = vsel %vm1596, %v1585, %v1640
        %v1652 = vmul.f32 %v664, %v557
        %v1653 = vmul.f32 %v669, %v557
        %v1654 = vmul.f32 %v674, %v557
        %v1655 = vmul.f32 %v679, %v557
        %v1656 = vmul.f32 %v684, %v557
        %v1657 = vmul.f32 %v689, %v557
        %v1658 = vmul.f32 %v694, %v557
        %v1659 = vmul.f32 %v699, %v557
        %v1660 = vmul.f32 %v704, %v557
        %v1661 = vmul.f32 %v709, %v557
        %v1662 = vadd.f32 %v1652, 0.0
        %v1663 = vadd.f32 %v1653, 0.0
        %v1664 = vadd.f32 %v1654, 0.0
        %v1665 = vadd.f32 %v1655, 0.0
        %v1666 = vadd.f32 %v1656, 0.0
        %v1667 = vadd.f32 %v1657, 0.0
        %v1668 = vadd.f32 %v1658, 0.0
        %v1669 = vadd.f32 %v1659, 0.0
        %v1670 = vadd.f32 %v1660, 0.0
        %v1671 = vadd.f32 %v1661, 0.0
        %v1672 = vmul.f32 %v745, %v638
        %v1673 = vmul.f32 %v750, %v638
        %v1674 = vmul.f32 %v755, %v638
        %v1675 = vmul.f32 %v760, %v638
        %v1676 = vmul.f32 %v765, %v638
        %v1677 = vmul.f32 %v770, %v638
        %v1678 = vmul.f32 %v775, %v638
        %v1679 = vmul.f32 %v780, %v638
        %v1680 = vmul.f32 %v785, %v638
        %v1681 = vmul.f32 %v790, %v638
        %v1682 = vadd.f32 %v1662, %v1672
        %v1683 = vadd.f32 %v1663, %v1673
        %v1684 = vadd.f32 %v1664, %v1674
        %v1685 = vadd.f32 %v1665, %v1675
        %v1686 = vadd.f32 %v1666, %v1676
        %v1687 = vadd.f32 %v1667, %v1677
        %v1688 = vadd.f32 %v1668, %v1678
        %v1689 = vadd.f32 %v1669, %v1679
        %v1690 = vadd.f32 %v1670, %v1680
        %v1691 = vadd.f32 %v1671, %v1681
        %v1692 = vmul.f32 %v502, %v719
        %v1693 = vmul.f32 %v507, %v719
        %v1694 = vmul.f32 %v512, %v719
        %v1695 = vmul.f32 %v517, %v719
        %v1696 = vmul.f32 %v522, %v719
        %v1697 = vmul.f32 %v527, %v719
        %v1698 = vmul.f32 %v532, %v719
        %v1699 = vmul.f32 %v537, %v719
        %v1700 = vmul.f32 %v542, %v719
        %v1701 = vmul.f32 %v547, %v719
        %v1702 = vmul.f32 %v552, %v719
        %v1714 = vrot.slane %v1692, 1
        %v1715 = vrot.slane %v1693, 1
        %v1716 = vsel %vm849, %v1714, %v1715
        %v1717 = vrot.slane %v1694, 1
        %v1718 = vsel %vm849, %v1715, %v1717
        %v1719 = vrot.slane %v1695, 1
        %v1720 = vsel %vm849, %v1717, %v1719
        %v1721 = vrot.slane %v1696, 1
        %v1722 = vsel %vm849, %v1719, %v1721
        %v1723 = vrot.slane %v1697, 1
        %v1724 = vsel %vm849, %v1721, %v1723
        %v1725 = vrot.slane %v1698, 1
        %v1726 = vsel %vm849, %v1723, %v1725
        %v1727 = vrot.slane %v1699, 1
        %v1728 = vsel %vm849, %v1725, %v1727
        %v1729 = vrot.slane %v1700, 1
        %v1730 = vsel %vm849, %v1727, %v1729
        %v1731 = vrot.slane %v1701, 1
        %v1732 = vsel %vm849, %v1729, %v1731
        %v1733 = vrot.slane %v1702, 1
        %v1734 = vsel %vm849, %v1731, %v1733
        %v1745 = vadd.f32 %v1682, %v1716
        %v1746 = vadd.f32 %v1683, %v1718
        %v1747 = vadd.f32 %v1684, %v1720
        %v1748 = vadd.f32 %v1685, %v1722
        %v1749 = vadd.f32 %v1686, %v1724
        %v1750 = vadd.f32 %v1687, %v1726
        %v1751 = vadd.f32 %v1688, %v1728
        %v1752 = vadd.f32 %v1689, %v1730
        %v1753 = vadd.f32 %v1690, %v1732
        %v1754 = vadd.f32 %v1691, %v1734
        %v1755 = vmul.f32 %v583, %v800
        %v1756 = vmul.f32 %v588, %v800
        %v1757 = vmul.f32 %v593, %v800
        %v1758 = vmul.f32 %v598, %v800
        %v1759 = vmul.f32 %v603, %v800
        %v1760 = vmul.f32 %v608, %v800
        %v1761 = vmul.f32 %v613, %v800
        %v1762 = vmul.f32 %v618, %v800
        %v1763 = vmul.f32 %v623, %v800
        %v1764 = vmul.f32 %v628, %v800
        %v1765 = vmul.f32 %v633, %v800
        %v1777 = vrot.slane %v1755, 1
        %v1778 = vrot.slane %v1756, 1
        %v1779 = vsel %vm849, %v1777, %v1778
        %v1780 = vrot.slane %v1757, 1
        %v1781 = vsel %vm849, %v1778, %v1780
        %v1782 = vrot.slane %v1758, 1
        %v1783 = vsel %vm849, %v1780, %v1782
        %v1784 = vrot.slane %v1759, 1
        %v1785 = vsel %vm849, %v1782, %v1784
        %v1786 = vrot.slane %v1760, 1
        %v1787 = vsel %vm849, %v1784, %v1786
        %v1788 = vrot.slane %v1761, 1
        %v1789 = vsel %vm849, %v1786, %v1788
        %v1790 = vrot.slane %v1762, 1
        %v1791 = vsel %vm849, %v1788, %v1790
        %v1792 = vrot.slane %v1763, 1
        %v1793 = vsel %vm849, %v1790, %v1792
        %v1794 = vrot.slane %v1764, 1
        %v1795 = vsel %vm849, %v1792, %v1794
        %v1796 = vrot.slane %v1765, 1
        %v1797 = vsel %vm849, %v1794, %v1796
        %v1808 = vadd.f32 %v1745, %v1779
        %v1809 = vadd.f32 %v1746, %v1781
        %v1810 = vadd.f32 %v1747, %v1783
        %v1811 = vadd.f32 %v1748, %v1785
        %v1812 = vadd.f32 %v1749, %v1787
        %v1813 = vadd.f32 %v1750, %v1789
        %v1814 = vadd.f32 %v1751, %v1791
        %v1815 = vadd.f32 %v1752, %v1793
        %v1816 = vadd.f32 %v1753, %v1795
        %v1817 = vadd.f32 %v1754, %v1797
        %v1818 = vmul.f32 %v664, %v826
        %v1819 = vmul.f32 %v669, %v826
        %v1820 = vmul.f32 %v674, %v826
        %v1821 = vmul.f32 %v679, %v826
        %v1822 = vmul.f32 %v684, %v826
        %v1823 = vmul.f32 %v689, %v826
        %v1824 = vmul.f32 %v694, %v826
        %v1825 = vmul.f32 %v699, %v826
        %v1826 = vmul.f32 %v704, %v826
        %v1827 = vmul.f32 %v709, %v826
        %v1828 = vmul.f32 %v714, %v826
        %v1840 = vrot.slane %v1818, 1
        %v1841 = vrot.slane %v1819, 1
        %v1842 = vsel %vm849, %v1840, %v1841
        %v1843 = vrot.slane %v1820, 1
        %v1844 = vsel %vm849, %v1841, %v1843
        %v1845 = vrot.slane %v1821, 1
        %v1846 = vsel %vm849, %v1843, %v1845
        %v1847 = vrot.slane %v1822, 1
        %v1848 = vsel %vm849, %v1845, %v1847
        %v1849 = vrot.slane %v1823, 1
        %v1850 = vsel %vm849, %v1847, %v1849
        %v1851 = vrot.slane %v1824, 1
        %v1852 = vsel %vm849, %v1849, %v1851
        %v1853 = vrot.slane %v1825, 1
        %v1854 = vsel %vm849, %v1851, %v1853
        %v1855 = vrot.slane %v1826, 1
        %v1856 = vsel %vm849, %v1853, %v1855
        %v1857 = vrot.slane %v1827, 1
        %v1858 = vsel %vm849, %v1855, %v1857
        %v1859 = vrot.slane %v1828, 1
        %v1860 = vsel %vm849, %v1857, %v1859
        %v1871 = vadd.f32 %v1808, %v1842
        %v1872 = vadd.f32 %v1809, %v1844
        %v1873 = vadd.f32 %v1810, %v1846
        %v1874 = vadd.f32 %v1811, %v1848
        %v1875 = vadd.f32 %v1812, %v1850
        %v1876 = vadd.f32 %v1813, %v1852
        %v1877 = vadd.f32 %v1814, %v1854
        %v1878 = vadd.f32 %v1815, %v1856
        %v1879 = vadd.f32 %v1816, %v1858
        %v1880 = vadd.f32 %v1817, %v1860
        %v1881 = vmul.f32 %v745, %v896
        %v1882 = vmul.f32 %v750, %v896
        %v1883 = vmul.f32 %v755, %v896
        %v1884 = vmul.f32 %v760, %v896
        %v1885 = vmul.f32 %v765, %v896
        %v1886 = vmul.f32 %v770, %v896
        %v1887 = vmul.f32 %v775, %v896
        %v1888 = vmul.f32 %v780, %v896
        %v1889 = vmul.f32 %v785, %v896
        %v1890 = vmul.f32 %v790, %v896
        %v1891 = vmul.f32 %v795, %v896
        %v1903 = vrot.slane %v1881, 1
        %v1904 = vrot.slane %v1882, 1
        %v1905 = vsel %vm849, %v1903, %v1904
        %v1906 = vrot.slane %v1883, 1
        %v1907 = vsel %vm849, %v1904, %v1906
        %v1908 = vrot.slane %v1884, 1
        %v1909 = vsel %vm849, %v1906, %v1908
        %v1910 = vrot.slane %v1885, 1
        %v1911 = vsel %vm849, %v1908, %v1910
        %v1912 = vrot.slane %v1886, 1
        %v1913 = vsel %vm849, %v1910, %v1912
        %v1914 = vrot.slane %v1887, 1
        %v1915 = vsel %vm849, %v1912, %v1914
        %v1916 = vrot.slane %v1888, 1
        %v1917 = vsel %vm849, %v1914, %v1916
        %v1918 = vrot.slane %v1889, 1
        %v1919 = vsel %vm849, %v1916, %v1918
        %v1920 = vrot.slane %v1890, 1
        %v1921 = vsel %vm849, %v1918, %v1920
        %v1922 = vrot.slane %v1891, 1
        %v1923 = vsel %vm849, %v1920, %v1922
        %v1934 = vadd.f32 %v1871, %v1905
        %v1935 = vadd.f32 %v1872, %v1907
        %v1936 = vadd.f32 %v1873, %v1909
        %v1937 = vadd.f32 %v1874, %v1911
        %v1938 = vadd.f32 %v1875, %v1913
        %v1939 = vadd.f32 %v1876, %v1915
        %v1940 = vadd.f32 %v1877, %v1917
        %v1941 = vadd.f32 %v1878, %v1919
        %v1942 = vadd.f32 %v1879, %v1921
        %v1943 = vadd.f32 %v1880, %v1923
        %v1944 = vmul.f32 %v502, %v965
        %v1945 = vmul.f32 %v507, %v965
        %v1946 = vmul.f32 %v512, %v965
        %v1947 = vmul.f32 %v517, %v965
        %v1948 = vmul.f32 %v522, %v965
        %v1949 = vmul.f32 %v527, %v965
        %v1950 = vmul.f32 %v532, %v965
        %v1951 = vmul.f32 %v537, %v965
        %v1952 = vmul.f32 %v542, %v965
        %v1953 = vmul.f32 %v547, %v965
        %v1954 = vmul.f32 %v552, %v965
        %v1966 = vrot.slane %v1944, 2
        %v1967 = vrot.slane %v1945, 2
        %v1968 = vsel %vm1531, %v1966, %v1967
        %v1969 = vrot.slane %v1946, 2
        %v1970 = vsel %vm1531, %v1967, %v1969
        %v1971 = vrot.slane %v1947, 2
        %v1972 = vsel %vm1531, %v1969, %v1971
        %v1973 = vrot.slane %v1948, 2
        %v1974 = vsel %vm1531, %v1971, %v1973
        %v1975 = vrot.slane %v1949, 2
        %v1976 = vsel %vm1531, %v1973, %v1975
        %v1977 = vrot.slane %v1950, 2
        %v1978 = vsel %vm1531, %v1975, %v1977
        %v1979 = vrot.slane %v1951, 2
        %v1980 = vsel %vm1531, %v1977, %v1979
        %v1981 = vrot.slane %v1952, 2
        %v1982 = vsel %vm1531, %v1979, %v1981
        %v1983 = vrot.slane %v1953, 2
        %v1984 = vsel %vm1531, %v1981, %v1983
        %v1985 = vrot.slane %v1954, 2
        %v1986 = vsel %vm1531, %v1983, %v1985
        %v1997 = vadd.f32 %v1934, %v1968
        %v1998 = vadd.f32 %v1935, %v1970
        %v1999 = vadd.f32 %v1936, %v1972
        %v2000 = vadd.f32 %v1937, %v1974
        %v2001 = vadd.f32 %v1938, %v1976
        %v2002 = vadd.f32 %v1939, %v1978
        %v2003 = vadd.f32 %v1940, %v1980
        %v2004 = vadd.f32 %v1941, %v1982
        %v2005 = vadd.f32 %v1942, %v1984
        %v2006 = vadd.f32 %v1943, %v1986
        %v2007 = vmul.f32 %v583, %v1034
        %v2008 = vmul.f32 %v588, %v1034
        %v2009 = vmul.f32 %v593, %v1034
        %v2010 = vmul.f32 %v598, %v1034
        %v2011 = vmul.f32 %v603, %v1034
        %v2012 = vmul.f32 %v608, %v1034
        %v2013 = vmul.f32 %v613, %v1034
        %v2014 = vmul.f32 %v618, %v1034
        %v2015 = vmul.f32 %v623, %v1034
        %v2016 = vmul.f32 %v628, %v1034
        %v2017 = vmul.f32 %v633, %v1034
        %v2029 = vrot.slane %v2007, 2
        %v2030 = vrot.slane %v2008, 2
        %v2031 = vsel %vm1531, %v2029, %v2030
        %v2032 = vrot.slane %v2009, 2
        %v2033 = vsel %vm1531, %v2030, %v2032
        %v2034 = vrot.slane %v2010, 2
        %v2035 = vsel %vm1531, %v2032, %v2034
        %v2036 = vrot.slane %v2011, 2
        %v2037 = vsel %vm1531, %v2034, %v2036
        %v2038 = vrot.slane %v2012, 2
        %v2039 = vsel %vm1531, %v2036, %v2038
        %v2040 = vrot.slane %v2013, 2
        %v2041 = vsel %vm1531, %v2038, %v2040
        %v2042 = vrot.slane %v2014, 2
        %v2043 = vsel %vm1531, %v2040, %v2042
        %v2044 = vrot.slane %v2015, 2
        %v2045 = vsel %vm1531, %v2042, %v2044
        %v2046 = vrot.slane %v2016, 2
        %v2047 = vsel %vm1531, %v2044, %v2046
        %v2048 = vrot.slane %v2017, 2
        %v2049 = vsel %vm1531, %v2046, %v2048
        %v2060 = vadd.f32 %v1997, %v2031
        %v2061 = vadd.f32 %v1998, %v2033
        %v2062 = vadd.f32 %v1999, %v2035
        %v2063 = vadd.f32 %v2000, %v2037
        %v2064 = vadd.f32 %v2001, %v2039
        %v2065 = vadd.f32 %v2002, %v2041
        %v2066 = vadd.f32 %v2003, %v2043
        %v2067 = vadd.f32 %v2004, %v2045
        %v2068 = vadd.f32 %v2005, %v2047
        %v2069 = vadd.f32 %v2006, %v2049
        %v2070 = vadd.f32 %v2060, %v1104
        %v2071 = vadd.f32 %v2061, %v1104
        %v2072 = vadd.f32 %v2062, %v1104
        %v2073 = vadd.f32 %v2063, %v1104
        %v2074 = vadd.f32 %v2064, %v1104
        %v2075 = vadd.f32 %v2065, %v1104
        %v2076 = vadd.f32 %v2066, %v1104
        %v2077 = vadd.f32 %v2067, %v1104
        %v2078 = vadd.f32 %v2068, %v1104
        %v2079 = vadd.f32 %v2069, %v1104
        %vm2080 = vcmp.gt.f32.partialorder %v2070, 0.0
        %vm2081 = vcmp.gt.f32.partialorder %v2071, 0.0
        %vm2082 = vcmp.gt.f32.partialorder %v2072, 0.0
        %vm2083 = vcmp.gt.f32.partialorder %v2073, 0.0
        %vm2084 = vcmp.gt.f32.partialorder %v2074, 0.0
        %vm2085 = vcmp.gt.f32.partialorder %v2075, 0.0
        %vm2086 = vcmp.gt.f32.partialorder %v2076, 0.0
        %vm2087 = vcmp.gt.f32.partialorder %v2077, 0.0
        %vm2088 = vcmp.gt.f32.partialorder %v2078, 0.0
        %vm2089 = vcmp.gt.f32.partialorder %v2079, 0.0
        %v2090 = vmin.f32 %v2070, 0.0
        %v2091 = vmin.f32 %v2071, 0.0
        %v2092 = vmin.f32 %v2072, 0.0
        %v2093 = vmin.f32 %v2073, 0.0
        %v2094 = vmin.f32 %v2074, 0.0
        %v2095 = vmin.f32 %v2075, 0.0
        %v2096 = vmin.f32 %v2076, 0.0
        %v2097 = vmin.f32 %v2077, 0.0
        %v2098 = vmin.f32 %v2078, 0.0
        %v2099 = vmin.f32 %v2079, 0.0
        %v2100 = vmul.f32 %v2090, 1.442695
        %v2101 = vpow.pop %v2100
        %v2102 = vmul.f32 %v2091, 1.442695
        %v2103 = vpow.pop %v2102
        %v2104 = vmul.f32 %v2092, 1.442695
        %v2105 = vpow.pop %v2104
        %v2106 = vmul.f32 %v2093, 1.442695
        %v2107 = vpow.pop %v2106
        %v2108 = vmul.f32 %v2094, 1.442695
        %v2109 = vpow.pop %v2108
        %v2110 = vmul.f32 %v2095, 1.442695
        %v2111 = vpow.pop %v2110
        %v2112 = vmul.f32 %v2096, 1.442695
        %v2113 = vpow.pop %v2112
        %v2114 = vmul.f32 %v2097, 1.442695
        %v2115 = vpow.pop %v2114
        %v2116 = vmul.f32 %v2098, 1.442695
        %v2117 = vpow.pop %v2116
        %v2118 = vmul.f32 %v2099, 1.442695
        %v2119 = vpow.pop %v2118
        %v2120 = vsub.f32 %v2101, 1.0
        %v2121 = vsub.f32 %v2103, 1.0
        %v2122 = vsub.f32 %v2105, 1.0
        %v2123 = vsub.f32 %v2107, 1.0
        %v2124 = vsub.f32 %v2109, 1.0
        %v2125 = vsub.f32 %v2111, 1.0
        %v2126 = vsub.f32 %v2113, 1.0
        %v2127 = vsub.f32 %v2115, 1.0
        %v2128 = vsub.f32 %v2117, 1.0
        %v2129 = vsub.f32 %v2119, 1.0
        %v2130 = vsel %vm2080, %v2070, %v2120
        %v2131 = vsel %vm2081, %v2071, %v2121
        %v2132 = vsel %vm2082, %v2072, %v2122
        %v2133 = vsel %vm2083, %v2073, %v2123
        %v2134 = vsel %vm2084, %v2074, %v2124
        %v2135 = vsel %vm2085, %v2075, %v2125
        %v2136 = vsel %vm2086, %v2076, %v2126
        %v2137 = vsel %vm2087, %v2077, %v2127
        %v2138 = vsel %vm2088, %v2078, %v2128
        %v2139 = vsel %vm2089, %v2079, %v2129
        %v2140 = vmul.f32 %v745, %v557
        %v2141 = vmul.f32 %v750, %v557
        %v2142 = vmul.f32 %v755, %v557
        %v2143 = vmul.f32 %v760, %v557
        %v2144 = vmul.f32 %v765, %v557
        %v2145 = vmul.f32 %v770, %v557
        %v2146 = vmul.f32 %v775, %v557
        %v2147 = vmul.f32 %v780, %v557
        %v2148 = vmul.f32 %v785, %v557
        %v2149 = vmul.f32 %v790, %v557
        %v2150 = vadd.f32 %v2140, 0.0
        %v2151 = vadd.f32 %v2141, 0.0
        %v2152 = vadd.f32 %v2142, 0.0
        %v2153 = vadd.f32 %v2143, 0.0
        %v2154 = vadd.f32 %v2144, 0.0
        %v2155 = vadd.f32 %v2145, 0.0
        %v2156 = vadd.f32 %v2146, 0.0
        %v2157 = vadd.f32 %v2147, 0.0
        %v2158 = vadd.f32 %v2148, 0.0
        %v2159 = vadd.f32 %v2149, 0.0
        %v2160 = vmul.f32 %v502, %v638
        %v2161 = vmul.f32 %v507, %v638
        %v2162 = vmul.f32 %v512, %v638
        %v2163 = vmul.f32 %v517, %v638
        %v2164 = vmul.f32 %v522, %v638
        %v2165 = vmul.f32 %v527, %v638
        %v2166 = vmul.f32 %v532, %v638
        %v2167 = vmul.f32 %v537, %v638
        %v2168 = vmul.f32 %v542, %v638
        %v2169 = vmul.f32 %v547, %v638
        %v2170 = vmul.f32 %v552, %v638
        %v2182 = vrot.slane %v2160, 1
        %v2183 = vrot.slane %v2161, 1
        %v2184 = vsel %vm849, %v2182, %v2183
        %v2185 = vrot.slane %v2162, 1
        %v2186 = vsel %vm849, %v2183, %v2185
        %v2187 = vrot.slane %v2163, 1
        %v2188 = vsel %vm849, %v2185, %v2187
        %v2189 = vrot.slane %v2164, 1
        %v2190 = vsel %vm849, %v2187, %v2189
        %v2191 = vrot.slane %v2165, 1
        %v2192 = vsel %vm849, %v2189, %v2191
        %v2193 = vrot.slane %v2166, 1
        %v2194 = vsel %vm849, %v2191, %v2193
        %v2195 = vrot.slane %v2167, 1
        %v2196 = vsel %vm849, %v2193, %v2195
        %v2197 = vrot.slane %v2168, 1
        %v2198 = vsel %vm849, %v2195, %v2197
        %v2199 = vrot.slane %v2169, 1
        %v2200 = vsel %vm849, %v2197, %v2199
        %v2201 = vrot.slane %v2170, 1
        %v2202 = vsel %vm849, %v2199, %v2201
        %v2213 = vadd.f32 %v2150, %v2184
        %v2214 = vadd.f32 %v2151, %v2186
        %v2215 = vadd.f32 %v2152, %v2188
        %v2216 = vadd.f32 %v2153, %v2190
        %v2217 = vadd.f32 %v2154, %v2192
        %v2218 = vadd.f32 %v2155, %v2194
        %v2219 = vadd.f32 %v2156, %v2196
        %v2220 = vadd.f32 %v2157, %v2198
        %v2221 = vadd.f32 %v2158, %v2200
        %v2222 = vadd.f32 %v2159, %v2202
        %v2223 = vmul.f32 %v583, %v719
        %v2224 = vmul.f32 %v588, %v719
        %v2225 = vmul.f32 %v593, %v719
        %v2226 = vmul.f32 %v598, %v719
        %v2227 = vmul.f32 %v603, %v719
        %v2228 = vmul.f32 %v608, %v719
        %v2229 = vmul.f32 %v613, %v719
        %v2230 = vmul.f32 %v618, %v719
        %v2231 = vmul.f32 %v623, %v719
        %v2232 = vmul.f32 %v628, %v719
        %v2233 = vmul.f32 %v633, %v719
        %v2245 = vrot.slane %v2223, 1
        %v2246 = vrot.slane %v2224, 1
        %v2247 = vsel %vm849, %v2245, %v2246
        %v2248 = vrot.slane %v2225, 1
        %v2249 = vsel %vm849, %v2246, %v2248
        %v2250 = vrot.slane %v2226, 1
        %v2251 = vsel %vm849, %v2248, %v2250
        %v2252 = vrot.slane %v2227, 1
        %v2253 = vsel %vm849, %v2250, %v2252
        %v2254 = vrot.slane %v2228, 1
        %v2255 = vsel %vm849, %v2252, %v2254
        %v2256 = vrot.slane %v2229, 1
        %v2257 = vsel %vm849, %v2254, %v2256
        %v2258 = vrot.slane %v2230, 1
        %v2259 = vsel %vm849, %v2256, %v2258
        %v2260 = vrot.slane %v2231, 1
        %v2261 = vsel %vm849, %v2258, %v2260
        %v2262 = vrot.slane %v2232, 1
        %v2263 = vsel %vm849, %v2260, %v2262
        %v2264 = vrot.slane %v2233, 1
        %v2265 = vsel %vm849, %v2262, %v2264
        %v2276 = vadd.f32 %v2213, %v2247
        %v2277 = vadd.f32 %v2214, %v2249
        %v2278 = vadd.f32 %v2215, %v2251
        %v2279 = vadd.f32 %v2216, %v2253
        %v2280 = vadd.f32 %v2217, %v2255
        %v2281 = vadd.f32 %v2218, %v2257
        %v2282 = vadd.f32 %v2219, %v2259
        %v2283 = vadd.f32 %v2220, %v2261
        %v2284 = vadd.f32 %v2221, %v2263
        %v2285 = vadd.f32 %v2222, %v2265
        %v2286 = vmul.f32 %v664, %v800
        %v2287 = vmul.f32 %v669, %v800
        %v2288 = vmul.f32 %v674, %v800
        %v2289 = vmul.f32 %v679, %v800
        %v2290 = vmul.f32 %v684, %v800
        %v2291 = vmul.f32 %v689, %v800
        %v2292 = vmul.f32 %v694, %v800
        %v2293 = vmul.f32 %v699, %v800
        %v2294 = vmul.f32 %v704, %v800
        %v2295 = vmul.f32 %v709, %v800
        %v2296 = vmul.f32 %v714, %v800
        %v2308 = vrot.slane %v2286, 1
        %v2309 = vrot.slane %v2287, 1
        %v2310 = vsel %vm849, %v2308, %v2309
        %v2311 = vrot.slane %v2288, 1
        %v2312 = vsel %vm849, %v2309, %v2311
        %v2313 = vrot.slane %v2289, 1
        %v2314 = vsel %vm849, %v2311, %v2313
        %v2315 = vrot.slane %v2290, 1
        %v2316 = vsel %vm849, %v2313, %v2315
        %v2317 = vrot.slane %v2291, 1
        %v2318 = vsel %vm849, %v2315, %v2317
        %v2319 = vrot.slane %v2292, 1
        %v2320 = vsel %vm849, %v2317, %v2319
        %v2321 = vrot.slane %v2293, 1
        %v2322 = vsel %vm849, %v2319, %v2321
        %v2323 = vrot.slane %v2294, 1
        %v2324 = vsel %vm849, %v2321, %v2323
        %v2325 = vrot.slane %v2295, 1
        %v2326 = vsel %vm849, %v2323, %v2325
        %v2327 = vrot.slane %v2296, 1
        %v2328 = vsel %vm849, %v2325, %v2327
        %v2339 = vadd.f32 %v2276, %v2310
        %v2340 = vadd.f32 %v2277, %v2312
        %v2341 = vadd.f32 %v2278, %v2314
        %v2342 = vadd.f32 %v2279, %v2316
        %v2343 = vadd.f32 %v2280, %v2318
        %v2344 = vadd.f32 %v2281, %v2320
        %v2345 = vadd.f32 %v2282, %v2322
        %v2346 = vadd.f32 %v2283, %v2324
        %v2347 = vadd.f32 %v2284, %v2326
        %v2348 = vadd.f32 %v2285, %v2328
        %v2349 = vmul.f32 %v745, %v826
        %v2350 = vmul.f32 %v750, %v826
        %v2351 = vmul.f32 %v755, %v826
        %v2352 = vmul.f32 %v760, %v826
        %v2353 = vmul.f32 %v765, %v826
        %v2354 = vmul.f32 %v770, %v826
        %v2355 = vmul.f32 %v775, %v826
        %v2356 = vmul.f32 %v780, %v826
        %v2357 = vmul.f32 %v785, %v826
        %v2358 = vmul.f32 %v790, %v826
        %v2359 = vmul.f32 %v795, %v826
        %v2371 = vrot.slane %v2349, 1
        %v2372 = vrot.slane %v2350, 1
        %v2373 = vsel %vm849, %v2371, %v2372
        %v2374 = vrot.slane %v2351, 1
        %v2375 = vsel %vm849, %v2372, %v2374
        %v2376 = vrot.slane %v2352, 1
        %v2377 = vsel %vm849, %v2374, %v2376
        %v2378 = vrot.slane %v2353, 1
        %v2379 = vsel %vm849, %v2376, %v2378
        %v2380 = vrot.slane %v2354, 1
        %v2381 = vsel %vm849, %v2378, %v2380
        %v2382 = vrot.slane %v2355, 1
        %v2383 = vsel %vm849, %v2380, %v2382
        %v2384 = vrot.slane %v2356, 1
        %v2385 = vsel %vm849, %v2382, %v2384
        %v2386 = vrot.slane %v2357, 1
        %v2387 = vsel %vm849, %v2384, %v2386
        %v2388 = vrot.slane %v2358, 1
        %v2389 = vsel %vm849, %v2386, %v2388
        %v2390 = vrot.slane %v2359, 1
        %v2391 = vsel %vm849, %v2388, %v2390
        %v2402 = vadd.f32 %v2339, %v2373
        %v2403 = vadd.f32 %v2340, %v2375
        %v2404 = vadd.f32 %v2341, %v2377
        %v2405 = vadd.f32 %v2342, %v2379
        %v2406 = vadd.f32 %v2343, %v2381
        %v2407 = vadd.f32 %v2344, %v2383
        %v2408 = vadd.f32 %v2345, %v2385
        %v2409 = vadd.f32 %v2346, %v2387
        %v2410 = vadd.f32 %v2347, %v2389
        %v2411 = vadd.f32 %v2348, %v2391
        %v2412 = vmul.f32 %v502, %v896
        %v2413 = vmul.f32 %v507, %v896
        %v2414 = vmul.f32 %v512, %v896
        %v2415 = vmul.f32 %v517, %v896
        %v2416 = vmul.f32 %v522, %v896
        %v2417 = vmul.f32 %v527, %v896
        %v2418 = vmul.f32 %v532, %v896
        %v2419 = vmul.f32 %v537, %v896
        %v2420 = vmul.f32 %v542, %v896
        %v2421 = vmul.f32 %v547, %v896
        %v2422 = vmul.f32 %v552, %v896
        %v2434 = vrot.slane %v2412, 2
        %v2435 = vrot.slane %v2413, 2
        %v2436 = vsel %vm1531, %v2434, %v2435
        %v2437 = vrot.slane %v2414, 2
        %v2438 = vsel %vm1531, %v2435, %v2437
        %v2439 = vrot.slane %v2415, 2
        %v2440 = vsel %vm1531, %v2437, %v2439
        %v2441 = vrot.slane %v2416, 2
        %v2442 = vsel %vm1531, %v2439, %v2441
        %v2443 = vrot.slane %v2417, 2
        %v2444 = vsel %vm1531, %v2441, %v2443
        %v2445 = vrot.slane %v2418, 2
        %v2446 = vsel %vm1531, %v2443, %v2445
        %v2447 = vrot.slane %v2419, 2
        %v2448 = vsel %vm1531, %v2445, %v2447
        %v2449 = vrot.slane %v2420, 2
        %v2450 = vsel %vm1531, %v2447, %v2449
        %v2451 = vrot.slane %v2421, 2
        %v2452 = vsel %vm1531, %v2449, %v2451
        %v2453 = vrot.slane %v2422, 2
        %v2454 = vsel %vm1531, %v2451, %v2453
        %v2465 = vadd.f32 %v2402, %v2436
        %v2466 = vadd.f32 %v2403, %v2438
        %v2467 = vadd.f32 %v2404, %v2440
        %v2468 = vadd.f32 %v2405, %v2442
        %v2469 = vadd.f32 %v2406, %v2444
        %v2470 = vadd.f32 %v2407, %v2446
        %v2471 = vadd.f32 %v2408, %v2448
        %v2472 = vadd.f32 %v2409, %v2450
        %v2473 = vadd.f32 %v2410, %v2452
        %v2474 = vadd.f32 %v2411, %v2454
        %v2475 = vmul.f32 %v583, %v965
        %v2476 = vmul.f32 %v588, %v965
        %v2477 = vmul.f32 %v593, %v965
        %v2478 = vmul.f32 %v598, %v965
        %v2479 = vmul.f32 %v603, %v965
        %v2480 = vmul.f32 %v608, %v965
        %v2481 = vmul.f32 %v613, %v965
        %v2482 = vmul.f32 %v618, %v965
        %v2483 = vmul.f32 %v623, %v965
        %v2484 = vmul.f32 %v628, %v965
        %v2485 = vmul.f32 %v633, %v965
        %v2497 = vrot.slane %v2475, 2
        %v2498 = vrot.slane %v2476, 2
        %v2499 = vsel %vm1531, %v2497, %v2498
        %v2500 = vrot.slane %v2477, 2
        %v2501 = vsel %vm1531, %v2498, %v2500
        %v2502 = vrot.slane %v2478, 2
        %v2503 = vsel %vm1531, %v2500, %v2502
        %v2504 = vrot.slane %v2479, 2
        %v2505 = vsel %vm1531, %v2502, %v2504
        %v2506 = vrot.slane %v2480, 2
        %v2507 = vsel %vm1531, %v2504, %v2506
        %v2508 = vrot.slane %v2481, 2
        %v2509 = vsel %vm1531, %v2506, %v2508
        %v2510 = vrot.slane %v2482, 2
        %v2511 = vsel %vm1531, %v2508, %v2510
        %v2512 = vrot.slane %v2483, 2
        %v2513 = vsel %vm1531, %v2510, %v2512
        %v2514 = vrot.slane %v2484, 2
        %v2515 = vsel %vm1531, %v2512, %v2514
        %v2516 = vrot.slane %v2485, 2
        %v2517 = vsel %vm1531, %v2514, %v2516
        %v2528 = vadd.f32 %v2465, %v2499
        %v2529 = vadd.f32 %v2466, %v2501
        %v2530 = vadd.f32 %v2467, %v2503
        %v2531 = vadd.f32 %v2468, %v2505
        %v2532 = vadd.f32 %v2469, %v2507
        %v2533 = vadd.f32 %v2470, %v2509
        %v2534 = vadd.f32 %v2471, %v2511
        %v2535 = vadd.f32 %v2472, %v2513
        %v2536 = vadd.f32 %v2473, %v2515
        %v2537 = vadd.f32 %v2474, %v2517
        %v2538 = vmul.f32 %v664, %v1034
        %v2539 = vmul.f32 %v669, %v1034
        %v2540 = vmul.f32 %v674, %v1034
        %v2541 = vmul.f32 %v679, %v1034
        %v2542 = vmul.f32 %v684, %v1034
        %v2543 = vmul.f32 %v689, %v1034
        %v2544 = vmul.f32 %v694, %v1034
        %v2545 = vmul.f32 %v699, %v1034
        %v2546 = vmul.f32 %v704, %v1034
        %v2547 = vmul.f32 %v709, %v1034
        %v2548 = vmul.f32 %v714, %v1034
        %v2560 = vrot.slane %v2538, 2
        %v2561 = vrot.slane %v2539, 2
        %v2562 = vsel %vm1531, %v2560, %v2561
        %v2563 = vrot.slane %v2540, 2
        %v2564 = vsel %vm1531, %v2561, %v2563
        %v2565 = vrot.slane %v2541, 2
        %v2566 = vsel %vm1531, %v2563, %v2565
        %v2567 = vrot.slane %v2542, 2
        %v2568 = vsel %vm1531, %v2565, %v2567
        %v2569 = vrot.slane %v2543, 2
        %v2570 = vsel %vm1531, %v2567, %v2569
        %v2571 = vrot.slane %v2544, 2
        %v2572 = vsel %vm1531, %v2569, %v2571
        %v2573 = vrot.slane %v2545, 2
        %v2574 = vsel %vm1531, %v2571, %v2573
        %v2575 = vrot.slane %v2546, 2
        %v2576 = vsel %vm1531, %v2573, %v2575
        %v2577 = vrot.slane %v2547, 2
        %v2578 = vsel %vm1531, %v2575, %v2577
        %v2579 = vrot.slane %v2548, 2
        %v2580 = vsel %vm1531, %v2577, %v2579
        %v2591 = vadd.f32 %v2528, %v2562
        %v2592 = vadd.f32 %v2529, %v2564
        %v2593 = vadd.f32 %v2530, %v2566
        %v2594 = vadd.f32 %v2531, %v2568
        %v2595 = vadd.f32 %v2532, %v2570
        %v2596 = vadd.f32 %v2533, %v2572
        %v2597 = vadd.f32 %v2534, %v2574
        %v2598 = vadd.f32 %v2535, %v2576
        %v2599 = vadd.f32 %v2536, %v2578
        %v2600 = vadd.f32 %v2537, %v2580
        %v2601 = vadd.f32 %v2591, %v1104
        %v2602 = vadd.f32 %v2592, %v1104
        %v2603 = vadd.f32 %v2593, %v1104
        %v2604 = vadd.f32 %v2594, %v1104
        %v2605 = vadd.f32 %v2595, %v1104
        %v2606 = vadd.f32 %v2596, %v1104
        %v2607 = vadd.f32 %v2597, %v1104
        %v2608 = vadd.f32 %v2598, %v1104
        %v2609 = vadd.f32 %v2599, %v1104
        %v2610 = vadd.f32 %v2600, %v1104
        %vm2611 = vcmp.gt.f32.partialorder %v2601, 0.0
        %vm2612 = vcmp.gt.f32.partialorder %v2602, 0.0
        %vm2613 = vcmp.gt.f32.partialorder %v2603, 0.0
        %vm2614 = vcmp.gt.f32.partialorder %v2604, 0.0
        %vm2615 = vcmp.gt.f32.partialorder %v2605, 0.0
        %vm2616 = vcmp.gt.f32.partialorder %v2606, 0.0
        %vm2617 = vcmp.gt.f32.partialorder %v2607, 0.0
        %vm2618 = vcmp.gt.f32.partialorder %v2608, 0.0
        %vm2619 = vcmp.gt.f32.partialorder %v2609, 0.0
        %vm2620 = vcmp.gt.f32.partialorder %v2610, 0.0
        %v2621 = vmin.f32 %v2601, 0.0
        %v2622 = vmin.f32 %v2602, 0.0
        %v2623 = vmin.f32 %v2603, 0.0
        %v2624 = vmin.f32 %v2604, 0.0
        %v2625 = vmin.f32 %v2605, 0.0
        %v2626 = vmin.f32 %v2606, 0.0
        %v2627 = vmin.f32 %v2607, 0.0
        %v2628 = vmin.f32 %v2608, 0.0
        %v2629 = vmin.f32 %v2609, 0.0
        %v2630 = vmin.f32 %v2610, 0.0
        %v2631 = vmul.f32 %v2621, 1.442695
        %v2632 = vpow.pop %v2631
        %v2633 = vmul.f32 %v2622, 1.442695
        %v2634 = vpow.pop %v2633
        %v2635 = vmul.f32 %v2623, 1.442695
        %v2636 = vpow.pop %v2635
        %v2637 = vmul.f32 %v2624, 1.442695
        %v2638 = vpow.pop %v2637
        %v2639 = vmul.f32 %v2625, 1.442695
        %v2640 = vpow.pop %v2639
        %v2641 = vmul.f32 %v2626, 1.442695
        %v2642 = vpow.pop %v2641
        %v2643 = vmul.f32 %v2627, 1.442695
        %v2644 = vpow.pop %v2643
        %v2645 = vmul.f32 %v2628, 1.442695
        %v2646 = vpow.pop %v2645
        %v2647 = vmul.f32 %v2629, 1.442695
        %v2648 = vpow.pop %v2647
        %v2649 = vmul.f32 %v2630, 1.442695
        %v2650 = vpow.pop %v2649
        %v2651 = vsub.f32 %v2632, 1.0
        %v2652 = vsub.f32 %v2634, 1.0
        %v2653 = vsub.f32 %v2636, 1.0
        %v2654 = vsub.f32 %v2638, 1.0
        %v2655 = vsub.f32 %v2640, 1.0
        %v2656 = vsub.f32 %v2642, 1.0
        %v2657 = vsub.f32 %v2644, 1.0
        %v2658 = vsub.f32 %v2646, 1.0
        %v2659 = vsub.f32 %v2648, 1.0
        %v2660 = vsub.f32 %v2650, 1.0
        %v2661 = vsel %vm2611, %v2601, %v2651
        %v2662 = vsel %vm2612, %v2602, %v2652
        %v2663 = vsel %vm2613, %v2603, %v2653
        %v2664 = vsel %vm2614, %v2604, %v2654
        %v2665 = vsel %vm2615, %v2605, %v2655
        %v2666 = vsel %vm2616, %v2606, %v2656
        %v2667 = vsel %vm2617, %v2607, %v2657
        %v2668 = vsel %vm2618, %v2608, %v2658
        %v2669 = vsel %vm2619, %v2609, %v2659
        %v2670 = vsel %vm2620, %v2610, %v2660
        %v2671 = vmax.f32 %v1172, %v1641
        %v2672 = vmax.f32 %v1173, %v1642
        %v2673 = vmax.f32 %v1174, %v1643
        %v2674 = vmax.f32 %v1175, %v1644
        %v2675 = vmax.f32 %v1176, %v1645
        %v2676 = vmax.f32 %v1177, %v1646
        %v2677 = vmax.f32 %v1178, %v1647
        %v2678 = vmax.f32 %v1179, %v1648
        %v2679 = vmax.f32 %v1180, %v1649
        %v2680 = vmax.f32 %v1181, %v1650
        %v2681 = vmax.f32 %v1182, %v1651
        %v2682 = vmax.f32 %v2130, %v2661
        %v2683 = vmax.f32 %v2131, %v2662
        %v2684 = vmax.f32 %v2132, %v2663
        %v2685 = vmax.f32 %v2133, %v2664
        %v2686 = vmax.f32 %v2134, %v2665
        %v2687 = vmax.f32 %v2135, %v2666
        %v2688 = vmax.f32 %v2136, %v2667
        %v2689 = vmax.f32 %v2137, %v2668
        %v2690 = vmax.f32 %v2138, %v2669
        %v2691 = vmax.f32 %v2139, %v2670
        %v2692 = vpack.c.bf16 %v2672, %v2671
        %v2693 = vpack.c.bf16 %v2674, %v2673
        %v2694 = vpack.c.bf16 %v2676, %v2675
        %v2695 = vpack.c.bf16 %v2678, %v2677
        %v2696 = vpack.c.bf16 %v2680, %v2679
        %v2697 = vpack.c.bf16 %v2683, %v2682
        %v2698 = vpack.c.bf16 %v2685, %v2684
        %v2699 = vpack.c.bf16 %v2687, %v2686
        %v2700 = vpack.c.bf16 %v2689, %v2688
        %v2701 = vpack.c.bf16 %v2691, %v2690
        %v2704 = vunpack.c.l.b16 %v424
        %v2705 = vunpack.c.l.b16 %v425
        %v2706 = vpack.c.b16 %v2705, %v2704
        %vm2708 = vcmask 130048
        %v2710 = vsel %vm2708, %v2697, 0
        %v2713 = vsel %vm2708, %v2698, 0
        %v2716 = vsel %vm2708, %v2699, 0
        %v2719 = vsel %vm2708, %v2700, 0
        %v2722 = vsel %vm2708, %v2701, 0
        %2724 = vmatprep.subr.bf16.mxu0 0
        %2725 = vmatpush1.bf16.msra.mxu0 %v2706
        %2726 = vmatprep.subr.bf16.mxu0 0
        %2727 = vmatpush1.bf16.msra.mxu0 0
        %2728 = vmatprep.subr.bf16.mxu0 0
        %2729 = vmatpush1.bf16.msra.mxu0 0
        %2730 = vmatprep.subr.bf16.mxu0 0
        %2731 = vmatpush1.bf16.msra.mxu0 0
        %2732 = vmatprep.subr.bf16.mxu0 0
        %2733 = vmatpush1.bf16.msra.mxu0 0
        %2734 = vmatprep.subr.bf16.mxu0 0
        %2735 = vmatpush1.bf16.msra.mxu0 0
        %2736 = vmatprep.subr.bf16.mxu0 0
        %2737 = vmatpush1.bf16.msra.mxu0 0
        %2738 = vmatprep.subr.bf16.mxu0 0
        %2739 = vmatpush1.bf16.msra.mxu0 0
        %2740 = vmatprep.subr.bf16.mxu0 0
        %2741 = vmatpush1.bf16.msra.mxu0 0
        %2742 = vmatprep.subr.bf16.mxu0 0
        %2743 = vmatpush1.bf16.msra.mxu0 0
        %2744 = vmatprep.subr.bf16.mxu0 0
        %2745 = vmatpush1.bf16.msra.mxu0 0
        %2746 = vmatprep.subr.bf16.mxu0 0
        %2747 = vmatpush1.bf16.msra.mxu0 0
        %2748 = vmatprep.subr.bf16.mxu0 0
        %2749 = vmatpush1.bf16.msra.mxu0 0
        %2750 = vmatprep.subr.bf16.mxu0 0
        %2751 = vmatpush1.bf16.msra.mxu0 0
        %2752 = vmatprep.subr.bf16.mxu0 0
        %2753 = vmatpush1.bf16.msra.mxu0 0
        %2754 = vmatprep.subr.bf16.mxu0 0
        %2755 = vmatpush1.bf16.msra.mxu0 0
        %2756 = vmatprep.mubr.bf16.mxu0 0
        %2757 = vmatmul.mubr.bf16.gmra.mrb[0].mxu0 %v2710
        %v2758 = vpop.f32.mrb[0].mxu0
        %v2759 = vadd.f32 0.0, %v2758
        %v2760 = vpop.f32.mrb[0].mxu0
        %v2761 = vpop.f32.mrb[0].mxu0
        %v2762 = vadd.f32 0.0, %v2761
        %v2763 = vpop.f32.mrb[0].mxu0
        %2764 = vmatprep.mubr.bf16.mxu0 0
        %2765 = vmatmul.mubr.bf16.gmra.mrb[0].mxu0 %v2713
        %v2766 = vpop.f32.mrb[0].mxu0
        %v2767 = vadd.f32 0.0, %v2766
        %v2768 = vpop.f32.mrb[0].mxu0
        %v2769 = vpop.f32.mrb[0].mxu0
        %v2770 = vadd.f32 0.0, %v2769
        %v2771 = vpop.f32.mrb[0].mxu0
        %2772 = vmatprep.mubr.bf16.mxu0 0
        %2773 = vmatmul.mubr.bf16.gmra.mrb[0].mxu0 %v2716
        %v2774 = vpop.f32.mrb[0].mxu0
        %v2775 = vadd.f32 0.0, %v2774
        %v2776 = vpop.f32.mrb[0].mxu0
        %v2777 = vpop.f32.mrb[0].mxu0
        %v2778 = vadd.f32 0.0, %v2777
        %v2779 = vpop.f32.mrb[0].mxu0
        %2780 = vmatprep.mubr.bf16.mxu0 0
        %2781 = vmatmul.mubr.bf16.gmra.mrb[0].mxu0 %v2719
        %v2782 = vpop.f32.mrb[0].mxu0
        %v2783 = vadd.f32 0.0, %v2782
        %v2784 = vpop.f32.mrb[0].mxu0
        %v2785 = vpop.f32.mrb[0].mxu0
        %v2786 = vadd.f32 0.0, %v2785
        %v2787 = vpop.f32.mrb[0].mxu0
        %2788 = vmatprep.mubr.bf16.mxu0 0
        %2789 = vmatmul.mubr.bf16.gmra.mrb[0].mxu0 %v2722
        %v2790 = vpop.f32.mrb[0].mxu0
        %v2791 = vadd.f32 0.0, %v2790
        %v2792 = vpop.f32.mrb[0].mxu0
        %v2793 = vpop.f32.mrb[0].mxu0
        %v2794 = vadd.f32 0.0, %v2793
        %v2795 = vpop.f32.mrb[0].mxu0
        %2796 = vdwg.mxu0
        %v2799 = vunpack.c.l.b16 %v422
        %v2800 = vunpack.c.l.b16 %v423
        %v2801 = vpack.c.b16 %v2800, %v2799
        %v2804 = vsel %vm2708, %v2692, 0
        %v2807 = vsel %vm2708, %v2693, 0
        %v2810 = vsel %vm2708, %v2694, 0
        %v2813 = vsel %vm2708, %v2695, 0
        %v2816 = vsel %vm2708, %v2696, 0
        %2818 = vmatprep.subr.bf16.mxu0 0
        %2819 = vmatpush1.bf16.msra.mxu0 %v2801
        %2820 = vmatprep.subr.bf16.mxu0 0
        %2821 = vmatpush1.bf16.msra.mxu0 0
        %2822 = vmatprep.subr.bf16.mxu0 0
        %2823 = vmatpush1.bf16.msra.mxu0 0
        %2824 = vmatprep.subr.bf16.mxu0 0
        %2825 = vmatpush1.bf16.msra.mxu0 0
        %2826 = vmatprep.subr.bf16.mxu0 0
        %2827 = vmatpush1.bf16.msra.mxu0 0
        %2828 = vmatprep.subr.bf16.mxu0 0
        %2829 = vmatpush1.bf16.msra.mxu0 0
        %2830 = vmatprep.subr.bf16.mxu0 0
        %2831 = vmatpush1.bf16.msra.mxu0 0
        %2832 = vmatprep.subr.bf16.mxu0 0
        %2833 = vmatpush1.bf16.msra.mxu0 0
        %2834 = vmatprep.subr.bf16.mxu0 0
        %2835 = vmatpush1.bf16.msra.mxu0 0
        %2836 = vmatprep.subr.bf16.mxu0 0
        %2837 = vmatpush1.bf16.msra.mxu0 0
        %2838 = vmatprep.subr.bf16.mxu0 0
        %2839 = vmatpush1.bf16.msra.mxu0 0
        %2840 = vmatprep.subr.bf16.mxu0 0
        %2841 = vmatpush1.bf16.msra.mxu0 0
        %2842 = vmatprep.subr.bf16.mxu0 0
        %2843 = vmatpush1.bf16.msra.mxu0 0
        %2844 = vmatprep.subr.bf16.mxu0 0
        %2845 = vmatpush1.bf16.msra.mxu0 0
        %2846 = vmatprep.subr.bf16.mxu0 0
        %2847 = vmatpush1.bf16.msra.mxu0 0
        %2848 = vmatprep.subr.bf16.mxu0 0
        %2849 = vmatpush1.bf16.msra.mxu0 0
        %2850 = vmatprep.mubr.bf16.mxu0 0
        %2851 = vmatmul.mubr.bf16.gmra.mrb[0].mxu0 %v2804
        %v2852 = vpop.f32.mrb[0].mxu0
        %v2853 = vadd.f32 %v2759, %v2852
        %v2854 = vpop.f32.mrb[0].mxu0
        %v2855 = vpop.f32.mrb[0].mxu0
        %v2856 = vadd.f32 %v2762, %v2855
        %v2857 = vpop.f32.mrb[0].mxu0
        %2858 = vmatprep.mubr.bf16.mxu0 0
        %2859 = vmatmul.mubr.bf16.gmra.mrb[0].mxu0 %v2807
        %v2860 = vpop.f32.mrb[0].mxu0
        %v2861 = vadd.f32 %v2767, %v2860
        %v2862 = vpop.f32.mrb[0].mxu0
        %v2863 = vpop.f32.mrb[0].mxu0
        %v2864 = vadd.f32 %v2770, %v2863
        %v2865 = vpop.f32.mrb[0].mxu0
        %2866 = vmatprep.mubr.bf16.mxu0 0
        %2867 = vmatmul.mubr.bf16.gmra.mrb[0].mxu0 %v2810
        %v2868 = vpop.f32.mrb[0].mxu0
        %v2869 = vadd.f32 %v2775, %v2868
        %v2870 = vpop.f32.mrb[0].mxu0
        %v2871 = vpop.f32.mrb[0].mxu0
        %v2872 = vadd.f32 %v2778, %v2871
        %v2873 = vpop.f32.mrb[0].mxu0
        %2874 = vmatprep.mubr.bf16.mxu0 0
        %2875 = vmatmul.mubr.bf16.gmra.mrb[0].mxu0 %v2813
        %v2876 = vpop.f32.mrb[0].mxu0
        %v2877 = vadd.f32 %v2783, %v2876
        %v2878 = vpop.f32.mrb[0].mxu0
        %v2879 = vpop.f32.mrb[0].mxu0
        %v2880 = vadd.f32 %v2786, %v2879
        %v2881 = vpop.f32.mrb[0].mxu0
        %2882 = vmatprep.mubr.bf16.mxu0 0
        %2883 = vmatmul.mubr.bf16.gmra.mrb[0].mxu0 %v2816
        %v2884 = vpop.f32.mrb[0].mxu0
        %v2885 = vadd.f32 %v2791, %v2884
        %v2886 = vpop.f32.mrb[0].mxu0
        %v2887 = vpop.f32.mrb[0].mxu0
        %v2888 = vadd.f32 %v2794, %v2887
        %v2889 = vpop.f32.mrb[0].mxu0
        %2890 = vdwg.mxu0
        %vm2891 = vsmask.f32 7424
        %v2892 = vshrl.u32 %v2692, 16
        %v2894 = vshll.u32 %v2692, 16
        %v2896 = vrot.slane %v2894, 1
        %v2897 = vor.u32 %v2892, %v2896
        %v2898 = vshll.u32 %v2693, 16
        %v2900 = vrot.slane %v2898, 1
        %v2901 = vsel %vm2891, %v2897, %v2900
        %v2902 = vshrl.u32 %v2693, 16
        %v2904 = vor.u32 %v2902, %v2900
        %v2905 = vshll.u32 %v2694, 16
        %v2907 = vrot.slane %v2905, 1
        %v2908 = vsel %vm2891, %v2904, %v2907
        %v2909 = vshrl.u32 %v2694, 16
        %v2911 = vor.u32 %v2909, %v2907
        %v2912 = vshll.u32 %v2695, 16
        %v2914 = vrot.slane %v2912, 1
        %v2915 = vsel %vm2891, %v2911, %v2914
        %v2916 = vshrl.u32 %v2695, 16
        %v2918 = vor.u32 %v2916, %v2914
        %v2919 = vshll.u32 %v2696, 16
        %v2921 = vrot.slane %v2919, 1
        %v2922 = vsel %vm2891, %v2918, %v2921
        %v2923 = vshrl.u32 %v2696, 16
        %v2925 = vor.u32 %v2923, %v2921
        %v2928 = vunpack.c.l.b16 %v426
        %v2929 = vunpack.c.l.b16 %v427
        %v2930 = vpack.c.b16 %v2929, %v2928
        %v2933 = vsel %vm2708, %v2901, 0
        %v2936 = vsel %vm2708, %v2908, 0
        %v2939 = vsel %vm2708, %v2915, 0
        %v2942 = vsel %vm2708, %v2922, 0
        %v2945 = vsel %vm2708, %v2925, 0
        %2947 = vmatprep.subr.bf16.mxu0 0
        %2948 = vmatpush1.bf16.msra.mxu0 %v2930
        %2949 = vmatprep.subr.bf16.mxu0 0
        %2950 = vmatpush1.bf16.msra.mxu0 0
        %2951 = vmatprep.subr.bf16.mxu0 0
        %2952 = vmatpush1.bf16.msra.mxu0 0
        %2953 = vmatprep.subr.bf16.mxu0 0
        %2954 = vmatpush1.bf16.msra.mxu0 0
        %2955 = vmatprep.subr.bf16.mxu0 0
        %2956 = vmatpush1.bf16.msra.mxu0 0
        %2957 = vmatprep.subr.bf16.mxu0 0
        %2958 = vmatpush1.bf16.msra.mxu0 0
        %2959 = vmatprep.subr.bf16.mxu0 0
        %2960 = vmatpush1.bf16.msra.mxu0 0
        %2961 = vmatprep.subr.bf16.mxu0 0
        %2962 = vmatpush1.bf16.msra.mxu0 0
        %2963 = vmatprep.subr.bf16.mxu0 0
        %2964 = vmatpush1.bf16.msra.mxu0 0
        %2965 = vmatprep.subr.bf16.mxu0 0
        %2966 = vmatpush1.bf16.msra.mxu0 0
        %2967 = vmatprep.subr.bf16.mxu0 0
        %2968 = vmatpush1.bf16.msra.mxu0 0
        %2969 = vmatprep.subr.bf16.mxu0 0
        %2970 = vmatpush1.bf16.msra.mxu0 0
        %2971 = vmatprep.subr.bf16.mxu0 0
        %2972 = vmatpush1.bf16.msra.mxu0 0
        %2973 = vmatprep.subr.bf16.mxu0 0
        %2974 = vmatpush1.bf16.msra.mxu0 0
        %2975 = vmatprep.subr.bf16.mxu0 0
        %2976 = vmatpush1.bf16.msra.mxu0 0
        %2977 = vmatprep.subr.bf16.mxu0 0
        %2978 = vmatpush1.bf16.msra.mxu0 0
        %2979 = vmatprep.mubr.bf16.mxu0 0
        %2980 = vmatmul.mubr.bf16.gmra.mrb[0].mxu0 %v2933
        %v2981 = vpop.f32.mrb[0].mxu0
        %v2982 = vadd.f32 0.0, %v2981
        %v2983 = vpop.f32.mrb[0].mxu0
        %v2984 = vpop.f32.mrb[0].mxu0
        %v2985 = vadd.f32 0.0, %v2984
        %v2986 = vpop.f32.mrb[0].mxu0
        %2987 = vmatprep.mubr.bf16.mxu0 0
        %2988 = vmatmul.mubr.bf16.gmra.mrb[0].mxu0 %v2936
        %v2989 = vpop.f32.mrb[0].mxu0
        %v2990 = vadd.f32 0.0, %v2989
        %v2991 = vpop.f32.mrb[0].mxu0
        %v2992 = vpop.f32.mrb[0].mxu0
        %v2993 = vadd.f32 0.0, %v2992
        %v2994 = vpop.f32.mrb[0].mxu0
        %2995 = vmatprep.mubr.bf16.mxu0 0
        %2996 = vmatmul.mubr.bf16.gmra.mrb[0].mxu0 %v2939
        %v2997 = vpop.f32.mrb[0].mxu0
        %v2998 = vadd.f32 0.0, %v2997
        %v2999 = vpop.f32.mrb[0].mxu0
        %v3000 = vpop.f32.mrb[0].mxu0
        %v3001 = vadd.f32 0.0, %v3000
        %v3002 = vpop.f32.mrb[0].mxu0
        %3003 = vmatprep.mubr.bf16.mxu0 0
        %3004 = vmatmul.mubr.bf16.gmra.mrb[0].mxu0 %v2942
        %v3005 = vpop.f32.mrb[0].mxu0
        %v3006 = vadd.f32 0.0, %v3005
        %v3007 = vpop.f32.mrb[0].mxu0
        %v3008 = vpop.f32.mrb[0].mxu0
        %v3009 = vadd.f32 0.0, %v3008
        %v3010 = vpop.f32.mrb[0].mxu0
        %3011 = vmatprep.mubr.bf16.mxu0 0
        %3012 = vmatmul.mubr.bf16.gmra.mrb[0].mxu0 %v2945
        %v3013 = vpop.f32.mrb[0].mxu0
        %v3014 = vadd.f32 0.0, %v3013
        %v3015 = vpop.f32.mrb[0].mxu0
        %v3016 = vpop.f32.mrb[0].mxu0
        %v3017 = vadd.f32 0.0, %v3016
        %v3018 = vpop.f32.mrb[0].mxu0
        %3019 = vdwg.mxu0
        %v3020 = vadd.f32 %v2853, %v2982
        %v3021 = vadd.f32 %v2856, %v2985
        %v3022 = vadd.f32 %v2861, %v2990
        %v3023 = vadd.f32 %v2864, %v2993
        %v3024 = vadd.f32 %v2869, %v2998
        %v3025 = vadd.f32 %v2872, %v3001
        %v3026 = vadd.f32 %v2877, %v3006
        %v3027 = vadd.f32 %v2880, %v3009
        %v3028 = vadd.f32 %v2885, %v3014
        %v3029 = vadd.f32 %v2888, %v3017
        %v3030 = vshrl.u32 %v2697, 16
        %v3032 = vshll.u32 %v2697, 16
        %v3034 = vrot.slane %v3032, 1
        %v3035 = vor.u32 %v3030, %v3034
        %v3036 = vshll.u32 %v2698, 16
        %v3038 = vrot.slane %v3036, 1
        %v3039 = vsel %vm2891, %v3035, %v3038
        %v3040 = vshrl.u32 %v2698, 16
        %v3042 = vor.u32 %v3040, %v3038
        %v3043 = vshll.u32 %v2699, 16
        %v3045 = vrot.slane %v3043, 1
        %v3046 = vsel %vm2891, %v3042, %v3045
        %v3047 = vshrl.u32 %v2699, 16
        %v3049 = vor.u32 %v3047, %v3045
        %v3050 = vshll.u32 %v2700, 16
        %v3052 = vrot.slane %v3050, 1
        %v3053 = vsel %vm2891, %v3049, %v3052
        %v3054 = vshrl.u32 %v2700, 16
        %v3056 = vor.u32 %v3054, %v3052
        %v3057 = vshll.u32 %v2701, 16
        %v3059 = vrot.slane %v3057, 1
        %v3060 = vsel %vm2891, %v3056, %v3059
        %v3061 = vshrl.u32 %v2701, 16
        %v3063 = vor.u32 %v3061, %v3059
        %v3066 = vunpack.c.l.b16 %v428
        %v3067 = vunpack.c.l.b16 %v429
        %v3068 = vpack.c.b16 %v3067, %v3066
        %v3071 = vsel %vm2708, %v3039, 0
        %v3074 = vsel %vm2708, %v3046, 0
        %v3077 = vsel %vm2708, %v3053, 0
        %v3080 = vsel %vm2708, %v3060, 0
        %v3083 = vsel %vm2708, %v3063, 0
        %3085 = vmatprep.subr.bf16.mxu0 0
        %3086 = vmatpush1.bf16.msra.mxu0 %v3068
        %3087 = vmatprep.subr.bf16.mxu0 0
        %3088 = vmatpush1.bf16.msra.mxu0 0
        %3089 = vmatprep.subr.bf16.mxu0 0
        %3090 = vmatpush1.bf16.msra.mxu0 0
        %3091 = vmatprep.subr.bf16.mxu0 0
        %3092 = vmatpush1.bf16.msra.mxu0 0
        %3093 = vmatprep.subr.bf16.mxu0 0
        %3094 = vmatpush1.bf16.msra.mxu0 0
        %3095 = vmatprep.subr.bf16.mxu0 0
        %3096 = vmatpush1.bf16.msra.mxu0 0
        %3097 = vmatprep.subr.bf16.mxu0 0
        %3098 = vmatpush1.bf16.msra.mxu0 0
        %3099 = vmatprep.subr.bf16.mxu0 0
        %3100 = vmatpush1.bf16.msra.mxu0 0
        %3101 = vmatprep.subr.bf16.mxu0 0
        %3102 = vmatpush1.bf16.msra.mxu0 0
        %3103 = vmatprep.subr.bf16.mxu0 0
        %3104 = vmatpush1.bf16.msra.mxu0 0
        %3105 = vmatprep.subr.bf16.mxu0 0
        %3106 = vmatpush1.bf16.msra.mxu0 0
        %3107 = vmatprep.subr.bf16.mxu0 0
        %3108 = vmatpush1.bf16.msra.mxu0 0
        %3109 = vmatprep.subr.bf16.mxu0 0
        %3110 = vmatpush1.bf16.msra.mxu0 0
        %3111 = vmatprep.subr.bf16.mxu0 0
        %3112 = vmatpush1.bf16.msra.mxu0 0
        %3113 = vmatprep.subr.bf16.mxu0 0
        %3114 = vmatpush1.bf16.msra.mxu0 0
        %3115 = vmatprep.subr.bf16.mxu0 0
        %3116 = vmatpush1.bf16.msra.mxu0 0
        %3117 = vmatprep.mubr.bf16.mxu0 0
        %3118 = vmatmul.mubr.bf16.gmra.mrb[0].mxu0 %v3071
        %v3119 = vpop.f32.mrb[0].mxu0
        %v3120 = vadd.f32 0.0, %v3119
        %v3121 = vpop.f32.mrb[0].mxu0
        %v3122 = vpop.f32.mrb[0].mxu0
        %v3123 = vadd.f32 0.0, %v3122
        %v3124 = vpop.f32.mrb[0].mxu0
        %3125 = vmatprep.mubr.bf16.mxu0 0
        %3126 = vmatmul.mubr.bf16.gmra.mrb[0].mxu0 %v3074
        %v3127 = vpop.f32.mrb[0].mxu0
        %v3128 = vadd.f32 0.0, %v3127
        %v3129 = vpop.f32.mrb[0].mxu0
        %v3130 = vpop.f32.mrb[0].mxu0
        %v3131 = vadd.f32 0.0, %v3130
        %v3132 = vpop.f32.mrb[0].mxu0
        %3133 = vmatprep.mubr.bf16.mxu0 0
        %3134 = vmatmul.mubr.bf16.gmra.mrb[0].mxu0 %v3077
        %v3135 = vpop.f32.mrb[0].mxu0
        %v3136 = vadd.f32 0.0, %v3135
        %v3137 = vpop.f32.mrb[0].mxu0
        %v3138 = vpop.f32.mrb[0].mxu0
        %v3139 = vadd.f32 0.0, %v3138
        %v3140 = vpop.f32.mrb[0].mxu0
        %3141 = vmatprep.mubr.bf16.mxu0 0
        %3142 = vmatmul.mubr.bf16.gmra.mrb[0].mxu0 %v3080
        %v3143 = vpop.f32.mrb[0].mxu0
        %v3144 = vadd.f32 0.0, %v3143
        %v3145 = vpop.f32.mrb[0].mxu0
        %v3146 = vpop.f32.mrb[0].mxu0
        %v3147 = vadd.f32 0.0, %v3146
        %v3148 = vpop.f32.mrb[0].mxu0
        %3149 = vmatprep.mubr.bf16.mxu0 0
        %3150 = vmatmul.mubr.bf16.gmra.mrb[0].mxu0 %v3083
        %v3151 = vpop.f32.mrb[0].mxu0
        %v3152 = vadd.f32 0.0, %v3151
        %v3153 = vpop.f32.mrb[0].mxu0
        %v3154 = vpop.f32.mrb[0].mxu0
        %v3155 = vadd.f32 0.0, %v3154
        %v3156 = vpop.f32.mrb[0].mxu0
        %3157 = vdwg.mxu0
        %v3158 = vadd.f32 %v3020, %v3120
        %v3159 = vadd.f32 %v3021, %v3123
        %v3160 = vadd.f32 %v3022, %v3128
        %v3161 = vadd.f32 %v3023, %v3131
        %v3162 = vadd.f32 %v3024, %v3136
        %v3163 = vadd.f32 %v3025, %v3139
        %v3164 = vadd.f32 %v3026, %v3144
        %v3165 = vadd.f32 %v3027, %v3147
        %v3166 = vadd.f32 %v3028, %v3152
        %v3167 = vadd.f32 %v3029, %v3155
        %vm3173 = vcmask 1046528
        %v3174 = vrot.slane %v2692, 1
        %v3175 = vrot.slane %v2693, 1
        %v3176 = vsel %vm3173, %v3174, %v3175
        %v3177 = vrot.slane %v2694, 1
        %v3178 = vsel %vm3173, %v3175, %v3177
        %v3179 = vrot.slane %v2695, 1
        %v3180 = vsel %vm3173, %v3177, %v3179
        %v3181 = vrot.slane %v2696, 1
        %v3182 = vsel %vm3173, %v3179, %v3181
        %v3185 = vunpack.c.l.b16 %v430
        %v3186 = vunpack.c.l.b16 %v431
        %v3187 = vpack.c.b16 %v3186, %v3185
        %v3190 = vsel %vm2708, %v3176, 0
        %v3193 = vsel %vm2708, %v3178, 0
        %v3196 = vsel %vm2708, %v3180, 0
        %v3199 = vsel %vm2708, %v3182, 0
        %v3202 = vsel %vm2708, %v3181, 0
        %3204 = vmatprep.subr.bf16.mxu0 0
        %3205 = vmatpush1.bf16.msra.mxu0 %v3187
        %3206 = vmatprep.subr.bf16.mxu0 0
        %3207 = vmatpush1.bf16.msra.mxu0 0
        %3208 = vmatprep.subr.bf16.mxu0 0
        %3209 = vmatpush1.bf16.msra.mxu0 0
        %3210 = vmatprep.subr.bf16.mxu0 0
        %3211 = vmatpush1.bf16.msra.mxu0 0
        %3212 = vmatprep.subr.bf16.mxu0 0
        %3213 = vmatpush1.bf16.msra.mxu0 0
        %3214 = vmatprep.subr.bf16.mxu0 0
        %3215 = vmatpush1.bf16.msra.mxu0 0
        %3216 = vmatprep.subr.bf16.mxu0 0
        %3217 = vmatpush1.bf16.msra.mxu0 0
        %3218 = vmatprep.subr.bf16.mxu0 0
        %3219 = vmatpush1.bf16.msra.mxu0 0
        %3220 = vmatprep.subr.bf16.mxu0 0
        %3221 = vmatpush1.bf16.msra.mxu0 0
        %3222 = vmatprep.subr.bf16.mxu0 0
        %3223 = vmatpush1.bf16.msra.mxu0 0
        %3224 = vmatprep.subr.bf16.mxu0 0
        %3225 = vmatpush1.bf16.msra.mxu0 0
        %3226 = vmatprep.subr.bf16.mxu0 0
        %3227 = vmatpush1.bf16.msra.mxu0 0
        %3228 = vmatprep.subr.bf16.mxu0 0
        %3229 = vmatpush1.bf16.msra.mxu0 0
        %3230 = vmatprep.subr.bf16.mxu0 0
        %3231 = vmatpush1.bf16.msra.mxu0 0
        %3232 = vmatprep.subr.bf16.mxu0 0
        %3233 = vmatpush1.bf16.msra.mxu0 0
        %3234 = vmatprep.subr.bf16.mxu0 0
        %3235 = vmatpush1.bf16.msra.mxu0 0
        %3236 = vmatprep.mubr.bf16.mxu0 0
        %3237 = vmatmul.mubr.bf16.gmra.mrb[0].mxu0 %v3190
        %v3238 = vpop.f32.mrb[0].mxu0
        %v3239 = vadd.f32 0.0, %v3238
        %v3240 = vpop.f32.mrb[0].mxu0
        %v3241 = vpop.f32.mrb[0].mxu0
        %v3242 = vadd.f32 0.0, %v3241
        %v3243 = vpop.f32.mrb[0].mxu0
        %3244 = vmatprep.mubr.bf16.mxu0 0
        %3245 = vmatmul.mubr.bf16.gmra.mrb[0].mxu0 %v3193
        %v3246 = vpop.f32.mrb[0].mxu0
        %v3247 = vadd.f32 0.0, %v3246
        %v3248 = vpop.f32.mrb[0].mxu0
        %v3249 = vpop.f32.mrb[0].mxu0
        %v3250 = vadd.f32 0.0, %v3249
        %v3251 = vpop.f32.mrb[0].mxu0
        %3252 = vmatprep.mubr.bf16.mxu0 0
        %3253 = vmatmul.mubr.bf16.gmra.mrb[0].mxu0 %v3196
        %v3254 = vpop.f32.mrb[0].mxu0
        %v3255 = vadd.f32 0.0, %v3254
        %v3256 = vpop.f32.mrb[0].mxu0
        %v3257 = vpop.f32.mrb[0].mxu0
        %v3258 = vadd.f32 0.0, %v3257
        %v3259 = vpop.f32.mrb[0].mxu0
        %3260 = vmatprep.mubr.bf16.mxu0 0
        %3261 = vmatmul.mubr.bf16.gmra.mrb[0].mxu0 %v3199
        %v3262 = vpop.f32.mrb[0].mxu0
        %v3263 = vadd.f32 0.0, %v3262
        %v3264 = vpop.f32.mrb[0].mxu0
        %v3265 = vpop.f32.mrb[0].mxu0
        %v3266 = vadd.f32 0.0, %v3265
        %v3267 = vpop.f32.mrb[0].mxu0
        %3268 = vmatprep.mubr.bf16.mxu0 0
        %3269 = vmatmul.mubr.bf16.gmra.mrb[0].mxu0 %v3202
        %v3270 = vpop.f32.mrb[0].mxu0
        %v3271 = vadd.f32 0.0, %v3270
        %v3272 = vpop.f32.mrb[0].mxu0
        %v3273 = vpop.f32.mrb[0].mxu0
        %v3274 = vadd.f32 0.0, %v3273
        %v3275 = vpop.f32.mrb[0].mxu0
        %3276 = vdwg.mxu0
        %v3277 = vadd.f32 %v3158, %v3239
        %v3278 = vadd.f32 %v3159, %v3242
        %v3279 = vadd.f32 %v3160, %v3247
        %v3280 = vadd.f32 %v3161, %v3250
        %v3281 = vadd.f32 %v3162, %v3255
        %v3282 = vadd.f32 %v3163, %v3258
        %v3283 = vadd.f32 %v3164, %v3263
        %v3284 = vadd.f32 %v3165, %v3266
        %v3285 = vadd.f32 %v3166, %v3271
        %v3286 = vadd.f32 %v3167, %v3274
        %v3292 = vrot.slane %v2697, 1
        %v3293 = vrot.slane %v2698, 1
        %v3294 = vsel %vm3173, %v3292, %v3293
        %v3295 = vrot.slane %v2699, 1
        %v3296 = vsel %vm3173, %v3293, %v3295
        %v3297 = vrot.slane %v2700, 1
        %v3298 = vsel %vm3173, %v3295, %v3297
        %v3299 = vrot.slane %v2701, 1
        %v3300 = vsel %vm3173, %v3297, %v3299
        %v3303 = vunpack.c.l.b16 %v432
        %v3304 = vunpack.c.l.b16 %v433
        %v3305 = vpack.c.b16 %v3304, %v3303
        %v3308 = vsel %vm2708, %v3294, 0
        %v3311 = vsel %vm2708, %v3296, 0
        %v3314 = vsel %vm2708, %v3298, 0
        %v3317 = vsel %vm2708, %v3300, 0
        %v3320 = vsel %vm2708, %v3299, 0
        %3322 = vmatprep.subr.bf16.mxu0 0
        %3323 = vmatpush1.bf16.msra.mxu0 %v3305
        %3324 = vmatprep.subr.bf16.mxu0 0
        %3325 = vmatpush1.bf16.msra.mxu0 0
        %3326 = vmatprep.subr.bf16.mxu0 0
        %3327 = vmatpush1.bf16.msra.mxu0 0
        %3328 = vmatprep.subr.bf16.mxu0 0
        %3329 = vmatpush1.bf16.msra.mxu0 0
        %3330 = vmatprep.subr.bf16.mxu0 0
        %3331 = vmatpush1.bf16.msra.mxu0 0
        %3332 = vmatprep.subr.bf16.mxu0 0
        %3333 = vmatpush1.bf16.msra.mxu0 0
        %3334 = vmatprep.subr.bf16.mxu0 0
        %3335 = vmatpush1.bf16.msra.mxu0 0
        %3336 = vmatprep.subr.bf16.mxu0 0
        %3337 = vmatpush1.bf16.msra.mxu0 0
        %3338 = vmatprep.subr.bf16.mxu0 0
        %3339 = vmatpush1.bf16.msra.mxu0 0
        %3340 = vmatprep.subr.bf16.mxu0 0
        %3341 = vmatpush1.bf16.msra.mxu0 0
        %3342 = vmatprep.subr.bf16.mxu0 0
        %3343 = vmatpush1.bf16.msra.mxu0 0
        %3344 = vmatprep.subr.bf16.mxu0 0
        %3345 = vmatpush1.bf16.msra.mxu0 0
        %3346 = vmatprep.subr.bf16.mxu0 0
        %3347 = vmatpush1.bf16.msra.mxu0 0
        %3348 = vmatprep.subr.bf16.mxu0 0
        %3349 = vmatpush1.bf16.msra.mxu0 0
        %3350 = vmatprep.subr.bf16.mxu0 0
        %3351 = vmatpush1.bf16.msra.mxu0 0
        %3352 = vmatprep.subr.bf16.mxu0 0
        %3353 = vmatpush1.bf16.msra.mxu0 0
        %3354 = vmatprep.mubr.bf16.mxu0 0
        %3355 = vmatmul.mubr.bf16.gmra.mrb[0].mxu0 %v3308
        %v3356 = vpop.f32.mrb[0].mxu0
        %v3357 = vadd.f32 0.0, %v3356
        %v3358 = vpop.f32.mrb[0].mxu0
        %v3359 = vpop.f32.mrb[0].mxu0
        %v3360 = vadd.f32 0.0, %v3359
        %v3361 = vpop.f32.mrb[0].mxu0
        %3362 = vmatprep.mubr.bf16.mxu0 0
        %3363 = vmatmul.mubr.bf16.gmra.mrb[0].mxu0 %v3311
        %v3364 = vpop.f32.mrb[0].mxu0
        %v3365 = vadd.f32 0.0, %v3364
        %v3366 = vpop.f32.mrb[0].mxu0
        %v3367 = vpop.f32.mrb[0].mxu0
        %v3368 = vadd.f32 0.0, %v3367
        %v3369 = vpop.f32.mrb[0].mxu0
        %3370 = vmatprep.mubr.bf16.mxu0 0
        %3371 = vmatmul.mubr.bf16.gmra.mrb[0].mxu0 %v3314
        %v3372 = vpop.f32.mrb[0].mxu0
        %v3373 = vadd.f32 0.0, %v3372
        %v3374 = vpop.f32.mrb[0].mxu0
        %v3375 = vpop.f32.mrb[0].mxu0
        %v3376 = vadd.f32 0.0, %v3375
        %v3377 = vpop.f32.mrb[0].mxu0
        %3378 = vmatprep.mubr.bf16.mxu0 0
        %3379 = vmatmul.mubr.bf16.gmra.mrb[0].mxu0 %v3317
        %v3380 = vpop.f32.mrb[0].mxu0
        %v3381 = vadd.f32 0.0, %v3380
        %v3382 = vpop.f32.mrb[0].mxu0
        %v3383 = vpop.f32.mrb[0].mxu0
        %v3384 = vadd.f32 0.0, %v3383
        %v3385 = vpop.f32.mrb[0].mxu0
        %3386 = vmatprep.mubr.bf16.mxu0 0
        %3387 = vmatmul.mubr.bf16.gmra.mrb[0].mxu0 %v3320
        %v3388 = vpop.f32.mrb[0].mxu0
        %v3389 = vadd.f32 0.0, %v3388
        %v3390 = vpop.f32.mrb[0].mxu0
        %v3391 = vpop.f32.mrb[0].mxu0
        %v3392 = vadd.f32 0.0, %v3391
        %v3393 = vpop.f32.mrb[0].mxu0
        %3394 = vdwg.mxu0
        %v3395 = vadd.f32 %v3277, %v3357
        %v3396 = vadd.f32 %v3278, %v3360
        %v3397 = vadd.f32 %v3279, %v3365
        %v3398 = vadd.f32 %v3280, %v3368
        %v3399 = vadd.f32 %v3281, %v3373
        %v3400 = vadd.f32 %v3282, %v3376
        %v3401 = vadd.f32 %v3283, %v3381
        %v3402 = vadd.f32 %v3284, %v3384
        %v3403 = vadd.f32 %v3285, %v3389
        %v3404 = vadd.f32 %v3286, %v3392
        %vm3405 = vsmask.f32 6400
        %v3406 = vrot.slane %v2892, 1
        %v3407 = vrot.slane %v2894, 2
        %v3408 = vor.u32 %v3406, %v3407
        %v3409 = vrot.slane %v2902, 1
        %v3410 = vrot.slane %v2898, 2
        %v3411 = vor.u32 %v3409, %v3410
        %v3412 = vsel %vm3405, %v3408, %v3411
        %v3413 = vrot.slane %v2909, 1
        %v3414 = vrot.slane %v2905, 2
        %v3415 = vor.u32 %v3413, %v3414
        %v3416 = vsel %vm3405, %v3411, %v3415
        %v3417 = vrot.slane %v2916, 1
        %v3418 = vrot.slane %v2912, 2
        %v3419 = vor.u32 %v3417, %v3418
        %v3420 = vsel %vm3405, %v3415, %v3419
        %v3421 = vrot.slane %v2923, 1
        %v3422 = vrot.slane %v2919, 2
        %v3423 = vor.u32 %v3421, %v3422
        %v3424 = vsel %vm3405, %v3419, %v3423
        %v3427 = vunpack.c.l.b16 %v434
        %v3428 = vunpack.c.l.b16 %v435
        %v3429 = vpack.c.b16 %v3428, %v3427
        %v3432 = vsel %vm2708, %v3412, 0
        %v3435 = vsel %vm2708, %v3416, 0
        %v3438 = vsel %vm2708, %v3420, 0
        %v3441 = vsel %vm2708, %v3424, 0
        %v3444 = vsel %vm2708, %v3423, 0
        %3446 = vmatprep.subr.bf16.mxu0 0
        %3447 = vmatpush1.bf16.msra.mxu0 %v3429
        %3448 = vmatprep.subr.bf16.mxu0 0
        %3449 = vmatpush1.bf16.msra.mxu0 0
        %3450 = vmatprep.subr.bf16.mxu0 0
        %3451 = vmatpush1.bf16.msra.mxu0 0
        %3452 = vmatprep.subr.bf16.mxu0 0
        %3453 = vmatpush1.bf16.msra.mxu0 0
        %3454 = vmatprep.subr.bf16.mxu0 0
        %3455 = vmatpush1.bf16.msra.mxu0 0
        %3456 = vmatprep.subr.bf16.mxu0 0
        %3457 = vmatpush1.bf16.msra.mxu0 0
        %3458 = vmatprep.subr.bf16.mxu0 0
        %3459 = vmatpush1.bf16.msra.mxu0 0
        %3460 = vmatprep.subr.bf16.mxu0 0
        %3461 = vmatpush1.bf16.msra.mxu0 0
        %3462 = vmatprep.subr.bf16.mxu0 0
        %3463 = vmatpush1.bf16.msra.mxu0 0
        %3464 = vmatprep.subr.bf16.mxu0 0
        %3465 = vmatpush1.bf16.msra.mxu0 0
        %3466 = vmatprep.subr.bf16.mxu0 0
        %3467 = vmatpush1.bf16.msra.mxu0 0
        %3468 = vmatprep.subr.bf16.mxu0 0
        %3469 = vmatpush1.bf16.msra.mxu0 0
        %3470 = vmatprep.subr.bf16.mxu0 0
        %3471 = vmatpush1.bf16.msra.mxu0 0
        %3472 = vmatprep.subr.bf16.mxu0 0
        %3473 = vmatpush1.bf16.msra.mxu0 0
        %3474 = vmatprep.subr.bf16.mxu0 0
        %3475 = vmatpush1.bf16.msra.mxu0 0
        %3476 = vmatprep.subr.bf16.mxu0 0
        %3477 = vmatpush1.bf16.msra.mxu0 0
        %3478 = vmatprep.mubr.bf16.mxu0 0
        %3479 = vmatmul.mubr.bf16.gmra.mrb[0].mxu0 %v3432
        %v3480 = vpop.f32.mrb[0].mxu0
        %v3481 = vadd.f32 0.0, %v3480
        %v3482 = vpop.f32.mrb[0].mxu0
        %v3483 = vpop.f32.mrb[0].mxu0
        %v3484 = vadd.f32 0.0, %v3483
        %v3485 = vpop.f32.mrb[0].mxu0
        %3486 = vmatprep.mubr.bf16.mxu0 0
        %3487 = vmatmul.mubr.bf16.gmra.mrb[0].mxu0 %v3435
        %v3488 = vpop.f32.mrb[0].mxu0
        %v3489 = vadd.f32 0.0, %v3488
        %v3490 = vpop.f32.mrb[0].mxu0
        %v3491 = vpop.f32.mrb[0].mxu0
        %v3492 = vadd.f32 0.0, %v3491
        %v3493 = vpop.f32.mrb[0].mxu0
        %3494 = vmatprep.mubr.bf16.mxu0 0
        %3495 = vmatmul.mubr.bf16.gmra.mrb[0].mxu0 %v3438
        %v3496 = vpop.f32.mrb[0].mxu0
        %v3497 = vadd.f32 0.0, %v3496
        %v3498 = vpop.f32.mrb[0].mxu0
        %v3499 = vpop.f32.mrb[0].mxu0
        %v3500 = vadd.f32 0.0, %v3499
        %v3501 = vpop.f32.mrb[0].mxu0
        %3502 = vmatprep.mubr.bf16.mxu0 0
        %3503 = vmatmul.mubr.bf16.gmra.mrb[0].mxu0 %v3441
        %v3504 = vpop.f32.mrb[0].mxu0
        %v3505 = vadd.f32 0.0, %v3504
        %v3506 = vpop.f32.mrb[0].mxu0
        %v3507 = vpop.f32.mrb[0].mxu0
        %v3508 = vadd.f32 0.0, %v3507
        %v3509 = vpop.f32.mrb[0].mxu0
        %3510 = vmatprep.mubr.bf16.mxu0 0
        %3511 = vmatmul.mubr.bf16.gmra.mrb[0].mxu0 %v3444
        %v3512 = vpop.f32.mrb[0].mxu0
        %v3513 = vadd.f32 0.0, %v3512
        %v3514 = vpop.f32.mrb[0].mxu0
        %v3515 = vpop.f32.mrb[0].mxu0
        %v3516 = vadd.f32 0.0, %v3515
        %v3517 = vpop.f32.mrb[0].mxu0
        %3518 = vdwg.mxu0
        %v3519 = vadd.f32 %v3395, %v3481
        %v3520 = vadd.f32 %v3396, %v3484
        %v3521 = vadd.f32 %v3397, %v3489
        %v3522 = vadd.f32 %v3398, %v3492
        %v3523 = vadd.f32 %v3399, %v3497
        %v3524 = vadd.f32 %v3400, %v3500
        %v3525 = vadd.f32 %v3401, %v3505
        %v3526 = vadd.f32 %v3402, %v3508
        %v3527 = vadd.f32 %v3403, %v3513
        %v3528 = vadd.f32 %v3404, %v3516
        %v3529 = vrot.slane %v3030, 1
        %v3530 = vrot.slane %v3032, 2
        %v3531 = vor.u32 %v3529, %v3530
        %v3532 = vrot.slane %v3040, 1
        %v3533 = vrot.slane %v3036, 2
        %v3534 = vor.u32 %v3532, %v3533
        %v3535 = vsel %vm3405, %v3531, %v3534
        %v3536 = vrot.slane %v3047, 1
        %v3537 = vrot.slane %v3043, 2
        %v3538 = vor.u32 %v3536, %v3537
        %v3539 = vsel %vm3405, %v3534, %v3538
        %v3540 = vrot.slane %v3054, 1
        %v3541 = vrot.slane %v3050, 2
        %v3542 = vor.u32 %v3540, %v3541
        %v3543 = vsel %vm3405, %v3538, %v3542
        %v3544 = vrot.slane %v3061, 1
        %v3545 = vrot.slane %v3057, 2
        %v3546 = vor.u32 %v3544, %v3545
        %v3547 = vsel %vm3405, %v3542, %v3546
        %v3550 = vunpack.c.l.b16 %v436
        %v3551 = vunpack.c.l.b16 %v437
        %v3552 = vpack.c.b16 %v3551, %v3550
        %v3555 = vsel %vm2708, %v3535, 0
        %v3558 = vsel %vm2708, %v3539, 0
        %v3561 = vsel %vm2708, %v3543, 0
        %v3564 = vsel %vm2708, %v3547, 0
        %v3567 = vsel %vm2708, %v3546, 0
        %3569 = vmatprep.subr.bf16.mxu0 0
        %3570 = vmatpush1.bf16.msra.mxu0 %v3552
        %3571 = vmatprep.subr.bf16.mxu0 0
        %3572 = vmatpush1.bf16.msra.mxu0 0
        %3573 = vmatprep.subr.bf16.mxu0 0
        %3574 = vmatpush1.bf16.msra.mxu0 0
        %3575 = vmatprep.subr.bf16.mxu0 0
        %3576 = vmatpush1.bf16.msra.mxu0 0
        %3577 = vmatprep.subr.bf16.mxu0 0
        %3578 = vmatpush1.bf16.msra.mxu0 0
        %3579 = vmatprep.subr.bf16.mxu0 0
        %3580 = vmatpush1.bf16.msra.mxu0 0
        %3581 = vmatprep.subr.bf16.mxu0 0
        %3582 = vmatpush1.bf16.msra.mxu0 0
        %3583 = vmatprep.subr.bf16.mxu0 0
        %3584 = vmatpush1.bf16.msra.mxu0 0
        %3585 = vmatprep.subr.bf16.mxu0 0
        %3586 = vmatpush1.bf16.msra.mxu0 0
        %3587 = vmatprep.subr.bf16.mxu0 0
        %3588 = vmatpush1.bf16.msra.mxu0 0
        %3589 = vmatprep.subr.bf16.mxu0 0
        %3590 = vmatpush1.bf16.msra.mxu0 0
        %3591 = vmatprep.subr.bf16.mxu0 0
        %3592 = vmatpush1.bf16.msra.mxu0 0
        %3593 = vmatprep.subr.bf16.mxu0 0
        %3594 = vmatpush1.bf16.msra.mxu0 0
        %3595 = vmatprep.subr.bf16.mxu0 0
        %3596 = vmatpush1.bf16.msra.mxu0 0
        %3597 = vmatprep.subr.bf16.mxu0 0
        %3598 = vmatpush1.bf16.msra.mxu0 0
        %3599 = vmatprep.subr.bf16.mxu0 0
        %3600 = vmatpush1.bf16.msra.mxu0 0
        %3601 = vmatprep.mubr.bf16.mxu0 0
        %3602 = vmatmul.mubr.bf16.gmra.mrb[0].mxu0 %v3555
        %v3603 = vpop.f32.mrb[0].mxu0
        %v3604 = vadd.f32 0.0, %v3603
        %v3605 = vpop.f32.mrb[0].mxu0
        %v3606 = vpop.f32.mrb[0].mxu0
        %v3607 = vadd.f32 0.0, %v3606
        %v3608 = vpop.f32.mrb[0].mxu0
        %3609 = vmatprep.mubr.bf16.mxu0 0
        %3610 = vmatmul.mubr.bf16.gmra.mrb[0].mxu0 %v3558
        %v3611 = vpop.f32.mrb[0].mxu0
        %v3612 = vadd.f32 0.0, %v3611
        %v3613 = vpop.f32.mrb[0].mxu0
        %v3614 = vpop.f32.mrb[0].mxu0
        %v3615 = vadd.f32 0.0, %v3614
        %v3616 = vpop.f32.mrb[0].mxu0
        %3617 = vmatprep.mubr.bf16.mxu0 0
        %3618 = vmatmul.mubr.bf16.gmra.mrb[0].mxu0 %v3561
        %v3619 = vpop.f32.mrb[0].mxu0
        %v3620 = vadd.f32 0.0, %v3619
        %v3621 = vpop.f32.mrb[0].mxu0
        %v3622 = vpop.f32.mrb[0].mxu0
        %v3623 = vadd.f32 0.0, %v3622
        %v3624 = vpop.f32.mrb[0].mxu0
        %3625 = vmatprep.mubr.bf16.mxu0 0
        %3626 = vmatmul.mubr.bf16.gmra.mrb[0].mxu0 %v3564
        %v3627 = vpop.f32.mrb[0].mxu0
        %v3628 = vadd.f32 0.0, %v3627
        %v3629 = vpop.f32.mrb[0].mxu0
        %v3630 = vpop.f32.mrb[0].mxu0
        %v3631 = vadd.f32 0.0, %v3630
        %v3632 = vpop.f32.mrb[0].mxu0
        %3633 = vmatprep.mubr.bf16.mxu0 0
        %3634 = vmatmul.mubr.bf16.gmra.mrb[0].mxu0 %v3567
        %v3635 = vpop.f32.mrb[0].mxu0
        %v3636 = vadd.f32 0.0, %v3635
        %v3637 = vpop.f32.mrb[0].mxu0
        %v3638 = vpop.f32.mrb[0].mxu0
        %v3639 = vadd.f32 0.0, %v3638
        %v3640 = vpop.f32.mrb[0].mxu0
        %3641 = vdwg.mxu0
        %v3642 = vadd.f32 %v3519, %v3604
        %v3643 = vadd.f32 %v3520, %v3607
        %v3644 = vadd.f32 %v3521, %v3612
        %v3645 = vadd.f32 %v3522, %v3615
        %v3646 = vadd.f32 %v3523, %v3620
        %v3647 = vadd.f32 %v3524, %v3623
        %v3648 = vadd.f32 %v3525, %v3628
        %v3649 = vadd.f32 %v3526, %v3631
        %v3650 = vadd.f32 %v3527, %v3636
        %v3651 = vadd.f32 %v3528, %v3639
        %vm3652 = vcmask 1045504
        %v3653 = vrot.slane %v2692, 2
        %v3654 = vrot.slane %v2693, 2
        %v3655 = vsel %vm3652, %v3653, %v3654
        %v3656 = vrot.slane %v2694, 2
        %v3657 = vsel %vm3652, %v3654, %v3656
        %v3658 = vrot.slane %v2695, 2
        %v3659 = vsel %vm3652, %v3656, %v3658
        %v3660 = vrot.slane %v2696, 2
        %v3661 = vsel %vm3652, %v3658, %v3660
        %v3664 = vunpack.c.l.b16 %v438
        %v3665 = vunpack.c.l.b16 %v439
        %v3666 = vpack.c.b16 %v3665, %v3664
        %v3669 = vsel %vm2708, %v3655, 0
        %v3672 = vsel %vm2708, %v3657, 0
        %v3675 = vsel %vm2708, %v3659, 0
        %v3678 = vsel %vm2708, %v3661, 0
        %v3681 = vsel %vm2708, %v3660, 0
        %3683 = vmatprep.subr.bf16.mxu0 0
        %3684 = vmatpush1.bf16.msra.mxu0 %v3666
        %3685 = vmatprep.subr.bf16.mxu0 0
        %3686 = vmatpush1.bf16.msra.mxu0 0
        %3687 = vmatprep.subr.bf16.mxu0 0
        %3688 = vmatpush1.bf16.msra.mxu0 0
        %3689 = vmatprep.subr.bf16.mxu0 0
        %3690 = vmatpush1.bf16.msra.mxu0 0
        %3691 = vmatprep.subr.bf16.mxu0 0
        %3692 = vmatpush1.bf16.msra.mxu0 0
        %3693 = vmatprep.subr.bf16.mxu0 0
        %3694 = vmatpush1.bf16.msra.mxu0 0
        %3695 = vmatprep.subr.bf16.mxu0 0
        %3696 = vmatpush1.bf16.msra.mxu0 0
        %3697 = vmatprep.subr.bf16.mxu0 0
        %3698 = vmatpush1.bf16.msra.mxu0 0
        %3699 = vmatprep.subr.bf16.mxu0 0
        %3700 = vmatpush1.bf16.msra.mxu0 0
        %3701 = vmatprep.subr.bf16.mxu0 0
        %3702 = vmatpush1.bf16.msra.mxu0 0
        %3703 = vmatprep.subr.bf16.mxu0 0
        %3704 = vmatpush1.bf16.msra.mxu0 0
        %3705 = vmatprep.subr.bf16.mxu0 0
        %3706 = vmatpush1.bf16.msra.mxu0 0
        %3707 = vmatprep.subr.bf16.mxu0 0
        %3708 = vmatpush1.bf16.msra.mxu0 0
        %3709 = vmatprep.subr.bf16.mxu0 0
        %3710 = vmatpush1.bf16.msra.mxu0 0
        %3711 = vmatprep.subr.bf16.mxu0 0
        %3712 = vmatpush1.bf16.msra.mxu0 0
        %3713 = vmatprep.subr.bf16.mxu0 0
        %3714 = vmatpush1.bf16.msra.mxu0 0
        %3715 = vmatprep.mubr.bf16.mxu0 0
        %3716 = vmatmul.mubr.bf16.gmra.mrb[0].mxu0 %v3669
        %v3717 = vpop.f32.mrb[0].mxu0
        %v3718 = vadd.f32 0.0, %v3717
        %v3719 = vpop.f32.mrb[0].mxu0
        %v3720 = vpop.f32.mrb[0].mxu0
        %v3721 = vadd.f32 0.0, %v3720
        %v3722 = vpop.f32.mrb[0].mxu0
        %3723 = vmatprep.mubr.bf16.mxu0 0
        %3724 = vmatmul.mubr.bf16.gmra.mrb[0].mxu0 %v3672
        %v3725 = vpop.f32.mrb[0].mxu0
        %v3726 = vadd.f32 0.0, %v3725
        %v3727 = vpop.f32.mrb[0].mxu0
        %v3728 = vpop.f32.mrb[0].mxu0
        %v3729 = vadd.f32 0.0, %v3728
        %v3730 = vpop.f32.mrb[0].mxu0
        %3731 = vmatprep.mubr.bf16.mxu0 0
        %3732 = vmatmul.mubr.bf16.gmra.mrb[0].mxu0 %v3675
        %v3733 = vpop.f32.mrb[0].mxu0
        %v3734 = vadd.f32 0.0, %v3733
        %v3735 = vpop.f32.mrb[0].mxu0
        %v3736 = vpop.f32.mrb[0].mxu0
        %v3737 = vadd.f32 0.0, %v3736
        %v3738 = vpop.f32.mrb[0].mxu0
        %3739 = vmatprep.mubr.bf16.mxu0 0
        %3740 = vmatmul.mubr.bf16.gmra.mrb[0].mxu0 %v3678
        %v3741 = vpop.f32.mrb[0].mxu0
        %v3742 = vadd.f32 0.0, %v3741
        %v3743 = vpop.f32.mrb[0].mxu0
        %v3744 = vpop.f32.mrb[0].mxu0
        %v3745 = vadd.f32 0.0, %v3744
        %v3746 = vpop.f32.mrb[0].mxu0
        %3747 = vmatprep.mubr.bf16.mxu0 0
        %3748 = vmatmul.mubr.bf16.gmra.mrb[0].mxu0 %v3681
        %v3749 = vpop.f32.mrb[0].mxu0
        %v3750 = vadd.f32 0.0, %v3749
        %v3751 = vpop.f32.mrb[0].mxu0
        %v3752 = vpop.f32.mrb[0].mxu0
        %v3753 = vadd.f32 0.0, %v3752
        %v3754 = vpop.f32.mrb[0].mxu0
        %3755 = vdwg.mxu0
        %v3756 = vadd.f32 %v3642, %v3718
        %v3757 = vadd.f32 %v3643, %v3721
        %v3758 = vadd.f32 %v3644, %v3726
        %v3759 = vadd.f32 %v3645, %v3729
        %v3760 = vadd.f32 %v3646, %v3734
        %v3761 = vadd.f32 %v3647, %v3737
        %v3762 = vadd.f32 %v3648, %v3742
        %v3763 = vadd.f32 %v3649, %v3745
        %v3764 = vadd.f32 %v3650, %v3750
        %v3765 = vadd.f32 %v3651, %v3753
        %v3766 = vrot.slane %v2697, 2
        %v3767 = vrot.slane %v2698, 2
        %v3768 = vsel %vm3652, %v3766, %v3767
        %v3769 = vrot.slane %v2699, 2
        %v3770 = vsel %vm3652, %v3767, %v3769
        %v3771 = vrot.slane %v2700, 2
        %v3772 = vsel %vm3652, %v3769, %v3771
        %v3773 = vrot.slane %v2701, 2
        %v3774 = vsel %vm3652, %v3771, %v3773
        %v3777 = vunpack.c.l.b16 %v440
        %v3778 = vunpack.c.l.b16 %v441
        %v3779 = vpack.c.b16 %v3778, %v3777
        %v3782 = vsel %vm2708, %v3768, 0
        %v3785 = vsel %vm2708, %v3770, 0
        %v3788 = vsel %vm2708, %v3772, 0
        %v3791 = vsel %vm2708, %v3774, 0
        %v3794 = vsel %vm2708, %v3773, 0
        %3796 = vmatprep.subr.bf16.mxu0 0
        %3797 = vmatpush1.bf16.msra.mxu0 %v3779
        %3798 = vmatprep.subr.bf16.mxu0 0
        %3799 = vmatpush1.bf16.msra.mxu0 0
        %3800 = vmatprep.subr.bf16.mxu0 0
        %3801 = vmatpush1.bf16.msra.mxu0 0
        %3802 = vmatprep.subr.bf16.mxu0 0
        %3803 = vmatpush1.bf16.msra.mxu0 0
        %3804 = vmatprep.subr.bf16.mxu0 0
        %3805 = vmatpush1.bf16.msra.mxu0 0
        %3806 = vmatprep.subr.bf16.mxu0 0
        %3807 = vmatpush1.bf16.msra.mxu0 0
        %3808 = vmatprep.subr.bf16.mxu0 0
        %3809 = vmatpush1.bf16.msra.mxu0 0
        %3810 = vmatprep.subr.bf16.mxu0 0
        %3811 = vmatpush1.bf16.msra.mxu0 0
        %3812 = vmatprep.subr.bf16.mxu0 0
        %3813 = vmatpush1.bf16.msra.mxu0 0
        %3814 = vmatprep.subr.bf16.mxu0 0
        %3815 = vmatpush1.bf16.msra.mxu0 0
        %3816 = vmatprep.subr.bf16.mxu0 0
        %3817 = vmatpush1.bf16.msra.mxu0 0
        %3818 = vmatprep.subr.bf16.mxu0 0
        %3819 = vmatpush1.bf16.msra.mxu0 0
        %3820 = vmatprep.subr.bf16.mxu0 0
        %3821 = vmatpush1.bf16.msra.mxu0 0
        %3822 = vmatprep.subr.bf16.mxu0 0
        %3823 = vmatpush1.bf16.msra.mxu0 0
        %3824 = vmatprep.subr.bf16.mxu0 0
        %3825 = vmatpush1.bf16.msra.mxu0 0
        %3826 = vmatprep.subr.bf16.mxu0 0
        %3827 = vmatpush1.bf16.msra.mxu0 0
        %3828 = vmatprep.mubr.bf16.mxu0 0
        %3829 = vmatmul.mubr.bf16.gmra.mrb[0].mxu0 %v3782
        %v3830 = vpop.f32.mrb[0].mxu0
        %v3831 = vadd.f32 0.0, %v3830
        %v3832 = vpop.f32.mrb[0].mxu0
        %v3833 = vpop.f32.mrb[0].mxu0
        %v3834 = vadd.f32 0.0, %v3833
        %v3835 = vpop.f32.mrb[0].mxu0
        %3836 = vmatprep.mubr.bf16.mxu0 0
        %3837 = vmatmul.mubr.bf16.gmra.mrb[0].mxu0 %v3785
        %v3838 = vpop.f32.mrb[0].mxu0
        %v3839 = vadd.f32 0.0, %v3838
        %v3840 = vpop.f32.mrb[0].mxu0
        %v3841 = vpop.f32.mrb[0].mxu0
        %v3842 = vadd.f32 0.0, %v3841
        %v3843 = vpop.f32.mrb[0].mxu0
        %3844 = vmatprep.mubr.bf16.mxu0 0
        %3845 = vmatmul.mubr.bf16.gmra.mrb[0].mxu0 %v3788
        %v3846 = vpop.f32.mrb[0].mxu0
        %v3847 = vadd.f32 0.0, %v3846
        %v3848 = vpop.f32.mrb[0].mxu0
        %v3849 = vpop.f32.mrb[0].mxu0
        %v3850 = vadd.f32 0.0, %v3849
        %v3851 = vpop.f32.mrb[0].mxu0
        %3852 = vmatprep.mubr.bf16.mxu0 0
        %3853 = vmatmul.mubr.bf16.gmra.mrb[0].mxu0 %v3791
        %v3854 = vpop.f32.mrb[0].mxu0
        %v3855 = vadd.f32 0.0, %v3854
        %v3856 = vpop.f32.mrb[0].mxu0
        %v3857 = vpop.f32.mrb[0].mxu0
        %v3858 = vadd.f32 0.0, %v3857
        %v3859 = vpop.f32.mrb[0].mxu0
        %3860 = vmatprep.mubr.bf16.mxu0 0
        %3861 = vmatmul.mubr.bf16.gmra.mrb[0].mxu0 %v3794
        %v3862 = vpop.f32.mrb[0].mxu0
        %v3863 = vadd.f32 0.0, %v3862
        %v3864 = vpop.f32.mrb[0].mxu0
        %v3865 = vpop.f32.mrb[0].mxu0
        %v3866 = vadd.f32 0.0, %v3865
        %v3867 = vpop.f32.mrb[0].mxu0
        %3868 = vdwg.mxu0
        %v3869 = vadd.f32 %v3756, %v3831
        %v3870 = vadd.f32 %v3757, %v3834
        %v3871 = vadd.f32 %v3758, %v3839
        %v3872 = vadd.f32 %v3759, %v3842
        %v3873 = vadd.f32 %v3760, %v3847
        %v3874 = vadd.f32 %v3761, %v3850
        %v3875 = vadd.f32 %v3762, %v3855
        %v3876 = vadd.f32 %v3763, %v3858
        %v3877 = vadd.f32 %v3764, %v3863
        %v3878 = vadd.f32 %v3765, %v3866
        %vm3879 = vsmask.f32 5376
        %v3880 = vrot.slane %v2892, 2
        %v3881 = vrot.slane %v2894, 3
        %v3882 = vor.u32 %v3880, %v3881
        %v3883 = vrot.slane %v2902, 2
        %v3884 = vrot.slane %v2898, 3
        %v3885 = vor.u32 %v3883, %v3884
        %v3886 = vsel %vm3879, %v3882, %v3885
        %v3887 = vrot.slane %v2909, 2
        %v3888 = vrot.slane %v2905, 3
        %v3889 = vor.u32 %v3887, %v3888
        %v3890 = vsel %vm3879, %v3885, %v3889
        %v3891 = vrot.slane %v2916, 2
        %v3892 = vrot.slane %v2912, 3
        %v3893 = vor.u32 %v3891, %v3892
        %v3894 = vsel %vm3879, %v3889, %v3893
        %v3895 = vrot.slane %v2923, 2
        %v3896 = vrot.slane %v2919, 3
        %v3897 = vor.u32 %v3895, %v3896
        %v3898 = vsel %vm3879, %v3893, %v3897
        %v3901 = vunpack.c.l.b16 %v442
        %v3902 = vunpack.c.l.b16 %v443
        %v3903 = vpack.c.b16 %v3902, %v3901
        %v3906 = vsel %vm2708, %v3886, 0
        %v3909 = vsel %vm2708, %v3890, 0
        %v3912 = vsel %vm2708, %v3894, 0
        %v3915 = vsel %vm2708, %v3898, 0
        %v3918 = vsel %vm2708, %v3897, 0
        %3920 = vmatprep.subr.bf16.mxu0 0
        %3921 = vmatpush1.bf16.msra.mxu0 %v3903
        %3922 = vmatprep.subr.bf16.mxu0 0
        %3923 = vmatpush1.bf16.msra.mxu0 0
        %3924 = vmatprep.subr.bf16.mxu0 0
        %3925 = vmatpush1.bf16.msra.mxu0 0
        %3926 = vmatprep.subr.bf16.mxu0 0
        %3927 = vmatpush1.bf16.msra.mxu0 0
        %3928 = vmatprep.subr.bf16.mxu0 0
        %3929 = vmatpush1.bf16.msra.mxu0 0
        %3930 = vmatprep.subr.bf16.mxu0 0
        %3931 = vmatpush1.bf16.msra.mxu0 0
        %3932 = vmatprep.subr.bf16.mxu0 0
        %3933 = vmatpush1.bf16.msra.mxu0 0
        %3934 = vmatprep.subr.bf16.mxu0 0
        %3935 = vmatpush1.bf16.msra.mxu0 0
        %3936 = vmatprep.subr.bf16.mxu0 0
        %3937 = vmatpush1.bf16.msra.mxu0 0
        %3938 = vmatprep.subr.bf16.mxu0 0
        %3939 = vmatpush1.bf16.msra.mxu0 0
        %3940 = vmatprep.subr.bf16.mxu0 0
        %3941 = vmatpush1.bf16.msra.mxu0 0
        %3942 = vmatprep.subr.bf16.mxu0 0
        %3943 = vmatpush1.bf16.msra.mxu0 0
        %3944 = vmatprep.subr.bf16.mxu0 0
        %3945 = vmatpush1.bf16.msra.mxu0 0
        %3946 = vmatprep.subr.bf16.mxu0 0
        %3947 = vmatpush1.bf16.msra.mxu0 0
        %3948 = vmatprep.subr.bf16.mxu0 0
        %3949 = vmatpush1.bf16.msra.mxu0 0
        %3950 = vmatprep.subr.bf16.mxu0 0
        %3951 = vmatpush1.bf16.msra.mxu0 0
        %3952 = vmatprep.mubr.bf16.mxu0 0
        %3953 = vmatmul.mubr.bf16.gmra.mrb[0].mxu0 %v3906
        %v3954 = vpop.f32.mrb[0].mxu0
        %v3955 = vadd.f32 0.0, %v3954
        %v3956 = vpop.f32.mrb[0].mxu0
        %v3957 = vpop.f32.mrb[0].mxu0
        %v3958 = vadd.f32 0.0, %v3957
        %v3959 = vpop.f32.mrb[0].mxu0
        %3960 = vmatprep.mubr.bf16.mxu0 0
        %3961 = vmatmul.mubr.bf16.gmra.mrb[0].mxu0 %v3909
        %v3962 = vpop.f32.mrb[0].mxu0
        %v3963 = vadd.f32 0.0, %v3962
        %v3964 = vpop.f32.mrb[0].mxu0
        %v3965 = vpop.f32.mrb[0].mxu0
        %v3966 = vadd.f32 0.0, %v3965
        %v3967 = vpop.f32.mrb[0].mxu0
        %3968 = vmatprep.mubr.bf16.mxu0 0
        %3969 = vmatmul.mubr.bf16.gmra.mrb[0].mxu0 %v3912
        %v3970 = vpop.f32.mrb[0].mxu0
        %v3971 = vadd.f32 0.0, %v3970
        %v3972 = vpop.f32.mrb[0].mxu0
        %v3973 = vpop.f32.mrb[0].mxu0
        %v3974 = vadd.f32 0.0, %v3973
        %v3975 = vpop.f32.mrb[0].mxu0
        %3976 = vmatprep.mubr.bf16.mxu0 0
        %3977 = vmatmul.mubr.bf16.gmra.mrb[0].mxu0 %v3915
        %v3978 = vpop.f32.mrb[0].mxu0
        %v3979 = vadd.f32 0.0, %v3978
        %v3980 = vpop.f32.mrb[0].mxu0
        %v3981 = vpop.f32.mrb[0].mxu0
        %v3982 = vadd.f32 0.0, %v3981
        %v3983 = vpop.f32.mrb[0].mxu0
        %3984 = vmatprep.mubr.bf16.mxu0 0
        %3985 = vmatmul.mubr.bf16.gmra.mrb[0].mxu0 %v3918
        %v3986 = vpop.f32.mrb[0].mxu0
        %v3987 = vadd.f32 0.0, %v3986
        %v3988 = vpop.f32.mrb[0].mxu0
        %v3989 = vpop.f32.mrb[0].mxu0
        %v3990 = vadd.f32 0.0, %v3989
        %v3991 = vpop.f32.mrb[0].mxu0
        %3992 = vdwg.mxu0
        %v3993 = vadd.f32 %v3869, %v3955
        %v3994 = vadd.f32 %v3870, %v3958
        %v3995 = vadd.f32 %v3871, %v3963
        %v3996 = vadd.f32 %v3872, %v3966
        %v3997 = vadd.f32 %v3873, %v3971
        %v3998 = vadd.f32 %v3874, %v3974
        %v3999 = vadd.f32 %v3875, %v3979
        %v4000 = vadd.f32 %v3876, %v3982
        %v4001 = vadd.f32 %v3877, %v3987
        %v4002 = vadd.f32 %v3878, %v3990
        %v4003 = vrot.slane %v3030, 2
        %v4004 = vrot.slane %v3032, 3
        %v4005 = vor.u32 %v4003, %v4004
        %v4006 = vrot.slane %v3040, 2
        %v4007 = vrot.slane %v3036, 3
        %v4008 = vor.u32 %v4006, %v4007
        %v4009 = vsel %vm3879, %v4005, %v4008
        %v4010 = vrot.slane %v3047, 2
        %v4011 = vrot.slane %v3043, 3
        %v4012 = vor.u32 %v4010, %v4011
        %v4013 = vsel %vm3879, %v4008, %v4012
        %v4014 = vrot.slane %v3054, 2
        %v4015 = vrot.slane %v3050, 3
        %v4016 = vor.u32 %v4014, %v4015
        %v4017 = vsel %vm3879, %v4012, %v4016
        %v4018 = vrot.slane %v3061, 2
        %v4019 = vrot.slane %v3057, 3
        %v4020 = vor.u32 %v4018, %v4019
        %v4021 = vsel %vm3879, %v4016, %v4020
        %v4024 = vunpack.c.l.b16 %v444
        %v4025 = vunpack.c.l.b16 %v445
        %v4026 = vpack.c.b16 %v4025, %v4024
        %v4029 = vsel %vm2708, %v4009, 0
        %v4032 = vsel %vm2708, %v4013, 0
        %v4035 = vsel %vm2708, %v4017, 0
        %v4038 = vsel %vm2708, %v4021, 0
        %v4041 = vsel %vm2708, %v4020, 0
        %4043 = vmatprep.subr.bf16.mxu0 0
        %4044 = vmatpush1.bf16.msra.mxu0 %v4026
        %4045 = vmatprep.subr.bf16.mxu0 0
        %4046 = vmatpush1.bf16.msra.mxu0 0
        %4047 = vmatprep.subr.bf16.mxu0 0
        %4048 = vmatpush1.bf16.msra.mxu0 0
        %4049 = vmatprep.subr.bf16.mxu0 0
        %4050 = vmatpush1.bf16.msra.mxu0 0
        %4051 = vmatprep.subr.bf16.mxu0 0
        %4052 = vmatpush1.bf16.msra.mxu0 0
        %4053 = vmatprep.subr.bf16.mxu0 0
        %4054 = vmatpush1.bf16.msra.mxu0 0
        %4055 = vmatprep.subr.bf16.mxu0 0
        %4056 = vmatpush1.bf16.msra.mxu0 0
        %4057 = vmatprep.subr.bf16.mxu0 0
        %4058 = vmatpush1.bf16.msra.mxu0 0
        %4059 = vmatprep.subr.bf16.mxu0 0
        %4060 = vmatpush1.bf16.msra.mxu0 0
        %4061 = vmatprep.subr.bf16.mxu0 0
        %4062 = vmatpush1.bf16.msra.mxu0 0
        %4063 = vmatprep.subr.bf16.mxu0 0
        %4064 = vmatpush1.bf16.msra.mxu0 0
        %4065 = vmatprep.subr.bf16.mxu0 0
        %4066 = vmatpush1.bf16.msra.mxu0 0
        %4067 = vmatprep.subr.bf16.mxu0 0
        %4068 = vmatpush1.bf16.msra.mxu0 0
        %4069 = vmatprep.subr.bf16.mxu0 0
        %4070 = vmatpush1.bf16.msra.mxu0 0
        %4071 = vmatprep.subr.bf16.mxu0 0
        %4072 = vmatpush1.bf16.msra.mxu0 0
        %4073 = vmatprep.subr.bf16.mxu0 0
        %4074 = vmatpush1.bf16.msra.mxu0 0
        %4075 = vmatprep.mubr.bf16.mxu0 0
        %4076 = vmatmul.mubr.bf16.gmra.mrb[0].mxu0 %v4029
        %v4077 = vpop.f32.mrb[0].mxu0
        %v4078 = vadd.f32 0.0, %v4077
        %v4079 = vpop.f32.mrb[0].mxu0
        %v4080 = vpop.f32.mrb[0].mxu0
        %v4081 = vadd.f32 0.0, %v4080
        %v4082 = vpop.f32.mrb[0].mxu0
        %4083 = vmatprep.mubr.bf16.mxu0 0
        %4084 = vmatmul.mubr.bf16.gmra.mrb[0].mxu0 %v4032
        %v4085 = vpop.f32.mrb[0].mxu0
        %v4086 = vadd.f32 0.0, %v4085
        %v4087 = vpop.f32.mrb[0].mxu0
        %v4088 = vpop.f32.mrb[0].mxu0
        %v4089 = vadd.f32 0.0, %v4088
        %v4090 = vpop.f32.mrb[0].mxu0
        %4091 = vmatprep.mubr.bf16.mxu0 0
        %4092 = vmatmul.mubr.bf16.gmra.mrb[0].mxu0 %v4035
        %v4093 = vpop.f32.mrb[0].mxu0
        %v4094 = vadd.f32 0.0, %v4093
        %v4095 = vpop.f32.mrb[0].mxu0
        %v4096 = vpop.f32.mrb[0].mxu0
        %v4097 = vadd.f32 0.0, %v4096
        %v4098 = vpop.f32.mrb[0].mxu0
        %4099 = vmatprep.mubr.bf16.mxu0 0
        %4100 = vmatmul.mubr.bf16.gmra.mrb[0].mxu0 %v4038
        %v4101 = vpop.f32.mrb[0].mxu0
        %v4102 = vadd.f32 0.0, %v4101
        %v4103 = vpop.f32.mrb[0].mxu0
        %v4104 = vpop.f32.mrb[0].mxu0
        %v4105 = vadd.f32 0.0, %v4104
        %v4106 = vpop.f32.mrb[0].mxu0
        %4107 = vmatprep.mubr.bf16.mxu0 0
        %4108 = vmatmul.mubr.bf16.gmra.mrb[0].mxu0 %v4041
        %v4109 = vpop.f32.mrb[0].mxu0
        %v4110 = vadd.f32 0.0, %v4109
        %v4111 = vpop.f32.mrb[0].mxu0
        %v4112 = vpop.f32.mrb[0].mxu0
        %v4113 = vadd.f32 0.0, %v4112
        %v4114 = vpop.f32.mrb[0].mxu0
        %4115 = vdwg.mxu0
        %v4116 = vadd.f32 %v3993, %v4078
        %v4117 = vadd.f32 %v3994, %v4081
        %v4118 = vadd.f32 %v3995, %v4086
        %v4119 = vadd.f32 %v3996, %v4089
        %v4120 = vadd.f32 %v3997, %v4094
        %v4121 = vadd.f32 %v3998, %v4097
        %v4122 = vadd.f32 %v3999, %v4102
        %v4123 = vadd.f32 %v4000, %v4105
        %v4124 = vadd.f32 %v4001, %v4110
        %v4125 = vadd.f32 %v4002, %v4113
        %vm4126 = vcmask 1044480
        %v4127 = vrot.slane %v2692, 3
        %v4128 = vrot.slane %v2693, 3
        %v4129 = vsel %vm4126, %v4127, %v4128
        %v4130 = vrot.slane %v2694, 3
        %v4131 = vsel %vm4126, %v4128, %v4130
        %v4132 = vrot.slane %v2695, 3
        %v4133 = vsel %vm4126, %v4130, %v4132
        %v4134 = vrot.slane %v2696, 3
        %v4135 = vsel %vm4126, %v4132, %v4134
        %v4138 = vunpack.c.l.b16 %v446
        %v4139 = vunpack.c.l.b16 %v447
        %v4140 = vpack.c.b16 %v4139, %v4138
        %v4143 = vsel %vm2708, %v4129, 0
        %v4146 = vsel %vm2708, %v4131, 0
        %v4149 = vsel %vm2708, %v4133, 0
        %v4152 = vsel %vm2708, %v4135, 0
        %v4155 = vsel %vm2708, %v4134, 0
        %4157 = vmatprep.subr.bf16.mxu0 0
        %4158 = vmatpush1.bf16.msra.mxu0 %v4140
        %4159 = vmatprep.subr.bf16.mxu0 0
        %4160 = vmatpush1.bf16.msra.mxu0 0
        %4161 = vmatprep.subr.bf16.mxu0 0
        %4162 = vmatpush1.bf16.msra.mxu0 0
        %4163 = vmatprep.subr.bf16.mxu0 0
        %4164 = vmatpush1.bf16.msra.mxu0 0
        %4165 = vmatprep.subr.bf16.mxu0 0
        %4166 = vmatpush1.bf16.msra.mxu0 0
        %4167 = vmatprep.subr.bf16.mxu0 0
        %4168 = vmatpush1.bf16.msra.mxu0 0
        %4169 = vmatprep.subr.bf16.mxu0 0
        %4170 = vmatpush1.bf16.msra.mxu0 0
        %4171 = vmatprep.subr.bf16.mxu0 0
        %4172 = vmatpush1.bf16.msra.mxu0 0
        %4173 = vmatprep.subr.bf16.mxu0 0
        %4174 = vmatpush1.bf16.msra.mxu0 0
        %4175 = vmatprep.subr.bf16.mxu0 0
        %4176 = vmatpush1.bf16.msra.mxu0 0
        %4177 = vmatprep.subr.bf16.mxu0 0
        %4178 = vmatpush1.bf16.msra.mxu0 0
        %4179 = vmatprep.subr.bf16.mxu0 0
        %4180 = vmatpush1.bf16.msra.mxu0 0
        %4181 = vmatprep.subr.bf16.mxu0 0
        %4182 = vmatpush1.bf16.msra.mxu0 0
        %4183 = vmatprep.subr.bf16.mxu0 0
        %4184 = vmatpush1.bf16.msra.mxu0 0
        %4185 = vmatprep.subr.bf16.mxu0 0
        %4186 = vmatpush1.bf16.msra.mxu0 0
        %4187 = vmatprep.subr.bf16.mxu0 0
        %4188 = vmatpush1.bf16.msra.mxu0 0
        %4189 = vmatprep.mubr.bf16.mxu0 0
        %4190 = vmatmul.mubr.bf16.gmra.mrb[0].mxu0 %v4143
        %v4191 = vpop.f32.mrb[0].mxu0
        %v4192 = vadd.f32 0.0, %v4191
        %v4193 = vpop.f32.mrb[0].mxu0
        %v4194 = vpop.f32.mrb[0].mxu0
        %v4195 = vadd.f32 0.0, %v4194
        %v4196 = vpop.f32.mrb[0].mxu0
        %4197 = vmatprep.mubr.bf16.mxu0 0
        %4198 = vmatmul.mubr.bf16.gmra.mrb[0].mxu0 %v4146
        %v4199 = vpop.f32.mrb[0].mxu0
        %v4200 = vadd.f32 0.0, %v4199
        %v4201 = vpop.f32.mrb[0].mxu0
        %v4202 = vpop.f32.mrb[0].mxu0
        %v4203 = vadd.f32 0.0, %v4202
        %v4204 = vpop.f32.mrb[0].mxu0
        %4205 = vmatprep.mubr.bf16.mxu0 0
        %4206 = vmatmul.mubr.bf16.gmra.mrb[0].mxu0 %v4149
        %v4207 = vpop.f32.mrb[0].mxu0
        %v4208 = vadd.f32 0.0, %v4207
        %v4209 = vpop.f32.mrb[0].mxu0
        %v4210 = vpop.f32.mrb[0].mxu0
        %v4211 = vadd.f32 0.0, %v4210
        %v4212 = vpop.f32.mrb[0].mxu0
        %4213 = vmatprep.mubr.bf16.mxu0 0
        %4214 = vmatmul.mubr.bf16.gmra.mrb[0].mxu0 %v4152
        %v4215 = vpop.f32.mrb[0].mxu0
        %v4216 = vadd.f32 0.0, %v4215
        %v4217 = vpop.f32.mrb[0].mxu0
        %v4218 = vpop.f32.mrb[0].mxu0
        %v4219 = vadd.f32 0.0, %v4218
        %v4220 = vpop.f32.mrb[0].mxu0
        %4221 = vmatprep.mubr.bf16.mxu0 0
        %4222 = vmatmul.mubr.bf16.gmra.mrb[0].mxu0 %v4155
        %v4223 = vpop.f32.mrb[0].mxu0
        %v4224 = vadd.f32 0.0, %v4223
        %v4225 = vpop.f32.mrb[0].mxu0
        %v4226 = vpop.f32.mrb[0].mxu0
        %v4227 = vadd.f32 0.0, %v4226
        %v4228 = vpop.f32.mrb[0].mxu0
        %4229 = vdwg.mxu0
        %v4230 = vadd.f32 %v4116, %v4192
        %v4231 = vadd.f32 %v4117, %v4195
        %v4232 = vadd.f32 %v4118, %v4200
        %v4233 = vadd.f32 %v4119, %v4203
        %v4234 = vadd.f32 %v4120, %v4208
        %v4235 = vadd.f32 %v4121, %v4211
        %v4236 = vadd.f32 %v4122, %v4216
        %v4237 = vadd.f32 %v4123, %v4219
        %v4238 = vadd.f32 %v4124, %v4224
        %v4239 = vadd.f32 %v4125, %v4227
        %v4240 = vrot.slane %v2697, 3
        %v4241 = vrot.slane %v2698, 3
        %v4242 = vsel %vm4126, %v4240, %v4241
        %v4243 = vrot.slane %v2699, 3
        %v4244 = vsel %vm4126, %v4241, %v4243
        %v4245 = vrot.slane %v2700, 3
        %v4246 = vsel %vm4126, %v4243, %v4245
        %v4247 = vrot.slane %v2701, 3
        %v4248 = vsel %vm4126, %v4245, %v4247
        %v4251 = vunpack.c.l.b16 %v448
        %v4252 = vunpack.c.l.b16 %v449
        %v4253 = vpack.c.b16 %v4252, %v4251
        %v4256 = vsel %vm2708, %v4242, 0
        %v4259 = vsel %vm2708, %v4244, 0
        %v4262 = vsel %vm2708, %v4246, 0
        %v4265 = vsel %vm2708, %v4248, 0
        %v4268 = vsel %vm2708, %v4247, 0
        %4270 = vmatprep.subr.bf16.mxu0 0
        %4271 = vmatpush1.bf16.msra.mxu0 %v4253
        %4272 = vmatprep.subr.bf16.mxu0 0
        %4273 = vmatpush1.bf16.msra.mxu0 0
        %4274 = vmatprep.subr.bf16.mxu0 0
        %4275 = vmatpush1.bf16.msra.mxu0 0
        %4276 = vmatprep.subr.bf16.mxu0 0
        %4277 = vmatpush1.bf16.msra.mxu0 0
        %4278 = vmatprep.subr.bf16.mxu0 0
        %4279 = vmatpush1.bf16.msra.mxu0 0
        %4280 = vmatprep.subr.bf16.mxu0 0
        %4281 = vmatpush1.bf16.msra.mxu0 0
        %4282 = vmatprep.subr.bf16.mxu0 0
        %4283 = vmatpush1.bf16.msra.mxu0 0
        %4284 = vmatprep.subr.bf16.mxu0 0
        %4285 = vmatpush1.bf16.msra.mxu0 0
        %4286 = vmatprep.subr.bf16.mxu0 0
        %4287 = vmatpush1.bf16.msra.mxu0 0
        %4288 = vmatprep.subr.bf16.mxu0 0
        %4289 = vmatpush1.bf16.msra.mxu0 0
        %4290 = vmatprep.subr.bf16.mxu0 0
        %4291 = vmatpush1.bf16.msra.mxu0 0
        %4292 = vmatprep.subr.bf16.mxu0 0
        %4293 = vmatpush1.bf16.msra.mxu0 0
        %4294 = vmatprep.subr.bf16.mxu0 0
        %4295 = vmatpush1.bf16.msra.mxu0 0
        %4296 = vmatprep.subr.bf16.mxu0 0
        %4297 = vmatpush1.bf16.msra.mxu0 0
        %4298 = vmatprep.subr.bf16.mxu0 0
        %4299 = vmatpush1.bf16.msra.mxu0 0
        %4300 = vmatprep.subr.bf16.mxu0 0
        %4301 = vmatpush1.bf16.msra.mxu0 0
        %4302 = vmatprep.mubr.bf16.mxu0 0
        %4303 = vmatmul.mubr.bf16.gmra.mrb[0].mxu0 %v4256
        %v4304 = vpop.f32.mrb[0].mxu0
        %v4305 = vadd.f32 0.0, %v4304
        %v4306 = vpop.f32.mrb[0].mxu0
        %v4307 = vpop.f32.mrb[0].mxu0
        %v4308 = vadd.f32 0.0, %v4307
        %v4309 = vpop.f32.mrb[0].mxu0
        %4310 = vmatprep.mubr.bf16.mxu0 0
        %4311 = vmatmul.mubr.bf16.gmra.mrb[0].mxu0 %v4259
        %v4312 = vpop.f32.mrb[0].mxu0
        %v4313 = vadd.f32 0.0, %v4312
        %v4314 = vpop.f32.mrb[0].mxu0
        %v4315 = vpop.f32.mrb[0].mxu0
        %v4316 = vadd.f32 0.0, %v4315
        %v4317 = vpop.f32.mrb[0].mxu0
        %4318 = vmatprep.mubr.bf16.mxu0 0
        %4319 = vmatmul.mubr.bf16.gmra.mrb[0].mxu0 %v4262
        %v4320 = vpop.f32.mrb[0].mxu0
        %v4321 = vadd.f32 0.0, %v4320
        %v4322 = vpop.f32.mrb[0].mxu0
        %v4323 = vpop.f32.mrb[0].mxu0
        %v4324 = vadd.f32 0.0, %v4323
        %v4325 = vpop.f32.mrb[0].mxu0
        %4326 = vmatprep.mubr.bf16.mxu0 0
        %4327 = vmatmul.mubr.bf16.gmra.mrb[0].mxu0 %v4265
        %v4328 = vpop.f32.mrb[0].mxu0
        %v4329 = vadd.f32 0.0, %v4328
        %v4330 = vpop.f32.mrb[0].mxu0
        %v4331 = vpop.f32.mrb[0].mxu0
        %v4332 = vadd.f32 0.0, %v4331
        %v4333 = vpop.f32.mrb[0].mxu0
        %4334 = vmatprep.mubr.bf16.mxu0 0
        %4335 = vmatmul.mubr.bf16.gmra.mrb[0].mxu0 %v4268
        %v4336 = vpop.f32.mrb[0].mxu0
        %v4337 = vadd.f32 0.0, %v4336
        %v4338 = vpop.f32.mrb[0].mxu0
        %v4339 = vpop.f32.mrb[0].mxu0
        %v4340 = vadd.f32 0.0, %v4339
        %v4341 = vpop.f32.mrb[0].mxu0
        %4342 = vdwg.mxu0
        %v4343 = vadd.f32 %v4230, %v4305
        %v4344 = vadd.f32 %v4231, %v4308
        %v4345 = vadd.f32 %v4232, %v4313
        %v4346 = vadd.f32 %v4233, %v4316
        %v4347 = vadd.f32 %v4234, %v4321
        %v4348 = vadd.f32 %v4235, %v4324
        %v4349 = vadd.f32 %v4236, %v4329
        %v4350 = vadd.f32 %v4237, %v4332
        %v4351 = vadd.f32 %v4238, %v4337
        %v4352 = vadd.f32 %v4239, %v4340
        %vm4353 = vsmask.f32 4352
        %v4354 = vrot.slane %v2892, 3
        %v4355 = vrot.slane %v2894, 4
        %v4356 = vor.u32 %v4354, %v4355
        %v4357 = vrot.slane %v2902, 3
        %v4358 = vrot.slane %v2898, 4
        %v4359 = vor.u32 %v4357, %v4358
        %v4360 = vsel %vm4353, %v4356, %v4359
        %v4361 = vrot.slane %v2909, 3
        %v4362 = vrot.slane %v2905, 4
        %v4363 = vor.u32 %v4361, %v4362
        %v4364 = vsel %vm4353, %v4359, %v4363
        %v4365 = vrot.slane %v2916, 3
        %v4366 = vrot.slane %v2912, 4
        %v4367 = vor.u32 %v4365, %v4366
        %v4368 = vsel %vm4353, %v4363, %v4367
        %v4369 = vrot.slane %v2923, 3
        %v4370 = vrot.slane %v2919, 4
        %v4371 = vor.u32 %v4369, %v4370
        %v4372 = vsel %vm4353, %v4367, %v4371
        %v4375 = vunpack.c.l.b16 %v450
        %v4376 = vunpack.c.l.b16 %v451
        %v4377 = vpack.c.b16 %v4376, %v4375
        %v4380 = vsel %vm2708, %v4360, 0
        %v4383 = vsel %vm2708, %v4364, 0
        %v4386 = vsel %vm2708, %v4368, 0
        %v4389 = vsel %vm2708, %v4372, 0
        %v4392 = vsel %vm2708, %v4371, 0
        %4394 = vmatprep.subr.bf16.mxu0 0
        %4395 = vmatpush1.bf16.msra.mxu0 %v4377
        %4396 = vmatprep.subr.bf16.mxu0 0
        %4397 = vmatpush1.bf16.msra.mxu0 0
        %4398 = vmatprep.subr.bf16.mxu0 0
        %4399 = vmatpush1.bf16.msra.mxu0 0
        %4400 = vmatprep.subr.bf16.mxu0 0
        %4401 = vmatpush1.bf16.msra.mxu0 0
        %4402 = vmatprep.subr.bf16.mxu0 0
        %4403 = vmatpush1.bf16.msra.mxu0 0
        %4404 = vmatprep.subr.bf16.mxu0 0
        %4405 = vmatpush1.bf16.msra.mxu0 0
        %4406 = vmatprep.subr.bf16.mxu0 0
        %4407 = vmatpush1.bf16.msra.mxu0 0
        %4408 = vmatprep.subr.bf16.mxu0 0
        %4409 = vmatpush1.bf16.msra.mxu0 0
        %4410 = vmatprep.subr.bf16.mxu0 0
        %4411 = vmatpush1.bf16.msra.mxu0 0
        %4412 = vmatprep.subr.bf16.mxu0 0
        %4413 = vmatpush1.bf16.msra.mxu0 0
        %4414 = vmatprep.subr.bf16.mxu0 0
        %4415 = vmatpush1.bf16.msra.mxu0 0
        %4416 = vmatprep.subr.bf16.mxu0 0
        %4417 = vmatpush1.bf16.msra.mxu0 0
        %4418 = vmatprep.subr.bf16.mxu0 0
        %4419 = vmatpush1.bf16.msra.mxu0 0
        %4420 = vmatprep.subr.bf16.mxu0 0
        %4421 = vmatpush1.bf16.msra.mxu0 0
        %4422 = vmatprep.subr.bf16.mxu0 0
        %4423 = vmatpush1.bf16.msra.mxu0 0
        %4424 = vmatprep.subr.bf16.mxu0 0
        %4425 = vmatpush1.bf16.msra.mxu0 0
        %4426 = vmatprep.mubr.bf16.mxu0 0
        %4427 = vmatmul.mubr.bf16.gmra.mrb[0].mxu0 %v4380
        %v4428 = vpop.f32.mrb[0].mxu0
        %v4429 = vadd.f32 0.0, %v4428
        %v4430 = vpop.f32.mrb[0].mxu0
        %v4431 = vpop.f32.mrb[0].mxu0
        %v4432 = vadd.f32 0.0, %v4431
        %v4433 = vpop.f32.mrb[0].mxu0
        %4434 = vmatprep.mubr.bf16.mxu0 0
        %4435 = vmatmul.mubr.bf16.gmra.mrb[0].mxu0 %v4383
        %v4436 = vpop.f32.mrb[0].mxu0
        %v4437 = vadd.f32 0.0, %v4436
        %v4438 = vpop.f32.mrb[0].mxu0
        %v4439 = vpop.f32.mrb[0].mxu0
        %v4440 = vadd.f32 0.0, %v4439
        %v4441 = vpop.f32.mrb[0].mxu0
        %4442 = vmatprep.mubr.bf16.mxu0 0
        %4443 = vmatmul.mubr.bf16.gmra.mrb[0].mxu0 %v4386
        %v4444 = vpop.f32.mrb[0].mxu0
        %v4445 = vadd.f32 0.0, %v4444
        %v4446 = vpop.f32.mrb[0].mxu0
        %v4447 = vpop.f32.mrb[0].mxu0
        %v4448 = vadd.f32 0.0, %v4447
        %v4449 = vpop.f32.mrb[0].mxu0
        %4450 = vmatprep.mubr.bf16.mxu0 0
        %4451 = vmatmul.mubr.bf16.gmra.mrb[0].mxu0 %v4389
        %v4452 = vpop.f32.mrb[0].mxu0
        %v4453 = vadd.f32 0.0, %v4452
        %v4454 = vpop.f32.mrb[0].mxu0
        %v4455 = vpop.f32.mrb[0].mxu0
        %v4456 = vadd.f32 0.0, %v4455
        %v4457 = vpop.f32.mrb[0].mxu0
        %4458 = vmatprep.mubr.bf16.mxu0 0
        %4459 = vmatmul.mubr.bf16.gmra.mrb[0].mxu0 %v4392
        %v4460 = vpop.f32.mrb[0].mxu0
        %v4461 = vadd.f32 0.0, %v4460
        %v4462 = vpop.f32.mrb[0].mxu0
        %v4463 = vpop.f32.mrb[0].mxu0
        %v4464 = vadd.f32 0.0, %v4463
        %v4465 = vpop.f32.mrb[0].mxu0
        %4466 = vdwg.mxu0
        %v4467 = vadd.f32 %v4343, %v4429
        %v4468 = vadd.f32 %v4344, %v4432
        %v4469 = vadd.f32 %v4345, %v4437
        %v4470 = vadd.f32 %v4346, %v4440
        %v4471 = vadd.f32 %v4347, %v4445
        %v4472 = vadd.f32 %v4348, %v4448
        %v4473 = vadd.f32 %v4349, %v4453
        %v4474 = vadd.f32 %v4350, %v4456
        %v4475 = vadd.f32 %v4351, %v4461
        %v4476 = vadd.f32 %v4352, %v4464
        %v4477 = vrot.slane %v3030, 3
        %v4478 = vrot.slane %v3032, 4
        %v4479 = vor.u32 %v4477, %v4478
        %v4480 = vrot.slane %v3040, 3
        %v4481 = vrot.slane %v3036, 4
        %v4482 = vor.u32 %v4480, %v4481
        %v4483 = vsel %vm4353, %v4479, %v4482
        %v4484 = vrot.slane %v3047, 3
        %v4485 = vrot.slane %v3043, 4
        %v4486 = vor.u32 %v4484, %v4485
        %v4487 = vsel %vm4353, %v4482, %v4486
        %v4488 = vrot.slane %v3054, 3
        %v4489 = vrot.slane %v3050, 4
        %v4490 = vor.u32 %v4488, %v4489
        %v4491 = vsel %vm4353, %v4486, %v4490
        %v4492 = vrot.slane %v3061, 3
        %v4493 = vrot.slane %v3057, 4
        %v4494 = vor.u32 %v4492, %v4493
        %v4495 = vsel %vm4353, %v4490, %v4494
        %v4498 = vunpack.c.l.b16 %v452
        %v4499 = vunpack.c.l.b16 %v453
        %v4500 = vpack.c.b16 %v4499, %v4498
        %v4503 = vsel %vm2708, %v4483, 0
        %v4506 = vsel %vm2708, %v4487, 0
        %v4509 = vsel %vm2708, %v4491, 0
        %v4512 = vsel %vm2708, %v4495, 0
        %v4515 = vsel %vm2708, %v4494, 0
        %4517 = vmatprep.subr.bf16.mxu0 0
        %4518 = vmatpush1.bf16.msra.mxu0 %v4500
        %4519 = vmatprep.subr.bf16.mxu0 0
        %4520 = vmatpush1.bf16.msra.mxu0 0
        %4521 = vmatprep.subr.bf16.mxu0 0
        %4522 = vmatpush1.bf16.msra.mxu0 0
        %4523 = vmatprep.subr.bf16.mxu0 0
        %4524 = vmatpush1.bf16.msra.mxu0 0
        %4525 = vmatprep.subr.bf16.mxu0 0
        %4526 = vmatpush1.bf16.msra.mxu0 0
        %4527 = vmatprep.subr.bf16.mxu0 0
        %4528 = vmatpush1.bf16.msra.mxu0 0
        %4529 = vmatprep.subr.bf16.mxu0 0
        %4530 = vmatpush1.bf16.msra.mxu0 0
        %4531 = vmatprep.subr.bf16.mxu0 0
        %4532 = vmatpush1.bf16.msra.mxu0 0
        %4533 = vmatprep.subr.bf16.mxu0 0
        %4534 = vmatpush1.bf16.msra.mxu0 0
        %4535 = vmatprep.subr.bf16.mxu0 0
        %4536 = vmatpush1.bf16.msra.mxu0 0
        %4537 = vmatprep.subr.bf16.mxu0 0
        %4538 = vmatpush1.bf16.msra.mxu0 0
        %4539 = vmatprep.subr.bf16.mxu0 0
        %4540 = vmatpush1.bf16.msra.mxu0 0
        %4541 = vmatprep.subr.bf16.mxu0 0
        %4542 = vmatpush1.bf16.msra.mxu0 0
        %4543 = vmatprep.subr.bf16.mxu0 0
        %4544 = vmatpush1.bf16.msra.mxu0 0
        %4545 = vmatprep.subr.bf16.mxu0 0
        %4546 = vmatpush1.bf16.msra.mxu0 0
        %4547 = vmatprep.subr.bf16.mxu0 0
        %4548 = vmatpush1.bf16.msra.mxu0 0
        %4549 = vmatprep.mubr.bf16.mxu0 0
        %4550 = vmatmul.mubr.bf16.gmra.mrb[0].mxu0 %v4503
        %v4551 = vpop.f32.mrb[0].mxu0
        %v4552 = vadd.f32 0.0, %v4551
        %v4553 = vpop.f32.mrb[0].mxu0
        %v4554 = vpop.f32.mrb[0].mxu0
        %v4555 = vadd.f32 0.0, %v4554
        %v4556 = vpop.f32.mrb[0].mxu0
        %4557 = vmatprep.mubr.bf16.mxu0 0
        %4558 = vmatmul.mubr.bf16.gmra.mrb[0].mxu0 %v4506
        %v4559 = vpop.f32.mrb[0].mxu0
        %v4560 = vadd.f32 0.0, %v4559
        %v4561 = vpop.f32.mrb[0].mxu0
        %v4562 = vpop.f32.mrb[0].mxu0
        %v4563 = vadd.f32 0.0, %v4562
        %v4564 = vpop.f32.mrb[0].mxu0
        %4565 = vmatprep.mubr.bf16.mxu0 0
        %4566 = vmatmul.mubr.bf16.gmra.mrb[0].mxu0 %v4509
        %v4567 = vpop.f32.mrb[0].mxu0
        %v4568 = vadd.f32 0.0, %v4567
        %v4569 = vpop.f32.mrb[0].mxu0
        %v4570 = vpop.f32.mrb[0].mxu0
        %v4571 = vadd.f32 0.0, %v4570
        %v4572 = vpop.f32.mrb[0].mxu0
        %4573 = vmatprep.mubr.bf16.mxu0 0
        %4574 = vmatmul.mubr.bf16.gmra.mrb[0].mxu0 %v4512
        %v4575 = vpop.f32.mrb[0].mxu0
        %v4576 = vadd.f32 0.0, %v4575
        %v4577 = vpop.f32.mrb[0].mxu0
        %v4578 = vpop.f32.mrb[0].mxu0
        %v4579 = vadd.f32 0.0, %v4578
        %v4580 = vpop.f32.mrb[0].mxu0
        %4581 = vmatprep.mubr.bf16.mxu0 0
        %4582 = vmatmul.mubr.bf16.gmra.mrb[0].mxu0 %v4515
        %v4583 = vpop.f32.mrb[0].mxu0
        %v4584 = vadd.f32 0.0, %v4583
        %v4585 = vpop.f32.mrb[0].mxu0
        %v4586 = vpop.f32.mrb[0].mxu0
        %v4587 = vadd.f32 0.0, %v4586
        %v4588 = vpop.f32.mrb[0].mxu0
        %4589 = vdwg.mxu0
        %v4590 = vadd.f32 %v4467, %v4552
        %v4591 = vadd.f32 %v4468, %v4555
        %v4592 = vadd.f32 %v4469, %v4560
        %v4593 = vadd.f32 %v4470, %v4563
        %v4594 = vadd.f32 %v4471, %v4568
        %v4595 = vadd.f32 %v4472, %v4571
        %v4596 = vadd.f32 %v4473, %v4576
        %v4597 = vadd.f32 %v4474, %v4579
        %v4598 = vadd.f32 %v4475, %v4584
        %v4599 = vadd.f32 %v4476, %v4587
        %v4601 = vlaneseq
        %v4602 = vshrl.u32 %v4601, 7
        %v4603 = vsub.s32 0, %v4602
        %v4604 = vrot.slane %v454, %v4603
        %v4606 = vadd.f32 %v4590, %v4604
        %v4607 = vadd.f32 %v4591, %v4604
        %v4608 = vadd.f32 %v4592, %v4604
        %v4609 = vadd.f32 %v4593, %v4604
        %v4610 = vadd.f32 %v4594, %v4604
        %v4611 = vadd.f32 %v4595, %v4604
        %v4612 = vadd.f32 %v4596, %v4604
        %v4613 = vadd.f32 %v4597, %v4604
        %v4614 = vadd.f32 %v4598, %v4604
        %v4615 = vadd.f32 %v4599, %v4604
        %vm4616 = vcmp.gt.f32.partialorder %v4606, 0.0
        %vm4617 = vcmp.gt.f32.partialorder %v4607, 0.0
        %vm4618 = vcmp.gt.f32.partialorder %v4608, 0.0
        %vm4619 = vcmp.gt.f32.partialorder %v4609, 0.0
        %vm4620 = vcmp.gt.f32.partialorder %v4610, 0.0
        %vm4621 = vcmp.gt.f32.partialorder %v4611, 0.0
        %vm4622 = vcmp.gt.f32.partialorder %v4612, 0.0
        %vm4623 = vcmp.gt.f32.partialorder %v4613, 0.0
        %vm4624 = vcmp.gt.f32.partialorder %v4614, 0.0
        %vm4625 = vcmp.gt.f32.partialorder %v4615, 0.0
        %v4626 = vmin.f32 %v4606, 0.0
        %v4627 = vmin.f32 %v4607, 0.0
        %v4628 = vmin.f32 %v4608, 0.0
        %v4629 = vmin.f32 %v4609, 0.0
        %v4630 = vmin.f32 %v4610, 0.0
        %v4631 = vmin.f32 %v4611, 0.0
        %v4632 = vmin.f32 %v4612, 0.0
        %v4633 = vmin.f32 %v4613, 0.0
        %v4634 = vmin.f32 %v4614, 0.0
        %v4635 = vmin.f32 %v4615, 0.0
        %v4636 = vmul.f32 %v4626, 1.442695
        %v4637 = vpow.pop %v4636
        %v4638 = vmul.f32 %v4627, 1.442695
        %v4639 = vpow.pop %v4638
        %v4640 = vmul.f32 %v4628, 1.442695
        %v4641 = vpow.pop %v4640
        %v4642 = vmul.f32 %v4629, 1.442695
        %v4643 = vpow.pop %v4642
        %v4644 = vmul.f32 %v4630, 1.442695
        %v4645 = vpow.pop %v4644
        %v4646 = vmul.f32 %v4631, 1.442695
        %v4647 = vpow.pop %v4646
        %v4648 = vmul.f32 %v4632, 1.442695
        %v4649 = vpow.pop %v4648
        %v4650 = vmul.f32 %v4633, 1.442695
        %v4651 = vpow.pop %v4650
        %v4652 = vmul.f32 %v4634, 1.442695
        %v4653 = vpow.pop %v4652
        %v4654 = vmul.f32 %v4635, 1.442695
        %v4655 = vpow.pop %v4654
        %v4656 = vsub.f32 %v4637, 1.0
        %v4657 = vsub.f32 %v4639, 1.0
        %v4658 = vsub.f32 %v4641, 1.0
        %v4659 = vsub.f32 %v4643, 1.0
        %v4660 = vsub.f32 %v4645, 1.0
        %v4661 = vsub.f32 %v4647, 1.0
        %v4662 = vsub.f32 %v4649, 1.0
        %v4663 = vsub.f32 %v4651, 1.0
        %v4664 = vsub.f32 %v4653, 1.0
        %v4665 = vsub.f32 %v4655, 1.0
        %v4666 = vsel %vm4616, %v4606, %v4656
        %v4667 = vsel %vm4617, %v4607, %v4657
        %v4668 = vsel %vm4618, %v4608, %v4658
        %v4669 = vsel %vm4619, %v4609, %v4659
        %v4670 = vsel %vm4620, %v4610, %v4660
        %v4671 = vsel %vm4621, %v4611, %v4661
        %v4672 = vsel %vm4622, %v4612, %v4662
        %v4673 = vsel %vm4623, %v4613, %v4663
        %v4674 = vsel %vm4624, %v4614, %v4664
        %v4675 = vsel %vm4625, %v4615, %v4665
        %4676 = vmatprep.subr.bf16.mxu0 0
        %4677 = vmatpush1.bf16.msra.mxu0 %v2706
        %4678 = vmatprep.subr.bf16.mxu0 0
        %4679 = vmatpush1.bf16.msra.mxu0 0
        %4680 = vmatprep.subr.bf16.mxu0 0
        %4681 = vmatpush1.bf16.msra.mxu0 0
        %4682 = vmatprep.subr.bf16.mxu0 0
        %4683 = vmatpush1.bf16.msra.mxu0 0
        %4684 = vmatprep.subr.bf16.mxu0 0
        %4685 = vmatpush1.bf16.msra.mxu0 0
        %4686 = vmatprep.subr.bf16.mxu0 0
        %4687 = vmatpush1.bf16.msra.mxu0 0
        %4688 = vmatprep.subr.bf16.mxu0 0
        %4689 = vmatpush1.bf16.msra.mxu0 0
        %4690 = vmatprep.subr.bf16.mxu0 0
        %4691 = vmatpush1.bf16.msra.mxu0 0
        %4692 = vmatprep.subr.bf16.mxu0 0
        %4693 = vmatpush1.bf16.msra.mxu0 0
        %4694 = vmatprep.subr.bf16.mxu0 0
        %4695 = vmatpush1.bf16.msra.mxu0 0
        %4696 = vmatprep.subr.bf16.mxu0 0
        %4697 = vmatpush1.bf16.msra.mxu0 0
        %4698 = vmatprep.subr.bf16.mxu0 0
        %4699 = vmatpush1.bf16.msra.mxu0 0
        %4700 = vmatprep.subr.bf16.mxu0 0
        %4701 = vmatpush1.bf16.msra.mxu0 0
        %4702 = vmatprep.subr.bf16.mxu0 0
        %4703 = vmatpush1.bf16.msra.mxu0 0
        %4704 = vmatprep.subr.bf16.mxu0 0
        %4705 = vmatpush1.bf16.msra.mxu0 0
        %4706 = vmatprep.subr.bf16.mxu0 0
        %4707 = vmatpush1.bf16.msra.mxu0 0
        %4708 = vmatprep.mubr.bf16.mxu0 0
        %4709 = vmatmul.mubr.bf16.gmra.mrb[0].mxu0 %v2933
        %v4710 = vpop.f32.mrb[0].mxu0
        %v4711 = vadd.f32 0.0, %v4710
        %v4712 = vpop.f32.mrb[0].mxu0
        %v4713 = vpop.f32.mrb[0].mxu0
        %v4714 = vadd.f32 0.0, %v4713
        %v4715 = vpop.f32.mrb[0].mxu0
        %4716 = vmatprep.mubr.bf16.mxu0 0
        %4717 = vmatmul.mubr.bf16.gmra.mrb[0].mxu0 %v2936
        %v4718 = vpop.f32.mrb[0].mxu0
        %v4719 = vadd.f32 0.0, %v4718
        %v4720 = vpop.f32.mrb[0].mxu0
        %v4721 = vpop.f32.mrb[0].mxu0
        %v4722 = vadd.f32 0.0, %v4721
        %v4723 = vpop.f32.mrb[0].mxu0
        %4724 = vmatprep.mubr.bf16.mxu0 0
        %4725 = vmatmul.mubr.bf16.gmra.mrb[0].mxu0 %v2939
        %v4726 = vpop.f32.mrb[0].mxu0
        %v4727 = vadd.f32 0.0, %v4726
        %v4728 = vpop.f32.mrb[0].mxu0
        %v4729 = vpop.f32.mrb[0].mxu0
        %v4730 = vadd.f32 0.0, %v4729
        %v4731 = vpop.f32.mrb[0].mxu0
        %4732 = vmatprep.mubr.bf16.mxu0 0
        %4733 = vmatmul.mubr.bf16.gmra.mrb[0].mxu0 %v2942
        %v4734 = vpop.f32.mrb[0].mxu0
        %v4735 = vadd.f32 0.0, %v4734
        %v4736 = vpop.f32.mrb[0].mxu0
        %v4737 = vpop.f32.mrb[0].mxu0
        %v4738 = vadd.f32 0.0, %v4737
        %v4739 = vpop.f32.mrb[0].mxu0
        %4740 = vmatprep.mubr.bf16.mxu0 0
        %4741 = vmatmul.mubr.bf16.gmra.mrb[0].mxu0 %v2945
        %v4742 = vpop.f32.mrb[0].mxu0
        %v4743 = vadd.f32 0.0, %v4742
        %v4744 = vpop.f32.mrb[0].mxu0
        %v4745 = vpop.f32.mrb[0].mxu0
        %v4746 = vadd.f32 0.0, %v4745
        %v4747 = vpop.f32.mrb[0].mxu0
        %4748 = vdwg.mxu0
        %4749 = vmatprep.subr.bf16.mxu0 0
        %4750 = vmatpush1.bf16.msra.mxu0 %v2801
        %4751 = vmatprep.subr.bf16.mxu0 0
        %4752 = vmatpush1.bf16.msra.mxu0 0
        %4753 = vmatprep.subr.bf16.mxu0 0
        %4754 = vmatpush1.bf16.msra.mxu0 0
        %4755 = vmatprep.subr.bf16.mxu0 0
        %4756 = vmatpush1.bf16.msra.mxu0 0
        %4757 = vmatprep.subr.bf16.mxu0 0
        %4758 = vmatpush1.bf16.msra.mxu0 0
        %4759 = vmatprep.subr.bf16.mxu0 0
        %4760 = vmatpush1.bf16.msra.mxu0 0
        %4761 = vmatprep.subr.bf16.mxu0 0
        %4762 = vmatpush1.bf16.msra.mxu0 0
        %4763 = vmatprep.subr.bf16.mxu0 0
        %4764 = vmatpush1.bf16.msra.mxu0 0
        %4765 = vmatprep.subr.bf16.mxu0 0
        %4766 = vmatpush1.bf16.msra.mxu0 0
        %4767 = vmatprep.subr.bf16.mxu0 0
        %4768 = vmatpush1.bf16.msra.mxu0 0
        %4769 = vmatprep.subr.bf16.mxu0 0
        %4770 = vmatpush1.bf16.msra.mxu0 0
        %4771 = vmatprep.subr.bf16.mxu0 0
        %4772 = vmatpush1.bf16.msra.mxu0 0
        %4773 = vmatprep.subr.bf16.mxu0 0
        %4774 = vmatpush1.bf16.msra.mxu0 0
        %4775 = vmatprep.subr.bf16.mxu0 0
        %4776 = vmatpush1.bf16.msra.mxu0 0
        %4777 = vmatprep.subr.bf16.mxu0 0
        %4778 = vmatpush1.bf16.msra.mxu0 0
        %4779 = vmatprep.subr.bf16.mxu0 0
        %4780 = vmatpush1.bf16.msra.mxu0 0
        %4781 = vmatprep.mubr.bf16.mxu0 0
        %4782 = vmatmul.mubr.bf16.gmra.mrb[0].mxu0 %v2710
        %v4783 = vpop.f32.mrb[0].mxu0
        %v4784 = vadd.f32 %v4711, %v4783
        %v4785 = vpop.f32.mrb[0].mxu0
        %v4786 = vpop.f32.mrb[0].mxu0
        %v4787 = vadd.f32 %v4714, %v4786
        %v4788 = vpop.f32.mrb[0].mxu0
        %4789 = vmatprep.mubr.bf16.mxu0 0
        %4790 = vmatmul.mubr.bf16.gmra.mrb[0].mxu0 %v2713
        %v4791 = vpop.f32.mrb[0].mxu0
        %v4792 = vadd.f32 %v4719, %v4791
        %v4793 = vpop.f32.mrb[0].mxu0
        %v4794 = vpop.f32.mrb[0].mxu0
        %v4795 = vadd.f32 %v4722, %v4794
        %v4796 = vpop.f32.mrb[0].mxu0
        %4797 = vmatprep.mubr.bf16.mxu0 0
        %4798 = vmatmul.mubr.bf16.gmra.mrb[0].mxu0 %v2716
        %v4799 = vpop.f32.mrb[0].mxu0
        %v4800 = vadd.f32 %v4727, %v4799
        %v4801 = vpop.f32.mrb[0].mxu0
        %v4802 = vpop.f32.mrb[0].mxu0
        %v4803 = vadd.f32 %v4730, %v4802
        %v4804 = vpop.f32.mrb[0].mxu0
        %4805 = vmatprep.mubr.bf16.mxu0 0
        %4806 = vmatmul.mubr.bf16.gmra.mrb[0].mxu0 %v2719
        %v4807 = vpop.f32.mrb[0].mxu0
        %v4808 = vadd.f32 %v4735, %v4807
        %v4809 = vpop.f32.mrb[0].mxu0
        %v4810 = vpop.f32.mrb[0].mxu0
        %v4811 = vadd.f32 %v4738, %v4810
        %v4812 = vpop.f32.mrb[0].mxu0
        %4813 = vmatprep.mubr.bf16.mxu0 0
        %4814 = vmatmul.mubr.bf16.gmra.mrb[0].mxu0 %v2722
        %v4815 = vpop.f32.mrb[0].mxu0
        %v4816 = vadd.f32 %v4743, %v4815
        %v4817 = vpop.f32.mrb[0].mxu0
        %v4818 = vpop.f32.mrb[0].mxu0
        %v4819 = vadd.f32 %v4746, %v4818
        %v4820 = vpop.f32.mrb[0].mxu0
        %4821 = vdwg.mxu0
        %4822 = vmatprep.subr.bf16.mxu0 0
        %4823 = vmatpush1.bf16.msra.mxu0 %v2930
        %4824 = vmatprep.subr.bf16.mxu0 0
        %4825 = vmatpush1.bf16.msra.mxu0 0
        %4826 = vmatprep.subr.bf16.mxu0 0
        %4827 = vmatpush1.bf16.msra.mxu0 0
        %4828 = vmatprep.subr.bf16.mxu0 0
        %4829 = vmatpush1.bf16.msra.mxu0 0
        %4830 = vmatprep.subr.bf16.mxu0 0
        %4831 = vmatpush1.bf16.msra.mxu0 0
        %4832 = vmatprep.subr.bf16.mxu0 0
        %4833 = vmatpush1.bf16.msra.mxu0 0
        %4834 = vmatprep.subr.bf16.mxu0 0
        %4835 = vmatpush1.bf16.msra.mxu0 0
        %4836 = vmatprep.subr.bf16.mxu0 0
        %4837 = vmatpush1.bf16.msra.mxu0 0
        %4838 = vmatprep.subr.bf16.mxu0 0
        %4839 = vmatpush1.bf16.msra.mxu0 0
        %4840 = vmatprep.subr.bf16.mxu0 0
        %4841 = vmatpush1.bf16.msra.mxu0 0
        %4842 = vmatprep.subr.bf16.mxu0 0
        %4843 = vmatpush1.bf16.msra.mxu0 0
        %4844 = vmatprep.subr.bf16.mxu0 0
        %4845 = vmatpush1.bf16.msra.mxu0 0
        %4846 = vmatprep.subr.bf16.mxu0 0
        %4847 = vmatpush1.bf16.msra.mxu0 0
        %4848 = vmatprep.subr.bf16.mxu0 0
        %4849 = vmatpush1.bf16.msra.mxu0 0
        %4850 = vmatprep.subr.bf16.mxu0 0
        %4851 = vmatpush1.bf16.msra.mxu0 0
        %4852 = vmatprep.subr.bf16.mxu0 0
        %4853 = vmatpush1.bf16.msra.mxu0 0
        %4854 = vmatprep.mubr.bf16.mxu0 0
        %4855 = vmatmul.mubr.bf16.gmra.mrb[0].mxu0 %v3071
        %v4856 = vpop.f32.mrb[0].mxu0
        %v4857 = vadd.f32 0.0, %v4856
        %v4858 = vpop.f32.mrb[0].mxu0
        %v4859 = vpop.f32.mrb[0].mxu0
        %v4860 = vadd.f32 0.0, %v4859
        %v4861 = vpop.f32.mrb[0].mxu0
        %4862 = vmatprep.mubr.bf16.mxu0 0
        %4863 = vmatmul.mubr.bf16.gmra.mrb[0].mxu0 %v3074
        %v4864 = vpop.f32.mrb[0].mxu0
        %v4865 = vadd.f32 0.0, %v4864
        %v4866 = vpop.f32.mrb[0].mxu0
        %v4867 = vpop.f32.mrb[0].mxu0
        %v4868 = vadd.f32 0.0, %v4867
        %v4869 = vpop.f32.mrb[0].mxu0
        %4870 = vmatprep.mubr.bf16.mxu0 0
        %4871 = vmatmul.mubr.bf16.gmra.mrb[0].mxu0 %v3077
        %v4872 = vpop.f32.mrb[0].mxu0
        %v4873 = vadd.f32 0.0, %v4872
        %v4874 = vpop.f32.mrb[0].mxu0
        %v4875 = vpop.f32.mrb[0].mxu0
        %v4876 = vadd.f32 0.0, %v4875
        %v4877 = vpop.f32.mrb[0].mxu0
        %4878 = vmatprep.mubr.bf16.mxu0 0
        %4879 = vmatmul.mubr.bf16.gmra.mrb[0].mxu0 %v3080
        %v4880 = vpop.f32.mrb[0].mxu0
        %v4881 = vadd.f32 0.0, %v4880
        %v4882 = vpop.f32.mrb[0].mxu0
        %v4883 = vpop.f32.mrb[0].mxu0
        %v4884 = vadd.f32 0.0, %v4883
        %v4885 = vpop.f32.mrb[0].mxu0
        %4886 = vmatprep.mubr.bf16.mxu0 0
        %4887 = vmatmul.mubr.bf16.gmra.mrb[0].mxu0 %v3083
        %v4888 = vpop.f32.mrb[0].mxu0
        %v4889 = vadd.f32 0.0, %v4888
        %v4890 = vpop.f32.mrb[0].mxu0
        %v4891 = vpop.f32.mrb[0].mxu0
        %v4892 = vadd.f32 0.0, %v4891
        %v4893 = vpop.f32.mrb[0].mxu0
        %4894 = vdwg.mxu0
        %v4895 = vadd.f32 %v4784, %v4857
        %v4896 = vadd.f32 %v4787, %v4860
        %v4897 = vadd.f32 %v4792, %v4865
        %v4898 = vadd.f32 %v4795, %v4868
        %v4899 = vadd.f32 %v4800, %v4873
        %v4900 = vadd.f32 %v4803, %v4876
        %v4901 = vadd.f32 %v4808, %v4881
        %v4902 = vadd.f32 %v4811, %v4884
        %v4903 = vadd.f32 %v4816, %v4889
        %v4904 = vadd.f32 %v4819, %v4892
        %4905 = vmatprep.subr.bf16.mxu0 0
        %4906 = vmatpush1.bf16.msra.mxu0 %v3068
        %4907 = vmatprep.subr.bf16.mxu0 0
        %4908 = vmatpush1.bf16.msra.mxu0 0
        %4909 = vmatprep.subr.bf16.mxu0 0
        %4910 = vmatpush1.bf16.msra.mxu0 0
        %4911 = vmatprep.subr.bf16.mxu0 0
        %4912 = vmatpush1.bf16.msra.mxu0 0
        %4913 = vmatprep.subr.bf16.mxu0 0
        %4914 = vmatpush1.bf16.msra.mxu0 0
        %4915 = vmatprep.subr.bf16.mxu0 0
        %4916 = vmatpush1.bf16.msra.mxu0 0
        %4917 = vmatprep.subr.bf16.mxu0 0
        %4918 = vmatpush1.bf16.msra.mxu0 0
        %4919 = vmatprep.subr.bf16.mxu0 0
        %4920 = vmatpush1.bf16.msra.mxu0 0
        %4921 = vmatprep.subr.bf16.mxu0 0
        %4922 = vmatpush1.bf16.msra.mxu0 0
        %4923 = vmatprep.subr.bf16.mxu0 0
        %4924 = vmatpush1.bf16.msra.mxu0 0
        %4925 = vmatprep.subr.bf16.mxu0 0
        %4926 = vmatpush1.bf16.msra.mxu0 0
        %4927 = vmatprep.subr.bf16.mxu0 0
        %4928 = vmatpush1.bf16.msra.mxu0 0
        %4929 = vmatprep.subr.bf16.mxu0 0
        %4930 = vmatpush1.bf16.msra.mxu0 0
        %4931 = vmatprep.subr.bf16.mxu0 0
        %4932 = vmatpush1.bf16.msra.mxu0 0
        %4933 = vmatprep.subr.bf16.mxu0 0
        %4934 = vmatpush1.bf16.msra.mxu0 0
        %4935 = vmatprep.subr.bf16.mxu0 0
        %4936 = vmatpush1.bf16.msra.mxu0 0
        %4937 = vmatprep.mubr.bf16.mxu0 0
        %4938 = vmatmul.mubr.bf16.gmra.mrb[0].mxu0 %v3190
        %v4939 = vpop.f32.mrb[0].mxu0
        %v4940 = vadd.f32 0.0, %v4939
        %v4941 = vpop.f32.mrb[0].mxu0
        %v4942 = vpop.f32.mrb[0].mxu0
        %v4943 = vadd.f32 0.0, %v4942
        %v4944 = vpop.f32.mrb[0].mxu0
        %4945 = vmatprep.mubr.bf16.mxu0 0
        %4946 = vmatmul.mubr.bf16.gmra.mrb[0].mxu0 %v3193
        %v4947 = vpop.f32.mrb[0].mxu0
        %v4948 = vadd.f32 0.0, %v4947
        %v4949 = vpop.f32.mrb[0].mxu0
        %v4950 = vpop.f32.mrb[0].mxu0
        %v4951 = vadd.f32 0.0, %v4950
        %v4952 = vpop.f32.mrb[0].mxu0
        %4953 = vmatprep.mubr.bf16.mxu0 0
        %4954 = vmatmul.mubr.bf16.gmra.mrb[0].mxu0 %v3196
        %v4955 = vpop.f32.mrb[0].mxu0
        %v4956 = vadd.f32 0.0, %v4955
        %v4957 = vpop.f32.mrb[0].mxu0
        %v4958 = vpop.f32.mrb[0].mxu0
        %v4959 = vadd.f32 0.0, %v4958
        %v4960 = vpop.f32.mrb[0].mxu0
        %4961 = vmatprep.mubr.bf16.mxu0 0
        %4962 = vmatmul.mubr.bf16.gmra.mrb[0].mxu0 %v3199
        %v4963 = vpop.f32.mrb[0].mxu0
        %v4964 = vadd.f32 0.0, %v4963
        %v4965 = vpop.f32.mrb[0].mxu0
        %v4966 = vpop.f32.mrb[0].mxu0
        %v4967 = vadd.f32 0.0, %v4966
        %v4968 = vpop.f32.mrb[0].mxu0
        %4969 = vmatprep.mubr.bf16.mxu0 0
        %4970 = vmatmul.mubr.bf16.gmra.mrb[0].mxu0 %v3202
        %v4971 = vpop.f32.mrb[0].mxu0
        %v4972 = vadd.f32 0.0, %v4971
        %v4973 = vpop.f32.mrb[0].mxu0
        %v4974 = vpop.f32.mrb[0].mxu0
        %v4975 = vadd.f32 0.0, %v4974
        %v4976 = vpop.f32.mrb[0].mxu0
        %4977 = vdwg.mxu0
        %v4978 = vadd.f32 %v4895, %v4940
        %v4979 = vadd.f32 %v4896, %v4943
        %v4980 = vadd.f32 %v4897, %v4948
        %v4981 = vadd.f32 %v4898, %v4951
        %v4982 = vadd.f32 %v4899, %v4956
        %v4983 = vadd.f32 %v4900, %v4959
        %v4984 = vadd.f32 %v4901, %v4964
        %v4985 = vadd.f32 %v4902, %v4967
        %v4986 = vadd.f32 %v4903, %v4972
        %v4987 = vadd.f32 %v4904, %v4975
        %4988 = vmatprep.subr.bf16.mxu0 0
        %4989 = vmatpush1.bf16.msra.mxu0 %v3187
        %4990 = vmatprep.subr.bf16.mxu0 0
        %4991 = vmatpush1.bf16.msra.mxu0 0
        %4992 = vmatprep.subr.bf16.mxu0 0
        %4993 = vmatpush1.bf16.msra.mxu0 0
        %4994 = vmatprep.subr.bf16.mxu0 0
        %4995 = vmatpush1.bf16.msra.mxu0 0
        %4996 = vmatprep.subr.bf16.mxu0 0
        %4997 = vmatpush1.bf16.msra.mxu0 0
        %4998 = vmatprep.subr.bf16.mxu0 0
        %4999 = vmatpush1.bf16.msra.mxu0 0
        %5000 = vmatprep.subr.bf16.mxu0 0
        %5001 = vmatpush1.bf16.msra.mxu0 0
        %5002 = vmatprep.subr.bf16.mxu0 0
        %5003 = vmatpush1.bf16.msra.mxu0 0
        %5004 = vmatprep.subr.bf16.mxu0 0
        %5005 = vmatpush1.bf16.msra.mxu0 0
        %5006 = vmatprep.subr.bf16.mxu0 0
        %5007 = vmatpush1.bf16.msra.mxu0 0
        %5008 = vmatprep.subr.bf16.mxu0 0
        %5009 = vmatpush1.bf16.msra.mxu0 0
        %5010 = vmatprep.subr.bf16.mxu0 0
        %5011 = vmatpush1.bf16.msra.mxu0 0
        %5012 = vmatprep.subr.bf16.mxu0 0
        %5013 = vmatpush1.bf16.msra.mxu0 0
        %5014 = vmatprep.subr.bf16.mxu0 0
        %5015 = vmatpush1.bf16.msra.mxu0 0
        %5016 = vmatprep.subr.bf16.mxu0 0
        %5017 = vmatpush1.bf16.msra.mxu0 0
        %5018 = vmatprep.subr.bf16.mxu0 0
        %5019 = vmatpush1.bf16.msra.mxu0 0
        %5020 = vmatprep.mubr.bf16.mxu0 0
        %5021 = vmatmul.mubr.bf16.gmra.mrb[0].mxu0 %v3308
        %v5022 = vpop.f32.mrb[0].mxu0
        %v5023 = vadd.f32 0.0, %v5022
        %v5024 = vpop.f32.mrb[0].mxu0
        %v5025 = vpop.f32.mrb[0].mxu0
        %v5026 = vadd.f32 0.0, %v5025
        %v5027 = vpop.f32.mrb[0].mxu0
        %5028 = vmatprep.mubr.bf16.mxu0 0
        %5029 = vmatmul.mubr.bf16.gmra.mrb[0].mxu0 %v3311
        %v5030 = vpop.f32.mrb[0].mxu0
        %v5031 = vadd.f32 0.0, %v5030
        %v5032 = vpop.f32.mrb[0].mxu0
        %v5033 = vpop.f32.mrb[0].mxu0
        %v5034 = vadd.f32 0.0, %v5033
        %v5035 = vpop.f32.mrb[0].mxu0
        %5036 = vmatprep.mubr.bf16.mxu0 0
        %5037 = vmatmul.mubr.bf16.gmra.mrb[0].mxu0 %v3314
        %v5038 = vpop.f32.mrb[0].mxu0
        %v5039 = vadd.f32 0.0, %v5038
        %v5040 = vpop.f32.mrb[0].mxu0
        %v5041 = vpop.f32.mrb[0].mxu0
        %v5042 = vadd.f32 0.0, %v5041
        %v5043 = vpop.f32.mrb[0].mxu0
        %5044 = vmatprep.mubr.bf16.mxu0 0
        %5045 = vmatmul.mubr.bf16.gmra.mrb[0].mxu0 %v3317
        %v5046 = vpop.f32.mrb[0].mxu0
        %v5047 = vadd.f32 0.0, %v5046
        %v5048 = vpop.f32.mrb[0].mxu0
        %v5049 = vpop.f32.mrb[0].mxu0
        %v5050 = vadd.f32 0.0, %v5049
        %v5051 = vpop.f32.mrb[0].mxu0
        %5052 = vmatprep.mubr.bf16.mxu0 0
        %5053 = vmatmul.mubr.bf16.gmra.mrb[0].mxu0 %v3320
        %v5054 = vpop.f32.mrb[0].mxu0
        %v5055 = vadd.f32 0.0, %v5054
        %v5056 = vpop.f32.mrb[0].mxu0
        %v5057 = vpop.f32.mrb[0].mxu0
        %v5058 = vadd.f32 0.0, %v5057
        %v5059 = vpop.f32.mrb[0].mxu0
        %5060 = vdwg.mxu0
        %v5061 = vadd.f32 %v4978, %v5023
        %v5062 = vadd.f32 %v4979, %v5026
        %v5063 = vadd.f32 %v4980, %v5031
        %v5064 = vadd.f32 %v4981, %v5034
        %v5065 = vadd.f32 %v4982, %v5039
        %v5066 = vadd.f32 %v4983, %v5042
        %v5067 = vadd.f32 %v4984, %v5047
        %v5068 = vadd.f32 %v4985, %v5050
        %v5069 = vadd.f32 %v4986, %v5055
        %v5070 = vadd.f32 %v4987, %v5058
        %5071 = vmatprep.subr.bf16.mxu0 0
        %5072 = vmatpush1.bf16.msra.mxu0 %v3305
        %5073 = vmatprep.subr.bf16.mxu0 0
        %5074 = vmatpush1.bf16.msra.mxu0 0
        %5075 = vmatprep.subr.bf16.mxu0 0
        %5076 = vmatpush1.bf16.msra.mxu0 0
        %5077 = vmatprep.subr.bf16.mxu0 0
        %5078 = vmatpush1.bf16.msra.mxu0 0
        %5079 = vmatprep.subr.bf16.mxu0 0
        %5080 = vmatpush1.bf16.msra.mxu0 0
        %5081 = vmatprep.subr.bf16.mxu0 0
        %5082 = vmatpush1.bf16.msra.mxu0 0
        %5083 = vmatprep.subr.bf16.mxu0 0
        %5084 = vmatpush1.bf16.msra.mxu0 0
        %5085 = vmatprep.subr.bf16.mxu0 0
        %5086 = vmatpush1.bf16.msra.mxu0 0
        %5087 = vmatprep.subr.bf16.mxu0 0
        %5088 = vmatpush1.bf16.msra.mxu0 0
        %5089 = vmatprep.subr.bf16.mxu0 0
        %5090 = vmatpush1.bf16.msra.mxu0 0
        %5091 = vmatprep.subr.bf16.mxu0 0
        %5092 = vmatpush1.bf16.msra.mxu0 0
        %5093 = vmatprep.subr.bf16.mxu0 0
        %5094 = vmatpush1.bf16.msra.mxu0 0
        %5095 = vmatprep.subr.bf16.mxu0 0
        %5096 = vmatpush1.bf16.msra.mxu0 0
        %5097 = vmatprep.subr.bf16.mxu0 0
        %5098 = vmatpush1.bf16.msra.mxu0 0
        %5099 = vmatprep.subr.bf16.mxu0 0
        %5100 = vmatpush1.bf16.msra.mxu0 0
        %5101 = vmatprep.subr.bf16.mxu0 0
        %5102 = vmatpush1.bf16.msra.mxu0 0
        %5103 = vmatprep.mubr.bf16.mxu0 0
        %5104 = vmatmul.mubr.bf16.gmra.mrb[0].mxu0 %v3432
        %v5105 = vpop.f32.mrb[0].mxu0
        %v5106 = vadd.f32 0.0, %v5105
        %v5107 = vpop.f32.mrb[0].mxu0
        %v5108 = vpop.f32.mrb[0].mxu0
        %v5109 = vadd.f32 0.0, %v5108
        %v5110 = vpop.f32.mrb[0].mxu0
        %5111 = vmatprep.mubr.bf16.mxu0 0
        %5112 = vmatmul.mubr.bf16.gmra.mrb[0].mxu0 %v3435
        %v5113 = vpop.f32.mrb[0].mxu0
        %v5114 = vadd.f32 0.0, %v5113
        %v5115 = vpop.f32.mrb[0].mxu0
        %v5116 = vpop.f32.mrb[0].mxu0
        %v5117 = vadd.f32 0.0, %v5116
        %v5118 = vpop.f32.mrb[0].mxu0
        %5119 = vmatprep.mubr.bf16.mxu0 0
        %5120 = vmatmul.mubr.bf16.gmra.mrb[0].mxu0 %v3438
        %v5121 = vpop.f32.mrb[0].mxu0
        %v5122 = vadd.f32 0.0, %v5121
        %v5123 = vpop.f32.mrb[0].mxu0
        %v5124 = vpop.f32.mrb[0].mxu0
        %v5125 = vadd.f32 0.0, %v5124
        %v5126 = vpop.f32.mrb[0].mxu0
        %5127 = vmatprep.mubr.bf16.mxu0 0
        %5128 = vmatmul.mubr.bf16.gmra.mrb[0].mxu0 %v3441
        %v5129 = vpop.f32.mrb[0].mxu0
        %v5130 = vadd.f32 0.0, %v5129
        %v5131 = vpop.f32.mrb[0].mxu0
        %v5132 = vpop.f32.mrb[0].mxu0
        %v5133 = vadd.f32 0.0, %v5132
        %v5134 = vpop.f32.mrb[0].mxu0
        %5135 = vmatprep.mubr.bf16.mxu0 0
        %5136 = vmatmul.mubr.bf16.gmra.mrb[0].mxu0 %v3444
        %v5137 = vpop.f32.mrb[0].mxu0
        %v5138 = vadd.f32 0.0, %v5137
        %v5139 = vpop.f32.mrb[0].mxu0
        %v5140 = vpop.f32.mrb[0].mxu0
        %v5141 = vadd.f32 0.0, %v5140
        %v5142 = vpop.f32.mrb[0].mxu0
        %5143 = vdwg.mxu0
        %v5144 = vadd.f32 %v5061, %v5106
        %v5145 = vadd.f32 %v5062, %v5109
        %v5146 = vadd.f32 %v5063, %v5114
        %v5147 = vadd.f32 %v5064, %v5117
        %v5148 = vadd.f32 %v5065, %v5122
        %v5149 = vadd.f32 %v5066, %v5125
        %v5150 = vadd.f32 %v5067, %v5130
        %v5151 = vadd.f32 %v5068, %v5133
        %v5152 = vadd.f32 %v5069, %v5138
        %v5153 = vadd.f32 %v5070, %v5141
        %5154 = vmatprep.subr.bf16.mxu0 0
        %5155 = vmatpush1.bf16.msra.mxu0 %v3429
        %5156 = vmatprep.subr.bf16.mxu0 0
        %5157 = vmatpush1.bf16.msra.mxu0 0
        %5158 = vmatprep.subr.bf16.mxu0 0
        %5159 = vmatpush1.bf16.msra.mxu0 0
        %5160 = vmatprep.subr.bf16.mxu0 0
        %5161 = vmatpush1.bf16.msra.mxu0 0
        %5162 = vmatprep.subr.bf16.mxu0 0
        %5163 = vmatpush1.bf16.msra.mxu0 0
        %5164 = vmatprep.subr.bf16.mxu0 0
        %5165 = vmatpush1.bf16.msra.mxu0 0
        %5166 = vmatprep.subr.bf16.mxu0 0
        %5167 = vmatpush1.bf16.msra.mxu0 0
        %5168 = vmatprep.subr.bf16.mxu0 0
        %5169 = vmatpush1.bf16.msra.mxu0 0
        %5170 = vmatprep.subr.bf16.mxu0 0
        %5171 = vmatpush1.bf16.msra.mxu0 0
        %5172 = vmatprep.subr.bf16.mxu0 0
        %5173 = vmatpush1.bf16.msra.mxu0 0
        %5174 = vmatprep.subr.bf16.mxu0 0
        %5175 = vmatpush1.bf16.msra.mxu0 0
        %5176 = vmatprep.subr.bf16.mxu0 0
        %5177 = vmatpush1.bf16.msra.mxu0 0
        %5178 = vmatprep.subr.bf16.mxu0 0
        %5179 = vmatpush1.bf16.msra.mxu0 0
        %5180 = vmatprep.subr.bf16.mxu0 0
        %5181 = vmatpush1.bf16.msra.mxu0 0
        %5182 = vmatprep.subr.bf16.mxu0 0
        %5183 = vmatpush1.bf16.msra.mxu0 0
        %5184 = vmatprep.subr.bf16.mxu0 0
        %5185 = vmatpush1.bf16.msra.mxu0 0
        %5186 = vmatprep.mubr.bf16.mxu0 0
        %5187 = vmatmul.mubr.bf16.gmra.mrb[0].mxu0 %v3555
        %v5188 = vpop.f32.mrb[0].mxu0
        %v5189 = vadd.f32 0.0, %v5188
        %v5190 = vpop.f32.mrb[0].mxu0
        %v5191 = vpop.f32.mrb[0].mxu0
        %v5192 = vadd.f32 0.0, %v5191
        %v5193 = vpop.f32.mrb[0].mxu0
        %5194 = vmatprep.mubr.bf16.mxu0 0
        %5195 = vmatmul.mubr.bf16.gmra.mrb[0].mxu0 %v3558
        %v5196 = vpop.f32.mrb[0].mxu0
        %v5197 = vadd.f32 0.0, %v5196
        %v5198 = vpop.f32.mrb[0].mxu0
        %v5199 = vpop.f32.mrb[0].mxu0
        %v5200 = vadd.f32 0.0, %v5199
        %v5201 = vpop.f32.mrb[0].mxu0
        %5202 = vmatprep.mubr.bf16.mxu0 0
        %5203 = vmatmul.mubr.bf16.gmra.mrb[0].mxu0 %v3561
        %v5204 = vpop.f32.mrb[0].mxu0
        %v5205 = vadd.f32 0.0, %v5204
        %v5206 = vpop.f32.mrb[0].mxu0
        %v5207 = vpop.f32.mrb[0].mxu0
        %v5208 = vadd.f32 0.0, %v5207
        %v5209 = vpop.f32.mrb[0].mxu0
        %5210 = vmatprep.mubr.bf16.mxu0 0
        %5211 = vmatmul.mubr.bf16.gmra.mrb[0].mxu0 %v3564
        %v5212 = vpop.f32.mrb[0].mxu0
        %v5213 = vadd.f32 0.0, %v5212
        %v5214 = vpop.f32.mrb[0].mxu0
        %v5215 = vpop.f32.mrb[0].mxu0
        %v5216 = vadd.f32 0.0, %v5215
        %v5217 = vpop.f32.mrb[0].mxu0
        %5218 = vmatprep.mubr.bf16.mxu0 0
        %5219 = vmatmul.mubr.bf16.gmra.mrb[0].mxu0 %v3567
        %v5220 = vpop.f32.mrb[0].mxu0
        %v5221 = vadd.f32 0.0, %v5220
        %v5222 = vpop.f32.mrb[0].mxu0
        %v5223 = vpop.f32.mrb[0].mxu0
        %v5224 = vadd.f32 0.0, %v5223
        %v5225 = vpop.f32.mrb[0].mxu0
        %5226 = vdwg.mxu0
        %v5227 = vadd.f32 %v5144, %v5189
        %v5228 = vadd.f32 %v5145, %v5192
        %v5229 = vadd.f32 %v5146, %v5197
        %v5230 = vadd.f32 %v5147, %v5200
        %v5231 = vadd.f32 %v5148, %v5205
        %v5232 = vadd.f32 %v5149, %v5208
        %v5233 = vadd.f32 %v5150, %v5213
        %v5234 = vadd.f32 %v5151, %v5216
        %v5235 = vadd.f32 %v5152, %v5221
        %v5236 = vadd.f32 %v5153, %v5224
        %5237 = vmatprep.subr.bf16.mxu0 0
        %5238 = vmatpush1.bf16.msra.mxu0 %v3552
        %5239 = vmatprep.subr.bf16.mxu0 0
        %5240 = vmatpush1.bf16.msra.mxu0 0
        %5241 = vmatprep.subr.bf16.mxu0 0
        %5242 = vmatpush1.bf16.msra.mxu0 0
        %5243 = vmatprep.subr.bf16.mxu0 0
        %5244 = vmatpush1.bf16.msra.mxu0 0
        %5245 = vmatprep.subr.bf16.mxu0 0
        %5246 = vmatpush1.bf16.msra.mxu0 0
        %5247 = vmatprep.subr.bf16.mxu0 0
        %5248 = vmatpush1.bf16.msra.mxu0 0
        %5249 = vmatprep.subr.bf16.mxu0 0
        %5250 = vmatpush1.bf16.msra.mxu0 0
        %5251 = vmatprep.subr.bf16.mxu0 0
        %5252 = vmatpush1.bf16.msra.mxu0 0
        %5253 = vmatprep.subr.bf16.mxu0 0
        %5254 = vmatpush1.bf16.msra.mxu0 0
        %5255 = vmatprep.subr.bf16.mxu0 0
        %5256 = vmatpush1.bf16.msra.mxu0 0
        %5257 = vmatprep.subr.bf16.mxu0 0
        %5258 = vmatpush1.bf16.msra.mxu0 0
        %5259 = vmatprep.subr.bf16.mxu0 0
        %5260 = vmatpush1.bf16.msra.mxu0 0
        %5261 = vmatprep.subr.bf16.mxu0 0
        %5262 = vmatpush1.bf16.msra.mxu0 0
        %5263 = vmatprep.subr.bf16.mxu0 0
        %5264 = vmatpush1.bf16.msra.mxu0 0
        %5265 = vmatprep.subr.bf16.mxu0 0
        %5266 = vmatpush1.bf16.msra.mxu0 0
        %5267 = vmatprep.subr.bf16.mxu0 0
        %5268 = vmatpush1.bf16.msra.mxu0 0
        %5269 = vmatprep.mubr.bf16.mxu0 0
        %5270 = vmatmul.mubr.bf16.gmra.mrb[0].mxu0 %v3669
        %v5271 = vpop.f32.mrb[0].mxu0
        %v5272 = vadd.f32 0.0, %v5271
        %v5273 = vpop.f32.mrb[0].mxu0
        %v5274 = vpop.f32.mrb[0].mxu0
        %v5275 = vadd.f32 0.0, %v5274
        %v5276 = vpop.f32.mrb[0].mxu0
        %5277 = vmatprep.mubr.bf16.mxu0 0
        %5278 = vmatmul.mubr.bf16.gmra.mrb[0].mxu0 %v3672
        %v5279 = vpop.f32.mrb[0].mxu0
        %v5280 = vadd.f32 0.0, %v5279
        %v5281 = vpop.f32.mrb[0].mxu0
        %v5282 = vpop.f32.mrb[0].mxu0
        %v5283 = vadd.f32 0.0, %v5282
        %v5284 = vpop.f32.mrb[0].mxu0
        %5285 = vmatprep.mubr.bf16.mxu0 0
        %5286 = vmatmul.mubr.bf16.gmra.mrb[0].mxu0 %v3675
        %v5287 = vpop.f32.mrb[0].mxu0
        %v5288 = vadd.f32 0.0, %v5287
        %v5289 = vpop.f32.mrb[0].mxu0
        %v5290 = vpop.f32.mrb[0].mxu0
        %v5291 = vadd.f32 0.0, %v5290
        %v5292 = vpop.f32.mrb[0].mxu0
        %5293 = vmatprep.mubr.bf16.mxu0 0
        %5294 = vmatmul.mubr.bf16.gmra.mrb[0].mxu0 %v3678
        %v5295 = vpop.f32.mrb[0].mxu0
        %v5296 = vadd.f32 0.0, %v5295
        %v5297 = vpop.f32.mrb[0].mxu0
        %v5298 = vpop.f32.mrb[0].mxu0
        %v5299 = vadd.f32 0.0, %v5298
        %v5300 = vpop.f32.mrb[0].mxu0
        %5301 = vmatprep.mubr.bf16.mxu0 0
        %5302 = vmatmul.mubr.bf16.gmra.mrb[0].mxu0 %v3681
        %v5303 = vpop.f32.mrb[0].mxu0
        %v5304 = vadd.f32 0.0, %v5303
        %v5305 = vpop.f32.mrb[0].mxu0
        %v5306 = vpop.f32.mrb[0].mxu0
        %v5307 = vadd.f32 0.0, %v5306
        %v5308 = vpop.f32.mrb[0].mxu0
        %5309 = vdwg.mxu0
        %v5310 = vadd.f32 %v5227, %v5272
        %v5311 = vadd.f32 %v5228, %v5275
        %v5312 = vadd.f32 %v5229, %v5280
        %v5313 = vadd.f32 %v5230, %v5283
        %v5314 = vadd.f32 %v5231, %v5288
        %v5315 = vadd.f32 %v5232, %v5291
        %v5316 = vadd.f32 %v5233, %v5296
        %v5317 = vadd.f32 %v5234, %v5299
        %v5318 = vadd.f32 %v5235, %v5304
        %v5319 = vadd.f32 %v5236, %v5307
        %5320 = vmatprep.subr.bf16.mxu0 0
        %5321 = vmatpush1.bf16.msra.mxu0 %v3666
        %5322 = vmatprep.subr.bf16.mxu0 0
        %5323 = vmatpush1.bf16.msra.mxu0 0
        %5324 = vmatprep.subr.bf16.mxu0 0
        %5325 = vmatpush1.bf16.msra.mxu0 0
        %5326 = vmatprep.subr.bf16.mxu0 0
        %5327 = vmatpush1.bf16.msra.mxu0 0
        %5328 = vmatprep.subr.bf16.mxu0 0
        %5329 = vmatpush1.bf16.msra.mxu0 0
        %5330 = vmatprep.subr.bf16.mxu0 0
        %5331 = vmatpush1.bf16.msra.mxu0 0
        %5332 = vmatprep.subr.bf16.mxu0 0
        %5333 = vmatpush1.bf16.msra.mxu0 0
        %5334 = vmatprep.subr.bf16.mxu0 0
        %5335 = vmatpush1.bf16.msra.mxu0 0
        %5336 = vmatprep.subr.bf16.mxu0 0
        %5337 = vmatpush1.bf16.msra.mxu0 0
        %5338 = vmatprep.subr.bf16.mxu0 0
        %5339 = vmatpush1.bf16.msra.mxu0 0
        %5340 = vmatprep.subr.bf16.mxu0 0
        %5341 = vmatpush1.bf16.msra.mxu0 0
        %5342 = vmatprep.subr.bf16.mxu0 0
        %5343 = vmatpush1.bf16.msra.mxu0 0
        %5344 = vmatprep.subr.bf16.mxu0 0
        %5345 = vmatpush1.bf16.msra.mxu0 0
        %5346 = vmatprep.subr.bf16.mxu0 0
        %5347 = vmatpush1.bf16.msra.mxu0 0
        %5348 = vmatprep.subr.bf16.mxu0 0
        %5349 = vmatpush1.bf16.msra.mxu0 0
        %5350 = vmatprep.subr.bf16.mxu0 0
        %5351 = vmatpush1.bf16.msra.mxu0 0
        %5352 = vmatprep.mubr.bf16.mxu0 0
        %5353 = vmatmul.mubr.bf16.gmra.mrb[0].mxu0 %v3782
        %v5354 = vpop.f32.mrb[0].mxu0
        %v5355 = vadd.f32 0.0, %v5354
        %v5356 = vpop.f32.mrb[0].mxu0
        %v5357 = vpop.f32.mrb[0].mxu0
        %v5358 = vadd.f32 0.0, %v5357
        %v5359 = vpop.f32.mrb[0].mxu0
        %5360 = vmatprep.mubr.bf16.mxu0 0
        %5361 = vmatmul.mubr.bf16.gmra.mrb[0].mxu0 %v3785
        %v5362 = vpop.f32.mrb[0].mxu0
        %v5363 = vadd.f32 0.0, %v5362
        %v5364 = vpop.f32.mrb[0].mxu0
        %v5365 = vpop.f32.mrb[0].mxu0
        %v5366 = vadd.f32 0.0, %v5365
        %v5367 = vpop.f32.mrb[0].mxu0
        %5368 = vmatprep.mubr.bf16.mxu0 0
        %5369 = vmatmul.mubr.bf16.gmra.mrb[0].mxu0 %v3788
        %v5370 = vpop.f32.mrb[0].mxu0
        %v5371 = vadd.f32 0.0, %v5370
        %v5372 = vpop.f32.mrb[0].mxu0
        %v5373 = vpop.f32.mrb[0].mxu0
        %v5374 = vadd.f32 0.0, %v5373
        %v5375 = vpop.f32.mrb[0].mxu0
        %5376 = vmatprep.mubr.bf16.mxu0 0
        %5377 = vmatmul.mubr.bf16.gmra.mrb[0].mxu0 %v3791
        %v5378 = vpop.f32.mrb[0].mxu0
        %v5379 = vadd.f32 0.0, %v5378
        %v5380 = vpop.f32.mrb[0].mxu0
        %v5381 = vpop.f32.mrb[0].mxu0
        %v5382 = vadd.f32 0.0, %v5381
        %v5383 = vpop.f32.mrb[0].mxu0
        %5384 = vmatprep.mubr.bf16.mxu0 0
        %5385 = vmatmul.mubr.bf16.gmra.mrb[0].mxu0 %v3794
        %v5386 = vpop.f32.mrb[0].mxu0
        %v5387 = vadd.f32 0.0, %v5386
        %v5388 = vpop.f32.mrb[0].mxu0
        %v5389 = vpop.f32.mrb[0].mxu0
        %v5390 = vadd.f32 0.0, %v5389
        %v5391 = vpop.f32.mrb[0].mxu0
        %5392 = vdwg.mxu0
        %v5393 = vadd.f32 %v5310, %v5355
        %v5394 = vadd.f32 %v5311, %v5358
        %v5395 = vadd.f32 %v5312, %v5363
        %v5396 = vadd.f32 %v5313, %v5366
        %v5397 = vadd.f32 %v5314, %v5371
        %v5398 = vadd.f32 %v5315, %v5374
        %v5399 = vadd.f32 %v5316, %v5379
        %v5400 = vadd.f32 %v5317, %v5382
        %v5401 = vadd.f32 %v5318, %v5387
        %v5402 = vadd.f32 %v5319, %v5390
        %5403 = vmatprep.subr.bf16.mxu0 0
        %5404 = vmatpush1.bf16.msra.mxu0 %v3779
        %5405 = vmatprep.subr.bf16.mxu0 0
        %5406 = vmatpush1.bf16.msra.mxu0 0
        %5407 = vmatprep.subr.bf16.mxu0 0
        %5408 = vmatpush1.bf16.msra.mxu0 0
        %5409 = vmatprep.subr.bf16.mxu0 0
        %5410 = vmatpush1.bf16.msra.mxu0 0
        %5411 = vmatprep.subr.bf16.mxu0 0
        %5412 = vmatpush1.bf16.msra.mxu0 0
        %5413 = vmatprep.subr.bf16.mxu0 0
        %5414 = vmatpush1.bf16.msra.mxu0 0
        %5415 = vmatprep.subr.bf16.mxu0 0
        %5416 = vmatpush1.bf16.msra.mxu0 0
        %5417 = vmatprep.subr.bf16.mxu0 0
        %5418 = vmatpush1.bf16.msra.mxu0 0
        %5419 = vmatprep.subr.bf16.mxu0 0
        %5420 = vmatpush1.bf16.msra.mxu0 0
        %5421 = vmatprep.subr.bf16.mxu0 0
        %5422 = vmatpush1.bf16.msra.mxu0 0
        %5423 = vmatprep.subr.bf16.mxu0 0
        %5424 = vmatpush1.bf16.msra.mxu0 0
        %5425 = vmatprep.subr.bf16.mxu0 0
        %5426 = vmatpush1.bf16.msra.mxu0 0
        %5427 = vmatprep.subr.bf16.mxu0 0
        %5428 = vmatpush1.bf16.msra.mxu0 0
        %5429 = vmatprep.subr.bf16.mxu0 0
        %5430 = vmatpush1.bf16.msra.mxu0 0
        %5431 = vmatprep.subr.bf16.mxu0 0
        %5432 = vmatpush1.bf16.msra.mxu0 0
        %5433 = vmatprep.subr.bf16.mxu0 0
        %5434 = vmatpush1.bf16.msra.mxu0 0
        %5435 = vmatprep.mubr.bf16.mxu0 0
        %5436 = vmatmul.mubr.bf16.gmra.mrb[0].mxu0 %v3906
        %v5437 = vpop.f32.mrb[0].mxu0
        %v5438 = vadd.f32 0.0, %v5437
        %v5439 = vpop.f32.mrb[0].mxu0
        %v5440 = vpop.f32.mrb[0].mxu0
        %v5441 = vadd.f32 0.0, %v5440
        %v5442 = vpop.f32.mrb[0].mxu0
        %5443 = vmatprep.mubr.bf16.mxu0 0
        %5444 = vmatmul.mubr.bf16.gmra.mrb[0].mxu0 %v3909
        %v5445 = vpop.f32.mrb[0].mxu0
        %v5446 = vadd.f32 0.0, %v5445
        %v5447 = vpop.f32.mrb[0].mxu0
        %v5448 = vpop.f32.mrb[0].mxu0
        %v5449 = vadd.f32 0.0, %v5448
        %v5450 = vpop.f32.mrb[0].mxu0
        %5451 = vmatprep.mubr.bf16.mxu0 0
        %5452 = vmatmul.mubr.bf16.gmra.mrb[0].mxu0 %v3912
        %v5453 = vpop.f32.mrb[0].mxu0
        %v5454 = vadd.f32 0.0, %v5453
        %v5455 = vpop.f32.mrb[0].mxu0
        %v5456 = vpop.f32.mrb[0].mxu0
        %v5457 = vadd.f32 0.0, %v5456
        %v5458 = vpop.f32.mrb[0].mxu0
        %5459 = vmatprep.mubr.bf16.mxu0 0
        %5460 = vmatmul.mubr.bf16.gmra.mrb[0].mxu0 %v3915
        %v5461 = vpop.f32.mrb[0].mxu0
        %v5462 = vadd.f32 0.0, %v5461
        %v5463 = vpop.f32.mrb[0].mxu0
        %v5464 = vpop.f32.mrb[0].mxu0
        %v5465 = vadd.f32 0.0, %v5464
        %v5466 = vpop.f32.mrb[0].mxu0
        %5467 = vmatprep.mubr.bf16.mxu0 0
        %5468 = vmatmul.mubr.bf16.gmra.mrb[0].mxu0 %v3918
        %v5469 = vpop.f32.mrb[0].mxu0
        %v5470 = vadd.f32 0.0, %v5469
        %v5471 = vpop.f32.mrb[0].mxu0
        %v5472 = vpop.f32.mrb[0].mxu0
        %v5473 = vadd.f32 0.0, %v5472
        %v5474 = vpop.f32.mrb[0].mxu0
        %5475 = vdwg.mxu0
        %v5476 = vadd.f32 %v5393, %v5438
        %v5477 = vadd.f32 %v5394, %v5441
        %v5478 = vadd.f32 %v5395, %v5446
        %v5479 = vadd.f32 %v5396, %v5449
        %v5480 = vadd.f32 %v5397, %v5454
        %v5481 = vadd.f32 %v5398, %v5457
        %v5482 = vadd.f32 %v5399, %v5462
        %v5483 = vadd.f32 %v5400, %v5465
        %v5484 = vadd.f32 %v5401, %v5470
        %v5485 = vadd.f32 %v5402, %v5473
        %5486 = vmatprep.subr.bf16.mxu0 0
        %5487 = vmatpush1.bf16.msra.mxu0 %v3903
        %5488 = vmatprep.subr.bf16.mxu0 0
        %5489 = vmatpush1.bf16.msra.mxu0 0
        %5490 = vmatprep.subr.bf16.mxu0 0
        %5491 = vmatpush1.bf16.msra.mxu0 0
        %5492 = vmatprep.subr.bf16.mxu0 0
        %5493 = vmatpush1.bf16.msra.mxu0 0
        %5494 = vmatprep.subr.bf16.mxu0 0
        %5495 = vmatpush1.bf16.msra.mxu0 0
        %5496 = vmatprep.subr.bf16.mxu0 0
        %5497 = vmatpush1.bf16.msra.mxu0 0
        %5498 = vmatprep.subr.bf16.mxu0 0
        %5499 = vmatpush1.bf16.msra.mxu0 0
        %5500 = vmatprep.subr.bf16.mxu0 0
        %5501 = vmatpush1.bf16.msra.mxu0 0
        %5502 = vmatprep.subr.bf16.mxu0 0
        %5503 = vmatpush1.bf16.msra.mxu0 0
        %5504 = vmatprep.subr.bf16.mxu0 0
        %5505 = vmatpush1.bf16.msra.mxu0 0
        %5506 = vmatprep.subr.bf16.mxu0 0
        %5507 = vmatpush1.bf16.msra.mxu0 0
        %5508 = vmatprep.subr.bf16.mxu0 0
        %5509 = vmatpush1.bf16.msra.mxu0 0
        %5510 = vmatprep.subr.bf16.mxu0 0
        %5511 = vmatpush1.bf16.msra.mxu0 0
        %5512 = vmatprep.subr.bf16.mxu0 0
        %5513 = vmatpush1.bf16.msra.mxu0 0
        %5514 = vmatprep.subr.bf16.mxu0 0
        %5515 = vmatpush1.bf16.msra.mxu0 0
        %5516 = vmatprep.subr.bf16.mxu0 0
        %5517 = vmatpush1.bf16.msra.mxu0 0
        %5518 = vmatprep.mubr.bf16.mxu0 0
        %5519 = vmatmul.mubr.bf16.gmra.mrb[0].mxu0 %v4029
        %v5520 = vpop.f32.mrb[0].mxu0
        %v5521 = vadd.f32 0.0, %v5520
        %v5522 = vpop.f32.mrb[0].mxu0
        %v5523 = vpop.f32.mrb[0].mxu0
        %v5524 = vadd.f32 0.0, %v5523
        %v5525 = vpop.f32.mrb[0].mxu0
        %5526 = vmatprep.mubr.bf16.mxu0 0
        %5527 = vmatmul.mubr.bf16.gmra.mrb[0].mxu0 %v4032
        %v5528 = vpop.f32.mrb[0].mxu0
        %v5529 = vadd.f32 0.0, %v5528
        %v5530 = vpop.f32.mrb[0].mxu0
        %v5531 = vpop.f32.mrb[0].mxu0
        %v5532 = vadd.f32 0.0, %v5531
        %v5533 = vpop.f32.mrb[0].mxu0
        %5534 = vmatprep.mubr.bf16.mxu0 0
        %5535 = vmatmul.mubr.bf16.gmra.mrb[0].mxu0 %v4035
        %v5536 = vpop.f32.mrb[0].mxu0
        %v5537 = vadd.f32 0.0, %v5536
        %v5538 = vpop.f32.mrb[0].mxu0
        %v5539 = vpop.f32.mrb[0].mxu0
        %v5540 = vadd.f32 0.0, %v5539
        %v5541 = vpop.f32.mrb[0].mxu0
        %5542 = vmatprep.mubr.bf16.mxu0 0
        %5543 = vmatmul.mubr.bf16.gmra.mrb[0].mxu0 %v4038
        %v5544 = vpop.f32.mrb[0].mxu0
        %v5545 = vadd.f32 0.0, %v5544
        %v5546 = vpop.f32.mrb[0].mxu0
        %v5547 = vpop.f32.mrb[0].mxu0
        %v5548 = vadd.f32 0.0, %v5547
        %v5549 = vpop.f32.mrb[0].mxu0
        %5550 = vmatprep.mubr.bf16.mxu0 0
        %5551 = vmatmul.mubr.bf16.gmra.mrb[0].mxu0 %v4041
        %v5552 = vpop.f32.mrb[0].mxu0
        %v5553 = vadd.f32 0.0, %v5552
        %v5554 = vpop.f32.mrb[0].mxu0
        %v5555 = vpop.f32.mrb[0].mxu0
        %v5556 = vadd.f32 0.0, %v5555
        %v5557 = vpop.f32.mrb[0].mxu0
        %5558 = vdwg.mxu0
        %v5559 = vadd.f32 %v5476, %v5521
        %v5560 = vadd.f32 %v5477, %v5524
        %v5561 = vadd.f32 %v5478, %v5529
        %v5562 = vadd.f32 %v5479, %v5532
        %v5563 = vadd.f32 %v5480, %v5537
        %v5564 = vadd.f32 %v5481, %v5540
        %v5565 = vadd.f32 %v5482, %v5545
        %v5566 = vadd.f32 %v5483, %v5548
        %v5567 = vadd.f32 %v5484, %v5553
        %v5568 = vadd.f32 %v5485, %v5556
        %5569 = vmatprep.subr.bf16.mxu0 0
        %5570 = vmatpush1.bf16.msra.mxu0 %v4026
        %5571 = vmatprep.subr.bf16.mxu0 0
        %5572 = vmatpush1.bf16.msra.mxu0 0
        %5573 = vmatprep.subr.bf16.mxu0 0
        %5574 = vmatpush1.bf16.msra.mxu0 0
        %5575 = vmatprep.subr.bf16.mxu0 0
        %5576 = vmatpush1.bf16.msra.mxu0 0
        %5577 = vmatprep.subr.bf16.mxu0 0
        %5578 = vmatpush1.bf16.msra.mxu0 0
        %5579 = vmatprep.subr.bf16.mxu0 0
        %5580 = vmatpush1.bf16.msra.mxu0 0
        %5581 = vmatprep.subr.bf16.mxu0 0
        %5582 = vmatpush1.bf16.msra.mxu0 0
        %5583 = vmatprep.subr.bf16.mxu0 0
        %5584 = vmatpush1.bf16.msra.mxu0 0
        %5585 = vmatprep.subr.bf16.mxu0 0
        %5586 = vmatpush1.bf16.msra.mxu0 0
        %5587 = vmatprep.subr.bf16.mxu0 0
        %5588 = vmatpush1.bf16.msra.mxu0 0
        %5589 = vmatprep.subr.bf16.mxu0 0
        %5590 = vmatpush1.bf16.msra.mxu0 0
        %5591 = vmatprep.subr.bf16.mxu0 0
        %5592 = vmatpush1.bf16.msra.mxu0 0
        %5593 = vmatprep.subr.bf16.mxu0 0
        %5594 = vmatpush1.bf16.msra.mxu0 0
        %5595 = vmatprep.subr.bf16.mxu0 0
        %5596 = vmatpush1.bf16.msra.mxu0 0
        %5597 = vmatprep.subr.bf16.mxu0 0
        %5598 = vmatpush1.bf16.msra.mxu0 0
        %5599 = vmatprep.subr.bf16.mxu0 0
        %5600 = vmatpush1.bf16.msra.mxu0 0
        %5601 = vmatprep.mubr.bf16.mxu0 0
        %5602 = vmatmul.mubr.bf16.gmra.mrb[0].mxu0 %v4143
        %v5603 = vpop.f32.mrb[0].mxu0
        %v5604 = vadd.f32 0.0, %v5603
        %v5605 = vpop.f32.mrb[0].mxu0
        %v5606 = vpop.f32.mrb[0].mxu0
        %v5607 = vadd.f32 0.0, %v5606
        %v5608 = vpop.f32.mrb[0].mxu0
        %5609 = vmatprep.mubr.bf16.mxu0 0
        %5610 = vmatmul.mubr.bf16.gmra.mrb[0].mxu0 %v4146
        %v5611 = vpop.f32.mrb[0].mxu0
        %v5612 = vadd.f32 0.0, %v5611
        %v5613 = vpop.f32.mrb[0].mxu0
        %v5614 = vpop.f32.mrb[0].mxu0
        %v5615 = vadd.f32 0.0, %v5614
        %v5616 = vpop.f32.mrb[0].mxu0
        %5617 = vmatprep.mubr.bf16.mxu0 0
        %5618 = vmatmul.mubr.bf16.gmra.mrb[0].mxu0 %v4149
        %v5619 = vpop.f32.mrb[0].mxu0
        %v5620 = vadd.f32 0.0, %v5619
        %v5621 = vpop.f32.mrb[0].mxu0
        %v5622 = vpop.f32.mrb[0].mxu0
        %v5623 = vadd.f32 0.0, %v5622
        %v5624 = vpop.f32.mrb[0].mxu0
        %5625 = vmatprep.mubr.bf16.mxu0 0
        %5626 = vmatmul.mubr.bf16.gmra.mrb[0].mxu0 %v4152
        %v5627 = vpop.f32.mrb[0].mxu0
        %v5628 = vadd.f32 0.0, %v5627
        %v5629 = vpop.f32.mrb[0].mxu0
        %v5630 = vpop.f32.mrb[0].mxu0
        %v5631 = vadd.f32 0.0, %v5630
        %v5632 = vpop.f32.mrb[0].mxu0
        %5633 = vmatprep.mubr.bf16.mxu0 0
        %5634 = vmatmul.mubr.bf16.gmra.mrb[0].mxu0 %v4155
        %v5635 = vpop.f32.mrb[0].mxu0
        %v5636 = vadd.f32 0.0, %v5635
        %v5637 = vpop.f32.mrb[0].mxu0
        %v5638 = vpop.f32.mrb[0].mxu0
        %v5639 = vadd.f32 0.0, %v5638
        %v5640 = vpop.f32.mrb[0].mxu0
        %5641 = vdwg.mxu0
        %v5642 = vadd.f32 %v5559, %v5604
        %v5643 = vadd.f32 %v5560, %v5607
        %v5644 = vadd.f32 %v5561, %v5612
        %v5645 = vadd.f32 %v5562, %v5615
        %v5646 = vadd.f32 %v5563, %v5620
        %v5647 = vadd.f32 %v5564, %v5623
        %v5648 = vadd.f32 %v5565, %v5628
        %v5649 = vadd.f32 %v5566, %v5631
        %v5650 = vadd.f32 %v5567, %v5636
        %v5651 = vadd.f32 %v5568, %v5639
        %5652 = vmatprep.subr.bf16.mxu0 0
        %5653 = vmatpush1.bf16.msra.mxu0 %v4140
        %5654 = vmatprep.subr.bf16.mxu0 0
        %5655 = vmatpush1.bf16.msra.mxu0 0
        %5656 = vmatprep.subr.bf16.mxu0 0
        %5657 = vmatpush1.bf16.msra.mxu0 0
        %5658 = vmatprep.subr.bf16.mxu0 0
        %5659 = vmatpush1.bf16.msra.mxu0 0
        %5660 = vmatprep.subr.bf16.mxu0 0
        %5661 = vmatpush1.bf16.msra.mxu0 0
        %5662 = vmatprep.subr.bf16.mxu0 0
        %5663 = vmatpush1.bf16.msra.mxu0 0
        %5664 = vmatprep.subr.bf16.mxu0 0
        %5665 = vmatpush1.bf16.msra.mxu0 0
        %5666 = vmatprep.subr.bf16.mxu0 0
        %5667 = vmatpush1.bf16.msra.mxu0 0
        %5668 = vmatprep.subr.bf16.mxu0 0
        %5669 = vmatpush1.bf16.msra.mxu0 0
        %5670 = vmatprep.subr.bf16.mxu0 0
        %5671 = vmatpush1.bf16.msra.mxu0 0
        %5672 = vmatprep.subr.bf16.mxu0 0
        %5673 = vmatpush1.bf16.msra.mxu0 0
        %5674 = vmatprep.subr.bf16.mxu0 0
        %5675 = vmatpush1.bf16.msra.mxu0 0
        %5676 = vmatprep.subr.bf16.mxu0 0
        %5677 = vmatpush1.bf16.msra.mxu0 0
        %5678 = vmatprep.subr.bf16.mxu0 0
        %5679 = vmatpush1.bf16.msra.mxu0 0
        %5680 = vmatprep.subr.bf16.mxu0 0
        %5681 = vmatpush1.bf16.msra.mxu0 0
        %5682 = vmatprep.subr.bf16.mxu0 0
        %5683 = vmatpush1.bf16.msra.mxu0 0
        %5684 = vmatprep.mubr.bf16.mxu0 0
        %5685 = vmatmul.mubr.bf16.gmra.mrb[0].mxu0 %v4256
        %v5686 = vpop.f32.mrb[0].mxu0
        %v5687 = vadd.f32 0.0, %v5686
        %v5688 = vpop.f32.mrb[0].mxu0
        %v5689 = vpop.f32.mrb[0].mxu0
        %v5690 = vadd.f32 0.0, %v5689
        %v5691 = vpop.f32.mrb[0].mxu0
        %5692 = vmatprep.mubr.bf16.mxu0 0
        %5693 = vmatmul.mubr.bf16.gmra.mrb[0].mxu0 %v4259
        %v5694 = vpop.f32.mrb[0].mxu0
        %v5695 = vadd.f32 0.0, %v5694
        %v5696 = vpop.f32.mrb[0].mxu0
        %v5697 = vpop.f32.mrb[0].mxu0
        %v5698 = vadd.f32 0.0, %v5697
        %v5699 = vpop.f32.mrb[0].mxu0
        %5700 = vmatprep.mubr.bf16.mxu0 0
        %5701 = vmatmul.mubr.bf16.gmra.mrb[0].mxu0 %v4262
        %v5702 = vpop.f32.mrb[0].mxu0
        %v5703 = vadd.f32 0.0, %v5702
        %v5704 = vpop.f32.mrb[0].mxu0
        %v5705 = vpop.f32.mrb[0].mxu0
        %v5706 = vadd.f32 0.0, %v5705
        %v5707 = vpop.f32.mrb[0].mxu0
        %5708 = vmatprep.mubr.bf16.mxu0 0
        %5709 = vmatmul.mubr.bf16.gmra.mrb[0].mxu0 %v4265
        %v5710 = vpop.f32.mrb[0].mxu0
        %v5711 = vadd.f32 0.0, %v5710
        %v5712 = vpop.f32.mrb[0].mxu0
        %v5713 = vpop.f32.mrb[0].mxu0
        %v5714 = vadd.f32 0.0, %v5713
        %v5715 = vpop.f32.mrb[0].mxu0
        %5716 = vmatprep.mubr.bf16.mxu0 0
        %5717 = vmatmul.mubr.bf16.gmra.mrb[0].mxu0 %v4268
        %v5718 = vpop.f32.mrb[0].mxu0
        %v5719 = vadd.f32 0.0, %v5718
        %v5720 = vpop.f32.mrb[0].mxu0
        %v5721 = vpop.f32.mrb[0].mxu0
        %v5722 = vadd.f32 0.0, %v5721
        %v5723 = vpop.f32.mrb[0].mxu0
        %5724 = vdwg.mxu0
        %v5725 = vadd.f32 %v5642, %v5687
        %v5726 = vadd.f32 %v5643, %v5690
        %v5727 = vadd.f32 %v5644, %v5695
        %v5728 = vadd.f32 %v5645, %v5698
        %v5729 = vadd.f32 %v5646, %v5703
        %v5730 = vadd.f32 %v5647, %v5706
        %v5731 = vadd.f32 %v5648, %v5711
        %v5732 = vadd.f32 %v5649, %v5714
        %v5733 = vadd.f32 %v5650, %v5719
        %v5734 = vadd.f32 %v5651, %v5722
        %5735 = vmatprep.subr.bf16.mxu0 0
        %5736 = vmatpush1.bf16.msra.mxu0 %v4253
        %5737 = vmatprep.subr.bf16.mxu0 0
        %5738 = vmatpush1.bf16.msra.mxu0 0
        %5739 = vmatprep.subr.bf16.mxu0 0
        %5740 = vmatpush1.bf16.msra.mxu0 0
        %5741 = vmatprep.subr.bf16.mxu0 0
        %5742 = vmatpush1.bf16.msra.mxu0 0
        %5743 = vmatprep.subr.bf16.mxu0 0
        %5744 = vmatpush1.bf16.msra.mxu0 0
        %5745 = vmatprep.subr.bf16.mxu0 0
        %5746 = vmatpush1.bf16.msra.mxu0 0
        %5747 = vmatprep.subr.bf16.mxu0 0
        %5748 = vmatpush1.bf16.msra.mxu0 0
        %5749 = vmatprep.subr.bf16.mxu0 0
        %5750 = vmatpush1.bf16.msra.mxu0 0
        %5751 = vmatprep.subr.bf16.mxu0 0
        %5752 = vmatpush1.bf16.msra.mxu0 0
        %5753 = vmatprep.subr.bf16.mxu0 0
        %5754 = vmatpush1.bf16.msra.mxu0 0
        %5755 = vmatprep.subr.bf16.mxu0 0
        %5756 = vmatpush1.bf16.msra.mxu0 0
        %5757 = vmatprep.subr.bf16.mxu0 0
        %5758 = vmatpush1.bf16.msra.mxu0 0
        %5759 = vmatprep.subr.bf16.mxu0 0
        %5760 = vmatpush1.bf16.msra.mxu0 0
        %5761 = vmatprep.subr.bf16.mxu0 0
        %5762 = vmatpush1.bf16.msra.mxu0 0
        %5763 = vmatprep.subr.bf16.mxu0 0
        %5764 = vmatpush1.bf16.msra.mxu0 0
        %5765 = vmatprep.subr.bf16.mxu0 0
        %5766 = vmatpush1.bf16.msra.mxu0 0
        %5767 = vmatprep.mubr.bf16.mxu0 0
        %5768 = vmatmul.mubr.bf16.gmra.mrb[0].mxu0 %v4380
        %v5769 = vpop.f32.mrb[0].mxu0
        %v5770 = vadd.f32 0.0, %v5769
        %v5771 = vpop.f32.mrb[0].mxu0
        %v5772 = vpop.f32.mrb[0].mxu0
        %v5773 = vadd.f32 0.0, %v5772
        %v5774 = vpop.f32.mrb[0].mxu0
        %5775 = vmatprep.mubr.bf16.mxu0 0
        %5776 = vmatmul.mubr.bf16.gmra.mrb[0].mxu0 %v4383
        %v5777 = vpop.f32.mrb[0].mxu0
        %v5778 = vadd.f32 0.0, %v5777
        %v5779 = vpop.f32.mrb[0].mxu0
        %v5780 = vpop.f32.mrb[0].mxu0
        %v5781 = vadd.f32 0.0, %v5780
        %v5782 = vpop.f32.mrb[0].mxu0
        %5783 = vmatprep.mubr.bf16.mxu0 0
        %5784 = vmatmul.mubr.bf16.gmra.mrb[0].mxu0 %v4386
        %v5785 = vpop.f32.mrb[0].mxu0
        %v5786 = vadd.f32 0.0, %v5785
        %v5787 = vpop.f32.mrb[0].mxu0
        %v5788 = vpop.f32.mrb[0].mxu0
        %v5789 = vadd.f32 0.0, %v5788
        %v5790 = vpop.f32.mrb[0].mxu0
        %5791 = vmatprep.mubr.bf16.mxu0 0
        %5792 = vmatmul.mubr.bf16.gmra.mrb[0].mxu0 %v4389
        %v5793 = vpop.f32.mrb[0].mxu0
        %v5794 = vadd.f32 0.0, %v5793
        %v5795 = vpop.f32.mrb[0].mxu0
        %v5796 = vpop.f32.mrb[0].mxu0
        %v5797 = vadd.f32 0.0, %v5796
        %v5798 = vpop.f32.mrb[0].mxu0
        %5799 = vmatprep.mubr.bf16.mxu0 0
        %5800 = vmatmul.mubr.bf16.gmra.mrb[0].mxu0 %v4392
        %v5801 = vpop.f32.mrb[0].mxu0
        %v5802 = vadd.f32 0.0, %v5801
        %v5803 = vpop.f32.mrb[0].mxu0
        %v5804 = vpop.f32.mrb[0].mxu0
        %v5805 = vadd.f32 0.0, %v5804
        %v5806 = vpop.f32.mrb[0].mxu0
        %5807 = vdwg.mxu0
        %v5808 = vadd.f32 %v5725, %v5770
        %v5809 = vadd.f32 %v5726, %v5773
        %v5810 = vadd.f32 %v5727, %v5778
        %v5811 = vadd.f32 %v5728, %v5781
        %v5812 = vadd.f32 %v5729, %v5786
        %v5813 = vadd.f32 %v5730, %v5789
        %v5814 = vadd.f32 %v5731, %v5794
        %v5815 = vadd.f32 %v5732, %v5797
        %v5816 = vadd.f32 %v5733, %v5802
        %v5817 = vadd.f32 %v5734, %v5805
        %5818 = vmatprep.subr.bf16.mxu0 0
        %5819 = vmatpush1.bf16.msra.mxu0 %v4377
        %5820 = vmatprep.subr.bf16.mxu0 0
        %5821 = vmatpush1.bf16.msra.mxu0 0
        %5822 = vmatprep.subr.bf16.mxu0 0
        %5823 = vmatpush1.bf16.msra.mxu0 0
        %5824 = vmatprep.subr.bf16.mxu0 0
        %5825 = vmatpush1.bf16.msra.mxu0 0
        %5826 = vmatprep.subr.bf16.mxu0 0
        %5827 = vmatpush1.bf16.msra.mxu0 0
        %5828 = vmatprep.subr.bf16.mxu0 0
        %5829 = vmatpush1.bf16.msra.mxu0 0
        %5830 = vmatprep.subr.bf16.mxu0 0
        %5831 = vmatpush1.bf16.msra.mxu0 0
        %5832 = vmatprep.subr.bf16.mxu0 0
        %5833 = vmatpush1.bf16.msra.mxu0 0
        %5834 = vmatprep.subr.bf16.mxu0 0
        %5835 = vmatpush1.bf16.msra.mxu0 0
        %5836 = vmatprep.subr.bf16.mxu0 0
        %5837 = vmatpush1.bf16.msra.mxu0 0
        %5838 = vmatprep.subr.bf16.mxu0 0
        %5839 = vmatpush1.bf16.msra.mxu0 0
        %5840 = vmatprep.subr.bf16.mxu0 0
        %5841 = vmatpush1.bf16.msra.mxu0 0
        %5842 = vmatprep.subr.bf16.mxu0 0
        %5843 = vmatpush1.bf16.msra.mxu0 0
        %5844 = vmatprep.subr.bf16.mxu0 0
        %5845 = vmatpush1.bf16.msra.mxu0 0
        %5846 = vmatprep.subr.bf16.mxu0 0
        %5847 = vmatpush1.bf16.msra.mxu0 0
        %5848 = vmatprep.subr.bf16.mxu0 0
        %5849 = vmatpush1.bf16.msra.mxu0 0
        %5850 = vmatprep.mubr.bf16.mxu0 0
        %5851 = vmatmul.mubr.bf16.gmra.mrb[0].mxu0 %v4503
        %v5852 = vpop.f32.mrb[0].mxu0
        %v5853 = vadd.f32 0.0, %v5852
        %v5854 = vpop.f32.mrb[0].mxu0
        %v5855 = vpop.f32.mrb[0].mxu0
        %v5856 = vadd.f32 0.0, %v5855
        %v5857 = vpop.f32.mrb[0].mxu0
        %5858 = vmatprep.mubr.bf16.mxu0 0
        %5859 = vmatmul.mubr.bf16.gmra.mrb[0].mxu0 %v4506
        %v5860 = vpop.f32.mrb[0].mxu0
        %v5861 = vadd.f32 0.0, %v5860
        %v5862 = vpop.f32.mrb[0].mxu0
        %v5863 = vpop.f32.mrb[0].mxu0
        %v5864 = vadd.f32 0.0, %v5863
        %v5865 = vpop.f32.mrb[0].mxu0
        %5866 = vmatprep.mubr.bf16.mxu0 0
        %5867 = vmatmul.mubr.bf16.gmra.mrb[0].mxu0 %v4509
        %v5868 = vpop.f32.mrb[0].mxu0
        %v5869 = vadd.f32 0.0, %v5868
        %v5870 = vpop.f32.mrb[0].mxu0
        %v5871 = vpop.f32.mrb[0].mxu0
        %v5872 = vadd.f32 0.0, %v5871
        %v5873 = vpop.f32.mrb[0].mxu0
        %5874 = vmatprep.mubr.bf16.mxu0 0
        %5875 = vmatmul.mubr.bf16.gmra.mrb[0].mxu0 %v4512
        %v5876 = vpop.f32.mrb[0].mxu0
        %v5877 = vadd.f32 0.0, %v5876
        %v5878 = vpop.f32.mrb[0].mxu0
        %v5879 = vpop.f32.mrb[0].mxu0
        %v5880 = vadd.f32 0.0, %v5879
        %v5881 = vpop.f32.mrb[0].mxu0
        %5882 = vmatprep.mubr.bf16.mxu0 0
        %5883 = vmatmul.mubr.bf16.gmra.mrb[0].mxu0 %v4515
        %v5884 = vpop.f32.mrb[0].mxu0
        %v5885 = vadd.f32 0.0, %v5884
        %v5886 = vpop.f32.mrb[0].mxu0
        %v5887 = vpop.f32.mrb[0].mxu0
        %v5888 = vadd.f32 0.0, %v5887
        %v5889 = vpop.f32.mrb[0].mxu0
        %5890 = vdwg.mxu0
        %v5891 = vadd.f32 %v5808, %v5853
        %v5892 = vadd.f32 %v5809, %v5856
        %v5893 = vadd.f32 %v5810, %v5861
        %v5894 = vadd.f32 %v5811, %v5864
        %v5895 = vadd.f32 %v5812, %v5869
        %v5896 = vadd.f32 %v5813, %v5872
        %v5897 = vadd.f32 %v5814, %v5877
        %v5898 = vadd.f32 %v5815, %v5880
        %v5899 = vadd.f32 %v5816, %v5885
        %v5900 = vadd.f32 %v5817, %v5888
        %v5901 = vpack.c.bf16 %v2673, %v2672
        %v5902 = vpack.c.bf16 %v2675, %v2674
        %v5903 = vpack.c.bf16 %v2677, %v2676
        %v5904 = vpack.c.bf16 %v2679, %v2678
        %v5905 = vpack.c.bf16 %v2681, %v2680
        %v5907 = vsel %vm2708, %v5901, 0
        %v5910 = vsel %vm2708, %v5902, 0
        %v5913 = vsel %vm2708, %v5903, 0
        %v5916 = vsel %vm2708, %v5904, 0
        %v5919 = vsel %vm2708, %v5905, 0
        %5921 = vmatprep.subr.bf16.mxu0 0
        %5922 = vmatpush1.bf16.msra.mxu0 %v4500
        %5923 = vmatprep.subr.bf16.mxu0 0
        %5924 = vmatpush1.bf16.msra.mxu0 0
        %5925 = vmatprep.subr.bf16.mxu0 0
        %5926 = vmatpush1.bf16.msra.mxu0 0
        %5927 = vmatprep.subr.bf16.mxu0 0
        %5928 = vmatpush1.bf16.msra.mxu0 0
        %5929 = vmatprep.subr.bf16.mxu0 0
        %5930 = vmatpush1.bf16.msra.mxu0 0
        %5931 = vmatprep.subr.bf16.mxu0 0
        %5932 = vmatpush1.bf16.msra.mxu0 0
        %5933 = vmatprep.subr.bf16.mxu0 0
        %5934 = vmatpush1.bf16.msra.mxu0 0
        %5935 = vmatprep.subr.bf16.mxu0 0
        %5936 = vmatpush1.bf16.msra.mxu0 0
        %5937 = vmatprep.subr.bf16.mxu0 0
        %5938 = vmatpush1.bf16.msra.mxu0 0
        %5939 = vmatprep.subr.bf16.mxu0 0
        %5940 = vmatpush1.bf16.msra.mxu0 0
        %5941 = vmatprep.subr.bf16.mxu0 0
        %5942 = vmatpush1.bf16.msra.mxu0 0
        %5943 = vmatprep.subr.bf16.mxu0 0
        %5944 = vmatpush1.bf16.msra.mxu0 0
        %5945 = vmatprep.subr.bf16.mxu0 0
        %5946 = vmatpush1.bf16.msra.mxu0 0
        %5947 = vmatprep.subr.bf16.mxu0 0
        %5948 = vmatpush1.bf16.msra.mxu0 0
        %5949 = vmatprep.subr.bf16.mxu0 0
        %5950 = vmatpush1.bf16.msra.mxu0 0
        %5951 = vmatprep.subr.bf16.mxu0 0
        %5952 = vmatpush1.bf16.msra.mxu0 0
        %5953 = vmatprep.mubr.bf16.mxu0 0
        %5954 = vmatmul.mubr.bf16.gmra.mrb[0].mxu0 %v5907
        %v5955 = vpop.f32.mrb[0].mxu0
        %v5956 = vadd.f32 0.0, %v5955
        %v5957 = vpop.f32.mrb[0].mxu0
        %v5958 = vpop.f32.mrb[0].mxu0
        %v5959 = vadd.f32 0.0, %v5958
        %v5960 = vpop.f32.mrb[0].mxu0
        %5961 = vmatprep.mubr.bf16.mxu0 0
        %5962 = vmatmul.mubr.bf16.gmra.mrb[0].mxu0 %v5910
        %v5963 = vpop.f32.mrb[0].mxu0
        %v5964 = vadd.f32 0.0, %v5963
        %v5965 = vpop.f32.mrb[0].mxu0
        %v5966 = vpop.f32.mrb[0].mxu0
        %v5967 = vadd.f32 0.0, %v5966
        %v5968 = vpop.f32.mrb[0].mxu0
        %5969 = vmatprep.mubr.bf16.mxu0 0
        %5970 = vmatmul.mubr.bf16.gmra.mrb[0].mxu0 %v5913
        %v5971 = vpop.f32.mrb[0].mxu0
        %v5972 = vadd.f32 0.0, %v5971
        %v5973 = vpop.f32.mrb[0].mxu0
        %v5974 = vpop.f32.mrb[0].mxu0
        %v5975 = vadd.f32 0.0, %v5974
        %v5976 = vpop.f32.mrb[0].mxu0
        %5977 = vmatprep.mubr.bf16.mxu0 0
        %5978 = vmatmul.mubr.bf16.gmra.mrb[0].mxu0 %v5916
        %v5979 = vpop.f32.mrb[0].mxu0
        %v5980 = vadd.f32 0.0, %v5979
        %v5981 = vpop.f32.mrb[0].mxu0
        %v5982 = vpop.f32.mrb[0].mxu0
        %v5983 = vadd.f32 0.0, %v5982
        %v5984 = vpop.f32.mrb[0].mxu0
        %5985 = vmatprep.mubr.bf16.mxu0 0
        %5986 = vmatmul.mubr.bf16.gmra.mrb[0].mxu0 %v5919
        %v5987 = vpop.f32.mrb[0].mxu0
        %v5988 = vadd.f32 0.0, %v5987
        %v5989 = vpop.f32.mrb[0].mxu0
        %v5990 = vpop.f32.mrb[0].mxu0
        %v5991 = vadd.f32 0.0, %v5990
        %v5992 = vpop.f32.mrb[0].mxu0
        %5993 = vdwg.mxu0
        %v5994 = vadd.f32 %v5891, %v5956
        %v5995 = vadd.f32 %v5892, %v5959
        %v5996 = vadd.f32 %v5893, %v5964
        %v5997 = vadd.f32 %v5894, %v5967
        %v5998 = vadd.f32 %v5895, %v5972
        %v5999 = vadd.f32 %v5896, %v5975
        %v6000 = vadd.f32 %v5897, %v5980
        %v6001 = vadd.f32 %v5898, %v5983
        %v6002 = vadd.f32 %v5899, %v5988
        %v6003 = vadd.f32 %v5900, %v5991
        %v6004 = vadd.f32 %v5994, %v4604
        %v6005 = vadd.f32 %v5995, %v4604
        %v6006 = vadd.f32 %v5996, %v4604
        %v6007 = vadd.f32 %v5997, %v4604
        %v6008 = vadd.f32 %v5998, %v4604
        %v6009 = vadd.f32 %v5999, %v4604
        %v6010 = vadd.f32 %v6000, %v4604
        %v6011 = vadd.f32 %v6001, %v4604
        %v6012 = vadd.f32 %v6002, %v4604
        %v6013 = vadd.f32 %v6003, %v4604
        %vm6014 = vcmp.gt.f32.partialorder %v6004, 0.0
        %vm6015 = vcmp.gt.f32.partialorder %v6005, 0.0
        %vm6016 = vcmp.gt.f32.partialorder %v6006, 0.0
        %vm6017 = vcmp.gt.f32.partialorder %v6007, 0.0
        %vm6018 = vcmp.gt.f32.partialorder %v6008, 0.0
        %vm6019 = vcmp.gt.f32.partialorder %v6009, 0.0
        %vm6020 = vcmp.gt.f32.partialorder %v6010, 0.0
        %vm6021 = vcmp.gt.f32.partialorder %v6011, 0.0
        %vm6022 = vcmp.gt.f32.partialorder %v6012, 0.0
        %vm6023 = vcmp.gt.f32.partialorder %v6013, 0.0
        %v6024 = vmin.f32 %v6004, 0.0
        %v6025 = vmin.f32 %v6005, 0.0
        %v6026 = vmin.f32 %v6006, 0.0
        %v6027 = vmin.f32 %v6007, 0.0
        %v6028 = vmin.f32 %v6008, 0.0
        %v6029 = vmin.f32 %v6009, 0.0
        %v6030 = vmin.f32 %v6010, 0.0
        %v6031 = vmin.f32 %v6011, 0.0
        %v6032 = vmin.f32 %v6012, 0.0
        %v6033 = vmin.f32 %v6013, 0.0
        %v6034 = vmul.f32 %v6024, 1.442695
        %v6035 = vpow.pop %v6034
        %v6036 = vmul.f32 %v6025, 1.442695
        %v6037 = vpow.pop %v6036
        %v6038 = vmul.f32 %v6026, 1.442695
        %v6039 = vpow.pop %v6038
        %v6040 = vmul.f32 %v6027, 1.442695
        %v6041 = vpow.pop %v6040
        %v6042 = vmul.f32 %v6028, 1.442695
        %v6043 = vpow.pop %v6042
        %v6044 = vmul.f32 %v6029, 1.442695
        %v6045 = vpow.pop %v6044
        %v6046 = vmul.f32 %v6030, 1.442695
        %v6047 = vpow.pop %v6046
        %v6048 = vmul.f32 %v6031, 1.442695
        %v6049 = vpow.pop %v6048
        %v6050 = vmul.f32 %v6032, 1.442695
        %v6051 = vpow.pop %v6050
        %v6052 = vmul.f32 %v6033, 1.442695
        %v6053 = vpow.pop %v6052
        %v6054 = vsub.f32 %v6035, 1.0
        %v6055 = vsub.f32 %v6037, 1.0
        %v6056 = vsub.f32 %v6039, 1.0
        %v6057 = vsub.f32 %v6041, 1.0
        %v6058 = vsub.f32 %v6043, 1.0
        %v6059 = vsub.f32 %v6045, 1.0
        %v6060 = vsub.f32 %v6047, 1.0
        %v6061 = vsub.f32 %v6049, 1.0
        %v6062 = vsub.f32 %v6051, 1.0
        %v6063 = vsub.f32 %v6053, 1.0
        %v6064 = vsel %vm6014, %v6004, %v6054
        %v6065 = vsel %vm6015, %v6005, %v6055
        %v6066 = vsel %vm6016, %v6006, %v6056
        %v6067 = vsel %vm6017, %v6007, %v6057
        %v6068 = vsel %vm6018, %v6008, %v6058
        %v6069 = vsel %vm6019, %v6009, %v6059
        %v6070 = vsel %vm6020, %v6010, %v6060
        %v6071 = vsel %vm6021, %v6011, %v6061
        %v6072 = vsel %vm6022, %v6012, %v6062
        %v6073 = vsel %vm6023, %v6013, %v6063
        %v6074 = vmax.f32 %v4666, %v6064
        %v6075 = vmax.f32 %v4667, %v6065
        %v6076 = vmax.f32 %v4668, %v6066
        %v6077 = vmax.f32 %v4669, %v6067
        %v6078 = vmax.f32 %v4670, %v6068
        %v6079 = vmax.f32 %v4671, %v6069
        %v6080 = vmax.f32 %v4672, %v6070
        %v6081 = vmax.f32 %v4673, %v6071
        %v6082 = vmax.f32 %v4674, %v6072
        %v6083 = vmax.f32 %v4675, %v6073
        %vm6084 = vcmask 261120
        %6085 = vst.msk [vmem:[%s418] sm:$0xff] %vm6084, %v6074
        %6086 = vst.msk [vmem:[%s418 + $0x8] sm:$0xff] %vm6084, %v6075
        %6087 = vst.msk [vmem:[%s418 + $0x10] sm:$0xff] %vm6084, %v6076
        %6088 = vst.msk [vmem:[%s418 + $0x18] sm:$0xff] %vm6084, %v6077
        %6089 = vst.msk [vmem:[%s418 + $0x20] sm:$0xff] %vm6084, %v6078
        %6090 = vst.msk [vmem:[%s418 + $0x28] sm:$0xff] %vm6084, %v6079
        %6091 = vst.msk [vmem:[%s418 + $0x30] sm:$0xff] %vm6084, %v6080
        %6092 = vst.msk [vmem:[%s418 + $0x38] sm:$0xff] %vm6084, %v6081
        %6093 = vst.msk [vmem:[%s418 + $0x40] sm:$0xff] %vm6084, %v6082
        %vm6094 = vcmask 253952
        %6095 = vst.msk [vmem:[%s418 + $0x48] sm:$0x1] %vm6094, %v6083
        %p6096 = scmp.lt.s32.totalorder %s22, 1
        %s6097 = scalar_select %p6096, %s22, 1
        %s6098 = smul.addr %s6097, 10
        %s6099 = smul.addr %s6098, 8
        %s6100 = scalar_lea.vmem %s8, %s6099
        // Predicated region
        $region69: #{spectranet_forward.2} parent=51 // pred_check
          %p6101 = pneg %p228
        $region70: #{spectranet_forward.2} parent=51 // pred_check_branch
          %6103 = sbr.rel (%p6101) target = $region72
        $region71: #{spectranet_forward.2} parent=51 // pred_region
          _
        $region72: #{spectranet_forward.2} parent=51 // pred_fallthru
          _
      $region52: #{spectranet_forward.2} parent=5 // pred_fallthru
        _
      %p6104 = scmp.le.s32.totalorder 2, %s17
      // Predicated region
      $region73: #{spectranet_forward.2} parent=5 // pred_check
        %p6105 = pneg %p6104
      $region74: #{spectranet_forward.2} parent=5 // pred_check_branch
        %6107 = sbr.rel (%p6105) target = $region76
      $region75: #{spectranet_forward.2} parent=5 // pred_region
        %s6108 = ssub.s32 %s17, 2
        // Predicated region
        $region77: #{spectranet_forward.2} parent=75 // pred_check
          %p6109 = pneg %p234
        $region78: #{spectranet_forward.2} parent=75 // pred_check_branch
          %6111 = sbr.rel (%p6109) target = $region80
        $region79: #{spectranet_forward.2} parent=75 // pred_region
          %p6112 = scmp.lt.s32.totalorder %s23, 1
          %s6113 = scalar_select %p6112, %s23, 1
          %s6114 = smul.addr %s6113, 10
          %s6115 = smul.addr %s6114, 8
          %s6116 = scalar_lea.vmem %s8, %s6115
        $region80: #{spectranet_forward.2} parent=75 // pred_fallthru
          _
      $region76: #{spectranet_forward.2} parent=5 // pred_fallthru
        _
    $region6: #{spectranet_forward.2} parent=1 // loop_footer
      %s21 = sadd.s32 1, %s17
    $region7: #{spectranet_forward.2} parent=1 // loop_footer_branch
      %16 = sbr.rel target = $region3
    $region8: #{spectranet_forward.2} parent=1 // loop_exit
      _
    %6117 = vsyncpa [#allocation3], 1
    %s6118 = scalar_lea.sflag [#allocation3], 1
    %6119 = vsyncpa %s6118, 1
    %6120 = vsyncpa [#allocation5], 1
    %6121 = vsyncpa [#allocation8], 1

// kernel: spectranet_forward.3
$region0: #{spectranet_forward.3}
  #allocation0 [shape = 'u32[]', space=smem, size = 0x4, offset = 0x4, fixed_abs, tag = 'smem constant byte address 0x4 - core index']
  #allocation1 [shape = 'u32[144,128]{1,0:T(1,128)}', space=vmem, size = 0x12000, scoped, tag = 'internal scratch']
  %s0 = inlined_call_operand.vmem [shape: f32[2,2336], index: 0, kind: input, shape index: {}]
  %s1 = inlined_call_operand.hbm [shape: bf16[2336,512], index: 1, kind: input, shape index: {}]
  %s2 = inlined_call_operand.hbm [shape: f32[1,512], index: 2, kind: input, shape index: {}]
  %s3 = inlined_call_operand.hbm [shape: bf16[512,256], index: 3, kind: input, shape index: {}]
  %s4 = inlined_call_operand.hbm [shape: f32[1,256], index: 4, kind: input, shape index: {}]
  %s5 = inlined_call_operand.vmem [shape: bf16[256,3], index: 5, kind: input, shape index: {}]
  %s6 = inlined_call_operand.hbm [shape: f32[1,3], index: 6, kind: input, shape index: {}]
  %s7 = inlined_call_operand.hbm [shape: f32[2,3], index: 7, kind: output, shape index: {}]
  %s8 = sld [smem:[#allocation0]]
  $region58: #{spectranet_forward.3} parent=0
    _
  %s10 = ssub.s32 1, %s8
  %s11 = scalar_select 0, %s10, %s8
  $region1: #{spectranet_forward.3} parent=0
    #allocation2 [shape = 'u8[2392064]{0}', space=vmem, size = 0x248000, scoped, tag = 'input window, operand 1, single buffered']
    #allocation3 [shape = 's32[1]{0}', space=sflag, size = 0x4, scoped, tag = 'scoped memory for spectranet_forward.3']
    #allocation4 [shape = 's32[1]{0}', space=sflag, size = 0x4, scoped, tag = 'scoped memory for spectranet_forward.3']
    #allocation5 [shape = 'u8[2048]{0}', space=vmem, size = 0x800, scoped, tag = 'input window, operand 2, single buffered']
    #allocation6 [shape = 's32[1]{0}', space=sflag, size = 0x4, scoped, tag = 'scoped memory for spectranet_forward.3']
    #allocation7 [shape = 'u8[262144]{0}', space=vmem, size = 0x40000, scoped, tag = 'input window, operand 3, single buffered']
    #allocation8 [shape = 'u8[1024]{0}', space=vmem, size = 0x400, scoped, tag = 'input window, operand 4, single buffered']
    #allocation9 [shape = 's32[1]{0}', space=sflag, size = 0x4, scoped, tag = 'scoped memory for spectranet_forward.3']
    #allocation10 [shape = 'u8[512]{0}', space=vmem, size = 0x400, scoped, tag = 'input window, operand 6, single buffered']
    #allocation11 [shape = 'u8[1024]{0}', space=vmem, size = 0x400, scoped, tag = 'output window, operand 0, single buffered']
    %12 = vsyncpa [#allocation3], 0
    %13 = vsyncpa [#allocation6], 0
    %14 = vsyncpa [#allocation9], 0
    %15 = vsyncpa [#allocation4], 0
    // Predicated region
    $region2: #{spectranet_forward.3} parent=1 // pred_check
      _
    $region3: #{spectranet_forward.3} parent=1 // pred_check_branch
      %17 = sbr.rel (0) target = $region5
    $region4: #{spectranet_forward.3} parent=1 // pred_region
      _
    $region5: #{spectranet_forward.3} parent=1 // pred_fallthru
      _
    // Predicated region
    $region6: #{spectranet_forward.3} parent=1 // pred_check
      _
    $region7: #{spectranet_forward.3} parent=1 // pred_check_branch
      %19 = sbr.rel (0) target = $region9
    $region8: #{spectranet_forward.3} parent=1 // pred_region
      %s21 = ssub.s32 74752, 74752
      %22 = vsyncadd [#allocation3], %s21
      %s23 = sshll.u32 [#allocation2], 4
      %s24 = int_to_ptr.vmem [resolvable:$true] %s23
      %29 = dma.hbm_to_vmem [thread:$0]  %s1, 74752, %s24, [#allocation3], 256, 256, 16
    $region9: #{spectranet_forward.3} parent=1 // pred_fallthru
      _
    // Predicated region
    $region10: #{spectranet_forward.3} parent=1 // pred_check
      _
    $region11: #{spectranet_forward.3} parent=1 // pred_check_branch
      %31 = sbr.rel (0) target = $region13
    $region12: #{spectranet_forward.3} parent=1 // pred_region
      %s33 = ssub.s32 64, 64
      %34 = vsyncadd [#allocation6], %s33
      %s36 = sshll.u32 [#allocation5], 4
      %s37 = int_to_ptr.vmem [resolvable:$true] %s36
      %39 = dma.hbm_to_vmem [thread:$0]  %s2, 64, %s37, [#allocation6]
    $region13: #{spectranet_forward.3} parent=1 // pred_fallthru
      _
    // Predicated region
    $region14: #{spectranet_forward.3} parent=1 // pred_check
      _
    $region15: #{spectranet_forward.3} parent=1 // pred_check_branch
      %41 = sbr.rel (0) target = $region17
    $region16: #{spectranet_forward.3} parent=1 // pred_region
      %s43 = ssub.s32 8192, 8192
      %44 = vsyncadd [#allocation6], %s43
      %s45 = sshll.u32 [#allocation7], 4
      %s46 = int_to_ptr.vmem [resolvable:$true] %s45
      %51 = dma.hbm_to_vmem [thread:$0]  %s3, 8192, %s46, [#allocation6], 128, 128, 8
    $region17: #{spectranet_forward.3} parent=1 // pred_fallthru
      _
    // Predicated region
    $region18: #{spectranet_forward.3} parent=1 // pred_check
      _
    $region19: #{spectranet_forward.3} parent=1 // pred_check_branch
      %53 = sbr.rel (0) target = $region21
    $region20: #{spectranet_forward.3} parent=1 // pred_region
      %s55 = ssub.s32 32, 32
      %56 = vsyncadd [#allocation9], %s55
      %s58 = sshll.u32 [#allocation8], 4
      %s59 = int_to_ptr.vmem [resolvable:$true] %s58
      %61 = dma.hbm_to_vmem [thread:$0]  %s4, 32, %s59, [#allocation9]
    $region21: #{spectranet_forward.3} parent=1 // pred_fallthru
      _
    // Predicated region
    $region22: #{spectranet_forward.3} parent=1 // pred_check
      _
    $region23: #{spectranet_forward.3} parent=1 // pred_check_branch
      %63 = sbr.rel (0) target = $region25
    $region24: #{spectranet_forward.3} parent=1 // pred_region
      _
    $region25: #{spectranet_forward.3} parent=1 // pred_fallthru
      _
    // Predicated region
    $region26: #{spectranet_forward.3} parent=1 // pred_check
      _
    $region27: #{spectranet_forward.3} parent=1 // pred_check_branch
      %65 = sbr.rel (0) target = $region29
    $region28: #{spectranet_forward.3} parent=1 // pred_region
      %s67 = ssub.s32 16, 16
      %68 = vsyncadd [#allocation9], %s67
      %s70 = sshll.u32 [#allocation10], 4
      %s71 = int_to_ptr.vmem [resolvable:$true] %s70
      %73 = dma.hbm_to_vmem [thread:$0]  %s6, 16, %s71, [#allocation9]
    $region29: #{spectranet_forward.3} parent=1 // pred_fallthru
      _
    // Predicated region
    $region30: #{spectranet_forward.3} parent=1 // pred_check
      _
    $region31: #{spectranet_forward.3} parent=1 // pred_check_branch
      %75 = sbr.rel (0) target = $region33
    $region32: #{spectranet_forward.3} parent=1 // pred_region
      %76 = dma.done [#allocation3], 74752
    $region33: #{spectranet_forward.3} parent=1 // pred_fallthru
      _
    // Predicated region
    $region34: #{spectranet_forward.3} parent=1 // pred_check
      _
    $region35: #{spectranet_forward.3} parent=1 // pred_check_branch
      %78 = sbr.rel (0) target = $region37
    $region36: #{spectranet_forward.3} parent=1 // pred_region
      %79 = dma.done [#allocation6], 64
    $region37: #{spectranet_forward.3} parent=1 // pred_fallthru
      _
    // Predicated region
    $region38: #{spectranet_forward.3} parent=1 // pred_check
      _
    $region39: #{spectranet_forward.3} parent=1 // pred_check_branch
      %81 = sbr.rel (0) target = $region41
    $region40: #{spectranet_forward.3} parent=1 // pred_region
      %82 = dma.done [#allocation6], 8192
    $region41: #{spectranet_forward.3} parent=1 // pred_fallthru
      _
    // Predicated region
    $region42: #{spectranet_forward.3} parent=1 // pred_check
      _
    $region43: #{spectranet_forward.3} parent=1 // pred_check_branch
      %84 = sbr.rel (0) target = $region45
    $region44: #{spectranet_forward.3} parent=1 // pred_region
      %85 = dma.done [#allocation9], 32
    $region45: #{spectranet_forward.3} parent=1 // pred_fallthru
      _
    // Predicated region
    $region46: #{spectranet_forward.3} parent=1 // pred_check
      _
    $region47: #{spectranet_forward.3} parent=1 // pred_check_branch
      %87 = sbr.rel (0) target = $region49
    $region48: #{spectranet_forward.3} parent=1 // pred_region
      %88 = dma.done [#allocation9], 16
    $region49: #{spectranet_forward.3} parent=1 // pred_fallthru
      _
    %v90 = vld [vmem:[%s0] sm:$0xff]
    %v91 = vld [vmem:[%s0 + $0x8] sm:$0xff]
    %v92 = vld [vmem:[%s0 + $0x10] sm:$0xff]
    %v93 = vld [vmem:[%s0 + $0x18] sm:$0xff]
    %v94 = vld [vmem:[%s0 + $0x20] sm:$0x3f]
    %v100 = vcombine.high %v90, %v90
    %v102 = vunpack.c.l.s4 1983009808
    %v103 = vunpack.c.0.s8 %v102
    %v104 = vlaneseq
    %v105 = vshrl.u32 %v104, 7
    %v106 = vsub.s32 %v103, %v105
    %v107 = vrot.slane %v90, %v106
    %v109 = vunpack.c.l.s4 1983009808
    %v110 = vunpack.c.0.s8 %v109
    %v111 = vlaneseq
    %v112 = vshrl.u32 %v111, 7
    %v113 = vsub.s32 %v110, %v112
    %v114 = vrot.slane %v100, %v113
    %v115 = vcombine.high %v107, %v107
    %v116 = vcombine.high %v114, %v114
    %v117 = vcombine.high %v91, %v91
    %v119 = vunpack.c.l.s4 1983009808
    %v120 = vunpack.c.0.s8 %v119
    %v121 = vlaneseq
    %v122 = vshrl.u32 %v121, 7
    %v123 = vsub.s32 %v120, %v122
    %v124 = vrot.slane %v91, %v123
    %v126 = vunpack.c.l.s4 1983009808
    %v127 = vunpack.c.0.s8 %v126
    %v128 = vlaneseq
    %v129 = vshrl.u32 %v128, 7
    %v130 = vsub.s32 %v127, %v129
    %v131 = vrot.slane %v117, %v130
    %v132 = vcombine.high %v124, %v124
    %v133 = vcombine.high %v131, %v131
    %v134 = vcombine.high %v92, %v92
    %v136 = vunpack.c.l.s4 1983009808
    %v137 = vunpack.c.0.s8 %v136
    %v138 = vlaneseq
    %v139 = vshrl.u32 %v138, 7
    %v140 = vsub.s32 %v137, %v139
    %v141 = vrot.slane %v92, %v140
    %v143 = vunpack.c.l.s4 1983009808
    %v144 = vunpack.c.0.s8 %v143
    %v145 = vlaneseq
    %v146 = vshrl.u32 %v145, 7
    %v147 = vsub.s32 %v144, %v146
    %v148 = vrot.slane %v134, %v147
    %v149 = vcombine.high %v141, %v141
    %v150 = vcombine.high %v148, %v148
    %v151 = vcombine.high %v93, %v93
    %v153 = vunpack.c.l.s4 1983009808
    %v154 = vunpack.c.0.s8 %v153
    %v155 = vlaneseq
    %v156 = vshrl.u32 %v155, 7
    %v157 = vsub.s32 %v154, %v156
    %v158 = vrot.slane %v93, %v157
    %v160 = vunpack.c.l.s4 1983009808
    %v161 = vunpack.c.0.s8 %v160
    %v162 = vlaneseq
    %v163 = vshrl.u32 %v162, 7
    %v164 = vsub.s32 %v161, %v163
    %v165 = vrot.slane %v151, %v164
    %v166 = vcombine.high %v158, %v158
    %v167 = vcombine.high %v165, %v165
    %v168 = vcombine.high %v94, %v94
    %v170 = vunpack.c.l.s4 1983009808
    %v171 = vunpack.c.0.s8 %v170
    %v172 = vlaneseq
    %v173 = vshrl.u32 %v172, 7
    %v174 = vsub.s32 %v171, %v173
    %v175 = vrot.slane %v94, %v174
    %v177 = vunpack.c.l.s4 1983009808
    %v178 = vunpack.c.0.s8 %v177
    %v179 = vlaneseq
    %v180 = vshrl.u32 %v179, 7
    %v181 = vsub.s32 %v178, %v180
    %v182 = vrot.slane %v168, %v181
    %v183 = vcombine.high %v175, %v175
    %v203 = vpack.c.bf16 %v107, %v107
    %v204 = vpack.c.bf16 %v115, %v115
    %v205 = vpack.c.bf16 %v114, %v114
    %v206 = vpack.c.bf16 %v116, %v116
    %v207 = vpack.c.bf16 %v124, %v124
    %v208 = vpack.c.bf16 %v132, %v132
    %v209 = vpack.c.bf16 %v131, %v131
    %v210 = vpack.c.bf16 %v133, %v133
    %v211 = vpack.c.bf16 %v141, %v141
    %v212 = vpack.c.bf16 %v149, %v149
    %v213 = vpack.c.bf16 %v148, %v148
    %v214 = vpack.c.bf16 %v150, %v150
    %v215 = vpack.c.bf16 %v158, %v158
    %v216 = vpack.c.bf16 %v166, %v166
    %v217 = vpack.c.bf16 %v165, %v165
    %v218 = vpack.c.bf16 %v167, %v167
    %v219 = vpack.c.bf16 %v175, %v175
    %v220 = vpack.c.bf16 %v183, %v183
    %v221 = vpack.c.bf16 %v182, %v182
    %v222 = vld [vmem:[#allocation2] sm:$0xff]
    %v223 = vld [vmem:[#allocation2 + $0x8] sm:$0xff]
    %v224 = vld [vmem:[#allocation2 + $0x10] sm:$0xff]
    %v225 = vld [vmem:[#allocation2 + $0x18] sm:$0xff]
    %v226 = vld [vmem:[#allocation2 + $0x20] sm:$0xff]
    %v227 = vld [vmem:[#allocation2 + $0x28] sm:$0xff]
    %v228 = vld [vmem:[#allocation2 + $0x30] sm:$0xff]
    %v229 = vld [vmem:[#allocation2 + $0x38] sm:$0xff]
    %v230 = vld [vmem:[#allocation2 + $0x40] sm:$0xff]
    %v231 = vld [vmem:[#allocation2 + $0x48] sm:$0xff]
    %v232 = vld [vmem:[#allocation2 + $0x50] sm:$0xff]
    %v233 = vld [vmem:[#allocation2 + $0x58] sm:$0xff]
    %v234 = vld [vmem:[#allocation2 + $0x60] sm:$0xff]
    %v235 = vld [vmem:[#allocation2 + $0x68] sm:$0xff]
    %v236 = vld [vmem:[#allocation2 + $0x70] sm:$0xff]
    %v237 = vld [vmem:[#allocation2 + $0x78] sm:$0xff]
    %v238 = vld [vmem:[#allocation2 + $0x80] sm:$0xff]
    %v239 = vld [vmem:[#allocation2 + $0x88] sm:$0xff]
    %v240 = vld [vmem:[#allocation2 + $0x90] sm:$0xff]
    %v241 = vld [vmem:[#allocation2 + $0x98] sm:$0xff]
    %v242 = vld [vmem:[#allocation2 + $0xa0] sm:$0xff]
    %v243 = vld [vmem:[#allocation2 + $0xa8] sm:$0xff]
    %v244 = vld [vmem:[#allocation2 + $0xb0] sm:$0xff]
    %v245 = vld [vmem:[#allocation2 + $0xb8] sm:$0xff]
    %v246 = vld [vmem:[#allocation2 + $0xc0] sm:$0xff]
    %v247 = vld [vmem:[#allocation2 + $0xc8] sm:$0xff]
    %v248 = vld [vmem:[#allocation2 + $0xd0] sm:$0xff]
    %v249 = vld [vmem:[#allocation2 + $0xd8] sm:$0xff]
    %v250 = vld [vmem:[#allocation2 + $0xe0] sm:$0xff]
    %v251 = vld [vmem:[#allocation2 + $0xe8] sm:$0xff]
    %v252 = vld [vmem:[#allocation2 + $0xf0] sm:$0xff]
    %v253 = vld [vmem:[#allocation2 + $0xf8] sm:$0xff]
    %v254 = vld [vmem:[#allocation2 + $0x100] sm:$0xff]
    %v255 = vld [vmem:[#allocation2 + $0x108] sm:$0xff]
    %v256 = vld [vmem:[#allocation2 + $0x110] sm:$0xff]
    %v257 = vld [vmem:[#allocation2 + $0x118] sm:$0xff]
    %v258 = vld [vmem:[#allocation2 + $0x120] sm:$0xff]
    %v259 = vld [vmem:[#allocation2 + $0x128] sm:$0xff]
    %v260 = vld [vmem:[#allocation2 + $0x130] sm:$0xff]
    %v261 = vld [vmem:[#allocation2 + $0x138] sm:$0xff]
    %v262 = vld [vmem:[#allocation2 + $0x140] sm:$0xff]
    %v263 = vld [vmem:[#allocation2 + $0x148] sm:$0xff]
    %v264 = vld [vmem:[#allocation2 + $0x150] sm:$0xff]
    %v265 = vld [vmem:[#allocation2 + $0x158] sm:$0xff]
    %v266 = vld [vmem:[#allocation2 + $0x160] sm:$0xff]
    %v267 = vld [vmem:[#allocation2 + $0x168] sm:$0xff]
    %v268 = vld [vmem:[#allocation2 + $0x170] sm:$0xff]
    %v269 = vld [vmem:[#allocation2 + $0x178] sm:$0xff]
    %v270 = vld [vmem:[#allocation2 + $0x180] sm:$0xff]
    %v271 = vld [vmem:[#allocation2 + $0x188] sm:$0xff]
    %v272 = vld [vmem:[#allocation2 + $0x190] sm:$0xff]
    %v273 = vld [vmem:[#allocation2 + $0x198] sm:$0xff]
    %v274 = vld [vmem:[#allocation2 + $0x1a0] sm:$0xff]
    %v275 = vld [vmem:[#allocation2 + $0x1a8] sm:$0xff]
    %v276 = vld [vmem:[#allocation2 + $0x1b0] sm:$0xff]
    %v277 = vld [vmem:[#allocation2 + $0x1b8] sm:$0xff]
    %v278 = vld [vmem:[#allocation2 + $0x1c0] sm:$0xff]
    %v279 = vld [vmem:[#allocation2 + $0x1c8] sm:$0xff]
    %v280 = vld [vmem:[#allocation2 + $0x1d0] sm:$0xff]
    %v281 = vld [vmem:[#allocation2 + $0x1d8] sm:$0xff]
    %v282 = vld [vmem:[#allocation2 + $0x1e0] sm:$0xff]
    %v283 = vld [vmem:[#allocation2 + $0x1e8] sm:$0xff]
    %v284 = vld [vmem:[#allocation2 + $0x1f0] sm:$0xff]
    %v285 = vld [vmem:[#allocation2 + $0x1f8] sm:$0xff]
    %v286 = vld [vmem:[#allocation2 + $0x200] sm:$0xff]
    %v287 = vld [vmem:[#allocation2 + $0x208] sm:$0xff]
    %v288 = vld [vmem:[#allocation2 + $0x210] sm:$0xff]
    %v289 = vld [vmem:[#allocation2 + $0x218] sm:$0xff]
    %v290 = vld [vmem:[#allocation2 + $0x220] sm:$0xff]
    %v291 = vld [vmem:[#allocation2 + $0x228] sm:$0xff]
    %v292 = vld [vmem:[#allocation2 + $0x230] sm:$0xff]
    %v293 = vld [vmem:[#allocation2 + $0x238] sm:$0xff]
    %v294 = vld [vmem:[#allocation2 + $0x240] sm:$0xff]
    %v295 = vld [vmem:[#allocation2 + $0x248] sm:$0xff]
    %v296 = vld [vmem:[#allocation2 + $0x250] sm:$0xff]
    %v297 = vld [vmem:[#allocation2 + $0x258] sm:$0xff]
    %v298 = vld [vmem:[#allocation2 + $0x260] sm:$0xff]
    %v299 = vld [vmem:[#allocation2 + $0x268] sm:$0xff]
    %v300 = vld [vmem:[#allocation2 + $0x270] sm:$0xff]
    %v301 = vld [vmem:[#allocation2 + $0x278] sm:$0xff]
    %v302 = vld [vmem:[#allocation2 + $0x280] sm:$0xff]
    %v303 = vld [vmem:[#allocation2 + $0x288] sm:$0xff]
    %v304 = vld [vmem:[#allocation2 + $0x290] sm:$0xff]
    %v305 = vld [vmem:[#allocation2 + $0x298] sm:$0xff]
    %v306 = vld [vmem:[#allocation2 + $0x2a0] sm:$0xff]
    %v307 = vld [vmem:[#allocation2 + $0x2a8] sm:$0xff]
    %v308 = vld [vmem:[#allocation2 + $0x2b0] sm:$0xff]
    %v309 = vld [vmem:[#allocation2 + $0x2b8] sm:$0xff]
    %v310 = vld [vmem:[#allocation2 + $0x2c0] sm:$0xff]
    %v311 = vld [vmem:[#allocation2 + $0x2c8] sm:$0xff]
    %v312 = vld [vmem:[#allocation2 + $0x2d0] sm:$0xff]
    %v313 = vld [vmem:[#allocation2 + $0x2d8] sm:$0xff]
    %v314 = vld [vmem:[#allocation2 + $0x2e0] sm:$0xff]
    %v315 = vld [vmem:[#allocation2 + $0x2e8] sm:$0xff]
    %v316 = vld [vmem:[#allocation2 + $0x2f0] sm:$0xff]
    %v317 = vld [vmem:[#allocation2 + $0x2f8] sm:$0xff]
    %v318 = vld [vmem:[#allocation2 + $0x300] sm:$0xff]
    %v319 = vld [vmem:[#allocation2 + $0x308] sm:$0xff]
    %v320 = vld [vmem:[#allocation2 + $0x310] sm:$0xff]
    %v321 = vld [vmem:[#allocation2 + $0x318] sm:$0xff]
    %v322 = vld [vmem:[#allocation2 + $0x320] sm:$0xff]
    %v323 = vld [vmem:[#allocation2 + $0x328] sm:$0xff]
    %v324 = vld [vmem:[#allocation2 + $0x330] sm:$0xff]
    %v325 = vld [vmem:[#allocation2 + $0x338] sm:$0xff]
    %v326 = vld [vmem:[#allocation2 + $0x340] sm:$0xff]
    %v327 = vld [vmem:[#allocation2 + $0x348] sm:$0xff]
    %v328 = vld [vmem:[#allocation2 + $0x350] sm:$0xff]
    %v329 = vld [vmem:[#allocation2 + $0x358] sm:$0xff]
    %v330 = vld [vmem:[#allocation2 + $0x360] sm:$0xff]
    %v331 = vld [vmem:[#allocation2 + $0x368] sm:$0xff]
    %v332 = vld [vmem:[#allocation2 + $0x370] sm:$0xff]
    %v333 = vld [vmem:[#allocation2 + $0x378] sm:$0xff]
    %v334 = vld [vmem:[#allocation2 + $0x380] sm:$0xff]
    %v335 = vld [vmem:[#allocation2 + $0x388] sm:$0xff]
    %v336 = vld [vmem:[#allocation2 + $0x390] sm:$0xff]
    %v337 = vld [vmem:[#allocation2 + $0x398] sm:$0xff]
    %v338 = vld [vmem:[#allocation2 + $0x3a0] sm:$0xff]
    %v339 = vld [vmem:[#allocation2 + $0x3a8] sm:$0xff]
    %v340 = vld [vmem:[#allocation2 + $0x3b0] sm:$0xff]
    %v341 = vld [vmem:[#allocation2 + $0x3b8] sm:$0xff]
    %v342 = vld [vmem:[#allocation2 + $0x3c0] sm:$0xff]
    %v343 = vld [vmem:[#allocation2 + $0x3c8] sm:$0xff]
    %v344 = vld [vmem:[#allocation2 + $0x3d0] sm:$0xff]
    %v345 = vld [vmem:[#allocation2 + $0x3d8] sm:$0xff]
    %v346 = vld [vmem:[#allocation2 + $0x3e0] sm:$0xff]
    %v347 = vld [vmem:[#allocation2 + $0x3e8] sm:$0xff]
    %v348 = vld [vmem:[#allocation2 + $0x3f0] sm:$0xff]
    %v349 = vld [vmem:[#allocation2 + $0x3f8] sm:$0xff]
    %v350 = vld [vmem:[#allocation2 + $0x400] sm:$0xff]
    %v351 = vld [vmem:[#allocation2 + $0x408] sm:$0xff]
    %v352 = vld [vmem:[#allocation2 + $0x410] sm:$0xff]
    %v353 = vld [vmem:[#allocation2 + $0x418] sm:$0xff]
    %v354 = vld [vmem:[#allocation2 + $0x420] sm:$0xff]
    %v355 = vld [vmem:[#allocation2 + $0x428] sm:$0xff]
    %v356 = vld [vmem:[#allocation2 + $0x430] sm:$0xff]
    %v357 = vld [vmem:[#allocation2 + $0x438] sm:$0xff]
    %v358 = vld [vmem:[#allocation2 + $0x440] sm:$0xff]
    %v359 = vld [vmem:[#allocation2 + $0x448] sm:$0xff]
    %v360 = vld [vmem:[#allocation2 + $0x450] sm:$0xff]
    %v361 = vld [vmem:[#allocation2 + $0x458] sm:$0xff]
    %v362 = vld [vmem:[#allocation2 + $0x460] sm:$0xff]
    %v363 = vld [vmem:[#allocation2 + $0x468] sm:$0xff]
    %v364 = vld [vmem:[#allocation2 + $0x470] sm:$0xff]
    %v365 = vld [vmem:[#allocation2 + $0x478] sm:$0xff]
    %v366 = vld [vmem:[#allocation2 + $0x480] sm:$0xff]
    %v367 = vld [vmem:[#allocation2 + $0x488] sm:$0xff]
    %v368 = vld [vmem:[#allocation2 + $0x490] sm:$0xff]
    %v369 = vld [vmem:[#allocation2 + $0x498] sm:$0xff]
    %v370 = vld [vmem:[#allocation2 + $0x4a0] sm:$0xff]
    %v371 = vld [vmem:[#allocation2 + $0x4a8] sm:$0xff]
    %v372 = vld [vmem:[#allocation2 + $0x4b0] sm:$0xff]
    %v373 = vld [vmem:[#allocation2 + $0x4b8] sm:$0xff]
    %v374 = vld [vmem:[#allocation2 + $0x4c0] sm:$0xff]
    %v375 = vld [vmem:[#allocation2 + $0x4c8] sm:$0xff]
    %v376 = vld [vmem:[#allocation2 + $0x4d0] sm:$0xff]
    %v377 = vld [vmem:[#allocation2 + $0x4d8] sm:$0xff]
    %v378 = vld [vmem:[#allocation2 + $0x4e0] sm:$0xff]
    %v379 = vld [vmem:[#allocation2 + $0x4e8] sm:$0xff]
    %v380 = vld [vmem:[#allocation2 + $0x4f0] sm:$0xff]
    %v381 = vld [vmem:[#allocation2 + $0x4f8] sm:$0xff]
    %v382 = vld [vmem:[#allocation2 + $0x500] sm:$0xff]
    %v383 = vld [vmem:[#allocation2 + $0x508] sm:$0xff]
    %v384 = vld [vmem:[#allocation2 + $0x510] sm:$0xff]
    %v385 = vld [vmem:[#allocation2 + $0x518] sm:$0xff]
    %v386 = vld [vmem:[#allocation2 + $0x520] sm:$0xff]
    %v387 = vld [vmem:[#allocation2 + $0x528] sm:$0xff]
    %v388 = vld [vmem:[#allocation2 + $0x530] sm:$0xff]
    %v389 = vld [vmem:[#allocation2 + $0x538] sm:$0xff]
    %v390 = vld [vmem:[#allocation2 + $0x540] sm:$0xff]
    %v391 = vld [vmem:[#allocation2 + $0x548] sm:$0xff]
    %v392 = vld [vmem:[#allocation2 + $0x550] sm:$0xff]
    %v393 = vld [vmem:[#allocation2 + $0x558] sm:$0xff]
    %v394 = vld [vmem:[#allocation2 + $0x560] sm:$0xff]
    %v395 = vld [vmem:[#allocation2 + $0x568] sm:$0xff]
    %v396 = vld [vmem:[#allocation2 + $0x570] sm:$0xff]
    %v397 = vld [vmem:[#allocation2 + $0x578] sm:$0xff]
    %v398 = vld [vmem:[#allocation2 + $0x580] sm:$0xff]
    %v399 = vld [vmem:[#allocation2 + $0x588] sm:$0xff]
    %v400 = vld [vmem:[#allocation2 + $0x590] sm:$0xff]
    %v401 = vld [vmem:[#allocation2 + $0x598] sm:$0xff]
    %v402 = vld [vmem:[#allocation2 + $0x5a0] sm:$0xff]
    %v403 = vld [vmem:[#allocation2 + $0x5a8] sm:$0xff]
    %v404 = vld [vmem:[#allocation2 + $0x5b0] sm:$0xff]
    %v405 = vld [vmem:[#allocation2 + $0x5b8] sm:$0xff]
    %v406 = vld [vmem:[#allocation2 + $0x5c0] sm:$0xff]
    %v407 = vld [vmem:[#allocation2 + $0x5c8] sm:$0xff]
    %v408 = vld [vmem:[#allocation2 + $0x5d0] sm:$0xff]
    %v409 = vld [vmem:[#allocation2 + $0x5d8] sm:$0xff]
    %v410 = vld [vmem:[#allocation2 + $0x5e0] sm:$0xff]
    %v411 = vld [vmem:[#allocation2 + $0x5e8] sm:$0xff]
    %v412 = vld [vmem:[#allocation2 + $0x5f0] sm:$0xff]
    %v413 = vld [vmem:[#allocation2 + $0x5f8] sm:$0xff]
    %v414 = vld [vmem:[#allocation2 + $0x600] sm:$0xff]
    %v415 = vld [vmem:[#allocation2 + $0x608] sm:$0xff]
    %v416 = vld [vmem:[#allocation2 + $0x610] sm:$0xff]
    %v417 = vld [vmem:[#allocation2 + $0x618] sm:$0xff]
    %v418 = vld [vmem:[#allocation2 + $0x620] sm:$0xff]
    %v419 = vld [vmem:[#allocation2 + $0x628] sm:$0xff]
    %v420 = vld [vmem:[#allocation2 + $0x630] sm:$0xff]
    %v421 = vld [vmem:[#allocation2 + $0x638] sm:$0xff]
    %v422 = vld [vmem:[#allocation2 + $0x640] sm:$0xff]
    %v423 = vld [vmem:[#allocation2 + $0x648] sm:$0xff]
    %v424 = vld [vmem:[#allocation2 + $0x650] sm:$0xff]
    %v425 = vld [vmem:[#allocation2 + $0x658] sm:$0xff]
    %v426 = vld [vmem:[#allocation2 + $0x660] sm:$0xff]
    %v427 = vld [vmem:[#allocation2 + $0x668] sm:$0xff]
    %v428 = vld [vmem:[#allocation2 + $0x670] sm:$0xff]
    %v429 = vld [vmem:[#allocation2 + $0x678] sm:$0xff]
    %v430 = vld [vmem:[#allocation2 + $0x680] sm:$0xff]
    %v431 = vld [vmem:[#allocation2 + $0x688] sm:$0xff]
    %v432 = vld [vmem:[#allocation2 + $0x690] sm:$0xff]
    %v433 = vld [vmem:[#allocation2 + $0x698] sm:$0xff]
    %v434 = vld [vmem:[#allocation2 + $0x6a0] sm:$0xff]
    %v435 = vld [vmem:[#allocation2 + $0x6a8] sm:$0xff]
    %v436 = vld [vmem:[#allocation2 + $0x6b0] sm:$0xff]
    %v437 = vld [vmem:[#allocation2 + $0x6b8] sm:$0xff]
    %v438 = vld [vmem:[#allocation2 + $0x6c0] sm:$0xff]
    %v439 = vld [vmem:[#allocation2 + $0x6c8] sm:$0xff]
    %v440 = vld [vmem:[#allocation2 + $0x6d0] sm:$0xff]
    %v441 = vld [vmem:[#allocation2 + $0x6d8] sm:$0xff]
    %v442 = vld [vmem:[#allocation2 + $0x6e0] sm:$0xff]
    %v443 = vld [vmem:[#allocation2 + $0x6e8] sm:$0xff]
    %v444 = vld [vmem:[#allocation2 + $0x6f0] sm:$0xff]
    %v445 = vld [vmem:[#allocation2 + $0x6f8] sm:$0xff]
    %v446 = vld [vmem:[#allocation2 + $0x700] sm:$0xff]
    %v447 = vld [vmem:[#allocation2 + $0x708] sm:$0xff]
    %v448 = vld [vmem:[#allocation2 + $0x710] sm:$0xff]
    %v449 = vld [vmem:[#allocation2 + $0x718] sm:$0xff]
    %v450 = vld [vmem:[#allocation2 + $0x720] sm:$0xff]
    %v451 = vld [vmem:[#allocation2 + $0x728] sm:$0xff]
    %v452 = vld [vmem:[#allocation2 + $0x730] sm:$0xff]
    %v453 = vld [vmem:[#allocation2 + $0x738] sm:$0xff]
    %v454 = vld [vmem:[#allocation2 + $0x740] sm:$0xff]
    %v455 = vld [vmem:[#allocation2 + $0x748] sm:$0xff]
    %v456 = vld [vmem:[#allocation2 + $0x750] sm:$0xff]
    %v457 = vld [vmem:[#allocation2 + $0x758] sm:$0xff]
    %v458 = vld [vmem:[#allocation2 + $0x760] sm:$0xff]
    %v459 = vld [vmem:[#allocation2 + $0x768] sm:$0xff]
    %v460 = vld [vmem:[#allocation2 + $0x770] sm:$0xff]
    %v461 = vld [vmem:[#allocation2 + $0x778] sm:$0xff]
    %v462 = vld [vmem:[#allocation2 + $0x780] sm:$0xff]
    %v463 = vld [vmem:[#allocation2 + $0x788] sm:$0xff]
    %v464 = vld [vmem:[#allocation2 + $0x790] sm:$0xff]
    %v465 = vld [vmem:[#allocation2 + $0x798] sm:$0xff]
    %v466 = vld [vmem:[#allocation2 + $0x7a0] sm:$0xff]
    %v467 = vld [vmem:[#allocation2 + $0x7a8] sm:$0xff]
    %v468 = vld [vmem:[#allocation2 + $0x7b0] sm:$0xff]
    %v469 = vld [vmem:[#allocation2 + $0x7b8] sm:$0xff]
    %v470 = vld [vmem:[#allocation2 + $0x7c0] sm:$0xff]
    %v471 = vld [vmem:[#allocation2 + $0x7c8] sm:$0xff]
    %v472 = vld [vmem:[#allocation2 + $0x7d0] sm:$0xff]
    %v473 = vld [vmem:[#allocation2 + $0x7d8] sm:$0xff]
    %v474 = vld [vmem:[#allocation2 + $0x7e0] sm:$0xff]
    %v475 = vld [vmem:[#allocation2 + $0x7e8] sm:$0xff]
    %v476 = vld [vmem:[#allocation2 + $0x7f0] sm:$0xff]
    %v477 = vld [vmem:[#allocation2 + $0x7f8] sm:$0xff]
    %v478 = vld [vmem:[#allocation2 + $0x800] sm:$0xff]
    %v479 = vld [vmem:[#allocation2 + $0x808] sm:$0xff]
    %v480 = vld [vmem:[#allocation2 + $0x810] sm:$0xff]
    %v481 = vld [vmem:[#allocation2 + $0x818] sm:$0xff]
    %v482 = vld [vmem:[#allocation2 + $0x820] sm:$0xff]
    %v483 = vld [vmem:[#allocation2 + $0x828] sm:$0xff]
    %v484 = vld [vmem:[#allocation2 + $0x830] sm:$0xff]
    %v485 = vld [vmem:[#allocation2 + $0x838] sm:$0xff]
    %v486 = vld [vmem:[#allocation2 + $0x840] sm:$0xff]
    %v487 = vld [vmem:[#allocation2 + $0x848] sm:$0xff]
    %v488 = vld [vmem:[#allocation2 + $0x850] sm:$0xff]
    %v489 = vld [vmem:[#allocation2 + $0x858] sm:$0xff]
    %v490 = vld [vmem:[#allocation2 + $0x860] sm:$0xff]
    %v491 = vld [vmem:[#allocation2 + $0x868] sm:$0xff]
    %v492 = vld [vmem:[#allocation2 + $0x870] sm:$0xff]
    %v493 = vld [vmem:[#allocation2 + $0x878] sm:$0xff]
    %v494 = vld [vmem:[#allocation2 + $0x880] sm:$0xff]
    %v495 = vld [vmem:[#allocation2 + $0x888] sm:$0xff]
    %v496 = vld [vmem:[#allocation2 + $0x890] sm:$0xff]
    %v497 = vld [vmem:[#allocation2 + $0x898] sm:$0xff]
    %v498 = vld [vmem:[#allocation2 + $0x8a0] sm:$0xff]
    %v499 = vld [vmem:[#allocation2 + $0x8a8] sm:$0xff]
    %v500 = vld [vmem:[#allocation2 + $0x8b0] sm:$0xff]
    %v501 = vld [vmem:[#allocation2 + $0x8b8] sm:$0xff]
    %v502 = vld [vmem:[#allocation2 + $0x8c0] sm:$0xff]
    %v503 = vld [vmem:[#allocation2 + $0x8c8] sm:$0xff]
    %v504 = vld [vmem:[#allocation2 + $0x8d0] sm:$0xff]
    %v505 = vld [vmem:[#allocation2 + $0x8d8] sm:$0xff]
    %v506 = vld [vmem:[#allocation2 + $0x8e0] sm:$0xff]
    %v507 = vld [vmem:[#allocation2 + $0x8e8] sm:$0xff]
    %v508 = vld [vmem:[#allocation2 + $0x8f0] sm:$0xff]
    %v509 = vld [vmem:[#allocation2 + $0x8f8] sm:$0xff]
    %v510 = vld [vmem:[#allocation2 + $0x900] sm:$0xff]
    %v511 = vld [vmem:[#allocation2 + $0x908] sm:$0xff]
    %v512 = vld [vmem:[#allocation2 + $0x910] sm:$0xff]
    %v513 = vld [vmem:[#allocation2 + $0x918] sm:$0xff]
    %v514 = vld [vmem:[#allocation2 + $0x920] sm:$0xff]
    %v515 = vld [vmem:[#allocation2 + $0x928] sm:$0xff]
    %v516 = vld [vmem:[#allocation2 + $0x930] sm:$0xff]
    %v517 = vld [vmem:[#allocation2 + $0x938] sm:$0xff]
    %v518 = vld [vmem:[#allocation2 + $0x940] sm:$0xff]
    %v519 = vld [vmem:[#allocation2 + $0x948] sm:$0xff]
    %v520 = vld [vmem:[#allocation2 + $0x950] sm:$0xff]
    %v521 = vld [vmem:[#allocation2 + $0x958] sm:$0xff]
    %v522 = vld [vmem:[#allocation2 + $0x960] sm:$0xff]
    %v523 = vld [vmem:[#allocation2 + $0x968] sm:$0xff]
    %v524 = vld [vmem:[#allocation2 + $0x970] sm:$0xff]
    %v525 = vld [vmem:[#allocation2 + $0x978] sm:$0xff]
    %v526 = vld [vmem:[#allocation2 + $0x980] sm:$0xff]
    %v527 = vld [vmem:[#allocation2 + $0x988] sm:$0xff]
    %v528 = vld [vmem:[#allocation2 + $0x990] sm:$0xff]
    %v529 = vld [vmem:[#allocation2 + $0x998] sm:$0xff]
    %v530 = vld [vmem:[#allocation2 + $0x9a0] sm:$0xff]
    %v531 = vld [vmem:[#allocation2 + $0x9a8] sm:$0xff]
    %v532 = vld [vmem:[#allocation2 + $0x9b0] sm:$0xff]
    %v533 = vld [vmem:[#allocation2 + $0x9b8] sm:$0xff]
    %v534 = vld [vmem:[#allocation2 + $0x9c0] sm:$0xff]
    %v535 = vld [vmem:[#allocation2 + $0x9c8] sm:$0xff]
    %v536 = vld [vmem:[#allocation2 + $0x9d0] sm:$0xff]
    %v537 = vld [vmem:[#allocation2 + $0x9d8] sm:$0xff]
    %v538 = vld [vmem:[#allocation2 + $0x9e0] sm:$0xff]
    %v539 = vld [vmem:[#allocation2 + $0x9e8] sm:$0xff]
    %v540 = vld [vmem:[#allocation2 + $0x9f0] sm:$0xff]
    %v541 = vld [vmem:[#allocation2 + $0x9f8] sm:$0xff]
    %v542 = vld [vmem:[#allocation2 + $0xa00] sm:$0xff]
    %v543 = vld [vmem:[#allocation2 + $0xa08] sm:$0xff]
    %v544 = vld [vmem:[#allocation2 + $0xa10] sm:$0xff]
    %v545 = vld [vmem:[#allocation2 + $0xa18] sm:$0xff]
    %v546 = vld [vmem:[#allocation2 + $0xa20] sm:$0xff]
    %v547 = vld [vmem:[#allocation2 + $0xa28] sm:$0xff]
    %v548 = vld [vmem:[#allocation2 + $0xa30] sm:$0xff]
    %v549 = vld [vmem:[#allocation2 + $0xa38] sm:$0xff]
    %v550 = vld [vmem:[#allocation2 + $0xa40] sm:$0xff]
    %v551 = vld [vmem:[#allocation2 + $0xa48] sm:$0xff]
    %v552 = vld [vmem:[#allocation2 + $0xa50] sm:$0xff]
    %v553 = vld [vmem:[#allocation2 + $0xa58] sm:$0xff]
    %v554 = vld [vmem:[#allocation2 + $0xa60] sm:$0xff]
    %v555 = vld [vmem:[#allocation2 + $0xa68] sm:$0xff]
    %v556 = vld [vmem:[#allocation2 + $0xa70] sm:$0xff]
    %v557 = vld [vmem:[#allocation2 + $0xa78] sm:$0xff]
    %v558 = vld [vmem:[#allocation2 + $0xa80] sm:$0xff]
    %v559 = vld [vmem:[#allocation2 + $0xa88] sm:$0xff]
    %v560 = vld [vmem:[#allocation2 + $0xa90] sm:$0xff]
    %v561 = vld [vmem:[#allocation2 + $0xa98] sm:$0xff]
    %v562 = vld [vmem:[#allocation2 + $0xaa0] sm:$0xff]
    %v563 = vld [vmem:[#allocation2 + $0xaa8] sm:$0xff]
    %v564 = vld [vmem:[#allocation2 + $0xab0] sm:$0xff]
    %v565 = vld [vmem:[#allocation2 + $0xab8] sm:$0xff]
    %v566 = vld [vmem:[#allocation2 + $0xac0] sm:$0xff]
    %v567 = vld [vmem:[#allocation2 + $0xac8] sm:$0xff]
    %v568 = vld [vmem:[#allocation2 + $0xad0] sm:$0xff]
    %v569 = vld [vmem:[#allocation2 + $0xad8] sm:$0xff]
    %v570 = vld [vmem:[#allocation2 + $0xae0] sm:$0xff]
    %v571 = vld [vmem:[#allocation2 + $0xae8] sm:$0xff]
    %v572 = vld [vmem:[#allocation2 + $0xaf0] sm:$0xff]
    %v573 = vld [vmem:[#allocation2 + $0xaf8] sm:$0xff]
    %v574 = vld [vmem:[#allocation2 + $0xb00] sm:$0xff]
    %v575 = vld [vmem:[#allocation2 + $0xb08] sm:$0xff]
    %v576 = vld [vmem:[#allocation2 + $0xb10] sm:$0xff]
    %v577 = vld [vmem:[#allocation2 + $0xb18] sm:$0xff]
    %v578 = vld [vmem:[#allocation2 + $0xb20] sm:$0xff]
    %v579 = vld [vmem:[#allocation2 + $0xb28] sm:$0xff]
    %v580 = vld [vmem:[#allocation2 + $0xb30] sm:$0xff]
    %v581 = vld [vmem:[#allocation2 + $0xb38] sm:$0xff]
    %v582 = vld [vmem:[#allocation2 + $0xb40] sm:$0xff]
    %v583 = vld [vmem:[#allocation2 + $0xb48] sm:$0xff]
    %v584 = vld [vmem:[#allocation2 + $0xb50] sm:$0xff]
    %v585 = vld [vmem:[#allocation2 + $0xb58] sm:$0xff]
    %v586 = vld [vmem:[#allocation2 + $0xb60] sm:$0xff]
    %v587 = vld [vmem:[#allocation2 + $0xb68] sm:$0xff]
    %v588 = vld [vmem:[#allocation2 + $0xb70] sm:$0xff]
    %v589 = vld [vmem:[#allocation2 + $0xb78] sm:$0xff]
    %v590 = vld [vmem:[#allocation2 + $0xb80] sm:$0xff]
    %v591 = vld [vmem:[#allocation2 + $0xb88] sm:$0xff]
    %v592 = vld [vmem:[#allocation2 + $0xb90] sm:$0xff]
    %v593 = vld [vmem:[#allocation2 + $0xb98] sm:$0xff]
    %v594 = vld [vmem:[#allocation2 + $0xba0] sm:$0xff]
    %v595 = vld [vmem:[#allocation2 + $0xba8] sm:$0xff]
    %v596 = vld [vmem:[#allocation2 + $0xbb0] sm:$0xff]
    %v597 = vld [vmem:[#allocation2 + $0xbb8] sm:$0xff]
    %v598 = vld [vmem:[#allocation2 + $0xbc0] sm:$0xff]
    %v599 = vld [vmem:[#allocation2 + $0xbc8] sm:$0xff]
    %v600 = vld [vmem:[#allocation2 + $0xbd0] sm:$0xff]
    %v601 = vld [vmem:[#allocation2 + $0xbd8] sm:$0xff]
    %v602 = vld [vmem:[#allocation2 + $0xbe0] sm:$0xff]
    %v603 = vld [vmem:[#allocation2 + $0xbe8] sm:$0xff]
    %v604 = vld [vmem:[#allocation2 + $0xbf0] sm:$0xff]
    %v605 = vld [vmem:[#allocation2 + $0xbf8] sm:$0xff]
    %v606 = vld [vmem:[#allocation2 + $0xc00] sm:$0xff]
    %v607 = vld [vmem:[#allocation2 + $0xc08] sm:$0xff]
    %v608 = vld [vmem:[#allocation2 + $0xc10] sm:$0xff]
    %v609 = vld [vmem:[#allocation2 + $0xc18] sm:$0xff]
    %v610 = vld [vmem:[#allocation2 + $0xc20] sm:$0xff]
    %v611 = vld [vmem:[#allocation2 + $0xc28] sm:$0xff]
    %v612 = vld [vmem:[#allocation2 + $0xc30] sm:$0xff]
    %v613 = vld [vmem:[#allocation2 + $0xc38] sm:$0xff]
    %v614 = vld [vmem:[#allocation2 + $0xc40] sm:$0xff]
    %v615 = vld [vmem:[#allocation2 + $0xc48] sm:$0xff]
    %v616 = vld [vmem:[#allocation2 + $0xc50] sm:$0xff]
    %v617 = vld [vmem:[#allocation2 + $0xc58] sm:$0xff]
    %v618 = vld [vmem:[#allocation2 + $0xc60] sm:$0xff]
    %v619 = vld [vmem:[#allocation2 + $0xc68] sm:$0xff]
    %v620 = vld [vmem:[#allocation2 + $0xc70] sm:$0xff]
    %v621 = vld [vmem:[#allocation2 + $0xc78] sm:$0xff]
    %v622 = vld [vmem:[#allocation2 + $0xc80] sm:$0xff]
    %v623 = vld [vmem:[#allocation2 + $0xc88] sm:$0xff]
    %v624 = vld [vmem:[#allocation2 + $0xc90] sm:$0xff]
    %v625 = vld [vmem:[#allocation2 + $0xc98] sm:$0xff]
    %v626 = vld [vmem:[#allocation2 + $0xca0] sm:$0xff]
    %v627 = vld [vmem:[#allocation2 + $0xca8] sm:$0xff]
    %v628 = vld [vmem:[#allocation2 + $0xcb0] sm:$0xff]
    %v629 = vld [vmem:[#allocation2 + $0xcb8] sm:$0xff]
    %v630 = vld [vmem:[#allocation2 + $0xcc0] sm:$0xff]
    %v631 = vld [vmem:[#allocation2 + $0xcc8] sm:$0xff]
    %v632 = vld [vmem:[#allocation2 + $0xcd0] sm:$0xff]
    %v633 = vld [vmem:[#allocation2 + $0xcd8] sm:$0xff]
    %v634 = vld [vmem:[#allocation2 + $0xce0] sm:$0xff]
    %v635 = vld [vmem:[#allocation2 + $0xce8] sm:$0xff]
    %v636 = vld [vmem:[#allocation2 + $0xcf0] sm:$0xff]
    %v637 = vld [vmem:[#allocation2 + $0xcf8] sm:$0xff]
    %v638 = vld [vmem:[#allocation2 + $0xd00] sm:$0xff]
    %v639 = vld [vmem:[#allocation2 + $0xd08] sm:$0xff]
    %v640 = vld [vmem:[#allocation2 + $0xd10] sm:$0xff]
    %v641 = vld [vmem:[#allocation2 + $0xd18] sm:$0xff]
    %v642 = vld [vmem:[#allocation2 + $0xd20] sm:$0xff]
    %v643 = vld [vmem:[#allocation2 + $0xd28] sm:$0xff]
    %v644 = vld [vmem:[#allocation2 + $0xd30] sm:$0xff]
    %v645 = vld [vmem:[#allocation2 + $0xd38] sm:$0xff]
    %v646 = vld [vmem:[#allocation2 + $0xd40] sm:$0xff]
    %v647 = vld [vmem:[#allocation2 + $0xd48] sm:$0xff]
    %v648 = vld [vmem:[#allocation2 + $0xd50] sm:$0xff]
    %v649 = vld [vmem:[#allocation2 + $0xd58] sm:$0xff]
    %v650 = vld [vmem:[#allocation2 + $0xd60] sm:$0xff]
    %v651 = vld [vmem:[#allocation2 + $0xd68] sm:$0xff]
    %v652 = vld [vmem:[#allocation2 + $0xd70] sm:$0xff]
    %v653 = vld [vmem:[#allocation2 + $0xd78] sm:$0xff]
    %v654 = vld [vmem:[#allocation2 + $0xd80] sm:$0xff]
    %v655 = vld [vmem:[#allocation2 + $0xd88] sm:$0xff]
    %v656 = vld [vmem:[#allocation2 + $0xd90] sm:$0xff]
    %v657 = vld [vmem:[#allocation2 + $0xd98] sm:$0xff]
    %v658 = vld [vmem:[#allocation2 + $0xda0] sm:$0xff]
    %v659 = vld [vmem:[#allocation2 + $0xda8] sm:$0xff]
    %v660 = vld [vmem:[#allocation2 + $0xdb0] sm:$0xff]
    %v661 = vld [vmem:[#allocation2 + $0xdb8] sm:$0xff]
    %v662 = vld [vmem:[#allocation2 + $0xdc0] sm:$0xff]
    %v663 = vld [vmem:[#allocation2 + $0xdc8] sm:$0xff]
    %v664 = vld [vmem:[#allocation2 + $0xdd0] sm:$0xff]
    %v665 = vld [vmem:[#allocation2 + $0xdd8] sm:$0xff]
    %v666 = vld [vmem:[#allocation2 + $0xde0] sm:$0xff]
    %v667 = vld [vmem:[#allocation2 + $0xde8] sm:$0xff]
    %v668 = vld [vmem:[#allocation2 + $0xdf0] sm:$0xff]
    %v669 = vld [vmem:[#allocation2 + $0xdf8] sm:$0xff]
    %v670 = vld [vmem:[#allocation2 + $0xe00] sm:$0xff]
    %v671 = vld [vmem:[#allocation2 + $0xe08] sm:$0xff]
    %v672 = vld [vmem:[#allocation2 + $0xe10] sm:$0xff]
    %v673 = vld [vmem:[#allocation2 + $0xe18] sm:$0xff]
    %v674 = vld [vmem:[#allocation2 + $0xe20] sm:$0xff]
    %v675 = vld [vmem:[#allocation2 + $0xe28] sm:$0xff]
    %v676 = vld [vmem:[#allocation2 + $0xe30] sm:$0xff]
    %v677 = vld [vmem:[#allocation2 + $0xe38] sm:$0xff]
    %v678 = vld [vmem:[#allocation2 + $0xe40] sm:$0xff]
    %v679 = vld [vmem:[#allocation2 + $0xe48] sm:$0xff]
    %v680 = vld [vmem:[#allocation2 + $0xe50] sm:$0xff]
    %v681 = vld [vmem:[#allocation2 + $0xe58] sm:$0xff]
    %v682 = vld [vmem:[#allocation2 + $0xe60] sm:$0xff]
    %v683 = vld [vmem:[#allocation2 + $0xe68] sm:$0xff]
    %v684 = vld [vmem:[#allocation2 + $0xe70] sm:$0xff]
    %v685 = vld [vmem:[#allocation2 + $0xe78] sm:$0xff]
    %v686 = vld [vmem:[#allocation2 + $0xe80] sm:$0xff]
    %v687 = vld [vmem:[#allocation2 + $0xe88] sm:$0xff]
    %v688 = vld [vmem:[#allocation2 + $0xe90] sm:$0xff]
    %v689 = vld [vmem:[#allocation2 + $0xe98] sm:$0xff]
    %v690 = vld [vmem:[#allocation2 + $0xea0] sm:$0xff]
    %v691 = vld [vmem:[#allocation2 + $0xea8] sm:$0xff]
    %v692 = vld [vmem:[#allocation2 + $0xeb0] sm:$0xff]
    %v693 = vld [vmem:[#allocation2 + $0xeb8] sm:$0xff]
    %v694 = vld [vmem:[#allocation2 + $0xec0] sm:$0xff]
    %v695 = vld [vmem:[#allocation2 + $0xec8] sm:$0xff]
    %v696 = vld [vmem:[#allocation2 + $0xed0] sm:$0xff]
    %v697 = vld [vmem:[#allocation2 + $0xed8] sm:$0xff]
    %v698 = vld [vmem:[#allocation2 + $0xee0] sm:$0xff]
    %v699 = vld [vmem:[#allocation2 + $0xee8] sm:$0xff]
    %v700 = vld [vmem:[#allocation2 + $0xef0] sm:$0xff]
    %v701 = vld [vmem:[#allocation2 + $0xef8] sm:$0xff]
    %v702 = vld [vmem:[#allocation2 + $0xf00] sm:$0xff]
    %v703 = vld [vmem:[#allocation2 + $0xf08] sm:$0xff]
    %v704 = vld [vmem:[#allocation2 + $0xf10] sm:$0xff]
    %v705 = vld [vmem:[#allocation2 + $0xf18] sm:$0xff]
    %v706 = vld [vmem:[#allocation2 + $0xf20] sm:$0xff]
    %v707 = vld [vmem:[#allocation2 + $0xf28] sm:$0xff]
    %v708 = vld [vmem:[#allocation2 + $0xf30] sm:$0xff]
    %v709 = vld [vmem:[#allocation2 + $0xf38] sm:$0xff]
    %v710 = vld [vmem:[#allocation2 + $0xf40] sm:$0xff]
    %v711 = vld [vmem:[#allocation2 + $0xf48] sm:$0xff]
    %v712 = vld [vmem:[#allocation2 + $0xf50] sm:$0xff]
    %v713 = vld [vmem:[#allocation2 + $0xf58] sm:$0xff]
    %v714 = vld [vmem:[#allocation2 + $0xf60] sm:$0xff]
    %v715 = vld [vmem:[#allocation2 + $0xf68] sm:$0xff]
    %v716 = vld [vmem:[#allocation2 + $0xf70] sm:$0xff]
    %v717 = vld [vmem:[#allocation2 + $0xf78] sm:$0xff]
    %v718 = vld [vmem:[#allocation2 + $0xf80] sm:$0xff]
    %v719 = vld [vmem:[#allocation2 + $0xf88] sm:$0xff]
    %v720 = vld [vmem:[#allocation2 + $0xf90] sm:$0xff]
    %v721 = vld [vmem:[#allocation2 + $0xf98] sm:$0xff]
    %v722 = vld [vmem:[#allocation2 + $0xfa0] sm:$0xff]
    %v723 = vld [vmem:[#allocation2 + $0xfa8] sm:$0xff]
    %v724 = vld [vmem:[#allocation2 + $0xfb0] sm:$0xff]
    %v725 = vld [vmem:[#allocation2 + $0xfb8] sm:$0xff]
    %v726 = vld [vmem:[#allocation2 + $0xfc0] sm:$0xff]
    %v727 = vld [vmem:[#allocation2 + $0xfc8] sm:$0xff]
    %v728 = vld [vmem:[#allocation2 + $0xfd0] sm:$0xff]
    %v729 = vld [vmem:[#allocation2 + $0xfd8] sm:$0xff]
    %v730 = vld [vmem:[#allocation2 + $0xfe0] sm:$0xff]
    %v731 = vld [vmem:[#allocation2 + $0xfe8] sm:$0xff]
    %v732 = vld [vmem:[#allocation2 + $0xff0] sm:$0xff]
    %v733 = vld [vmem:[#allocation2 + $0xff8] sm:$0xff]
    %v734 = vld [vmem:[#allocation2 + $0x1000] sm:$0xff]
    %v735 = vld [vmem:[#allocation2 + $0x1008] sm:$0xff]
    %v736 = vld [vmem:[#allocation2 + $0x1010] sm:$0xff]
    %v737 = vld [vmem:[#allocation2 + $0x1018] sm:$0xff]
    %v738 = vld [vmem:[#allocation2 + $0x1020] sm:$0xff]
    %v739 = vld [vmem:[#allocation2 + $0x1028] sm:$0xff]
    %v740 = vld [vmem:[#allocation2 + $0x1030] sm:$0xff]
    %v741 = vld [vmem:[#allocation2 + $0x1038] sm:$0xff]
    %v742 = vld [vmem:[#allocation2 + $0x1040] sm:$0xff]
    %v743 = vld [vmem:[#allocation2 + $0x1048] sm:$0xff]
    %v744 = vld [vmem:[#allocation2 + $0x1050] sm:$0xff]
    %v745 = vld [vmem:[#allocation2 + $0x1058] sm:$0xff]
    %v746 = vld [vmem:[#allocation2 + $0x1060] sm:$0xff]
    %v747 = vld [vmem:[#allocation2 + $0x1068] sm:$0xff]
    %v748 = vld [vmem:[#allocation2 + $0x1070] sm:$0xff]
    %v749 = vld [vmem:[#allocation2 + $0x1078] sm:$0xff]
    %v750 = vld [vmem:[#allocation2 + $0x1080] sm:$0xff]
    %v751 = vld [vmem:[#allocation2 + $0x1088] sm:$0xff]
    %v752 = vld [vmem:[#allocation2 + $0x1090] sm:$0xff]
    %v753 = vld [vmem:[#allocation2 + $0x1098] sm:$0xff]
    %v754 = vld [vmem:[#allocation2 + $0x10a0] sm:$0xff]
    %v755 = vld [vmem:[#allocation2 + $0x10a8] sm:$0xff]
    %v756 = vld [vmem:[#allocation2 + $0x10b0] sm:$0xff]
    %v757 = vld [vmem:[#allocation2 + $0x10b8] sm:$0xff]
    %v758 = vld [vmem:[#allocation2 + $0x10c0] sm:$0xff]
    %v759 = vld [vmem:[#allocation2 + $0x10c8] sm:$0xff]
    %v760 = vld [vmem:[#allocation2 + $0x10d0] sm:$0xff]
    %v761 = vld [vmem:[#allocation2 + $0x10d8] sm:$0xff]
    %v762 = vld [vmem:[#allocation2 + $0x10e0] sm:$0xff]
    %v763 = vld [vmem:[#allocation2 + $0x10e8] sm:$0xff]
    %v764 = vld [vmem:[#allocation2 + $0x10f0] sm:$0xff]
    %v765 = vld [vmem:[#allocation2 + $0x10f8] sm:$0xff]
    %v766 = vld [vmem:[#allocation2 + $0x1100] sm:$0xff]
    %v767 = vld [vmem:[#allocation2 + $0x1108] sm:$0xff]
    %v768 = vld [vmem:[#allocation2 + $0x1110] sm:$0xff]
    %v769 = vld [vmem:[#allocation2 + $0x1118] sm:$0xff]
    %v770 = vld [vmem:[#allocation2 + $0x1120] sm:$0xff]
    %v771 = vld [vmem:[#allocation2 + $0x1128] sm:$0xff]
    %v772 = vld [vmem:[#allocation2 + $0x1130] sm:$0xff]
    %v773 = vld [vmem:[#allocation2 + $0x1138] sm:$0xff]
    %v774 = vld [vmem:[#allocation2 + $0x1140] sm:$0xff]
    %v775 = vld [vmem:[#allocation2 + $0x1148] sm:$0xff]
    %v776 = vld [vmem:[#allocation2 + $0x1150] sm:$0xff]
    %v777 = vld [vmem:[#allocation2 + $0x1158] sm:$0xff]
    %v778 = vld [vmem:[#allocation2 + $0x1160] sm:$0xff]
    %v779 = vld [vmem:[#allocation2 + $0x1168] sm:$0xff]
    %v780 = vld [vmem:[#allocation2 + $0x1170] sm:$0xff]
    %v781 = vld [vmem:[#allocation2 + $0x1178] sm:$0xff]
    %v782 = vld [vmem:[#allocation2 + $0x1180] sm:$0xff]
    %v783 = vld [vmem:[#allocation2 + $0x1188] sm:$0xff]
    %v784 = vld [vmem:[#allocation2 + $0x1190] sm:$0xff]
    %v785 = vld [vmem:[#allocation2 + $0x1198] sm:$0xff]
    %v786 = vld [vmem:[#allocation2 + $0x11a0] sm:$0xff]
    %v787 = vld [vmem:[#allocation2 + $0x11a8] sm:$0xff]
    %v788 = vld [vmem:[#allocation2 + $0x11b0] sm:$0xff]
    %v789 = vld [vmem:[#allocation2 + $0x11b8] sm:$0xff]
    %v790 = vld [vmem:[#allocation2 + $0x11c0] sm:$0xff]
    %v791 = vld [vmem:[#allocation2 + $0x11c8] sm:$0xff]
    %v792 = vld [vmem:[#allocation2 + $0x11d0] sm:$0xff]
    %v793 = vld [vmem:[#allocation2 + $0x11d8] sm:$0xff]
    %v794 = vld [vmem:[#allocation2 + $0x11e0] sm:$0xff]
    %v795 = vld [vmem:[#allocation2 + $0x11e8] sm:$0xff]
    %v796 = vld [vmem:[#allocation2 + $0x11f0] sm:$0xff]
    %v797 = vld [vmem:[#allocation2 + $0x11f8] sm:$0xff]
    %v798 = vld [vmem:[#allocation2 + $0x1200] sm:$0xff]
    %v799 = vld [vmem:[#allocation2 + $0x1208] sm:$0xff]
    %v800 = vld [vmem:[#allocation2 + $0x1210] sm:$0xff]
    %v801 = vld [vmem:[#allocation2 + $0x1218] sm:$0xff]
    %v802 = vld [vmem:[#allocation2 + $0x1220] sm:$0xff]
    %v803 = vld [vmem:[#allocation2 + $0x1228] sm:$0xff]
    %v804 = vld [vmem:[#allocation2 + $0x1230] sm:$0xff]
    %v805 = vld [vmem:[#allocation2 + $0x1238] sm:$0xff]
    %v806 = vld [vmem:[#allocation5] sm:$0xf]
    %v808 = vlaneseq
    %v809 = vshrl.u32 %v808, 7
    %v810 = vsub.s32 0, %v809
    %v811 = vrot.slane %v806, %v810
    %v812 = vlaneseq
    %v813 = vshrl.u32 %v812, 7
    %v814 = vsub.s32 1, %v813
    %v815 = vrot.slane %v806, %v814
    %v816 = vlaneseq
    %v817 = vshrl.u32 %v816, 7
    %v818 = vsub.s32 2, %v817
    %v819 = vrot.slane %v806, %v818
    %v820 = vlaneseq
    %v821 = vshrl.u32 %v820, 7
    %v822 = vsub.s32 3, %v821
    %v823 = vrot.slane %v806, %v822
    %v1412 = vunpack.c.l.b16 %v222
    %v1413 = vunpack.c.h.b16 %v222
    %v1414 = vunpack.c.l.b16 %v223
    %v1415 = vunpack.c.h.b16 %v223
    %v1416 = vunpack.c.l.b16 %v224
    %v1417 = vunpack.c.h.b16 %v224
    %v1418 = vunpack.c.l.b16 %v225
    %v1419 = vunpack.c.h.b16 %v225
    %v1420 = vunpack.c.l.b16 %v226
    %v1421 = vunpack.c.h.b16 %v226
    %v1422 = vunpack.c.l.b16 %v227
    %v1423 = vunpack.c.h.b16 %v227
    %v1424 = vunpack.c.l.b16 %v228
    %v1425 = vunpack.c.h.b16 %v228
    %v1426 = vunpack.c.l.b16 %v229
    %v1427 = vunpack.c.h.b16 %v229
    %v1428 = vunpack.c.l.b16 %v230
    %v1429 = vunpack.c.h.b16 %v230
    %v1430 = vunpack.c.l.b16 %v231
    %v1431 = vunpack.c.h.b16 %v231
    %v1432 = vunpack.c.l.b16 %v232
    %v1433 = vunpack.c.h.b16 %v232
    %v1434 = vunpack.c.l.b16 %v233
    %v1435 = vunpack.c.h.b16 %v233
    %v1436 = vunpack.c.l.b16 %v234
    %v1437 = vunpack.c.h.b16 %v234
    %v1438 = vunpack.c.l.b16 %v235
    %v1439 = vunpack.c.h.b16 %v235
    %v1440 = vunpack.c.l.b16 %v236
    %v1441 = vunpack.c.h.b16 %v236
    %v1442 = vunpack.c.l.b16 %v237
    %v1443 = vunpack.c.h.b16 %v237
    %v1444 = vunpack.c.l.b16 %v238
    %v1445 = vunpack.c.h.b16 %v238
    %v1446 = vunpack.c.l.b16 %v239
    %v1447 = vunpack.c.h.b16 %v239
    %v1448 = vunpack.c.l.b16 %v240
    %v1449 = vunpack.c.h.b16 %v240
    %v1450 = vunpack.c.l.b16 %v241
    %v1451 = vunpack.c.h.b16 %v241
    %v1452 = vunpack.c.l.b16 %v242
    %v1453 = vunpack.c.h.b16 %v242
    %v1454 = vunpack.c.l.b16 %v243
    %v1455 = vunpack.c.h.b16 %v243
    %v1456 = vunpack.c.l.b16 %v244
    %v1457 = vunpack.c.h.b16 %v244
    %v1458 = vunpack.c.l.b16 %v245
    %v1459 = vunpack.c.h.b16 %v245
    %v1460 = vunpack.c.l.b16 %v246
    %v1461 = vunpack.c.h.b16 %v246
    %v1462 = vunpack.c.l.b16 %v247
    %v1463 = vunpack.c.h.b16 %v247
    %v1464 = vunpack.c.l.b16 %v248
    %v1465 = vunpack.c.h.b16 %v248
    %v1466 = vunpack.c.l.b16 %v249
    %v1467 = vunpack.c.h.b16 %v249
    %v1468 = vunpack.c.l.b16 %v250
    %v1469 = vunpack.c.h.b16 %v250
    %v1470 = vunpack.c.l.b16 %v251
    %v1471 = vunpack.c.h.b16 %v251
    %v1472 = vunpack.c.l.b16 %v252
    %v1473 = vunpack.c.h.b16 %v252
    %v1474 = vunpack.c.l.b16 %v253
    %v1475 = vunpack.c.h.b16 %v253
    %v1476 = vunpack.c.l.b16 %v254
    %v1477 = vunpack.c.h.b16 %v254
    %v1478 = vunpack.c.l.b16 %v255
    %v1479 = vunpack.c.h.b16 %v255
    %v1480 = vunpack.c.l.b16 %v256
    %v1481 = vunpack.c.h.b16 %v256
    %v1482 = vunpack.c.l.b16 %v257
    %v1483 = vunpack.c.h.b16 %v257
    %v1484 = vunpack.c.l.b16 %v258
    %v1485 = vunpack.c.h.b16 %v258
    %v1486 = vunpack.c.l.b16 %v259
    %v1487 = vunpack.c.h.b16 %v259
    %v1488 = vunpack.c.l.b16 %v260
    %v1489 = vunpack.c.h.b16 %v260
    %v1490 = vunpack.c.l.b16 %v261
    %v1491 = vunpack.c.h.b16 %v261
    %v1492 = vunpack.c.l.b16 %v262
    %v1493 = vunpack.c.h.b16 %v262
    %v1494 = vunpack.c.l.b16 %v263
    %v1495 = vunpack.c.h.b16 %v263
    %v1496 = vunpack.c.l.b16 %v264
    %v1497 = vunpack.c.h.b16 %v264
    %v1498 = vunpack.c.l.b16 %v265
    %v1499 = vunpack.c.h.b16 %v265
    %v1500 = vunpack.c.l.b16 %v266
    %v1501 = vunpack.c.h.b16 %v266
    %v1502 = vunpack.c.l.b16 %v267
    %v1503 = vunpack.c.h.b16 %v267
    %v1504 = vunpack.c.l.b16 %v268
    %v1505 = vunpack.c.h.b16 %v268
    %v1506 = vunpack.c.l.b16 %v269
    %v1507 = vunpack.c.h.b16 %v269
    %v1508 = vunpack.c.l.b16 %v270
    %v1509 = vunpack.c.h.b16 %v270
    %v1510 = vunpack.c.l.b16 %v271
    %v1511 = vunpack.c.h.b16 %v271
    %v1512 = vunpack.c.l.b16 %v272
    %v1513 = vunpack.c.h.b16 %v272
    %v1514 = vunpack.c.l.b16 %v273
    %v1515 = vunpack.c.h.b16 %v273
    %v1516 = vunpack.c.l.b16 %v274
    %v1517 = vunpack.c.h.b16 %v274
    %v1518 = vunpack.c.l.b16 %v275
    %v1519 = vunpack.c.h.b16 %v275
    %v1520 = vunpack.c.l.b16 %v276
    %v1521 = vunpack.c.h.b16 %v276
    %v1522 = vunpack.c.l.b16 %v277
    %v1523 = vunpack.c.h.b16 %v277
    %v1524 = vunpack.c.l.b16 %v278
    %v1525 = vunpack.c.h.b16 %v278
    %v1526 = vunpack.c.l.b16 %v279
    %v1527 = vunpack.c.h.b16 %v279
    %v1528 = vunpack.c.l.b16 %v280
    %v1529 = vunpack.c.h.b16 %v280
    %v1530 = vunpack.c.l.b16 %v281
    %v1531 = vunpack.c.h.b16 %v281
    %v1532 = vunpack.c.l.b16 %v282
    %v1533 = vunpack.c.h.b16 %v282
    %v1534 = vunpack.c.l.b16 %v283
    %v1535 = vunpack.c.h.b16 %v283
    %v1536 = vunpack.c.l.b16 %v284
    %v1537 = vunpack.c.h.b16 %v284
    %v1538 = vunpack.c.l.b16 %v285
    %v1539 = vunpack.c.h.b16 %v285
    %v1540 = vunpack.c.l.b16 %v286
    %v1541 = vunpack.c.h.b16 %v286
    %v1542 = vunpack.c.l.b16 %v287
    %v1543 = vunpack.c.h.b16 %v287
    %v1544 = vunpack.c.l.b16 %v288
    %v1545 = vunpack.c.h.b16 %v288
    %v1546 = vunpack.c.l.b16 %v289
    %v1547 = vunpack.c.h.b16 %v289
    %v1548 = vunpack.c.l.b16 %v290
    %v1549 = vunpack.c.h.b16 %v290
    %v1550 = vunpack.c.l.b16 %v291
    %v1551 = vunpack.c.h.b16 %v291
    %v1552 = vunpack.c.l.b16 %v292
    %v1553 = vunpack.c.h.b16 %v292
    %v1554 = vunpack.c.l.b16 %v293
    %v1555 = vunpack.c.h.b16 %v293
    %v1556 = vunpack.c.l.b16 %v294
    %v1557 = vunpack.c.h.b16 %v294
    %v1558 = vunpack.c.l.b16 %v295
    %v1559 = vunpack.c.h.b16 %v295
    %v1560 = vunpack.c.l.b16 %v296
    %v1561 = vunpack.c.h.b16 %v296
    %v1562 = vunpack.c.l.b16 %v297
    %v1563 = vunpack.c.h.b16 %v297
    %v1564 = vunpack.c.l.b16 %v298
    %v1565 = vunpack.c.h.b16 %v298
    %v1566 = vunpack.c.l.b16 %v299
    %v1567 = vunpack.c.h.b16 %v299
    %v1568 = vunpack.c.l.b16 %v300
    %v1569 = vunpack.c.h.b16 %v300
    %v1570 = vunpack.c.l.b16 %v301
    %v1571 = vunpack.c.h.b16 %v301
    %v1572 = vunpack.c.l.b16 %v302
    %v1573 = vunpack.c.h.b16 %v302
    %v1574 = vunpack.c.l.b16 %v303
    %v1575 = vunpack.c.h.b16 %v303
    %v1576 = vunpack.c.l.b16 %v304
    %v1577 = vunpack.c.h.b16 %v304
    %v1578 = vunpack.c.l.b16 %v305
    %v1579 = vunpack.c.h.b16 %v305
    %v1580 = vunpack.c.l.b16 %v306
    %v1581 = vunpack.c.h.b16 %v306
    %v1582 = vunpack.c.l.b16 %v307
    %v1583 = vunpack.c.h.b16 %v307
    %v1584 = vunpack.c.l.b16 %v308
    %v1585 = vunpack.c.h.b16 %v308
    %v1586 = vunpack.c.l.b16 %v309
    %v1587 = vunpack.c.h.b16 %v309
    %v1588 = vunpack.c.l.b16 %v310
    %v1589 = vunpack.c.h.b16 %v310
    %v1590 = vunpack.c.l.b16 %v311
    %v1591 = vunpack.c.h.b16 %v311
    %v1592 = vunpack.c.l.b16 %v312
    %v1593 = vunpack.c.h.b16 %v312
    %v1594 = vunpack.c.l.b16 %v313
    %v1595 = vunpack.c.h.b16 %v313
    %v1596 = vunpack.c.l.b16 %v314
    %v1597 = vunpack.c.h.b16 %v314
    %v1598 = vunpack.c.l.b16 %v315
    %v1599 = vunpack.c.h.b16 %v315
    %v1600 = vunpack.c.l.b16 %v316
    %v1601 = vunpack.c.h.b16 %v316
    %v1602 = vunpack.c.l.b16 %v317
    %v1603 = vunpack.c.h.b16 %v317
    %v1604 = vunpack.c.l.b16 %v318
    %v1605 = vunpack.c.h.b16 %v318
    %v1606 = vunpack.c.l.b16 %v319
    %v1607 = vunpack.c.h.b16 %v319
    %v1608 = vunpack.c.l.b16 %v320
    %v1609 = vunpack.c.h.b16 %v320
    %v1610 = vunpack.c.l.b16 %v321
    %v1611 = vunpack.c.h.b16 %v321
    %v1612 = vunpack.c.l.b16 %v322
    %v1613 = vunpack.c.h.b16 %v322
    %v1614 = vunpack.c.l.b16 %v323
    %v1615 = vunpack.c.h.b16 %v323
    %v1616 = vunpack.c.l.b16 %v324
    %v1617 = vunpack.c.h.b16 %v324
    %v1618 = vunpack.c.l.b16 %v325
    %v1619 = vunpack.c.h.b16 %v325
    %v1620 = vunpack.c.l.b16 %v326
    %v1621 = vunpack.c.h.b16 %v326
    %v1622 = vunpack.c.l.b16 %v327
    %v1623 = vunpack.c.h.b16 %v327
    %v1624 = vunpack.c.l.b16 %v328
    %v1625 = vunpack.c.h.b16 %v328
    %v1626 = vunpack.c.l.b16 %v329
    %v1627 = vunpack.c.h.b16 %v329
    %v1628 = vunpack.c.l.b16 %v330
    %v1629 = vunpack.c.h.b16 %v330
    %v1630 = vunpack.c.l.b16 %v331
    %v1631 = vunpack.c.h.b16 %v331
    %v1632 = vunpack.c.l.b16 %v332
    %v1633 = vunpack.c.h.b16 %v332
    %v1634 = vunpack.c.l.b16 %v333
    %v1635 = vunpack.c.h.b16 %v333
    %v1636 = vunpack.c.l.b16 %v334
    %v1637 = vunpack.c.h.b16 %v334
    %v1638 = vunpack.c.l.b16 %v335
    %v1639 = vunpack.c.h.b16 %v335
    %v1640 = vunpack.c.l.b16 %v336
    %v1641 = vunpack.c.h.b16 %v336
    %v1642 = vunpack.c.l.b16 %v337
    %v1643 = vunpack.c.h.b16 %v337
    %v1644 = vunpack.c.l.b16 %v338
    %v1645 = vunpack.c.h.b16 %v338
    %v1646 = vunpack.c.l.b16 %v339
    %v1647 = vunpack.c.h.b16 %v339
    %v1648 = vunpack.c.l.b16 %v340
    %v1649 = vunpack.c.h.b16 %v340
    %v1650 = vunpack.c.l.b16 %v341
    %v1651 = vunpack.c.h.b16 %v341
    %v1652 = vunpack.c.l.b16 %v342
    %v1653 = vunpack.c.h.b16 %v342
    %v1654 = vunpack.c.l.b16 %v343
    %v1655 = vunpack.c.h.b16 %v343
    %v1656 = vunpack.c.l.b16 %v344
    %v1657 = vunpack.c.h.b16 %v344
    %v1658 = vunpack.c.l.b16 %v345
    %v1659 = vunpack.c.h.b16 %v345
    %v1660 = vunpack.c.l.b16 %v346
    %v1661 = vunpack.c.h.b16 %v346
    %v1662 = vunpack.c.l.b16 %v347
    %v1663 = vunpack.c.h.b16 %v347
    %v1664 = vunpack.c.l.b16 %v348
    %v1665 = vunpack.c.h.b16 %v348
    %v1666 = vunpack.c.l.b16 %v349
    %v1667 = vunpack.c.h.b16 %v349
    %v1668 = vunpack.c.l.b16 %v350
    %v1669 = vunpack.c.h.b16 %v350
    %v1670 = vunpack.c.l.b16 %v351
    %v1671 = vunpack.c.h.b16 %v351
    %v1672 = vunpack.c.l.b16 %v352
    %v1673 = vunpack.c.h.b16 %v352
    %v1674 = vunpack.c.l.b16 %v353
    %v1675 = vunpack.c.h.b16 %v353
    %v1676 = vunpack.c.l.b16 %v354
    %v1677 = vunpack.c.h.b16 %v354
    %v1678 = vunpack.c.l.b16 %v355
    %v1679 = vunpack.c.h.b16 %v355
    %v1680 = vunpack.c.l.b16 %v356
    %v1681 = vunpack.c.h.b16 %v356
    %v1682 = vunpack.c.l.b16 %v357
    %v1683 = vunpack.c.h.b16 %v357
    %v1684 = vunpack.c.l.b16 %v358
    %v1685 = vunpack.c.h.b16 %v358
    %v1686 = vunpack.c.l.b16 %v359
    %v1687 = vunpack.c.h.b16 %v359
    %v1688 = vunpack.c.l.b16 %v360
    %v1689 = vunpack.c.h.b16 %v360
    %v1690 = vunpack.c.l.b16 %v361
    %v1691 = vunpack.c.h.b16 %v361
    %v1692 = vunpack.c.l.b16 %v362
    %v1693 = vunpack.c.h.b16 %v362
    %v1694 = vunpack.c.l.b16 %v363
    %v1695 = vunpack.c.h.b16 %v363
    %v1696 = vunpack.c.l.b16 %v364
    %v1697 = vunpack.c.h.b16 %v364
    %v1698 = vunpack.c.l.b16 %v365
    %v1699 = vunpack.c.h.b16 %v365
    %v1700 = vunpack.c.l.b16 %v366
    %v1701 = vunpack.c.h.b16 %v366
    %v1702 = vunpack.c.l.b16 %v367
    %v1703 = vunpack.c.h.b16 %v367
    %v1704 = vunpack.c.l.b16 %v368
    %v1705 = vunpack.c.h.b16 %v368
    %v1706 = vunpack.c.l.b16 %v369
    %v1707 = vunpack.c.h.b16 %v369
    %v1708 = vunpack.c.l.b16 %v370
    %v1709 = vunpack.c.h.b16 %v370
    %v1710 = vunpack.c.l.b16 %v371
    %v1711 = vunpack.c.h.b16 %v371
    %v1712 = vunpack.c.l.b16 %v372
    %v1713 = vunpack.c.h.b16 %v372
    %v1714 = vunpack.c.l.b16 %v373
    %v1715 = vunpack.c.h.b16 %v373
    %v1716 = vunpack.c.l.b16 %v374
    %v1717 = vunpack.c.h.b16 %v374
    %v1718 = vunpack.c.l.b16 %v375
    %v1719 = vunpack.c.h.b16 %v375
    %v1720 = vunpack.c.l.b16 %v376
    %v1721 = vunpack.c.h.b16 %v376
    %v1722 = vunpack.c.l.b16 %v377
    %v1723 = vunpack.c.h.b16 %v377
    %v1724 = vunpack.c.l.b16 %v378
    %v1725 = vunpack.c.h.b16 %v378
    %v1726 = vunpack.c.l.b16 %v379
    %v1727 = vunpack.c.h.b16 %v379
    %v1728 = vunpack.c.l.b16 %v380
    %v1729 = vunpack.c.h.b16 %v380
    %v1730 = vunpack.c.l.b16 %v381
    %v1731 = vunpack.c.h.b16 %v381
    %v1732 = vunpack.c.l.b16 %v382
    %v1733 = vunpack.c.h.b16 %v382
    %v1734 = vunpack.c.l.b16 %v383
    %v1735 = vunpack.c.h.b16 %v383
    %v1736 = vunpack.c.l.b16 %v384
    %v1737 = vunpack.c.h.b16 %v384
    %v1738 = vunpack.c.l.b16 %v385
    %v1739 = vunpack.c.h.b16 %v385
    %v1740 = vunpack.c.l.b16 %v386
    %v1741 = vunpack.c.h.b16 %v386
    %v1742 = vunpack.c.l.b16 %v387
    %v1743 = vunpack.c.h.b16 %v387
    %v1744 = vunpack.c.l.b16 %v388
    %v1745 = vunpack.c.h.b16 %v388
    %v1746 = vunpack.c.l.b16 %v389
    %v1747 = vunpack.c.h.b16 %v389
    %v1748 = vunpack.c.l.b16 %v390
    %v1749 = vunpack.c.h.b16 %v390
    %v1750 = vunpack.c.l.b16 %v391
    %v1751 = vunpack.c.h.b16 %v391
    %v1752 = vunpack.c.l.b16 %v392
    %v1753 = vunpack.c.h.b16 %v392
    %v1754 = vunpack.c.l.b16 %v393
    %v1755 = vunpack.c.h.b16 %v393
    %v1756 = vunpack.c.l.b16 %v394
    %v1757 = vunpack.c.h.b16 %v394
    %v1758 = vunpack.c.l.b16 %v395
    %v1759 = vunpack.c.h.b16 %v395
    %v1760 = vunpack.c.l.b16 %v396
    %v1761 = vunpack.c.h.b16 %v396
    %v1762 = vunpack.c.l.b16 %v397
    %v1763 = vunpack.c.h.b16 %v397
    %v1764 = vunpack.c.l.b16 %v398
    %v1765 = vunpack.c.h.b16 %v398
    %v1766 = vunpack.c.l.b16 %v399
    %v1767 = vunpack.c.h.b16 %v399
    %v1768 = vunpack.c.l.b16 %v400
    %v1769 = vunpack.c.h.b16 %v400
    %v1770 = vunpack.c.l.b16 %v401
    %v1771 = vunpack.c.h.b16 %v401
    %v1772 = vunpack.c.l.b16 %v402
    %v1773 = vunpack.c.h.b16 %v402
    %v1774 = vunpack.c.l.b16 %v403
    %v1775 = vunpack.c.h.b16 %v403
    %v1776 = vunpack.c.l.b16 %v404
    %v1777 = vunpack.c.h.b16 %v404
    %v1778 = vunpack.c.l.b16 %v405
    %v1779 = vunpack.c.h.b16 %v405
    %v1780 = vunpack.c.l.b16 %v406
    %v1781 = vunpack.c.h.b16 %v406
    %v1782 = vunpack.c.l.b16 %v407
    %v1783 = vunpack.c.h.b16 %v407
    %v1784 = vunpack.c.l.b16 %v408
    %v1785 = vunpack.c.h.b16 %v408
    %v1786 = vunpack.c.l.b16 %v409
    %v1787 = vunpack.c.h.b16 %v409
    %v1788 = vunpack.c.l.b16 %v410
    %v1789 = vunpack.c.h.b16 %v410
    %v1790 = vunpack.c.l.b16 %v411
    %v1791 = vunpack.c.h.b16 %v411
    %v1792 = vunpack.c.l.b16 %v412
    %v1793 = vunpack.c.h.b16 %v412
    %v1794 = vunpack.c.l.b16 %v413
    %v1795 = vunpack.c.h.b16 %v413
    %v1796 = vunpack.c.l.b16 %v414
    %v1797 = vunpack.c.h.b16 %v414
    %v1798 = vunpack.c.l.b16 %v415
    %v1799 = vunpack.c.h.b16 %v415
    %v1800 = vunpack.c.l.b16 %v416
    %v1801 = vunpack.c.h.b16 %v416
    %v1802 = vunpack.c.l.b16 %v417
    %v1803 = vunpack.c.h.b16 %v417
    %v1804 = vunpack.c.l.b16 %v418
    %v1805 = vunpack.c.h.b16 %v418
    %v1806 = vunpack.c.l.b16 %v419
    %v1807 = vunpack.c.h.b16 %v419
    %v1808 = vunpack.c.l.b16 %v420
    %v1809 = vunpack.c.h.b16 %v420
    %v1810 = vunpack.c.l.b16 %v421
    %v1811 = vunpack.c.h.b16 %v421
    %v1812 = vunpack.c.l.b16 %v422
    %v1813 = vunpack.c.h.b16 %v422
    %v1814 = vunpack.c.l.b16 %v423
    %v1815 = vunpack.c.h.b16 %v423
    %v1816 = vunpack.c.l.b16 %v424
    %v1817 = vunpack.c.h.b16 %v424
    %v1818 = vunpack.c.l.b16 %v425
    %v1819 = vunpack.c.h.b16 %v425
    %v1820 = vunpack.c.l.b16 %v426
    %v1821 = vunpack.c.h.b16 %v426
    %v1822 = vunpack.c.l.b16 %v427
    %v1823 = vunpack.c.h.b16 %v427
    %v1824 = vunpack.c.l.b16 %v428
    %v1825 = vunpack.c.h.b16 %v428
    %v1826 = vunpack.c.l.b16 %v429
    %v1827 = vunpack.c.h.b16 %v429
    %v1828 = vunpack.c.l.b16 %v430
    %v1829 = vunpack.c.h.b16 %v430
    %v1830 = vunpack.c.l.b16 %v431
    %v1831 = vunpack.c.h.b16 %v431
    %v1832 = vunpack.c.l.b16 %v432
    %v1833 = vunpack.c.h.b16 %v432
    %v1834 = vunpack.c.l.b16 %v433
    %v1835 = vunpack.c.h.b16 %v433
    %v1836 = vunpack.c.l.b16 %v434
    %v1837 = vunpack.c.h.b16 %v434
    %v1838 = vunpack.c.l.b16 %v435
    %v1839 = vunpack.c.h.b16 %v435
    %v1840 = vunpack.c.l.b16 %v436
    %v1841 = vunpack.c.h.b16 %v436
    %v1842 = vunpack.c.l.b16 %v437
    %v1843 = vunpack.c.h.b16 %v437
    %v1844 = vunpack.c.l.b16 %v438
    %v1845 = vunpack.c.h.b16 %v438
    %v1846 = vunpack.c.l.b16 %v439
    %v1847 = vunpack.c.h.b16 %v439
    %v1848 = vunpack.c.l.b16 %v440
    %v1849 = vunpack.c.h.b16 %v440
    %v1850 = vunpack.c.l.b16 %v441
    %v1851 = vunpack.c.h.b16 %v441
    %v1852 = vunpack.c.l.b16 %v442
    %v1853 = vunpack.c.h.b16 %v442
    %v1854 = vunpack.c.l.b16 %v443
    %v1855 = vunpack.c.h.b16 %v443
    %v1856 = vunpack.c.l.b16 %v444
    %v1857 = vunpack.c.h.b16 %v444
    %v1858 = vunpack.c.l.b16 %v445
    %v1859 = vunpack.c.h.b16 %v445
    %v1860 = vunpack.c.l.b16 %v446
    %v1861 = vunpack.c.h.b16 %v446
    %v1862 = vunpack.c.l.b16 %v447
    %v1863 = vunpack.c.h.b16 %v447
    %v1864 = vunpack.c.l.b16 %v448
    %v1865 = vunpack.c.h.b16 %v448
    %v1866 = vunpack.c.l.b16 %v449
    %v1867 = vunpack.c.h.b16 %v449
    %v1868 = vunpack.c.l.b16 %v450
    %v1869 = vunpack.c.h.b16 %v450
    %v1870 = vunpack.c.l.b16 %v451
    %v1871 = vunpack.c.h.b16 %v451
    %v1872 = vunpack.c.l.b16 %v452
    %v1873 = vunpack.c.h.b16 %v452
    %v1874 = vunpack.c.l.b16 %v453
    %v1875 = vunpack.c.h.b16 %v453
    %v1876 = vunpack.c.l.b16 %v454
    %v1877 = vunpack.c.h.b16 %v454
    %v1878 = vunpack.c.l.b16 %v455
    %v1879 = vunpack.c.h.b16 %v455
    %v1880 = vunpack.c.l.b16 %v456
    %v1881 = vunpack.c.h.b16 %v456
    %v1882 = vunpack.c.l.b16 %v457
    %v1883 = vunpack.c.h.b16 %v457
    %v1884 = vunpack.c.l.b16 %v458
    %v1885 = vunpack.c.h.b16 %v458
    %v1886 = vunpack.c.l.b16 %v459
    %v1887 = vunpack.c.h.b16 %v459
    %v1888 = vunpack.c.l.b16 %v460
    %v1889 = vunpack.c.h.b16 %v460
    %v1890 = vunpack.c.l.b16 %v461
    %v1891 = vunpack.c.h.b16 %v461
    %v1892 = vunpack.c.l.b16 %v462
    %v1893 = vunpack.c.h.b16 %v462
    %v1894 = vunpack.c.l.b16 %v463
    %v1895 = vunpack.c.h.b16 %v463
    %v1896 = vunpack.c.l.b16 %v464
    %v1897 = vunpack.c.h.b16 %v464
    %v1898 = vunpack.c.l.b16 %v465
    %v1899 = vunpack.c.h.b16 %v465
    %v1900 = vunpack.c.l.b16 %v466
    %v1901 = vunpack.c.h.b16 %v466
    %v1902 = vunpack.c.l.b16 %v467
    %v1903 = vunpack.c.h.b16 %v467
    %v1904 = vunpack.c.l.b16 %v468
    %v1905 = vunpack.c.h.b16 %v468
    %v1906 = vunpack.c.l.b16 %v469
    %v1907 = vunpack.c.h.b16 %v469
    %v1908 = vunpack.c.l.b16 %v470
    %v1909 = vunpack.c.h.b16 %v470
    %v1910 = vunpack.c.l.b16 %v471
    %v1911 = vunpack.c.h.b16 %v471
    %v1912 = vunpack.c.l.b16 %v472
    %v1913 = vunpack.c.h.b16 %v472
    %v1914 = vunpack.c.l.b16 %v473
    %v1915 = vunpack.c.h.b16 %v473
    %v1916 = vunpack.c.l.b16 %v474
    %v1917 = vunpack.c.h.b16 %v474
    %v1918 = vunpack.c.l.b16 %v475
    %v1919 = vunpack.c.h.b16 %v475
    %v1920 = vunpack.c.l.b16 %v476
    %v1921 = vunpack.c.h.b16 %v476
    %v1922 = vunpack.c.l.b16 %v477
    %v1923 = vunpack.c.h.b16 %v477
    %v1924 = vunpack.c.l.b16 %v478
    %v1925 = vunpack.c.h.b16 %v478
    %v1926 = vunpack.c.l.b16 %v479
    %v1927 = vunpack.c.h.b16 %v479
    %v1928 = vunpack.c.l.b16 %v480
    %v1929 = vunpack.c.h.b16 %v480
    %v1930 = vunpack.c.l.b16 %v481
    %v1931 = vunpack.c.h.b16 %v481
    %v1932 = vunpack.c.l.b16 %v482
    %v1933 = vunpack.c.h.b16 %v482
    %v1934 = vunpack.c.l.b16 %v483
    %v1935 = vunpack.c.h.b16 %v483
    %v1936 = vunpack.c.l.b16 %v484
    %v1937 = vunpack.c.h.b16 %v484
    %v1938 = vunpack.c.l.b16 %v485
    %v1939 = vunpack.c.h.b16 %v485
    %v1940 = vunpack.c.l.b16 %v486
    %v1941 = vunpack.c.h.b16 %v486
    %v1942 = vunpack.c.l.b16 %v487
    %v1943 = vunpack.c.h.b16 %v487
    %v1944 = vunpack.c.l.b16 %v488
    %v1945 = vunpack.c.h.b16 %v488
    %v1946 = vunpack.c.l.b16 %v489
    %v1947 = vunpack.c.h.b16 %v489
    %v1948 = vunpack.c.l.b16 %v490
    %v1949 = vunpack.c.h.b16 %v490
    %v1950 = vunpack.c.l.b16 %v491
    %v1951 = vunpack.c.h.b16 %v491
    %v1952 = vunpack.c.l.b16 %v492
    %v1953 = vunpack.c.h.b16 %v492
    %v1954 = vunpack.c.l.b16 %v493
    %v1955 = vunpack.c.h.b16 %v493
    %v1956 = vunpack.c.l.b16 %v494
    %v1957 = vunpack.c.h.b16 %v494
    %v1958 = vunpack.c.l.b16 %v495
    %v1959 = vunpack.c.h.b16 %v495
    %v1960 = vunpack.c.l.b16 %v496
    %v1961 = vunpack.c.h.b16 %v496
    %v1962 = vunpack.c.l.b16 %v497
    %v1963 = vunpack.c.h.b16 %v497
    %v1964 = vunpack.c.l.b16 %v498
    %v1965 = vunpack.c.h.b16 %v498
    %v1966 = vunpack.c.l.b16 %v499
    %v1967 = vunpack.c.h.b16 %v499
    %v1968 = vunpack.c.l.b16 %v500
    %v1969 = vunpack.c.h.b16 %v500
    %v1970 = vunpack.c.l.b16 %v501
    %v1971 = vunpack.c.h.b16 %v501
    %v1972 = vunpack.c.l.b16 %v502
    %v1973 = vunpack.c.h.b16 %v502
    %v1974 = vunpack.c.l.b16 %v503
    %v1975 = vunpack.c.h.b16 %v503
    %v1976 = vunpack.c.l.b16 %v504
    %v1977 = vunpack.c.h.b16 %v504
    %v1978 = vunpack.c.l.b16 %v505
    %v1979 = vunpack.c.h.b16 %v505
    %v1980 = vunpack.c.l.b16 %v506
    %v1981 = vunpack.c.h.b16 %v506
    %v1982 = vunpack.c.l.b16 %v507
    %v1983 = vunpack.c.h.b16 %v507
    %v1984 = vunpack.c.l.b16 %v508
    %v1985 = vunpack.c.h.b16 %v508
    %v1986 = vunpack.c.l.b16 %v509
    %v1987 = vunpack.c.h.b16 %v509
    %v1988 = vunpack.c.l.b16 %v510
    %v1989 = vunpack.c.h.b16 %v510
    %v1990 = vunpack.c.l.b16 %v511
    %v1991 = vunpack.c.h.b16 %v511
    %v1992 = vunpack.c.l.b16 %v512
    %v1993 = vunpack.c.h.b16 %v512
    %v1994 = vunpack.c.l.b16 %v513
    %v1995 = vunpack.c.h.b16 %v513
    %v1996 = vunpack.c.l.b16 %v514
    %v1997 = vunpack.c.h.b16 %v514
    %v1998 = vunpack.c.l.b16 %v515
    %v1999 = vunpack.c.h.b16 %v515
    %v2000 = vunpack.c.l.b16 %v516
    %v2001 = vunpack.c.h.b16 %v516
    %v2002 = vunpack.c.l.b16 %v517
    %v2003 = vunpack.c.h.b16 %v517
    %v2004 = vunpack.c.l.b16 %v518
    %v2005 = vunpack.c.h.b16 %v518
    %v2006 = vunpack.c.l.b16 %v519
    %v2007 = vunpack.c.h.b16 %v519
    %v2008 = vunpack.c.l.b16 %v520
    %v2009 = vunpack.c.h.b16 %v520
    %v2010 = vunpack.c.l.b16 %v521
    %v2011 = vunpack.c.h.b16 %v521
    %v2012 = vunpack.c.l.b16 %v522
    %v2013 = vunpack.c.h.b16 %v522
    %v2014 = vunpack.c.l.b16 %v523
    %v2015 = vunpack.c.h.b16 %v523
    %v2016 = vunpack.c.l.b16 %v524
    %v2017 = vunpack.c.h.b16 %v524
    %v2018 = vunpack.c.l.b16 %v525
    %v2019 = vunpack.c.h.b16 %v525
    %v2020 = vunpack.c.l.b16 %v526
    %v2021 = vunpack.c.h.b16 %v526
    %v2022 = vunpack.c.l.b16 %v527
    %v2023 = vunpack.c.h.b16 %v527
    %v2024 = vunpack.c.l.b16 %v528
    %v2025 = vunpack.c.h.b16 %v528
    %v2026 = vunpack.c.l.b16 %v529
    %v2027 = vunpack.c.h.b16 %v529
    %v2028 = vunpack.c.l.b16 %v530
    %v2029 = vunpack.c.h.b16 %v530
    %v2030 = vunpack.c.l.b16 %v531
    %v2031 = vunpack.c.h.b16 %v531
    %v2032 = vunpack.c.l.b16 %v532
    %v2033 = vunpack.c.h.b16 %v532
    %v2034 = vunpack.c.l.b16 %v533
    %v2035 = vunpack.c.h.b16 %v533
    %v2036 = vunpack.c.l.b16 %v534
    %v2037 = vunpack.c.h.b16 %v534
    %v2038 = vunpack.c.l.b16 %v535
    %v2039 = vunpack.c.h.b16 %v535
    %v2040 = vunpack.c.l.b16 %v536
    %v2041 = vunpack.c.h.b16 %v536
    %v2042 = vunpack.c.l.b16 %v537
    %v2043 = vunpack.c.h.b16 %v537
    %v2044 = vunpack.c.l.b16 %v538
    %v2045 = vunpack.c.h.b16 %v538
    %v2046 = vunpack.c.l.b16 %v539
    %v2047 = vunpack.c.h.b16 %v539
    %v2048 = vunpack.c.l.b16 %v540
    %v2049 = vunpack.c.h.b16 %v540
    %v2050 = vunpack.c.l.b16 %v541
    %v2051 = vunpack.c.h.b16 %v541
    %v2052 = vunpack.c.l.b16 %v542
    %v2053 = vunpack.c.h.b16 %v542
    %v2054 = vunpack.c.l.b16 %v543
    %v2055 = vunpack.c.h.b16 %v543
    %v2056 = vunpack.c.l.b16 %v544
    %v2057 = vunpack.c.h.b16 %v544
    %v2058 = vunpack.c.l.b16 %v545
    %v2059 = vunpack.c.h.b16 %v545
    %v2060 = vunpack.c.l.b16 %v546
    %v2061 = vunpack.c.h.b16 %v546
    %v2062 = vunpack.c.l.b16 %v547
    %v2063 = vunpack.c.h.b16 %v547
    %v2064 = vunpack.c.l.b16 %v548
    %v2065 = vunpack.c.h.b16 %v548
    %v2066 = vunpack.c.l.b16 %v549
    %v2067 = vunpack.c.h.b16 %v549
    %v2068 = vunpack.c.l.b16 %v550
    %v2069 = vunpack.c.h.b16 %v550
    %v2070 = vunpack.c.l.b16 %v551
    %v2071 = vunpack.c.h.b16 %v551
    %v2072 = vunpack.c.l.b16 %v552
    %v2073 = vunpack.c.h.b16 %v552
    %v2074 = vunpack.c.l.b16 %v553
    %v2075 = vunpack.c.h.b16 %v553
    %v2076 = vunpack.c.l.b16 %v554
    %v2077 = vunpack.c.h.b16 %v554
    %v2078 = vunpack.c.l.b16 %v555
    %v2079 = vunpack.c.h.b16 %v555
    %v2080 = vunpack.c.l.b16 %v556
    %v2081 = vunpack.c.h.b16 %v556
    %v2082 = vunpack.c.l.b16 %v557
    %v2083 = vunpack.c.h.b16 %v557
    %v2084 = vunpack.c.l.b16 %v558
    %v2085 = vunpack.c.h.b16 %v558
    %v2086 = vunpack.c.l.b16 %v559
    %v2087 = vunpack.c.h.b16 %v559
    %v2088 = vunpack.c.l.b16 %v560
    %v2089 = vunpack.c.h.b16 %v560
    %v2090 = vunpack.c.l.b16 %v561
    %v2091 = vunpack.c.h.b16 %v561
    %v2092 = vunpack.c.l.b16 %v562
    %v2093 = vunpack.c.h.b16 %v562
    %v2094 = vunpack.c.l.b16 %v563
    %v2095 = vunpack.c.h.b16 %v563
    %v2096 = vunpack.c.l.b16 %v564
    %v2097 = vunpack.c.h.b16 %v564
    %v2098 = vunpack.c.l.b16 %v565
    %v2099 = vunpack.c.h.b16 %v565
    %v2100 = vunpack.c.l.b16 %v566
    %v2101 = vunpack.c.h.b16 %v566
    %v2102 = vunpack.c.l.b16 %v567
    %v2103 = vunpack.c.h.b16 %v567
    %v2104 = vunpack.c.l.b16 %v568
    %v2105 = vunpack.c.h.b16 %v568
    %v2106 = vunpack.c.l.b16 %v569
    %v2107 = vunpack.c.h.b16 %v569
    %v2108 = vunpack.c.l.b16 %v570
    %v2109 = vunpack.c.h.b16 %v570
    %v2110 = vunpack.c.l.b16 %v571
    %v2111 = vunpack.c.h.b16 %v571
    %v2112 = vunpack.c.l.b16 %v572
    %v2113 = vunpack.c.h.b16 %v572
    %v2114 = vunpack.c.l.b16 %v573
    %v2115 = vunpack.c.h.b16 %v573
    %v2116 = vunpack.c.l.b16 %v574
    %v2117 = vunpack.c.h.b16 %v574
    %v2118 = vunpack.c.l.b16 %v575
    %v2119 = vunpack.c.h.b16 %v575
    %v2120 = vunpack.c.l.b16 %v576
    %v2121 = vunpack.c.h.b16 %v576
    %v2122 = vunpack.c.l.b16 %v577
    %v2123 = vunpack.c.h.b16 %v577
    %v2124 = vunpack.c.l.b16 %v578
    %v2125 = vunpack.c.h.b16 %v578
    %v2126 = vunpack.c.l.b16 %v579
    %v2127 = vunpack.c.h.b16 %v579
    %v2128 = vunpack.c.l.b16 %v580
    %v2129 = vunpack.c.h.b16 %v580
    %v2130 = vunpack.c.l.b16 %v581
    %v2131 = vunpack.c.h.b16 %v581
    %v2132 = vunpack.c.l.b16 %v582
    %v2133 = vunpack.c.h.b16 %v582
    %v2134 = vunpack.c.l.b16 %v583
    %v2135 = vunpack.c.h.b16 %v583
    %v2136 = vunpack.c.l.b16 %v584
    %v2137 = vunpack.c.h.b16 %v584
    %v2138 = vunpack.c.l.b16 %v585
    %v2139 = vunpack.c.h.b16 %v585
    %v2140 = vunpack.c.l.b16 %v586
    %v2141 = vunpack.c.h.b16 %v586
    %v2142 = vunpack.c.l.b16 %v587
    %v2143 = vunpack.c.h.b16 %v587
    %v2144 = vunpack.c.l.b16 %v588
    %v2145 = vunpack.c.h.b16 %v588
    %v2146 = vunpack.c.l.b16 %v589
    %v2147 = vunpack.c.h.b16 %v589
    %v2148 = vunpack.c.l.b16 %v590
    %v2149 = vunpack.c.h.b16 %v590
    %v2150 = vunpack.c.l.b16 %v591
    %v2151 = vunpack.c.h.b16 %v591
    %v2152 = vunpack.c.l.b16 %v592
    %v2153 = vunpack.c.h.b16 %v592
    %v2154 = vunpack.c.l.b16 %v593
    %v2155 = vunpack.c.h.b16 %v593
    %v2156 = vunpack.c.l.b16 %v594
    %v2157 = vunpack.c.h.b16 %v594
    %v2158 = vunpack.c.l.b16 %v595
    %v2159 = vunpack.c.h.b16 %v595
    %v2160 = vunpack.c.l.b16 %v596
    %v2161 = vunpack.c.h.b16 %v596
    %v2162 = vunpack.c.l.b16 %v597
    %v2163 = vunpack.c.h.b16 %v597
    %v2164 = vunpack.c.l.b16 %v598
    %v2165 = vunpack.c.h.b16 %v598
    %v2166 = vunpack.c.l.b16 %v599
    %v2167 = vunpack.c.h.b16 %v599
    %v2168 = vunpack.c.l.b16 %v600
    %v2169 = vunpack.c.h.b16 %v600
    %v2170 = vunpack.c.l.b16 %v601
    %v2171 = vunpack.c.h.b16 %v601
    %v2172 = vunpack.c.l.b16 %v602
    %v2173 = vunpack.c.h.b16 %v602
    %v2174 = vunpack.c.l.b16 %v603
    %v2175 = vunpack.c.h.b16 %v603
    %v2176 = vunpack.c.l.b16 %v604
    %v2177 = vunpack.c.h.b16 %v604
    %v2178 = vunpack.c.l.b16 %v605
    %v2179 = vunpack.c.h.b16 %v605
    %v2180 = vunpack.c.l.b16 %v606
    %v2181 = vunpack.c.h.b16 %v606
    %v2182 = vunpack.c.l.b16 %v607
    %v2183 = vunpack.c.h.b16 %v607
    %v2184 = vunpack.c.l.b16 %v608
    %v2185 = vunpack.c.h.b16 %v608
    %v2186 = vunpack.c.l.b16 %v609
    %v2187 = vunpack.c.h.b16 %v609
    %v2188 = vunpack.c.l.b16 %v610
    %v2189 = vunpack.c.h.b16 %v610
    %v2190 = vunpack.c.l.b16 %v611
    %v2191 = vunpack.c.h.b16 %v611
    %v2192 = vunpack.c.l.b16 %v612
    %v2193 = vunpack.c.h.b16 %v612
    %v2194 = vunpack.c.l.b16 %v613
    %v2195 = vunpack.c.h.b16 %v613
    %v2196 = vunpack.c.l.b16 %v614
    %v2197 = vunpack.c.h.b16 %v614
    %v2198 = vunpack.c.l.b16 %v615
    %v2199 = vunpack.c.h.b16 %v615
    %v2200 = vunpack.c.l.b16 %v616
    %v2201 = vunpack.c.h.b16 %v616
    %v2202 = vunpack.c.l.b16 %v617
    %v2203 = vunpack.c.h.b16 %v617
    %v2204 = vunpack.c.l.b16 %v618
    %v2205 = vunpack.c.h.b16 %v618
    %v2206 = vunpack.c.l.b16 %v619
    %v2207 = vunpack.c.h.b16 %v619
    %v2208 = vunpack.c.l.b16 %v620
    %v2209 = vunpack.c.h.b16 %v620
    %v2210 = vunpack.c.l.b16 %v621
    %v2211 = vunpack.c.h.b16 %v621
    %v2212 = vunpack.c.l.b16 %v622
    %v2213 = vunpack.c.h.b16 %v622
    %v2214 = vunpack.c.l.b16 %v623
    %v2215 = vunpack.c.h.b16 %v623
    %v2216 = vunpack.c.l.b16 %v624
    %v2217 = vunpack.c.h.b16 %v624
    %v2218 = vunpack.c.l.b16 %v625
    %v2219 = vunpack.c.h.b16 %v625
    %v2220 = vunpack.c.l.b16 %v626
    %v2221 = vunpack.c.h.b16 %v626
    %v2222 = vunpack.c.l.b16 %v627
    %v2223 = vunpack.c.h.b16 %v627
    %v2224 = vunpack.c.l.b16 %v628
    %v2225 = vunpack.c.h.b16 %v628
    %v2226 = vunpack.c.l.b16 %v629
    %v2227 = vunpack.c.h.b16 %v629
    %v2228 = vunpack.c.l.b16 %v630
    %v2229 = vunpack.c.h.b16 %v630
    %v2230 = vunpack.c.l.b16 %v631
    %v2231 = vunpack.c.h.b16 %v631
    %v2232 = vunpack.c.l.b16 %v632
    %v2233 = vunpack.c.h.b16 %v632
    %v2234 = vunpack.c.l.b16 %v633
    %v2235 = vunpack.c.h.b16 %v633
    %v2236 = vunpack.c.l.b16 %v634
    %v2237 = vunpack.c.h.b16 %v634
    %v2238 = vunpack.c.l.b16 %v635
    %v2239 = vunpack.c.h.b16 %v635
    %v2240 = vunpack.c.l.b16 %v636
    %v2241 = vunpack.c.h.b16 %v636
    %v2242 = vunpack.c.l.b16 %v637
    %v2243 = vunpack.c.h.b16 %v637
    %v2244 = vunpack.c.l.b16 %v638
    %v2245 = vunpack.c.h.b16 %v638
    %v2246 = vunpack.c.l.b16 %v639
    %v2247 = vunpack.c.h.b16 %v639
    %v2248 = vunpack.c.l.b16 %v640
    %v2249 = vunpack.c.h.b16 %v640
    %v2250 = vunpack.c.l.b16 %v641
    %v2251 = vunpack.c.h.b16 %v641
    %v2252 = vunpack.c.l.b16 %v642
    %v2253 = vunpack.c.h.b16 %v642
    %v2254 = vunpack.c.l.b16 %v643
    %v2255 = vunpack.c.h.b16 %v643
    %v2256 = vunpack.c.l.b16 %v644
    %v2257 = vunpack.c.h.b16 %v644
    %v2258 = vunpack.c.l.b16 %v645
    %v2259 = vunpack.c.h.b16 %v645
    %v2260 = vunpack.c.l.b16 %v646
    %v2261 = vunpack.c.h.b16 %v646
    %v2262 = vunpack.c.l.b16 %v647
    %v2263 = vunpack.c.h.b16 %v647
    %v2264 = vunpack.c.l.b16 %v648
    %v2265 = vunpack.c.h.b16 %v648
    %v2266 = vunpack.c.l.b16 %v649
    %v2267 = vunpack.c.h.b16 %v649
    %v2268 = vunpack.c.l.b16 %v650
    %v2269 = vunpack.c.h.b16 %v650
    %v2270 = vunpack.c.l.b16 %v651
    %v2271 = vunpack.c.h.b16 %v651
    %v2272 = vunpack.c.l.b16 %v652
    %v2273 = vunpack.c.h.b16 %v652
    %v2274 = vunpack.c.l.b16 %v653
    %v2275 = vunpack.c.h.b16 %v653
    %v2276 = vunpack.c.l.b16 %v654
    %v2277 = vunpack.c.h.b16 %v654
    %v2278 = vunpack.c.l.b16 %v655
    %v2279 = vunpack.c.h.b16 %v655
    %v2280 = vunpack.c.l.b16 %v656
    %v2281 = vunpack.c.h.b16 %v656
    %v2282 = vunpack.c.l.b16 %v657
    %v2283 = vunpack.c.h.b16 %v657
    %v2284 = vunpack.c.l.b16 %v658
    %v2285 = vunpack.c.h.b16 %v658
    %v2286 = vunpack.c.l.b16 %v659
    %v2287 = vunpack.c.h.b16 %v659
    %v2288 = vunpack.c.l.b16 %v660
    %v2289 = vunpack.c.h.b16 %v660
    %v2290 = vunpack.c.l.b16 %v661
    %v2291 = vunpack.c.h.b16 %v661
    %v2292 = vunpack.c.l.b16 %v662
    %v2293 = vunpack.c.h.b16 %v662
    %v2294 = vunpack.c.l.b16 %v663
    %v2295 = vunpack.c.h.b16 %v663
    %v2296 = vunpack.c.l.b16 %v664
    %v2297 = vunpack.c.h.b16 %v664
    %v2298 = vunpack.c.l.b16 %v665
    %v2299 = vunpack.c.h.b16 %v665
    %v2300 = vunpack.c.l.b16 %v666
    %v2301 = vunpack.c.h.b16 %v666
    %v2302 = vunpack.c.l.b16 %v667
    %v2303 = vunpack.c.h.b16 %v667
    %v2304 = vunpack.c.l.b16 %v668
    %v2305 = vunpack.c.h.b16 %v668
    %v2306 = vunpack.c.l.b16 %v669
    %v2307 = vunpack.c.h.b16 %v669
    %v2308 = vunpack.c.l.b16 %v670
    %v2309 = vunpack.c.h.b16 %v670
    %v2310 = vunpack.c.l.b16 %v671
    %v2311 = vunpack.c.h.b16 %v671
    %v2312 = vunpack.c.l.b16 %v672
    %v2313 = vunpack.c.h.b16 %v672
    %v2314 = vunpack.c.l.b16 %v673
    %v2315 = vunpack.c.h.b16 %v673
    %v2316 = vunpack.c.l.b16 %v674
    %v2317 = vunpack.c.h.b16 %v674
    %v2318 = vunpack.c.l.b16 %v675
    %v2319 = vunpack.c.h.b16 %v675
    %v2320 = vunpack.c.l.b16 %v676
    %v2321 = vunpack.c.h.b16 %v676
    %v2322 = vunpack.c.l.b16 %v677
    %v2323 = vunpack.c.h.b16 %v677
    %v2324 = vunpack.c.l.b16 %v678
    %v2325 = vunpack.c.h.b16 %v678
    %v2326 = vunpack.c.l.b16 %v679
    %v2327 = vunpack.c.h.b16 %v679
    %v2328 = vunpack.c.l.b16 %v680
    %v2329 = vunpack.c.h.b16 %v680
    %v2330 = vunpack.c.l.b16 %v681
    %v2331 = vunpack.c.h.b16 %v681
    %v2332 = vunpack.c.l.b16 %v682
    %v2333 = vunpack.c.h.b16 %v682
    %v2334 = vunpack.c.l.b16 %v683
    %v2335 = vunpack.c.h.b16 %v683
    %v2336 = vunpack.c.l.b16 %v684
    %v2337 = vunpack.c.h.b16 %v684
    %v2338 = vunpack.c.l.b16 %v685
    %v2339 = vunpack.c.h.b16 %v685
    %v2340 = vunpack.c.l.b16 %v686
    %v2341 = vunpack.c.h.b16 %v686
    %v2342 = vunpack.c.l.b16 %v687
    %v2343 = vunpack.c.h.b16 %v687
    %v2344 = vunpack.c.l.b16 %v688
    %v2345 = vunpack.c.h.b16 %v688
    %v2346 = vunpack.c.l.b16 %v689
    %v2347 = vunpack.c.h.b16 %v689
    %v2348 = vunpack.c.l.b16 %v690
    %v2349 = vunpack.c.h.b16 %v690
    %v2350 = vunpack.c.l.b16 %v691
    %v2351 = vunpack.c.h.b16 %v691
    %v2352 = vunpack.c.l.b16 %v692
    %v2353 = vunpack.c.h.b16 %v692
    %v2354 = vunpack.c.l.b16 %v693
    %v2355 = vunpack.c.h.b16 %v693
    %v2356 = vunpack.c.l.b16 %v694
    %v2357 = vunpack.c.h.b16 %v694
    %v2358 = vunpack.c.l.b16 %v695
    %v2359 = vunpack.c.h.b16 %v695
    %v2360 = vunpack.c.l.b16 %v696
    %v2361 = vunpack.c.h.b16 %v696
    %v2362 = vunpack.c.l.b16 %v697
    %v2363 = vunpack.c.h.b16 %v697
    %v2364 = vunpack.c.l.b16 %v698
    %v2365 = vunpack.c.h.b16 %v698
    %v2366 = vunpack.c.l.b16 %v699
    %v2367 = vunpack.c.h.b16 %v699
    %v2368 = vunpack.c.l.b16 %v700
    %v2369 = vunpack.c.h.b16 %v700
    %v2370 = vunpack.c.l.b16 %v701
    %v2371 = vunpack.c.h.b16 %v701
    %v2372 = vunpack.c.l.b16 %v702
    %v2373 = vunpack.c.h.b16 %v702
    %v2374 = vunpack.c.l.b16 %v703
    %v2375 = vunpack.c.h.b16 %v703
    %v2376 = vunpack.c.l.b16 %v704
    %v2377 = vunpack.c.h.b16 %v704
    %v2378 = vunpack.c.l.b16 %v705
    %v2379 = vunpack.c.h.b16 %v705
    %v2380 = vunpack.c.l.b16 %v706
    %v2381 = vunpack.c.h.b16 %v706
    %v2382 = vunpack.c.l.b16 %v707
    %v2383 = vunpack.c.h.b16 %v707
    %v2384 = vunpack.c.l.b16 %v708
    %v2385 = vunpack.c.h.b16 %v708
    %v2386 = vunpack.c.l.b16 %v709
    %v2387 = vunpack.c.h.b16 %v709
    %v2388 = vunpack.c.l.b16 %v710
    %v2389 = vunpack.c.h.b16 %v710
    %v2390 = vunpack.c.l.b16 %v711
    %v2391 = vunpack.c.h.b16 %v711
    %v2392 = vunpack.c.l.b16 %v712
    %v2393 = vunpack.c.h.b16 %v712
    %v2394 = vunpack.c.l.b16 %v713
    %v2395 = vunpack.c.h.b16 %v713
    %v2396 = vunpack.c.l.b16 %v714
    %v2397 = vunpack.c.h.b16 %v714
    %v2398 = vunpack.c.l.b16 %v715
    %v2399 = vunpack.c.h.b16 %v715
    %v2400 = vunpack.c.l.b16 %v716
    %v2401 = vunpack.c.h.b16 %v716
    %v2402 = vunpack.c.l.b16 %v717
    %v2403 = vunpack.c.h.b16 %v717
    %v2404 = vunpack.c.l.b16 %v718
    %v2405 = vunpack.c.h.b16 %v718
    %v2406 = vunpack.c.l.b16 %v719
    %v2407 = vunpack.c.h.b16 %v719
    %v2408 = vunpack.c.l.b16 %v720
    %v2409 = vunpack.c.h.b16 %v720
    %v2410 = vunpack.c.l.b16 %v721
    %v2411 = vunpack.c.h.b16 %v721
    %v2412 = vunpack.c.l.b16 %v722
    %v2413 = vunpack.c.h.b16 %v722
    %v2414 = vunpack.c.l.b16 %v723
    %v2415 = vunpack.c.h.b16 %v723
    %v2416 = vunpack.c.l.b16 %v724
    %v2417 = vunpack.c.h.b16 %v724
    %v2418 = vunpack.c.l.b16 %v725
    %v2419 = vunpack.c.h.b16 %v725
    %v2420 = vunpack.c.l.b16 %v726
    %v2421 = vunpack.c.h.b16 %v726
    %v2422 = vunpack.c.l.b16 %v727
    %v2423 = vunpack.c.h.b16 %v727
    %v2424 = vunpack.c.l.b16 %v728
    %v2425 = vunpack.c.h.b16 %v728
    %v2426 = vunpack.c.l.b16 %v729
    %v2427 = vunpack.c.h.b16 %v729
    %v2428 = vunpack.c.l.b16 %v730
    %v2429 = vunpack.c.h.b16 %v730
    %v2430 = vunpack.c.l.b16 %v731
    %v2431 = vunpack.c.h.b16 %v731
    %v2432 = vunpack.c.l.b16 %v732
    %v2433 = vunpack.c.h.b16 %v732
    %v2434 = vunpack.c.l.b16 %v733
    %v2435 = vunpack.c.h.b16 %v733
    %v2436 = vunpack.c.l.b16 %v734
    %v2437 = vunpack.c.h.b16 %v734
    %v2438 = vunpack.c.l.b16 %v735
    %v2439 = vunpack.c.h.b16 %v735
    %v2440 = vunpack.c.l.b16 %v736
    %v2441 = vunpack.c.h.b16 %v736
    %v2442 = vunpack.c.l.b16 %v737
    %v2443 = vunpack.c.h.b16 %v737
    %v2444 = vunpack.c.l.b16 %v738
    %v2445 = vunpack.c.h.b16 %v738
    %v2446 = vunpack.c.l.b16 %v739
    %v2447 = vunpack.c.h.b16 %v739
    %v2448 = vunpack.c.l.b16 %v740
    %v2449 = vunpack.c.h.b16 %v740
    %v2450 = vunpack.c.l.b16 %v741
    %v2451 = vunpack.c.h.b16 %v741
    %v2452 = vunpack.c.l.b16 %v742
    %v2453 = vunpack.c.h.b16 %v742
    %v2454 = vunpack.c.l.b16 %v743
    %v2455 = vunpack.c.h.b16 %v743
    %v2456 = vunpack.c.l.b16 %v744
    %v2457 = vunpack.c.h.b16 %v744
    %v2458 = vunpack.c.l.b16 %v745
    %v2459 = vunpack.c.h.b16 %v745
    %v2460 = vunpack.c.l.b16 %v746
    %v2461 = vunpack.c.h.b16 %v746
    %v2462 = vunpack.c.l.b16 %v747
    %v2463 = vunpack.c.h.b16 %v747
    %v2464 = vunpack.c.l.b16 %v748
    %v2465 = vunpack.c.h.b16 %v748
    %v2466 = vunpack.c.l.b16 %v749
    %v2467 = vunpack.c.h.b16 %v749
    %v2468 = vunpack.c.l.b16 %v750
    %v2469 = vunpack.c.h.b16 %v750
    %v2470 = vunpack.c.l.b16 %v751
    %v2471 = vunpack.c.h.b16 %v751
    %v2472 = vunpack.c.l.b16 %v752
    %v2473 = vunpack.c.h.b16 %v752
    %v2474 = vunpack.c.l.b16 %v753
    %v2475 = vunpack.c.h.b16 %v753
    %v2476 = vunpack.c.l.b16 %v754
    %v2477 = vunpack.c.h.b16 %v754
    %v2478 = vunpack.c.l.b16 %v755
    %v2479 = vunpack.c.h.b16 %v755
    %v2480 = vunpack.c.l.b16 %v756
    %v2481 = vunpack.c.h.b16 %v756
    %v2482 = vunpack.c.l.b16 %v757
    %v2483 = vunpack.c.h.b16 %v757
    %v2484 = vunpack.c.l.b16 %v758
    %v2485 = vunpack.c.h.b16 %v758
    %v2486 = vunpack.c.l.b16 %v759
    %v2487 = vunpack.c.h.b16 %v759
    %v2488 = vunpack.c.l.b16 %v760
    %v2489 = vunpack.c.h.b16 %v760
    %v2490 = vunpack.c.l.b16 %v761
    %v2491 = vunpack.c.h.b16 %v761
    %v2492 = vunpack.c.l.b16 %v762
    %v2493 = vunpack.c.h.b16 %v762
    %v2494 = vunpack.c.l.b16 %v763
    %v2495 = vunpack.c.h.b16 %v763
    %v2496 = vunpack.c.l.b16 %v764
    %v2497 = vunpack.c.h.b16 %v764
    %v2498 = vunpack.c.l.b16 %v765
    %v2499 = vunpack.c.h.b16 %v765
    %v2500 = vunpack.c.l.b16 %v766
    %v2501 = vunpack.c.h.b16 %v766
    %v2502 = vunpack.c.l.b16 %v767
    %v2503 = vunpack.c.h.b16 %v767
    %v2504 = vunpack.c.l.b16 %v768
    %v2505 = vunpack.c.h.b16 %v768
    %v2506 = vunpack.c.l.b16 %v769
    %v2507 = vunpack.c.h.b16 %v769
    %v2508 = vunpack.c.l.b16 %v770
    %v2509 = vunpack.c.h.b16 %v770
    %v2510 = vunpack.c.l.b16 %v771
    %v2511 = vunpack.c.h.b16 %v771
    %v2512 = vunpack.c.l.b16 %v772
    %v2513 = vunpack.c.h.b16 %v772
    %v2514 = vunpack.c.l.b16 %v773
    %v2515 = vunpack.c.h.b16 %v773
    %v2516 = vunpack.c.l.b16 %v774
    %v2517 = vunpack.c.h.b16 %v774
    %v2518 = vunpack.c.l.b16 %v775
    %v2519 = vunpack.c.h.b16 %v775
    %v2520 = vunpack.c.l.b16 %v776
    %v2521 = vunpack.c.h.b16 %v776
    %v2522 = vunpack.c.l.b16 %v777
    %v2523 = vunpack.c.h.b16 %v777
    %v2524 = vunpack.c.l.b16 %v778
    %v2525 = vunpack.c.h.b16 %v778
    %v2526 = vunpack.c.l.b16 %v779
    %v2527 = vunpack.c.h.b16 %v779
    %v2528 = vunpack.c.l.b16 %v780
    %v2529 = vunpack.c.h.b16 %v780
    %v2530 = vunpack.c.l.b16 %v781
    %v2531 = vunpack.c.h.b16 %v781
    %v2532 = vunpack.c.l.b16 %v782
    %v2533 = vunpack.c.h.b16 %v782
    %v2534 = vunpack.c.l.b16 %v783
    %v2535 = vunpack.c.h.b16 %v783
    %v2536 = vunpack.c.l.b16 %v784
    %v2537 = vunpack.c.h.b16 %v784
    %v2538 = vunpack.c.l.b16 %v785
    %v2539 = vunpack.c.h.b16 %v785
    %v2540 = vunpack.c.l.b16 %v786
    %v2541 = vunpack.c.h.b16 %v786
    %v2542 = vunpack.c.l.b16 %v787
    %v2543 = vunpack.c.h.b16 %v787
    %v2544 = vunpack.c.l.b16 %v788
    %v2545 = vunpack.c.h.b16 %v788
    %v2546 = vunpack.c.l.b16 %v789
    %v2547 = vunpack.c.h.b16 %v789
    %v2548 = vunpack.c.l.b16 %v790
    %v2549 = vunpack.c.h.b16 %v790
    %v2550 = vunpack.c.l.b16 %v791
    %v2551 = vunpack.c.h.b16 %v791
    %v2552 = vunpack.c.l.b16 %v792
    %v2553 = vunpack.c.h.b16 %v792
    %v2554 = vunpack.c.l.b16 %v793
    %v2555 = vunpack.c.h.b16 %v793
    %v2556 = vunpack.c.l.b16 %v794
    %v2557 = vunpack.c.h.b16 %v794
    %v2558 = vunpack.c.l.b16 %v795
    %v2559 = vunpack.c.h.b16 %v795
    %v2560 = vunpack.c.l.b16 %v796
    %v2561 = vunpack.c.h.b16 %v796
    %v2562 = vunpack.c.l.b16 %v797
    %v2563 = vunpack.c.h.b16 %v797
    %v2564 = vunpack.c.l.b16 %v798
    %v2565 = vunpack.c.h.b16 %v798
    %v2566 = vunpack.c.l.b16 %v799
    %v2567 = vunpack.c.h.b16 %v799
    %v2568 = vunpack.c.l.b16 %v800
    %v2569 = vunpack.c.h.b16 %v800
    %v2570 = vunpack.c.l.b16 %v801
    %v2571 = vunpack.c.h.b16 %v801
    %v2572 = vunpack.c.l.b16 %v802
    %v2573 = vunpack.c.h.b16 %v802
    %v2574 = vunpack.c.l.b16 %v803
    %v2575 = vunpack.c.h.b16 %v803
    %v2576 = vunpack.c.l.b16 %v804
    %v2577 = vunpack.c.h.b16 %v804
    %v2578 = vunpack.c.l.b16 %v805
    %v2579 = vunpack.c.h.b16 %v805
    %v2580 = vpack.c.b16 %v1416, %v1412
    %v2581 = vpack.c.b16 %v1417, %v1413
    %v2582 = vpack.c.b16 %v1418, %v1414
    %v2583 = vpack.c.b16 %v1419, %v1415
    %v2584 = vpack.c.b16 %v1424, %v1420
    %v2585 = vpack.c.b16 %v1425, %v1421
    %v2586 = vpack.c.b16 %v1426, %v1422
    %v2587 = vpack.c.b16 %v1427, %v1423
    %v2588 = vpack.c.b16 %v1432, %v1428
    %v2589 = vpack.c.b16 %v1433, %v1429
    %v2590 = vpack.c.b16 %v1434, %v1430
    %v2591 = vpack.c.b16 %v1435, %v1431
    %v2592 = vpack.c.b16 %v1440, %v1436
    %v2593 = vpack.c.b16 %v1441, %v1437
    %v2594 = vpack.c.b16 %v1442, %v1438
    %v2595 = vpack.c.b16 %v1443, %v1439
    %v2596 = vpack.c.b16 %v1448, %v1444
    %v2597 = vpack.c.b16 %v1449, %v1445
    %v2598 = vpack.c.b16 %v1450, %v1446
    %v2599 = vpack.c.b16 %v1451, %v1447
    %v2600 = vpack.c.b16 %v1456, %v1452
    %v2601 = vpack.c.b16 %v1457, %v1453
    %v2602 = vpack.c.b16 %v1458, %v1454
    %v2603 = vpack.c.b16 %v1459, %v1455
    %v2604 = vpack.c.b16 %v1464, %v1460
    %v2605 = vpack.c.b16 %v1465, %v1461
    %v2606 = vpack.c.b16 %v1466, %v1462
    %v2607 = vpack.c.b16 %v1467, %v1463
    %v2608 = vpack.c.b16 %v1472, %v1468
    %v2609 = vpack.c.b16 %v1473, %v1469
    %v2610 = vpack.c.b16 %v1474, %v1470
    %v2611 = vpack.c.b16 %v1475, %v1471
    %v2612 = vpack.c.b16 %v1480, %v1476
    %v2613 = vpack.c.b16 %v1481, %v1477
    %v2614 = vpack.c.b16 %v1482, %v1478
    %v2615 = vpack.c.b16 %v1483, %v1479
    %v2616 = vpack.c.b16 %v1488, %v1484
    %v2617 = vpack.c.b16 %v1489, %v1485
    %v2618 = vpack.c.b16 %v1490, %v1486
    %v2619 = vpack.c.b16 %v1491, %v1487
    %v2620 = vpack.c.b16 %v1496, %v1492
    %v2621 = vpack.c.b16 %v1497, %v1493
    %v2622 = vpack.c.b16 %v1498, %v1494
    %v2623 = vpack.c.b16 %v1499, %v1495
    %v2624 = vpack.c.b16 %v1504, %v1500
    %v2625 = vpack.c.b16 %v1505, %v1501
    %v2626 = vpack.c.b16 %v1506, %v1502
    %v2627 = vpack.c.b16 %v1507, %v1503
    %v2628 = vpack.c.b16 %v1512, %v1508
    %v2629 = vpack.c.b16 %v1513, %v1509
    %v2630 = vpack.c.b16 %v1514, %v1510
    %v2631 = vpack.c.b16 %v1515, %v1511
    %v2632 = vpack.c.b16 %v1520, %v1516
    %v2633 = vpack.c.b16 %v1521, %v1517
    %v2634 = vpack.c.b16 %v1522, %v1518
    %v2635 = vpack.c.b16 %v1523, %v1519
    %v2636 = vpack.c.b16 %v1528, %v1524
    %v2637 = vpack.c.b16 %v1529, %v1525
    %v2638 = vpack.c.b16 %v1530, %v1526
    %v2639 = vpack.c.b16 %v1531, %v1527
    %v2640 = vpack.c.b16 %v1536, %v1532
    %v2641 = vpack.c.b16 %v1537, %v1533
    %v2642 = vpack.c.b16 %v1538, %v1534
    %v2643 = vpack.c.b16 %v1539, %v1535
    %v2644 = vpack.c.b16 %v1544, %v1540
    %v2645 = vpack.c.b16 %v1545, %v1541
    %v2646 = vpack.c.b16 %v1546, %v1542
    %v2647 = vpack.c.b16 %v1547, %v1543
    %v2648 = vpack.c.b16 %v1552, %v1548
    %v2649 = vpack.c.b16 %v1553, %v1549
    %v2650 = vpack.c.b16 %v1554, %v1550
    %v2651 = vpack.c.b16 %v1555, %v1551
    %v2652 = vpack.c.b16 %v1560, %v1556
    %v2653 = vpack.c.b16 %v1561, %v1557
    %v2654 = vpack.c.b16 %v1562, %v1558
    %v2655 = vpack.c.b16 %v1563, %v1559
    %v2656 = vpack.c.b16 %v1568, %v1564
    %v2657 = vpack.c.b16 %v1569, %v1565
    %v2658 = vpack.c.b16 %v1570, %v1566
    %v2659 = vpack.c.b16 %v1571, %v1567
    %v2660 = vpack.c.b16 %v1576, %v1572
    %v2661 = vpack.c.b16 %v1577, %v1573
    %v2662 = vpack.c.b16 %v1578, %v1574
    %v2663 = vpack.c.b16 %v1579, %v1575
    %v2664 = vpack.c.b16 %v1584, %v1580
    %v2665 = vpack.c.b16 %v1585, %v1581
    %v2666 = vpack.c.b16 %v1586, %v1582
    %v2667 = vpack.c.b16 %v1587, %v1583
    %v2668 = vpack.c.b16 %v1592, %v1588
    %v2669 = vpack.c.b16 %v1593, %v1589
    %v2670 = vpack.c.b16 %v1594, %v1590
    %v2671 = vpack.c.b16 %v1595, %v1591
    %v2672 = vpack.c.b16 %v1600, %v1596
    %v2673 = vpack.c.b16 %v1601, %v1597
    %v2674 = vpack.c.b16 %v1602, %v1598
    %v2675 = vpack.c.b16 %v1603, %v1599
    %v2676 = vpack.c.b16 %v1608, %v1604
    %v2677 = vpack.c.b16 %v1609, %v1605
    %v2678 = vpack.c.b16 %v1610, %v1606
    %v2679 = vpack.c.b16 %v1611, %v1607
    %v2680 = vpack.c.b16 %v1616, %v1612
    %v2681 = vpack.c.b16 %v1617, %v1613
    %v2682 = vpack.c.b16 %v1618, %v1614
    %v2683 = vpack.c.b16 %v1619, %v1615
    %v2684 = vpack.c.b16 %v1624, %v1620
    %v2685 = vpack.c.b16 %v1625, %v1621
    %v2686 = vpack.c.b16 %v1626, %v1622
    %v2687 = vpack.c.b16 %v1627, %v1623
    %v2688 = vpack.c.b16 %v1632, %v1628
    %v2689 = vpack.c.b16 %v1633, %v1629
    %v2690 = vpack.c.b16 %v1634, %v1630
    %v2691 = vpack.c.b16 %v1635, %v1631
    %v2692 = vpack.c.b16 %v1640, %v1636
    %v2693 = vpack.c.b16 %v1641, %v1637
    %v2694 = vpack.c.b16 %v1642, %v1638
    %v2695 = vpack.c.b16 %v1643, %v1639
    %v2696 = vpack.c.b16 %v1648, %v1644
    %v2697 = vpack.c.b16 %v1649, %v1645
    %v2698 = vpack.c.b16 %v1650, %v1646
    %v2699 = vpack.c.b16 %v1651, %v1647
    %v2700 = vpack.c.b16 %v1656, %v1652
    %v2701 = vpack.c.b16 %v1657, %v1653
    %v2702 = vpack.c.b16 %v1658, %v1654
    %v2703 = vpack.c.b16 %v1659, %v1655
    %v2704 = vpack.c.b16 %v1664, %v1660
    %v2705 = vpack.c.b16 %v1665, %v1661
    %v2706 = vpack.c.b16 %v1666, %v1662
    %v2707 = vpack.c.b16 %v1667, %v1663
    %v2708 = vpack.c.b16 %v1672, %v1668
    %v2709 = vpack.c.b16 %v1673, %v1669
    %v2710 = vpack.c.b16 %v1674, %v1670
    %v2711 = vpack.c.b16 %v1675, %v1671
    %v2712 = vpack.c.b16 %v1680, %v1676
    %v2713 = vpack.c.b16 %v1681, %v1677
    %v2714 = vpack.c.b16 %v1682, %v1678
    %v2715 = vpack.c.b16 %v1683, %v1679
    %v2716 = vpack.c.b16 %v1688, %v1684
    %v2717 = vpack.c.b16 %v1689, %v1685
    %v2718 = vpack.c.b16 %v1690, %v1686
    %v2719 = vpack.c.b16 %v1691, %v1687
    %v2720 = vpack.c.b16 %v1696, %v1692
    %v2721 = vpack.c.b16 %v1697, %v1693
    %v2722 = vpack.c.b16 %v1698, %v1694
    %v2723 = vpack.c.b16 %v1699, %v1695
    %v2724 = vpack.c.b16 %v1704, %v1700
    %v2725 = vpack.c.b16 %v1705, %v1701
    %v2726 = vpack.c.b16 %v1706, %v1702
    %v2727 = vpack.c.b16 %v1707, %v1703
    %v2728 = vpack.c.b16 %v1712, %v1708
    %v2729 = vpack.c.b16 %v1713, %v1709
    %v2730 = vpack.c.b16 %v1714, %v1710
    %v2731 = vpack.c.b16 %v1715, %v1711
    %v2732 = vpack.c.b16 %v1720, %v1716
    %v2733 = vpack.c.b16 %v1721, %v1717
    %v2734 = vpack.c.b16 %v1722, %v1718
    %v2735 = vpack.c.b16 %v1723, %v1719
    %v2736 = vpack.c.b16 %v1728, %v1724
    %v2737 = vpack.c.b16 %v1729, %v1725
    %v2738 = vpack.c.b16 %v1730, %v1726
    %v2739 = vpack.c.b16 %v1731, %v1727
    %v2740 = vpack.c.b16 %v1736, %v1732
    %v2741 = vpack.c.b16 %v1737, %v1733
    %v2742 = vpack.c.b16 %v1738, %v1734
    %v2743 = vpack.c.b16 %v1739, %v1735
    %v2744 = vpack.c.b16 %v1744, %v1740
    %v2745 = vpack.c.b16 %v1745, %v1741
    %v2746 = vpack.c.b16 %v1746, %v1742
    %v2747 = vpack.c.b16 %v1747, %v1743
    %v2748 = vpack.c.b16 %v1752, %v1748
    %v2749 = vpack.c.b16 %v1753, %v1749
    %v2750 = vpack.c.b16 %v1754, %v1750
    %v2751 = vpack.c.b16 %v1755, %v1751
    %v2752 = vpack.c.b16 %v1760, %v1756
    %v2753 = vpack.c.b16 %v1761, %v1757
    %v2754 = vpack.c.b16 %v1762, %v1758
    %v2755 = vpack.c.b16 %v1763, %v1759
    %v2756 = vpack.c.b16 %v1768, %v1764
    %v2757 = vpack.c.b16 %v1769, %v1765
    %v2758 = vpack.c.b16 %v1770, %v1766
    %v2759 = vpack.c.b16 %v1771, %v1767
    %v2760 = vpack.c.b16 %v1776, %v1772
    %v2761 = vpack.c.b16 %v1777, %v1773
    %v2762 = vpack.c.b16 %v1778, %v1774
    %v2763 = vpack.c.b16 %v1779, %v1775
    %v2764 = vpack.c.b16 %v1784, %v1780
    %v2765 = vpack.c.b16 %v1785, %v1781
    %v2766 = vpack.c.b16 %v1786, %v1782
    %v2767 = vpack.c.b16 %v1787, %v1783
    %v2768 = vpack.c.b16 %v1792, %v1788
    %v2769 = vpack.c.b16 %v1793, %v1789
    %v2770 = vpack.c.b16 %v1794, %v1790
    %v2771 = vpack.c.b16 %v1795, %v1791
    %v2772 = vpack.c.b16 %v1800, %v1796
    %v2773 = vpack.c.b16 %v1801, %v1797
    %v2774 = vpack.c.b16 %v1802, %v1798
    %v2775 = vpack.c.b16 %v1803, %v1799
    %v2776 = vpack.c.b16 %v1808, %v1804
    %v2777 = vpack.c.b16 %v1809, %v1805
    %v2778 = vpack.c.b16 %v1810, %v1806
    %v2779 = vpack.c.b16 %v1811, %v1807
    %v2780 = vpack.c.b16 %v1816, %v1812
    %v2781 = vpack.c.b16 %v1817, %v1813
    %v2782 = vpack.c.b16 %v1818, %v1814
    %v2783 = vpack.c.b16 %v1819, %v1815
    %v2784 = vpack.c.b16 %v1824, %v1820
    %v2785 = vpack.c.b16 %v1825, %v1821
    %v2786 = vpack.c.b16 %v1826, %v1822
    %v2787 = vpack.c.b16 %v1827, %v1823
    %v2788 = vpack.c.b16 %v1832, %v1828
    %v2789 = vpack.c.b16 %v1833, %v1829
    %v2790 = vpack.c.b16 %v1834, %v1830
    %v2791 = vpack.c.b16 %v1835, %v1831
    %v2792 = vpack.c.b16 %v1840, %v1836
    %v2793 = vpack.c.b16 %v1841, %v1837
    %v2794 = vpack.c.b16 %v1842, %v1838
    %v2795 = vpack.c.b16 %v1843, %v1839
    %v2796 = vpack.c.b16 %v1848, %v1844
    %v2797 = vpack.c.b16 %v1849, %v1845
    %v2798 = vpack.c.b16 %v1850, %v1846
    %v2799 = vpack.c.b16 %v1851, %v1847
    %v2800 = vpack.c.b16 %v1856, %v1852
    %v2801 = vpack.c.b16 %v1857, %v1853
    %v2802 = vpack.c.b16 %v1858, %v1854
    %v2803 = vpack.c.b16 %v1859, %v1855
    %v2804 = vpack.c.b16 %v1864, %v1860
    %v2805 = vpack.c.b16 %v1865, %v1861
    %v2806 = vpack.c.b16 %v1866, %v1862
    %v2807 = vpack.c.b16 %v1867, %v1863
    %v2808 = vpack.c.b16 %v1872, %v1868
    %v2809 = vpack.c.b16 %v1873, %v1869
    %v2810 = vpack.c.b16 %v1874, %v1870
    %v2811 = vpack.c.b16 %v1875, %v1871
    %v2812 = vpack.c.b16 %v1880, %v1876
    %v2813 = vpack.c.b16 %v1881, %v1877
    %v2814 = vpack.c.b16 %v1882, %v1878
    %v2815 = vpack.c.b16 %v1883, %v1879
    %v2816 = vpack.c.b16 %v1888, %v1884
    %v2817 = vpack.c.b16 %v1889, %v1885
    %v2818 = vpack.c.b16 %v1890, %v1886
    %v2819 = vpack.c.b16 %v1891, %v1887
    %v2820 = vpack.c.b16 %v1896, %v1892
    %v2821 = vpack.c.b16 %v1897, %v1893
    %v2822 = vpack.c.b16 %v1898, %v1894
    %v2823 = vpack.c.b16 %v1899, %v1895
    %v2824 = vpack.c.b16 %v1904, %v1900
    %v2825 = vpack.c.b16 %v1905, %v1901
    %v2826 = vpack.c.b16 %v1906, %v1902
    %v2827 = vpack.c.b16 %v1907, %v1903
    %v2828 = vpack.c.b16 %v1912, %v1908
    %v2829 = vpack.c.b16 %v1913, %v1909
    %v2830 = vpack.c.b16 %v1914, %v1910
    %v2831 = vpack.c.b16 %v1915, %v1911
    %v2832 = vpack.c.b16 %v1920, %v1916
    %v2833 = vpack.c.b16 %v1921, %v1917
    %v2834 = vpack.c.b16 %v1922, %v1918
    %v2835 = vpack.c.b16 %v1923, %v1919
    %v2836 = vpack.c.b16 %v1928, %v1924
    %v2837 = vpack.c.b16 %v1929, %v1925
    %v2838 = vpack.c.b16 %v1930, %v1926
    %v2839 = vpack.c.b16 %v1931, %v1927
    %v2840 = vpack.c.b16 %v1936, %v1932
    %v2841 = vpack.c.b16 %v1937, %v1933
    %v2842 = vpack.c.b16 %v1938, %v1934
    %v2843 = vpack.c.b16 %v1939, %v1935
    %v2844 = vpack.c.b16 %v1944, %v1940
    %v2845 = vpack.c.b16 %v1945, %v1941
    %v2846 = vpack.c.b16 %v1946, %v1942
    %v2847 = vpack.c.b16 %v1947, %v1943
    %v2848 = vpack.c.b16 %v1952, %v1948
    %v2849 = vpack.c.b16 %v1953, %v1949
    %v2850 = vpack.c.b16 %v1954, %v1950
    %v2851 = vpack.c.b16 %v1955, %v1951
    %v2852 = vpack.c.b16 %v1960, %v1956
    %v2853 = vpack.c.b16 %v1961, %v1957
    %v2854 = vpack.c.b16 %v1962, %v1958
    %v2855 = vpack.c.b16 %v1963, %v1959
    %v2856 = vpack.c.b16 %v1968, %v1964
    %v2857 = vpack.c.b16 %v1969, %v1965
    %v2858 = vpack.c.b16 %v1970, %v1966
    %v2859 = vpack.c.b16 %v1971, %v1967
    %v2860 = vpack.c.b16 %v1976, %v1972
    %v2861 = vpack.c.b16 %v1977, %v1973
    %v2862 = vpack.c.b16 %v1978, %v1974
    %v2863 = vpack.c.b16 %v1979, %v1975
    %v2864 = vpack.c.b16 %v1984, %v1980
    %v2865 = vpack.c.b16 %v1985, %v1981
    %v2866 = vpack.c.b16 %v1986, %v1982
    %v2867 = vpack.c.b16 %v1987, %v1983
    %v2868 = vpack.c.b16 %v1992, %v1988
    %v2869 = vpack.c.b16 %v1993, %v1989
    %v2870 = vpack.c.b16 %v1994, %v1990
    %v2871 = vpack.c.b16 %v1995, %v1991
    %v2872 = vpack.c.b16 %v2000, %v1996
    %v2873 = vpack.c.b16 %v2001, %v1997
    %v2874 = vpack.c.b16 %v2002, %v1998
    %v2875 = vpack.c.b16 %v2003, %v1999
    %v2876 = vpack.c.b16 %v2008, %v2004
    %v2877 = vpack.c.b16 %v2009, %v2005
    %v2878 = vpack.c.b16 %v2010, %v2006
    %v2879 = vpack.c.b16 %v2011, %v2007
    %v2880 = vpack.c.b16 %v2016, %v2012
    %v2881 = vpack.c.b16 %v2017, %v2013
    %v2882 = vpack.c.b16 %v2018, %v2014
    %v2883 = vpack.c.b16 %v2019, %v2015
    %v2884 = vpack.c.b16 %v2024, %v2020
    %v2885 = vpack.c.b16 %v2025, %v2021
    %v2886 = vpack.c.b16 %v2026, %v2022
    %v2887 = vpack.c.b16 %v2027, %v2023
    %v2888 = vpack.c.b16 %v2032, %v2028
    %v2889 = vpack.c.b16 %v2033, %v2029
    %v2890 = vpack.c.b16 %v2034, %v2030
    %v2891 = vpack.c.b16 %v2035, %v2031
    %v2892 = vpack.c.b16 %v2040, %v2036
    %v2893 = vpack.c.b16 %v2041, %v2037
    %v2894 = vpack.c.b16 %v2042, %v2038
    %v2895 = vpack.c.b16 %v2043, %v2039
    %v2896 = vpack.c.b16 %v2048, %v2044
    %v2897 = vpack.c.b16 %v2049, %v2045
    %v2898 = vpack.c.b16 %v2050, %v2046
    %v2899 = vpack.c.b16 %v2051, %v2047
    %v2900 = vpack.c.b16 %v2056, %v2052
    %v2901 = vpack.c.b16 %v2057, %v2053
    %v2902 = vpack.c.b16 %v2058, %v2054
    %v2903 = vpack.c.b16 %v2059, %v2055
    %v2904 = vpack.c.b16 %v2064, %v2060
    %v2905 = vpack.c.b16 %v2065, %v2061
    %v2906 = vpack.c.b16 %v2066, %v2062
    %v2907 = vpack.c.b16 %v2067, %v2063
    %v2908 = vpack.c.b16 %v2072, %v2068
    %v2909 = vpack.c.b16 %v2073, %v2069
    %v2910 = vpack.c.b16 %v2074, %v2070
    %v2911 = vpack.c.b16 %v2075, %v2071
    %v2912 = vpack.c.b16 %v2080, %v2076
    %v2913 = vpack.c.b16 %v2081, %v2077
    %v2914 = vpack.c.b16 %v2082, %v2078
    %v2915 = vpack.c.b16 %v2083, %v2079
    %v2916 = vpack.c.b16 %v2088, %v2084
    %v2917 = vpack.c.b16 %v2089, %v2085
    %v2918 = vpack.c.b16 %v2090, %v2086
    %v2919 = vpack.c.b16 %v2091, %v2087
    %v2920 = vpack.c.b16 %v2096, %v2092
    %v2921 = vpack.c.b16 %v2097, %v2093
    %v2922 = vpack.c.b16 %v2098, %v2094
    %v2923 = vpack.c.b16 %v2099, %v2095
    %v2924 = vpack.c.b16 %v2104, %v2100
    %v2925 = vpack.c.b16 %v2105, %v2101
    %v2926 = vpack.c.b16 %v2106, %v2102
    %v2927 = vpack.c.b16 %v2107, %v2103
    %v2928 = vpack.c.b16 %v2112, %v2108
    %v2929 = vpack.c.b16 %v2113, %v2109
    %v2930 = vpack.c.b16 %v2114, %v2110
    %v2931 = vpack.c.b16 %v2115, %v2111
    %v2932 = vpack.c.b16 %v2120, %v2116
    %v2933 = vpack.c.b16 %v2121, %v2117
    %v2934 = vpack.c.b16 %v2122, %v2118
    %v2935 = vpack.c.b16 %v2123, %v2119
    %v2936 = vpack.c.b16 %v2128, %v2124
    %v2937 = vpack.c.b16 %v2129, %v2125
    %v2938 = vpack.c.b16 %v2130, %v2126
    %v2939 = vpack.c.b16 %v2131, %v2127
    %v2940 = vpack.c.b16 %v2136, %v2132
    %v2941 = vpack.c.b16 %v2137, %v2133
    %v2942 = vpack.c.b16 %v2138, %v2134
    %v2943 = vpack.c.b16 %v2139, %v2135
    %v2944 = vpack.c.b16 %v2144, %v2140
    %v2945 = vpack.c.b16 %v2145, %v2141
    %v2946 = vpack.c.b16 %v2146, %v2142
    %v2947 = vpack.c.b16 %v2147, %v2143
    %v2948 = vpack.c.b16 %v2152, %v2148
    %v2949 = vpack.c.b16 %v2153, %v2149
    %v2950 = vpack.c.b16 %v2154, %v2150
    %v2951 = vpack.c.b16 %v2155, %v2151
    %v2952 = vpack.c.b16 %v2160, %v2156
    %v2953 = vpack.c.b16 %v2161, %v2157
    %v2954 = vpack.c.b16 %v2162, %v2158
    %v2955 = vpack.c.b16 %v2163, %v2159
    %v2956 = vpack.c.b16 %v2168, %v2164
    %v2957 = vpack.c.b16 %v2169, %v2165
    %v2958 = vpack.c.b16 %v2170, %v2166
    %v2959 = vpack.c.b16 %v2171, %v2167
    %v2960 = vpack.c.b16 %v2176, %v2172
    %v2961 = vpack.c.b16 %v2177, %v2173
    %v2962 = vpack.c.b16 %v2178, %v2174
    %v2963 = vpack.c.b16 %v2179, %v2175
    %v2964 = vpack.c.b16 %v2184, %v2180
    %v2965 = vpack.c.b16 %v2185, %v2181
    %v2966 = vpack.c.b16 %v2186, %v2182
    %v2967 = vpack.c.b16 %v2187, %v2183
    %v2968 = vpack.c.b16 %v2192, %v2188
    %v2969 = vpack.c.b16 %v2193, %v2189
    %v2970 = vpack.c.b16 %v2194, %v2190
    %v2971 = vpack.c.b16 %v2195, %v2191
    %v2972 = vpack.c.b16 %v2200, %v2196
    %v2973 = vpack.c.b16 %v2201, %v2197
    %v2974 = vpack.c.b16 %v2202, %v2198
    %v2975 = vpack.c.b16 %v2203, %v2199
    %v2976 = vpack.c.b16 %v2208, %v2204
    %v2977 = vpack.c.b16 %v2209, %v2205
    %v2978 = vpack.c.b16 %v2210, %v2206
    %v2979 = vpack.c.b16 %v2211, %v2207
    %v2980 = vpack.c.b16 %v2216, %v2212
    %v2981 = vpack.c.b16 %v2217, %v2213
    %v2982 = vpack.c.b16 %v2218, %v2214
    %v2983 = vpack.c.b16 %v2219, %v2215
    %v2984 = vpack.c.b16 %v2224, %v2220
    %v2985 = vpack.c.b16 %v2225, %v2221
    %v2986 = vpack.c.b16 %v2226, %v2222
    %v2987 = vpack.c.b16 %v2227, %v2223
    %v2988 = vpack.c.b16 %v2232, %v2228
    %v2989 = vpack.c.b16 %v2233, %v2229
    %v2990 = vpack.c.b16 %v2234, %v2230
    %v2991 = vpack.c.b16 %v2235, %v2231
    %v2992 = vpack.c.b16 %v2240, %v2236
    %v2993 = vpack.c.b16 %v2241, %v2237
    %v2994 = vpack.c.b16 %v2242, %v2238
    %v2995 = vpack.c.b16 %v2243, %v2239
    %v2996 = vpack.c.b16 %v2248, %v2244
    %v2997 = vpack.c.b16 %v2249, %v2245
    %v2998 = vpack.c.b16 %v2250, %v2246
    %v2999 = vpack.c.b16 %v2251, %v2247
    %v3000 = vpack.c.b16 %v2256, %v2252
    %v3001 = vpack.c.b16 %v2257, %v2253
    %v3002 = vpack.c.b16 %v2258, %v2254
    %v3003 = vpack.c.b16 %v2259, %v2255
    %v3004 = vpack.c.b16 %v2264, %v2260
    %v3005 = vpack.c.b16 %v2265, %v2261
    %v3006 = vpack.c.b16 %v2266, %v2262
    %v3007 = vpack.c.b16 %v2267, %v2263
    %v3008 = vpack.c.b16 %v2272, %v2268
    %v3009 = vpack.c.b16 %v2273, %v2269
    %v3010 = vpack.c.b16 %v2274, %v2270
    %v3011 = vpack.c.b16 %v2275, %v2271
    %v3012 = vpack.c.b16 %v2280, %v2276
    %v3013 = vpack.c.b16 %v2281, %v2277
    %v3014 = vpack.c.b16 %v2282, %v2278
    %v3015 = vpack.c.b16 %v2283, %v2279
    %v3016 = vpack.c.b16 %v2288, %v2284
    %v3017 = vpack.c.b16 %v2289, %v2285
    %v3018 = vpack.c.b16 %v2290, %v2286
    %v3019 = vpack.c.b16 %v2291, %v2287
    %v3020 = vpack.c.b16 %v2296, %v2292
    %v3021 = vpack.c.b16 %v2297, %v2293
    %v3022 = vpack.c.b16 %v2298, %v2294
    %v3023 = vpack.c.b16 %v2299, %v2295
    %v3024 = vpack.c.b16 %v2304, %v2300
    %v3025 = vpack.c.b16 %v2305, %v2301
    %v3026 = vpack.c.b16 %v2306, %v2302
    %v3027 = vpack.c.b16 %v2307, %v2303
    %v3028 = vpack.c.b16 %v2312, %v2308
    %v3029 = vpack.c.b16 %v2313, %v2309
    %v3030 = vpack.c.b16 %v2314, %v2310
    %v3031 = vpack.c.b16 %v2315, %v2311
    %v3032 = vpack.c.b16 %v2320, %v2316
    %v3033 = vpack.c.b16 %v2321, %v2317
    %v3034 = vpack.c.b16 %v2322, %v2318
    %v3035 = vpack.c.b16 %v2323, %v2319
    %v3036 = vpack.c.b16 %v2328, %v2324
    %v3037 = vpack.c.b16 %v2329, %v2325
    %v3038 = vpack.c.b16 %v2330, %v2326
    %v3039 = vpack.c.b16 %v2331, %v2327
    %v3040 = vpack.c.b16 %v2336, %v2332
    %v3041 = vpack.c.b16 %v2337, %v2333
    %v3042 = vpack.c.b16 %v2338, %v2334
    %v3043 = vpack.c.b16 %v2339, %v2335
    %v3044 = vpack.c.b16 %v2344, %v2340
    %v3045 = vpack.c.b16 %v2345, %v2341
    %v3046 = vpack.c.b16 %v2346, %v2342
    %v3047 = vpack.c.b16 %v2347, %v2343
    %v3048 = vpack.c.b16 %v2352, %v2348
    %v3049 = vpack.c.b16 %v2353, %v2349
    %v3050 = vpack.c.b16 %v2354, %v2350
    %v3051 = vpack.c.b16 %v2355, %v2351
    %v3052 = vpack.c.b16 %v2360, %v2356
    %v3053 = vpack.c.b16 %v2361, %v2357
    %v3054 = vpack.c.b16 %v2362, %v2358
    %v3055 = vpack.c.b16 %v2363, %v2359
    %v3056 = vpack.c.b16 %v2368, %v2364
    %v3057 = vpack.c.b16 %v2369, %v2365
    %v3058 = vpack.c.b16 %v2370, %v2366
    %v3059 = vpack.c.b16 %v2371, %v2367
    %v3060 = vpack.c.b16 %v2376, %v2372
    %v3061 = vpack.c.b16 %v2377, %v2373
    %v3062 = vpack.c.b16 %v2378, %v2374
    %v3063 = vpack.c.b16 %v2379, %v2375
    %v3064 = vpack.c.b16 %v2384, %v2380
    %v3065 = vpack.c.b16 %v2385, %v2381
    %v3066 = vpack.c.b16 %v2386, %v2382
    %v3067 = vpack.c.b16 %v2387, %v2383
    %v3068 = vpack.c.b16 %v2392, %v2388
    %v3069 = vpack.c.b16 %v2393, %v2389
    %v3070 = vpack.c.b16 %v2394, %v2390
    %v3071 = vpack.c.b16 %v2395, %v2391
    %v3072 = vpack.c.b16 %v2400, %v2396
    %v3073 = vpack.c.b16 %v2401, %v2397
    %v3074 = vpack.c.b16 %v2402, %v2398
    %v3075 = vpack.c.b16 %v2403, %v2399
    %v3076 = vpack.c.b16 %v2408, %v2404
    %v3077 = vpack.c.b16 %v2409, %v2405
    %v3078 = vpack.c.b16 %v2410, %v2406
    %v3079 = vpack.c.b16 %v2411, %v2407
    %v3080 = vpack.c.b16 %v2416, %v2412
    %v3081 = vpack.c.b16 %v2417, %v2413
    %v3082 = vpack.c.b16 %v2418, %v2414
    %v3083 = vpack.c.b16 %v2419, %v2415
    %v3084 = vpack.c.b16 %v2424, %v2420
    %v3085 = vpack.c.b16 %v2425, %v2421
    %v3086 = vpack.c.b16 %v2426, %v2422
    %v3087 = vpack.c.b16 %v2427, %v2423
    %v3088 = vpack.c.b16 %v2432, %v2428
    %v3089 = vpack.c.b16 %v2433, %v2429
    %v3090 = vpack.c.b16 %v2434, %v2430
    %v3091 = vpack.c.b16 %v2435, %v2431
    %v3092 = vpack.c.b16 %v2440, %v2436
    %v3093 = vpack.c.b16 %v2441, %v2437
    %v3094 = vpack.c.b16 %v2442, %v2438
    %v3095 = vpack.c.b16 %v2443, %v2439
    %v3096 = vpack.c.b16 %v2448, %v2444
    %v3097 = vpack.c.b16 %v2449, %v2445
    %v3098 = vpack.c.b16 %v2450, %v2446
    %v3099 = vpack.c.b16 %v2451, %v2447
    %v3100 = vpack.c.b16 %v2456, %v2452
    %v3101 = vpack.c.b16 %v2457, %v2453
    %v3102 = vpack.c.b16 %v2458, %v2454
    %v3103 = vpack.c.b16 %v2459, %v2455
    %v3104 = vpack.c.b16 %v2464, %v2460
    %v3105 = vpack.c.b16 %v2465, %v2461
    %v3106 = vpack.c.b16 %v2466, %v2462
    %v3107 = vpack.c.b16 %v2467, %v2463
    %v3108 = vpack.c.b16 %v2472, %v2468
    %v3109 = vpack.c.b16 %v2473, %v2469
    %v3110 = vpack.c.b16 %v2474, %v2470
    %v3111 = vpack.c.b16 %v2475, %v2471
    %v3112 = vpack.c.b16 %v2480, %v2476
    %v3113 = vpack.c.b16 %v2481, %v2477
    %v3114 = vpack.c.b16 %v2482, %v2478
    %v3115 = vpack.c.b16 %v2483, %v2479
    %v3116 = vpack.c.b16 %v2488, %v2484
    %v3117 = vpack.c.b16 %v2489, %v2485
    %v3118 = vpack.c.b16 %v2490, %v2486
    %v3119 = vpack.c.b16 %v2491, %v2487
    %v3120 = vpack.c.b16 %v2496, %v2492
    %v3121 = vpack.c.b16 %v2497, %v2493
    %v3122 = vpack.c.b16 %v2498, %v2494
    %v3123 = vpack.c.b16 %v2499, %v2495
    %v3124 = vpack.c.b16 %v2504, %v2500
    %v3125 = vpack.c.b16 %v2505, %v2501
    %v3126 = vpack.c.b16 %v2506, %v2502
    %v3127 = vpack.c.b16 %v2507, %v2503
    %v3128 = vpack.c.b16 %v2512, %v2508
    %v3129 = vpack.c.b16 %v2513, %v2509
    %v3130 = vpack.c.b16 %v2514, %v2510
    %v3131 = vpack.c.b16 %v2515, %v2511
    %v3132 = vpack.c.b16 %v2520, %v2516
    %v3133 = vpack.c.b16 %v2521, %v2517
    %v3134 = vpack.c.b16 %v2522, %v2518
    %v3135 = vpack.c.b16 %v2523, %v2519
    %v3136 = vpack.c.b16 %v2528, %v2524
    %v3137 = vpack.c.b16 %v2529, %v2525
    %v3138 = vpack.c.b16 %v2530, %v2526
    %v3139 = vpack.c.b16 %v2531, %v2527
    %v3140 = vpack.c.b16 %v2536, %v2532
    %v3141 = vpack.c.b16 %v2537, %v2533
    %v3142 = vpack.c.b16 %v2538, %v2534
    %v3143 = vpack.c.b16 %v2539, %v2535
    %v3144 = vpack.c.b16 %v2544, %v2540
    %v3145 = vpack.c.b16 %v2545, %v2541
    %v3146 = vpack.c.b16 %v2546, %v2542
    %v3147 = vpack.c.b16 %v2547, %v2543
    %v3148 = vpack.c.b16 %v2552, %v2548
    %v3149 = vpack.c.b16 %v2553, %v2549
    %v3150 = vpack.c.b16 %v2554, %v2550
    %v3151 = vpack.c.b16 %v2555, %v2551
    %v3152 = vpack.c.b16 %v2560, %v2556
    %v3153 = vpack.c.b16 %v2561, %v2557
    %v3154 = vpack.c.b16 %v2562, %v2558
    %v3155 = vpack.c.b16 %v2563, %v2559
    %v3156 = vpack.c.b16 %v2568, %v2564
    %v3157 = vpack.c.b16 %v2569, %v2565
    %v3158 = vpack.c.b16 %v2570, %v2566
    %v3159 = vpack.c.b16 %v2571, %v2567
    %v3160 = vpack.c.b16 %v2576, %v2572
    %v3161 = vpack.c.b16 %v2577, %v2573
    %v3162 = vpack.c.b16 %v2578, %v2574
    %v3163 = vpack.c.b16 %v2579, %v2575
    %vm3748 = vcmask 261120
    %v3750 = vsel %vm3748, %v221, 0
    %3752 = vmatprep.subr.bf16.mxu0 %v2581
    %3753 = vmatpush1.bf16.msra.mxu0 %v2580
    %3754 = vmatprep.subr.bf16.mxu0 %v2585
    %3755 = vmatpush1.bf16.msra.mxu0 %v2584
    %3756 = vmatprep.subr.bf16.mxu0 %v2589
    %3757 = vmatpush1.bf16.msra.mxu0 %v2588
    %3758 = vmatprep.subr.bf16.mxu0 %v2593
    %3759 = vmatpush1.bf16.msra.mxu0 %v2592
    %3760 = vmatprep.subr.bf16.mxu0 %v2597
    %3761 = vmatpush1.bf16.msra.mxu0 %v2596
    %3762 = vmatprep.subr.bf16.mxu0 %v2601
    %3763 = vmatpush1.bf16.msra.mxu0 %v2600
    %3764 = vmatprep.subr.bf16.mxu0 %v2605
    %3765 = vmatpush1.bf16.msra.mxu0 %v2604
    %3766 = vmatprep.subr.bf16.mxu0 %v2609
    %3767 = vmatpush1.bf16.msra.mxu0 %v2608
    %3768 = vmatprep.subr.bf16.mxu0 %v2613
    %3769 = vmatpush1.bf16.msra.mxu0 %v2612
    %3770 = vmatprep.subr.bf16.mxu0 %v2617
    %3771 = vmatpush1.bf16.msra.mxu0 %v2616
    %3772 = vmatprep.subr.bf16.mxu0 %v2621
    %3773 = vmatpush1.bf16.msra.mxu0 %v2620
    %3774 = vmatprep.subr.bf16.mxu0 %v2625
    %3775 = vmatpush1.bf16.msra.mxu0 %v2624
    %3776 = vmatprep.subr.bf16.mxu0 %v2629
    %3777 = vmatpush1.bf16.msra.mxu0 %v2628
    %3778 = vmatprep.subr.bf16.mxu0 %v2633
    %3779 = vmatpush1.bf16.msra.mxu0 %v2632
    %3780 = vmatprep.subr.bf16.mxu0 %v2637
    %3781 = vmatpush1.bf16.msra.mxu0 %v2636
    %3782 = vmatprep.subr.bf16.mxu0 %v2641
    %3783 = vmatpush1.bf16.msra.mxu0 %v2640
    %3784 = vmatprep.mubr.bf16.mxu0 %v204
    %3785 = vmatmul.mubr.bf16.gmra.mrb[0].mxu0 %v203
    %v3786 = vpop.f32.mrb[0].mxu0
    %v3787 = vadd.f32 %v811, %v3786
    %v3788 = vpop.f32.mrb[0].mxu0
    %v3789 = vadd.f32 %v815, %v3788
    %v3790 = vpop.f32.mrb[0].mxu0
    %v3791 = vpop.f32.mrb[0].mxu0
    %3792 = vdwg.mxu0
    %3793 = vmatprep.subr.bf16.mxu0 %v2645
    %3794 = vmatpush1.bf16.msra.mxu0 %v2644
    %3795 = vmatprep.subr.bf16.mxu0 %v2649
    %3796 = vmatpush1.bf16.msra.mxu0 %v2648
    %3797 = vmatprep.subr.bf16.mxu0 %v2653
    %3798 = vmatpush1.bf16.msra.mxu0 %v2652
    %3799 = vmatprep.subr.bf16.mxu0 %v2657
    %3800 = vmatpush1.bf16.msra.mxu0 %v2656
    %3801 = vmatprep.subr.bf16.mxu0 %v2661
    %3802 = vmatpush1.bf16.msra.mxu0 %v2660
    %3803 = vmatprep.subr.bf16.mxu0 %v2665
    %3804 = vmatpush1.bf16.msra.mxu0 %v2664
    %3805 = vmatprep.subr.bf16.mxu0 %v2669
    %3806 = vmatpush1.bf16.msra.mxu0 %v2668
    %3807 = vmatprep.subr.bf16.mxu0 %v2673
    %3808 = vmatpush1.bf16.msra.mxu0 %v2672
    %3809 = vmatprep.subr.bf16.mxu0 %v2677
    %3810 = vmatpush1.bf16.msra.mxu0 %v2676
    %3811 = vmatprep.subr.bf16.mxu0 %v2681
    %3812 = vmatpush1.bf16.msra.mxu0 %v2680
    %3813 = vmatprep.subr.bf16.mxu0 %v2685
    %3814 = vmatpush1.bf16.msra.mxu0 %v2684
    %3815 = vmatprep.subr.bf16.mxu0 %v2689
    %3816 = vmatpush1.bf16.msra.mxu0 %v2688
    %3817 = vmatprep.subr.bf16.mxu0 %v2693
    %3818 = vmatpush1.bf16.msra.mxu0 %v2692
    %3819 = vmatprep.subr.bf16.mxu0 %v2697
    %3820 = vmatpush1.bf16.msra.mxu0 %v2696
    %3821 = vmatprep.subr.bf16.mxu0 %v2701
    %3822 = vmatpush1.bf16.msra.mxu0 %v2700
    %3823 = vmatprep.subr.bf16.mxu0 %v2705
    %3824 = vmatpush1.bf16.msra.mxu0 %v2704
    %3825 = vmatprep.mubr.bf16.mxu0 %v206
    %3826 = vmatmul.mubr.bf16.gmra.mrb[0].mxu0 %v205
    %v3827 = vpop.f32.mrb[0].mxu0
    %v3828 = vadd.f32 %v3787, %v3827
    %v3829 = vpop.f32.mrb[0].mxu0
    %v3830 = vadd.f32 %v3789, %v3829
    %v3831 = vpop.f32.mrb[0].mxu0
    %v3832 = vpop.f32.mrb[0].mxu0
    %3833 = vdwg.mxu0
    %3834 = vmatprep.subr.bf16.mxu0 %v2709
    %3835 = vmatpush1.bf16.msra.mxu0 %v2708
    %3836 = vmatprep.subr.bf16.mxu0 %v2713
    %3837 = vmatpush1.bf16.msra.mxu0 %v2712
    %3838 = vmatprep.subr.bf16.mxu0 %v2717
    %3839 = vmatpush1.bf16.msra.mxu0 %v2716
    %3840 = vmatprep.subr.bf16.mxu0 %v2721
    %3841 = vmatpush1.bf16.msra.mxu0 %v2720
    %3842 = vmatprep.subr.bf16.mxu0 %v2725
    %3843 = vmatpush1.bf16.msra.mxu0 %v2724
    %3844 = vmatprep.subr.bf16.mxu0 %v2729
    %3845 = vmatpush1.bf16.msra.mxu0 %v2728
    %3846 = vmatprep.subr.bf16.mxu0 %v2733
    %3847 = vmatpush1.bf16.msra.mxu0 %v2732
    %3848 = vmatprep.subr.bf16.mxu0 %v2737
    %3849 = vmatpush1.bf16.msra.mxu0 %v2736
    %3850 = vmatprep.subr.bf16.mxu0 %v2741
    %3851 = vmatpush1.bf16.msra.mxu0 %v2740
    %3852 = vmatprep.subr.bf16.mxu0 %v2745
    %3853 = vmatpush1.bf16.msra.mxu0 %v2744
    %3854 = vmatprep.subr.bf16.mxu0 %v2749
    %3855 = vmatpush1.bf16.msra.mxu0 %v2748
    %3856 = vmatprep.subr.bf16.mxu0 %v2753
    %3857 = vmatpush1.bf16.msra.mxu0 %v2752
    %3858 = vmatprep.subr.bf16.mxu0 %v2757
    %3859 = vmatpush1.bf16.msra.mxu0 %v2756
    %3860 = vmatprep.subr.bf16.mxu0 %v2761
    %3861 = vmatpush1.bf16.msra.mxu0 %v2760
    %3862 = vmatprep.subr.bf16.mxu0 %v2765
    %3863 = vmatpush1.bf16.msra.mxu0 %v2764
    %3864 = vmatprep.subr.bf16.mxu0 %v2769
    %3865 = vmatpush1.bf16.msra.mxu0 %v2768
    %3866 = vmatprep.mubr.bf16.mxu0 %v208
    %3867 = vmatmul.mubr.bf16.gmra.mrb[0].mxu0 %v207
    %v3868 = vpop.f32.mrb[0].mxu0
    %v3869 = vadd.f32 %v3828, %v3868
    %v3870 = vpop.f32.mrb[0].mxu0
    %v3871 = vadd.f32 %v3830, %v3870
    %v3872 = vpop.f32.mrb[0].mxu0
    %v3873 = vpop.f32.mrb[0].mxu0
    %3874 = vdwg.mxu0
    %3875 = vmatprep.subr.bf16.mxu0 %v2773
    %3876 = vmatpush1.bf16.msra.mxu0 %v2772
    %3877 = vmatprep.subr.bf16.mxu0 %v2777
    %3878 = vmatpush1.bf16.msra.mxu0 %v2776
    %3879 = vmatprep.subr.bf16.mxu0 %v2781
    %3880 = vmatpush1.bf16.msra.mxu0 %v2780
    %3881 = vmatprep.subr.bf16.mxu0 %v2785
    %3882 = vmatpush1.bf16.msra.mxu0 %v2784
    %3883 = vmatprep.subr.bf16.mxu0 %v2789
    %3884 = vmatpush1.bf16.msra.mxu0 %v2788
    %3885 = vmatprep.subr.bf16.mxu0 %v2793
    %3886 = vmatpush1.bf16.msra.mxu0 %v2792
    %3887 = vmatprep.subr.bf16.mxu0 %v2797
    %3888 = vmatpush1.bf16.msra.mxu0 %v2796
    %3889 = vmatprep.subr.bf16.mxu0 %v2801
    %3890 = vmatpush1.bf16.msra.mxu0 %v2800
    %3891 = vmatprep.subr.bf16.mxu0 %v2805
    %3892 = vmatpush1.bf16.msra.mxu0 %v2804
    %3893 = vmatprep.subr.bf16.mxu0 %v2809
    %3894 = vmatpush1.bf16.msra.mxu0 %v2808
    %3895 = vmatprep.subr.bf16.mxu0 %v2813
    %3896 = vmatpush1.bf16.msra.mxu0 %v2812
    %3897 = vmatprep.subr.bf16.mxu0 %v2817
    %3898 = vmatpush1.bf16.msra.mxu0 %v2816
    %3899 = vmatprep.subr.bf16.mxu0 %v2821
    %3900 = vmatpush1.bf16.msra.mxu0 %v2820
    %3901 = vmatprep.subr.bf16.mxu0 %v2825
    %3902 = vmatpush1.bf16.msra.mxu0 %v2824
    %3903 = vmatprep.subr.bf16.mxu0 %v2829
    %3904 = vmatpush1.bf16.msra.mxu0 %v2828
    %3905 = vmatprep.subr.bf16.mxu0 %v2833
    %3906 = vmatpush1.bf16.msra.mxu0 %v2832
    %3907 = vmatprep.mubr.bf16.mxu0 %v210
    %3908 = vmatmul.mubr.bf16.gmra.mrb[0].mxu0 %v209
    %v3909 = vpop.f32.mrb[0].mxu0
    %v3910 = vadd.f32 %v3869, %v3909
    %v3911 = vpop.f32.mrb[0].mxu0
    %v3912 = vadd.f32 %v3871, %v3911
    %v3913 = vpop.f32.mrb[0].mxu0
    %v3914 = vpop.f32.mrb[0].mxu0
    %3915 = vdwg.mxu0
    %3916 = vmatprep.subr.bf16.mxu0 %v2837
    %3917 = vmatpush1.bf16.msra.mxu0 %v2836
    %3918 = vmatprep.subr.bf16.mxu0 %v2841
    %3919 = vmatpush1.bf16.msra.mxu0 %v2840
    %3920 = vmatprep.subr.bf16.mxu0 %v2845
    %3921 = vmatpush1.bf16.msra.mxu0 %v2844
    %3922 = vmatprep.subr.bf16.mxu0 %v2849
    %3923 = vmatpush1.bf16.msra.mxu0 %v2848
    %3924 = vmatprep.subr.bf16.mxu0 %v2853
    %3925 = vmatpush1.bf16.msra.mxu0 %v2852
    %3926 = vmatprep.subr.bf16.mxu0 %v2857
    %3927 = vmatpush1.bf16.msra.mxu0 %v2856
    %3928 = vmatprep.subr.bf16.mxu0 %v2861
    %3929 = vmatpush1.bf16.msra.mxu0 %v2860
    %3930 = vmatprep.subr.bf16.mxu0 %v2865
    %3931 = vmatpush1.bf16.msra.mxu0 %v2864
    %3932 = vmatprep.subr.bf16.mxu0 %v2869
    %3933 = vmatpush1.bf16.msra.mxu0 %v2868
    %3934 = vmatprep.subr.bf16.mxu0 %v2873
    %3935 = vmatpush1.bf16.msra.mxu0 %v2872
    %3936 = vmatprep.subr.bf16.mxu0 %v2877
    %3937 = vmatpush1.bf16.msra.mxu0 %v2876
    %3938 = vmatprep.subr.bf16.mxu0 %v2881
    %3939 = vmatpush1.bf16.msra.mxu0 %v2880
    %3940 = vmatprep.subr.bf16.mxu0 %v2885
    %3941 = vmatpush1.bf16.msra.mxu0 %v2884
    %3942 = vmatprep.subr.bf16.mxu0 %v2889
    %3943 = vmatpush1.bf16.msra.mxu0 %v2888
    %3944 = vmatprep.subr.bf16.mxu0 %v2893
    %3945 = vmatpush1.bf16.msra.mxu0 %v2892
    %3946 = vmatprep.subr.bf16.mxu0 %v2897
    %3947 = vmatpush1.bf16.msra.mxu0 %v2896
    %3948 = vmatprep.mubr.bf16.mxu0 %v212
    %3949 = vmatmul.mubr.bf16.gmra.mrb[0].mxu0 %v211
    %v3950 = vpop.f32.mrb[0].mxu0
    %v3951 = vadd.f32 %v3910, %v3950
    %v3952 = vpop.f32.mrb[0].mxu0
    %v3953 = vadd.f32 %v3912, %v3952
    %v3954 = vpop.f32.mrb[0].mxu0
    %v3955 = vpop.f32.mrb[0].mxu0
    %3956 = vdwg.mxu0
    %3957 = vmatprep.subr.bf16.mxu0 %v2901
    %3958 = vmatpush1.bf16.msra.mxu0 %v2900
    %3959 = vmatprep.subr.bf16.mxu0 %v2905
    %3960 = vmatpush1.bf16.msra.mxu0 %v2904
    %3961 = vmatprep.subr.bf16.mxu0 %v2909
    %3962 = vmatpush1.bf16.msra.mxu0 %v2908
    %3963 = vmatprep.subr.bf16.mxu0 %v2913
    %3964 = vmatpush1.bf16.msra.mxu0 %v2912
    %3965 = vmatprep.subr.bf16.mxu0 %v2917
    %3966 = vmatpush1.bf16.msra.mxu0 %v2916
    %3967 = vmatprep.subr.bf16.mxu0 %v2921
    %3968 = vmatpush1.bf16.msra.mxu0 %v2920
    %3969 = vmatprep.subr.bf16.mxu0 %v2925
    %3970 = vmatpush1.bf16.msra.mxu0 %v2924
    %3971 = vmatprep.subr.bf16.mxu0 %v2929
    %3972 = vmatpush1.bf16.msra.mxu0 %v2928
    %3973 = vmatprep.subr.bf16.mxu0 %v2933
    %3974 = vmatpush1.bf16.msra.mxu0 %v2932
    %3975 = vmatprep.subr.bf16.mxu0 %v2937
    %3976 = vmatpush1.bf16.msra.mxu0 %v2936
    %3977 = vmatprep.subr.bf16.mxu0 %v2941
    %3978 = vmatpush1.bf16.msra.mxu0 %v2940
    %3979 = vmatprep.subr.bf16.mxu0 %v2945
    %3980 = vmatpush1.bf16.msra.mxu0 %v2944
    %3981 = vmatprep.subr.bf16.mxu0 %v2949
    %3982 = vmatpush1.bf16.msra.mxu0 %v2948
    %3983 = vmatprep.subr.bf16.mxu0 %v2953
    %3984 = vmatpush1.bf16.msra.mxu0 %v2952
    %3985 = vmatprep.subr.bf16.mxu0 %v2957
    %3986 = vmatpush1.bf16.msra.mxu0 %v2956
    %3987 = vmatprep.subr.bf16.mxu0 %v2961
    %3988 = vmatpush1.bf16.msra.mxu0 %v2960
    %3989 = vmatprep.mubr.bf16.mxu0 %v214
    %3990 = vmatmul.mubr.bf16.gmra.mrb[0].mxu0 %v213
    %v3991 = vpop.f32.mrb[0].mxu0
    %v3992 = vadd.f32 %v3951, %v3991
    %v3993 = vpop.f32.mrb[0].mxu0
    %v3994 = vadd.f32 %v3953, %v3993
    %v3995 = vpop.f32.mrb[0].mxu0
    %v3996 = vpop.f32.mrb[0].mxu0
    %3997 = vdwg.mxu0
    %3998 = vmatprep.subr.bf16.mxu0 %v2965
    %3999 = vmatpush1.bf16.msra.mxu0 %v2964
    %4000 = vmatprep.subr.bf16.mxu0 %v2969
    %4001 = vmatpush1.bf16.msra.mxu0 %v2968
    %4002 = vmatprep.subr.bf16.mxu0 %v2973
    %4003 = vmatpush1.bf16.msra.mxu0 %v2972
    %4004 = vmatprep.subr.bf16.mxu0 %v2977
    %4005 = vmatpush1.bf16.msra.mxu0 %v2976
    %4006 = vmatprep.subr.bf16.mxu0 %v2981
    %4007 = vmatpush1.bf16.msra.mxu0 %v2980
    %4008 = vmatprep.subr.bf16.mxu0 %v2985
    %4009 = vmatpush1.bf16.msra.mxu0 %v2984
    %4010 = vmatprep.subr.bf16.mxu0 %v2989
    %4011 = vmatpush1.bf16.msra.mxu0 %v2988
    %4012 = vmatprep.subr.bf16.mxu0 %v2993
    %4013 = vmatpush1.bf16.msra.mxu0 %v2992
    %4014 = vmatprep.subr.bf16.mxu0 %v2997
    %4015 = vmatpush1.bf16.msra.mxu0 %v2996
    %4016 = vmatprep.subr.bf16.mxu0 %v3001
    %4017 = vmatpush1.bf16.msra.mxu0 %v3000
    %4018 = vmatprep.subr.bf16.mxu0 %v3005
    %4019 = vmatpush1.bf16.msra.mxu0 %v3004
    %4020 = vmatprep.subr.bf16.mxu0 %v3009
    %4021 = vmatpush1.bf16.msra.mxu0 %v3008
    %4022 = vmatprep.subr.bf16.mxu0 %v3013
    %4023 = vmatpush1.bf16.msra.mxu0 %v3012
    %4024 = vmatprep.subr.bf16.mxu0 %v3017
    %4025 = vmatpush1.bf16.msra.mxu0 %v3016
    %4026 = vmatprep.subr.bf16.mxu0 %v3021
    %4027 = vmatpush1.bf16.msra.mxu0 %v3020
    %4028 = vmatprep.subr.bf16.mxu0 %v3025
    %4029 = vmatpush1.bf16.msra.mxu0 %v3024
    %4030 = vmatprep.mubr.bf16.mxu0 %v216
    %4031 = vmatmul.mubr.bf16.gmra.mrb[0].mxu0 %v215
    %v4032 = vpop.f32.mrb[0].mxu0
    %v4033 = vadd.f32 %v3992, %v4032
    %v4034 = vpop.f32.mrb[0].mxu0
    %v4035 = vadd.f32 %v3994, %v4034
    %v4036 = vpop.f32.mrb[0].mxu0
    %v4037 = vpop.f32.mrb[0].mxu0
    %4038 = vdwg.mxu0
    %4039 = vmatprep.subr.bf16.mxu0 %v3029
    %4040 = vmatpush1.bf16.msra.mxu0 %v3028
    %4041 = vmatprep.subr.bf16.mxu0 %v3033
    %4042 = vmatpush1.bf16.msra.mxu0 %v3032
    %4043 = vmatprep.subr.bf16.mxu0 %v3037
    %4044 = vmatpush1.bf16.msra.mxu0 %v3036
    %4045 = vmatprep.subr.bf16.mxu0 %v3041
    %4046 = vmatpush1.bf16.msra.mxu0 %v3040
    %4047 = vmatprep.subr.bf16.mxu0 %v3045
    %4048 = vmatpush1.bf16.msra.mxu0 %v3044
    %4049 = vmatprep.subr.bf16.mxu0 %v3049
    %4050 = vmatpush1.bf16.msra.mxu0 %v3048
    %4051 = vmatprep.subr.bf16.mxu0 %v3053
    %4052 = vmatpush1.bf16.msra.mxu0 %v3052
    %4053 = vmatprep.subr.bf16.mxu0 %v3057
    %4054 = vmatpush1.bf16.msra.mxu0 %v3056
    %4055 = vmatprep.subr.bf16.mxu0 %v3061
    %4056 = vmatpush1.bf16.msra.mxu0 %v3060
    %4057 = vmatprep.subr.bf16.mxu0 %v3065
    %4058 = vmatpush1.bf16.msra.mxu0 %v3064
    %4059 = vmatprep.subr.bf16.mxu0 %v3069
    %4060 = vmatpush1.bf16.msra.mxu0 %v3068
    %4061 = vmatprep.subr.bf16.mxu0 %v3073
    %4062 = vmatpush1.bf16.msra.mxu0 %v3072
    %4063 = vmatprep.subr.bf16.mxu0 %v3077
    %4064 = vmatpush1.bf16.msra.mxu0 %v3076
    %4065 = vmatprep.subr.bf16.mxu0 %v3081
    %4066 = vmatpush1.bf16.msra.mxu0 %v3080
    %4067 = vmatprep.subr.bf16.mxu0 %v3085
    %4068 = vmatpush1.bf16.msra.mxu0 %v3084
    %4069 = vmatprep.subr.bf16.mxu0 %v3089
    %4070 = vmatpush1.bf16.msra.mxu0 %v3088
    %4071 = vmatprep.mubr.bf16.mxu0 %v218
    %4072 = vmatmul.mubr.bf16.gmra.mrb[0].mxu0 %v217
    %v4073 = vpop.f32.mrb[0].mxu0
    %v4074 = vadd.f32 %v4033, %v4073
    %v4075 = vpop.f32.mrb[0].mxu0
    %v4076 = vadd.f32 %v4035, %v4075
    %v4077 = vpop.f32.mrb[0].mxu0
    %v4078 = vpop.f32.mrb[0].mxu0
    %4079 = vdwg.mxu0
    %4080 = vmatprep.subr.bf16.mxu0 %v3093
    %4081 = vmatpush1.bf16.msra.mxu0 %v3092
    %4082 = vmatprep.subr.bf16.mxu0 %v3097
    %4083 = vmatpush1.bf16.msra.mxu0 %v3096
    %4084 = vmatprep.subr.bf16.mxu0 %v3101
    %4085 = vmatpush1.bf16.msra.mxu0 %v3100
    %4086 = vmatprep.subr.bf16.mxu0 %v3105
    %4087 = vmatpush1.bf16.msra.mxu0 %v3104
    %4088 = vmatprep.subr.bf16.mxu0 %v3109
    %4089 = vmatpush1.bf16.msra.mxu0 %v3108
    %4090 = vmatprep.subr.bf16.mxu0 %v3113
    %4091 = vmatpush1.bf16.msra.mxu0 %v3112
    %4092 = vmatprep.subr.bf16.mxu0 %v3117
    %4093 = vmatpush1.bf16.msra.mxu0 %v3116
    %4094 = vmatprep.subr.bf16.mxu0 %v3121
    %4095 = vmatpush1.bf16.msra.mxu0 %v3120
    %4096 = vmatprep.subr.bf16.mxu0 %v3125
    %4097 = vmatpush1.bf16.msra.mxu0 %v3124
    %4098 = vmatprep.subr.bf16.mxu0 %v3129
    %4099 = vmatpush1.bf16.msra.mxu0 %v3128
    %4100 = vmatprep.subr.bf16.mxu0 %v3133
    %4101 = vmatpush1.bf16.msra.mxu0 %v3132
    %4102 = vmatprep.subr.bf16.mxu0 %v3137
    %4103 = vmatpush1.bf16.msra.mxu0 %v3136
    %4104 = vmatprep.subr.bf16.mxu0 %v3141
    %4105 = vmatpush1.bf16.msra.mxu0 %v3140
    %4106 = vmatprep.subr.bf16.mxu0 %v3145
    %4107 = vmatpush1.bf16.msra.mxu0 %v3144
    %4108 = vmatprep.subr.bf16.mxu0 %v3149
    %4109 = vmatpush1.bf16.msra.mxu0 %v3148
    %4110 = vmatprep.subr.bf16.mxu0 %v3153
    %4111 = vmatpush1.bf16.msra.mxu0 %v3152
    %4112 = vmatprep.mubr.bf16.mxu0 %v220
    %4113 = vmatmul.mubr.bf16.gmra.mrb[0].mxu0 %v219
    %v4114 = vpop.f32.mrb[0].mxu0
    %v4115 = vadd.f32 %v4074, %v4114
    %v4116 = vpop.f32.mrb[0].mxu0
    %v4117 = vadd.f32 %v4076, %v4116
    %v4118 = vpop.f32.mrb[0].mxu0
    %v4119 = vpop.f32.mrb[0].mxu0
    %4120 = vdwg.mxu0
    %4121 = vmatprep.subr.bf16.mxu0 %v3157
    %4122 = vmatpush1.bf16.msra.mxu0 %v3156
    %4123 = vmatprep.subr.bf16.mxu0 %v3161
    %4124 = vmatpush1.bf16.msra.mxu0 %v3160
    %4125 = vmatprep.subr.bf16.mxu0 0
    %4126 = vmatpush1.bf16.msra.mxu0 0
    %4127 = vmatprep.subr.bf16.mxu0 0
    %4128 = vmatpush1.bf16.msra.mxu0 0
    %4129 = vmatprep.subr.bf16.mxu0 0
    %4130 = vmatpush1.bf16.msra.mxu0 0
    %4131 = vmatprep.subr.bf16.mxu0 0
    %4132 = vmatpush1.bf16.msra.mxu0 0
    %4133 = vmatprep.subr.bf16.mxu0 0
    %4134 = vmatpush1.bf16.msra.mxu0 0
    %4135 = vmatprep.subr.bf16.mxu0 0
    %4136 = vmatpush1.bf16.msra.mxu0 0
    %4137 = vmatprep.subr.bf16.mxu0 0
    %4138 = vmatpush1.bf16.msra.mxu0 0
    %4139 = vmatprep.subr.bf16.mxu0 0
    %4140 = vmatpush1.bf16.msra.mxu0 0
    %4141 = vmatprep.subr.bf16.mxu0 0
    %4142 = vmatpush1.bf16.msra.mxu0 0
    %4143 = vmatprep.subr.bf16.mxu0 0
    %4144 = vmatpush1.bf16.msra.mxu0 0
    %4145 = vmatprep.subr.bf16.mxu0 0
    %4146 = vmatpush1.bf16.msra.mxu0 0
    %4147 = vmatprep.subr.bf16.mxu0 0
    %4148 = vmatpush1.bf16.msra.mxu0 0
    %4149 = vmatprep.subr.bf16.mxu0 0
    %4150 = vmatpush1.bf16.msra.mxu0 0
    %4151 = vmatprep.subr.bf16.mxu0 0
    %4152 = vmatpush1.bf16.msra.mxu0 0
    %4153 = vmatprep.mubr.bf16.mxu0 0
    %4154 = vmatmul.mubr.bf16.gmra.mrb[0].mxu0 %v3750
    %v4155 = vpop.f32.mrb[0].mxu0
    %v4156 = vadd.f32 %v4115, %v4155
    %v4157 = vpop.f32.mrb[0].mxu0
    %v4158 = vadd.f32 %v4117, %v4157
    %v4159 = vpop.f32.mrb[0].mxu0
    %v4160 = vpop.f32.mrb[0].mxu0
    %4161 = vdwg.mxu0
    %4162 = vmatprep.subr.bf16.mxu0 %v2583
    %4163 = vmatpush1.bf16.msra.mxu0 %v2582
    %4164 = vmatprep.subr.bf16.mxu0 %v2587
    %4165 = vmatpush1.bf16.msra.mxu0 %v2586
    %4166 = vmatprep.subr.bf16.mxu0 %v2591
    %4167 = vmatpush1.bf16.msra.mxu0 %v2590
    %4168 = vmatprep.subr.bf16.mxu0 %v2595
    %4169 = vmatpush1.bf16.msra.mxu0 %v2594
    %4170 = vmatprep.subr.bf16.mxu0 %v2599
    %4171 = vmatpush1.bf16.msra.mxu0 %v2598
    %4172 = vmatprep.subr.bf16.mxu0 %v2603
    %4173 = vmatpush1.bf16.msra.mxu0 %v2602
    %4174 = vmatprep.subr.bf16.mxu0 %v2607
    %4175 = vmatpush1.bf16.msra.mxu0 %v2606
    %4176 = vmatprep.subr.bf16.mxu0 %v2611
    %4177 = vmatpush1.bf16.msra.mxu0 %v2610
    %4178 = vmatprep.subr.bf16.mxu0 %v2615
    %4179 = vmatpush1.bf16.msra.mxu0 %v2614
    %4180 = vmatprep.subr.bf16.mxu0 %v2619
    %4181 = vmatpush1.bf16.msra.mxu0 %v2618
    %4182 = vmatprep.subr.bf16.mxu0 %v2623
    %4183 = vmatpush1.bf16.msra.mxu0 %v2622
    %4184 = vmatprep.subr.bf16.mxu0 %v2627
    %4185 = vmatpush1.bf16.msra.mxu0 %v2626
    %4186 = vmatprep.subr.bf16.mxu0 %v2631
    %4187 = vmatpush1.bf16.msra.mxu0 %v2630
    %4188 = vmatprep.subr.bf16.mxu0 %v2635
    %4189 = vmatpush1.bf16.msra.mxu0 %v2634
    %4190 = vmatprep.subr.bf16.mxu0 %v2639
    %4191 = vmatpush1.bf16.msra.mxu0 %v2638
    %4192 = vmatprep.subr.bf16.mxu0 %v2643
    %4193 = vmatpush1.bf16.msra.mxu0 %v2642
    %4194 = vmatprep.mubr.bf16.mxu0 %v204
    %4195 = vmatmul.mubr.bf16.gmra.mrb[0].mxu0 %v203
    %v4196 = vpop.f32.mrb[0].mxu0
    %v4197 = vadd.f32 %v819, %v4196
    %v4198 = vpop.f32.mrb[0].mxu0
    %v4199 = vadd.f32 %v823, %v4198
    %v4200 = vpop.f32.mrb[0].mxu0
    %v4201 = vpop.f32.mrb[0].mxu0
    %4202 = vdwg.mxu0
    %4203 = vmatprep.subr.bf16.mxu0 %v2647
    %4204 = vmatpush1.bf16.msra.mxu0 %v2646
    %4205 = vmatprep.subr.bf16.mxu0 %v2651
    %4206 = vmatpush1.bf16.msra.mxu0 %v2650
    %4207 = vmatprep.subr.bf16.mxu0 %v2655
    %4208 = vmatpush1.bf16.msra.mxu0 %v2654
    %4209 = vmatprep.subr.bf16.mxu0 %v2659
    %4210 = vmatpush1.bf16.msra.mxu0 %v2658
    %4211 = vmatprep.subr.bf16.mxu0 %v2663
    %4212 = vmatpush1.bf16.msra.mxu0 %v2662
    %4213 = vmatprep.subr.bf16.mxu0 %v2667
    %4214 = vmatpush1.bf16.msra.mxu0 %v2666
    %4215 = vmatprep.subr.bf16.mxu0 %v2671
    %4216 = vmatpush1.bf16.msra.mxu0 %v2670
    %4217 = vmatprep.subr.bf16.mxu0 %v2675
    %4218 = vmatpush1.bf16.msra.mxu0 %v2674
    %4219 = vmatprep.subr.bf16.mxu0 %v2679
    %4220 = vmatpush1.bf16.msra.mxu0 %v2678
    %4221 = vmatprep.subr.bf16.mxu0 %v2683
    %4222 = vmatpush1.bf16.msra.mxu0 %v2682
    %4223 = vmatprep.subr.bf16.mxu0 %v2687
    %4224 = vmatpush1.bf16.msra.mxu0 %v2686
    %4225 = vmatprep.subr.bf16.mxu0 %v2691
    %4226 = vmatpush1.bf16.msra.mxu0 %v2690
    %4227 = vmatprep.subr.bf16.mxu0 %v2695
    %4228 = vmatpush1.bf16.msra.mxu0 %v2694
    %4229 = vmatprep.subr.bf16.mxu0 %v2699
    %4230 = vmatpush1.bf16.msra.mxu0 %v2698
    %4231 = vmatprep.subr.bf16.mxu0 %v2703
    %4232 = vmatpush1.bf16.msra.mxu0 %v2702
    %4233 = vmatprep.subr.bf16.mxu0 %v2707
    %4234 = vmatpush1.bf16.msra.mxu0 %v2706
    %4235 = vmatprep.mubr.bf16.mxu0 %v206
    %4236 = vmatmul.mubr.bf16.gmra.mrb[0].mxu0 %v205
    %v4237 = vpop.f32.mrb[0].mxu0
    %v4238 = vadd.f32 %v4197, %v4237
    %v4239 = vpop.f32.mrb[0].mxu0
    %v4240 = vadd.f32 %v4199, %v4239
    %v4241 = vpop.f32.mrb[0].mxu0
    %v4242 = vpop.f32.mrb[0].mxu0
    %4243 = vdwg.mxu0
    %4244 = vmatprep.subr.bf16.mxu0 %v2711
    %4245 = vmatpush1.bf16.msra.mxu0 %v2710
    %4246 = vmatprep.subr.bf16.mxu0 %v2715
    %4247 = vmatpush1.bf16.msra.mxu0 %v2714
    %4248 = vmatprep.subr.bf16.mxu0 %v2719
    %4249 = vmatpush1.bf16.msra.mxu0 %v2718
    %4250 = vmatprep.subr.bf16.mxu0 %v2723
    %4251 = vmatpush1.bf16.msra.mxu0 %v2722
    %4252 = vmatprep.subr.bf16.mxu0 %v2727
    %4253 = vmatpush1.bf16.msra.mxu0 %v2726
    %4254 = vmatprep.subr.bf16.mxu0 %v2731
    %4255 = vmatpush1.bf16.msra.mxu0 %v2730
    %4256 = vmatprep.subr.bf16.mxu0 %v2735
    %4257 = vmatpush1.bf16.msra.mxu0 %v2734
    %4258 = vmatprep.subr.bf16.mxu0 %v2739
    %4259 = vmatpush1.bf16.msra.mxu0 %v2738
    %4260 = vmatprep.subr.bf16.mxu0 %v2743
    %4261 = vmatpush1.bf16.msra.mxu0 %v2742
    %4262 = vmatprep.subr.bf16.mxu0 %v2747
    %4263 = vmatpush1.bf16.msra.mxu0 %v2746
    %4264 = vmatprep.subr.bf16.mxu0 %v2751
    %4265 = vmatpush1.bf16.msra.mxu0 %v2750
    %4266 = vmatprep.subr.bf16.mxu0 %v2755
    %4267 = vmatpush1.bf16.msra.mxu0 %v2754
    %4268 = vmatprep.subr.bf16.mxu0 %v2759
    %4269 = vmatpush1.bf16.msra.mxu0 %v2758
    %4270 = vmatprep.subr.bf16.mxu0 %v2763
    %4271 = vmatpush1.bf16.msra.mxu0 %v2762
    %4272 = vmatprep.subr.bf16.mxu0 %v2767
    %4273 = vmatpush1.bf16.msra.mxu0 %v2766
    %4274 = vmatprep.subr.bf16.mxu0 %v2771
    %4275 = vmatpush1.bf16.msra.mxu0 %v2770
    %4276 = vmatprep.mubr.bf16.mxu0 %v208
    %4277 = vmatmul.mubr.bf16.gmra.mrb[0].mxu0 %v207
    %v4278 = vpop.f32.mrb[0].mxu0
    %v4279 = vadd.f32 %v4238, %v4278
    %v4280 = vpop.f32.mrb[0].mxu0
    %v4281 = vadd.f32 %v4240, %v4280
    %v4282 = vpop.f32.mrb[0].mxu0
    %v4283 = vpop.f32.mrb[0].mxu0
    %4284 = vdwg.mxu0
    %4285 = vmatprep.subr.bf16.mxu0 %v2775
    %4286 = vmatpush1.bf16.msra.mxu0 %v2774
    %4287 = vmatprep.subr.bf16.mxu0 %v2779
    %4288 = vmatpush1.bf16.msra.mxu0 %v2778
    %4289 = vmatprep.subr.bf16.mxu0 %v2783
    %4290 = vmatpush1.bf16.msra.mxu0 %v2782
    %4291 = vmatprep.subr.bf16.mxu0 %v2787
    %4292 = vmatpush1.bf16.msra.mxu0 %v2786
    %4293 = vmatprep.subr.bf16.mxu0 %v2791
    %4294 = vmatpush1.bf16.msra.mxu0 %v2790
    %4295 = vmatprep.subr.bf16.mxu0 %v2795
    %4296 = vmatpush1.bf16.msra.mxu0 %v2794
    %4297 = vmatprep.subr.bf16.mxu0 %v2799
    %4298 = vmatpush1.bf16.msra.mxu0 %v2798
    %4299 = vmatprep.subr.bf16.mxu0 %v2803
    %4300 = vmatpush1.bf16.msra.mxu0 %v2802
    %4301 = vmatprep.subr.bf16.mxu0 %v2807
    %4302 = vmatpush1.bf16.msra.mxu0 %v2806
    %4303 = vmatprep.subr.bf16.mxu0 %v2811
    %4304 = vmatpush1.bf16.msra.mxu0 %v2810
    %4305 = vmatprep.subr.bf16.mxu0 %v2815
    %4306 = vmatpush1.bf16.msra.mxu0 %v2814
    %4307 = vmatprep.subr.bf16.mxu0 %v2819
    %4308 = vmatpush1.bf16.msra.mxu0 %v2818
    %4309 = vmatprep.subr.bf16.mxu0 %v2823
    %4310 = vmatpush1.bf16.msra.mxu0 %v2822
    %4311 = vmatprep.subr.bf16.mxu0 %v2827
    %4312 = vmatpush1.bf16.msra.mxu0 %v2826
    %4313 = vmatprep.subr.bf16.mxu0 %v2831
    %4314 = vmatpush1.bf16.msra.mxu0 %v2830
    %4315 = vmatprep.subr.bf16.mxu0 %v2835
    %4316 = vmatpush1.bf16.msra.mxu0 %v2834
    %4317 = vmatprep.mubr.bf16.mxu0 %v210
    %4318 = vmatmul.mubr.bf16.gmra.mrb[0].mxu0 %v209
    %v4319 = vpop.f32.mrb[0].mxu0
    %v4320 = vadd.f32 %v4279, %v4319
    %v4321 = vpop.f32.mrb[0].mxu0
    %v4322 = vadd.f32 %v4281, %v4321
    %v4323 = vpop.f32.mrb[0].mxu0
    %v4324 = vpop.f32.mrb[0].mxu0
    %4325 = vdwg.mxu0
    %4326 = vmatprep.subr.bf16.mxu0 %v2839
    %4327 = vmatpush1.bf16.msra.mxu0 %v2838
    %4328 = vmatprep.subr.bf16.mxu0 %v2843
    %4329 = vmatpush1.bf16.msra.mxu0 %v2842
    %4330 = vmatprep.subr.bf16.mxu0 %v2847
    %4331 = vmatpush1.bf16.msra.mxu0 %v2846
    %4332 = vmatprep.subr.bf16.mxu0 %v2851
    %4333 = vmatpush1.bf16.msra.mxu0 %v2850
    %4334 = vmatprep.subr.bf16.mxu0 %v2855
    %4335 = vmatpush1.bf16.msra.mxu0 %v2854
    %4336 = vmatprep.subr.bf16.mxu0 %v2859
    %4337 = vmatpush1.bf16.msra.mxu0 %v2858
    %4338 = vmatprep.subr.bf16.mxu0 %v2863
    %4339 = vmatpush1.bf16.msra.mxu0 %v2862
    %4340 = vmatprep.subr.bf16.mxu0 %v2867
    %4341 = vmatpush1.bf16.msra.mxu0 %v2866
    %4342 = vmatprep.subr.bf16.mxu0 %v2871
    %4343 = vmatpush1.bf16.msra.mxu0 %v2870
    %4344 = vmatprep.subr.bf16.mxu0 %v2875
    %4345 = vmatpush1.bf16.msra.mxu0 %v2874
    %4346 = vmatprep.subr.bf16.mxu0 %v2879
    %4347 = vmatpush1.bf16.msra.mxu0 %v2878
    %4348 = vmatprep.subr.bf16.mxu0 %v2883
    %4349 = vmatpush1.bf16.msra.mxu0 %v2882
    %4350 = vmatprep.subr.bf16.mxu0 %v2887
    %4351 = vmatpush1.bf16.msra.mxu0 %v2886
    %4352 = vmatprep.subr.bf16.mxu0 %v2891
    %4353 = vmatpush1.bf16.msra.mxu0 %v2890
    %4354 = vmatprep.subr.bf16.mxu0 %v2895
    %4355 = vmatpush1.bf16.msra.mxu0 %v2894
    %4356 = vmatprep.subr.bf16.mxu0 %v2899
    %4357 = vmatpush1.bf16.msra.mxu0 %v2898
    %4358 = vmatprep.mubr.bf16.mxu0 %v212
    %4359 = vmatmul.mubr.bf16.gmra.mrb[0].mxu0 %v211
    %v4360 = vpop.f32.mrb[0].mxu0
    %v4361 = vadd.f32 %v4320, %v4360
    %v4362 = vpop.f32.mrb[0].mxu0
    %v4363 = vadd.f32 %v4322, %v4362
    %v4364 = vpop.f32.mrb[0].mxu0
    %v4365 = vpop.f32.mrb[0].mxu0
    %4366 = vdwg.mxu0
    %4367 = vmatprep.subr.bf16.mxu0 %v2903
    %4368 = vmatpush1.bf16.msra.mxu0 %v2902
    %4369 = vmatprep.subr.bf16.mxu0 %v2907
    %4370 = vmatpush1.bf16.msra.mxu0 %v2906
    %4371 = vmatprep.subr.bf16.mxu0 %v2911
    %4372 = vmatpush1.bf16.msra.mxu0 %v2910
    %4373 = vmatprep.subr.bf16.mxu0 %v2915
    %4374 = vmatpush1.bf16.msra.mxu0 %v2914
    %4375 = vmatprep.subr.bf16.mxu0 %v2919
    %4376 = vmatpush1.bf16.msra.mxu0 %v2918
    %4377 = vmatprep.subr.bf16.mxu0 %v2923
    %4378 = vmatpush1.bf16.msra.mxu0 %v2922
    %4379 = vmatprep.subr.bf16.mxu0 %v2927
    %4380 = vmatpush1.bf16.msra.mxu0 %v2926
    %4381 = vmatprep.subr.bf16.mxu0 %v2931
    %4382 = vmatpush1.bf16.msra.mxu0 %v2930
    %4383 = vmatprep.subr.bf16.mxu0 %v2935
    %4384 = vmatpush1.bf16.msra.mxu0 %v2934
    %4385 = vmatprep.subr.bf16.mxu0 %v2939
    %4386 = vmatpush1.bf16.msra.mxu0 %v2938
    %4387 = vmatprep.subr.bf16.mxu0 %v2943
    %4388 = vmatpush1.bf16.msra.mxu0 %v2942
    %4389 = vmatprep.subr.bf16.mxu0 %v2947
    %4390 = vmatpush1.bf16.msra.mxu0 %v2946
    %4391 = vmatprep.subr.bf16.mxu0 %v2951
    %4392 = vmatpush1.bf16.msra.mxu0 %v2950
    %4393 = vmatprep.subr.bf16.mxu0 %v2955
    %4394 = vmatpush1.bf16.msra.mxu0 %v2954
    %4395 = vmatprep.subr.bf16.mxu0 %v2959
    %4396 = vmatpush1.bf16.msra.mxu0 %v2958
    %4397 = vmatprep.subr.bf16.mxu0 %v2963
    %4398 = vmatpush1.bf16.msra.mxu0 %v2962
    %4399 = vmatprep.mubr.bf16.mxu0 %v214
    %4400 = vmatmul.mubr.bf16.gmra.mrb[0].mxu0 %v213
    %v4401 = vpop.f32.mrb[0].mxu0
    %v4402 = vadd.f32 %v4361, %v4401
    %v4403 = vpop.f32.mrb[0].mxu0
    %v4404 = vadd.f32 %v4363, %v4403
    %v4405 = vpop.f32.mrb[0].mxu0
    %v4406 = vpop.f32.mrb[0].mxu0
    %4407 = vdwg.mxu0
    %4408 = vmatprep.subr.bf16.mxu0 %v2967
    %4409 = vmatpush1.bf16.msra.mxu0 %v2966
    %4410 = vmatprep.subr.bf16.mxu0 %v2971
    %4411 = vmatpush1.bf16.msra.mxu0 %v2970
    %4412 = vmatprep.subr.bf16.mxu0 %v2975
    %4413 = vmatpush1.bf16.msra.mxu0 %v2974
    %4414 = vmatprep.subr.bf16.mxu0 %v2979
    %4415 = vmatpush1.bf16.msra.mxu0 %v2978
    %4416 = vmatprep.subr.bf16.mxu0 %v2983
    %4417 = vmatpush1.bf16.msra.mxu0 %v2982
    %4418 = vmatprep.subr.bf16.mxu0 %v2987
    %4419 = vmatpush1.bf16.msra.mxu0 %v2986
    %4420 = vmatprep.subr.bf16.mxu0 %v2991
    %4421 = vmatpush1.bf16.msra.mxu0 %v2990
    %4422 = vmatprep.subr.bf16.mxu0 %v2995
    %4423 = vmatpush1.bf16.msra.mxu0 %v2994
    %4424 = vmatprep.subr.bf16.mxu0 %v2999
    %4425 = vmatpush1.bf16.msra.mxu0 %v2998
    %4426 = vmatprep.subr.bf16.mxu0 %v3003
    %4427 = vmatpush1.bf16.msra.mxu0 %v3002
    %4428 = vmatprep.subr.bf16.mxu0 %v3007
    %4429 = vmatpush1.bf16.msra.mxu0 %v3006
    %4430 = vmatprep.subr.bf16.mxu0 %v3011
    %4431 = vmatpush1.bf16.msra.mxu0 %v3010
    %4432 = vmatprep.subr.bf16.mxu0 %v3015
    %4433 = vmatpush1.bf16.msra.mxu0 %v3014
    %4434 = vmatprep.subr.bf16.mxu0 %v3019
    %4435 = vmatpush1.bf16.msra.mxu0 %v3018
    %4436 = vmatprep.subr.bf16.mxu0 %v3023
    %4437 = vmatpush1.bf16.msra.mxu0 %v3022
    %4438 = vmatprep.subr.bf16.mxu0 %v3027
    %4439 = vmatpush1.bf16.msra.mxu0 %v3026
    %4440 = vmatprep.mubr.bf16.mxu0 %v216
    %4441 = vmatmul.mubr.bf16.gmra.mrb[0].mxu0 %v215
    %v4442 = vpop.f32.mrb[0].mxu0
    %v4443 = vadd.f32 %v4402, %v4442
    %v4444 = vpop.f32.mrb[0].mxu0
    %v4445 = vadd.f32 %v4404, %v4444
    %v4446 = vpop.f32.mrb[0].mxu0
    %v4447 = vpop.f32.mrb[0].mxu0
    %4448 = vdwg.mxu0
    %4449 = vmatprep.subr.bf16.mxu0 %v3031
    %4450 = vmatpush1.bf16.msra.mxu0 %v3030
    %4451 = vmatprep.subr.bf16.mxu0 %v3035
    %4452 = vmatpush1.bf16.msra.mxu0 %v3034
    %4453 = vmatprep.subr.bf16.mxu0 %v3039
    %4454 = vmatpush1.bf16.msra.mxu0 %v3038
    %4455 = vmatprep.subr.bf16.mxu0 %v3043
    %4456 = vmatpush1.bf16.msra.mxu0 %v3042
    %4457 = vmatprep.subr.bf16.mxu0 %v3047
    %4458 = vmatpush1.bf16.msra.mxu0 %v3046
    %4459 = vmatprep.subr.bf16.mxu0 %v3051
    %4460 = vmatpush1.bf16.msra.mxu0 %v3050
    %4461 = vmatprep.subr.bf16.mxu0 %v3055
    %4462 = vmatpush1.bf16.msra.mxu0 %v3054
    %4463 = vmatprep.subr.bf16.mxu0 %v3059
    %4464 = vmatpush1.bf16.msra.mxu0 %v3058
    %4465 = vmatprep.subr.bf16.mxu0 %v3063
    %4466 = vmatpush1.bf16.msra.mxu0 %v3062
    %4467 = vmatprep.subr.bf16.mxu0 %v3067
    %4468 = vmatpush1.bf16.msra.mxu0 %v3066
    %4469 = vmatprep.subr.bf16.mxu0 %v3071
    %4470 = vmatpush1.bf16.msra.mxu0 %v3070
    %4471 = vmatprep.subr.bf16.mxu0 %v3075
    %4472 = vmatpush1.bf16.msra.mxu0 %v3074
    %4473 = vmatprep.subr.bf16.mxu0 %v3079
    %4474 = vmatpush1.bf16.msra.mxu0 %v3078
    %4475 = vmatprep.subr.bf16.mxu0 %v3083
    %4476 = vmatpush1.bf16.msra.mxu0 %v3082
    %4477 = vmatprep.subr.bf16.mxu0 %v3087
    %4478 = vmatpush1.bf16.msra.mxu0 %v3086
    %4479 = vmatprep.subr.bf16.mxu0 %v3091
    %4480 = vmatpush1.bf16.msra.mxu0 %v3090
    %4481 = vmatprep.mubr.bf16.mxu0 %v218
    %4482 = vmatmul.mubr.bf16.gmra.mrb[0].mxu0 %v217
    %v4483 = vpop.f32.mrb[0].mxu0
    %v4484 = vadd.f32 %v4443, %v4483
    %v4485 = vpop.f32.mrb[0].mxu0
    %v4486 = vadd.f32 %v4445, %v4485
    %v4487 = vpop.f32.mrb[0].mxu0
    %v4488 = vpop.f32.mrb[0].mxu0
    %4489 = vdwg.mxu0
    %4490 = vmatprep.subr.bf16.mxu0 %v3095
    %4491 = vmatpush1.bf16.msra.mxu0 %v3094
    %4492 = vmatprep.subr.bf16.mxu0 %v3099
    %4493 = vmatpush1.bf16.msra.mxu0 %v3098
    %4494 = vmatprep.subr.bf16.mxu0 %v3103
    %4495 = vmatpush1.bf16.msra.mxu0 %v3102
    %4496 = vmatprep.subr.bf16.mxu0 %v3107
    %4497 = vmatpush1.bf16.msra.mxu0 %v3106
    %4498 = vmatprep.subr.bf16.mxu0 %v3111
    %4499 = vmatpush1.bf16.msra.mxu0 %v3110
    %4500 = vmatprep.subr.bf16.mxu0 %v3115
    %4501 = vmatpush1.bf16.msra.mxu0 %v3114
    %4502 = vmatprep.subr.bf16.mxu0 %v3119
    %4503 = vmatpush1.bf16.msra.mxu0 %v3118
    %4504 = vmatprep.subr.bf16.mxu0 %v3123
    %4505 = vmatpush1.bf16.msra.mxu0 %v3122
    %4506 = vmatprep.subr.bf16.mxu0 %v3127
    %4507 = vmatpush1.bf16.msra.mxu0 %v3126
    %4508 = vmatprep.subr.bf16.mxu0 %v3131
    %4509 = vmatpush1.bf16.msra.mxu0 %v3130
    %4510 = vmatprep.subr.bf16.mxu0 %v3135
    %4511 = vmatpush1.bf16.msra.mxu0 %v3134
    %4512 = vmatprep.subr.bf16.mxu0 %v3139
    %4513 = vmatpush1.bf16.msra.mxu0 %v3138
    %4514 = vmatprep.subr.bf16.mxu0 %v3143
    %4515 = vmatpush1.bf16.msra.mxu0 %v3142
    %4516 = vmatprep.subr.bf16.mxu0 %v3147
    %4517 = vmatpush1.bf16.msra.mxu0 %v3146
    %4518 = vmatprep.subr.bf16.mxu0 %v3151
    %4519 = vmatpush1.bf16.msra.mxu0 %v3150
    %4520 = vmatprep.subr.bf16.mxu0 %v3155
    %4521 = vmatpush1.bf16.msra.mxu0 %v3154
    %4522 = vmatprep.mubr.bf16.mxu0 %v220
    %4523 = vmatmul.mubr.bf16.gmra.mrb[0].mxu0 %v219
    %v4524 = vpop.f32.mrb[0].mxu0
    %v4525 = vadd.f32 %v4484, %v4524
    %v4526 = vpop.f32.mrb[0].mxu0
    %v4527 = vadd.f32 %v4486, %v4526
    %v4528 = vpop.f32.mrb[0].mxu0
    %v4529 = vpop.f32.mrb[0].mxu0
    %4530 = vdwg.mxu0
    %4531 = vmatprep.subr.bf16.mxu0 %v3159
    %4532 = vmatpush1.bf16.msra.mxu0 %v3158
    %4533 = vmatprep.subr.bf16.mxu0 %v3163
    %4534 = vmatpush1.bf16.msra.mxu0 %v3162
    %4535 = vmatprep.subr.bf16.mxu0 0
    %4536 = vmatpush1.bf16.msra.mxu0 0
    %4537 = vmatprep.subr.bf16.mxu0 0
    %4538 = vmatpush1.bf16.msra.mxu0 0
    %4539 = vmatprep.subr.bf16.mxu0 0
    %4540 = vmatpush1.bf16.msra.mxu0 0
    %4541 = vmatprep.subr.bf16.mxu0 0
    %4542 = vmatpush1.bf16.msra.mxu0 0
    %4543 = vmatprep.subr.bf16.mxu0 0
    %4544 = vmatpush1.bf16.msra.mxu0 0
    %4545 = vmatprep.subr.bf16.mxu0 0
    %4546 = vmatpush1.bf16.msra.mxu0 0
    %4547 = vmatprep.subr.bf16.mxu0 0
    %4548 = vmatpush1.bf16.msra.mxu0 0
    %4549 = vmatprep.subr.bf16.mxu0 0
    %4550 = vmatpush1.bf16.msra.mxu0 0
    %4551 = vmatprep.subr.bf16.mxu0 0
    %4552 = vmatpush1.bf16.msra.mxu0 0
    %4553 = vmatprep.subr.bf16.mxu0 0
    %4554 = vmatpush1.bf16.msra.mxu0 0
    %4555 = vmatprep.subr.bf16.mxu0 0
    %4556 = vmatpush1.bf16.msra.mxu0 0
    %4557 = vmatprep.subr.bf16.mxu0 0
    %4558 = vmatpush1.bf16.msra.mxu0 0
    %4559 = vmatprep.subr.bf16.mxu0 0
    %4560 = vmatpush1.bf16.msra.mxu0 0
    %4561 = vmatprep.subr.bf16.mxu0 0
    %4562 = vmatpush1.bf16.msra.mxu0 0
    %4563 = vmatprep.mubr.bf16.mxu0 0
    %4564 = vmatmul.mubr.bf16.gmra.mrb[0].mxu0 %v3750
    %v4565 = vpop.f32.mrb[0].mxu0
    %v4566 = vadd.f32 %v4525, %v4565
    %v4567 = vpop.f32.mrb[0].mxu0
    %v4568 = vadd.f32 %v4527, %v4567
    %v4569 = vpop.f32.mrb[0].mxu0
    %v4570 = vpop.f32.mrb[0].mxu0
    %4571 = vdwg.mxu0
    %vm4572 = vcmp.gt.f32.partialorder %v4156, 0.0
    %vm4573 = vcmp.gt.f32.partialorder %v4158, 0.0
    %vm4574 = vcmp.gt.f32.partialorder %v4566, 0.0
    %vm4575 = vcmp.gt.f32.partialorder %v4568, 0.0
    %v4576 = vmin.f32 %v4156, 0.0
    %v4577 = vmin.f32 %v4158, 0.0
    %v4578 = vmin.f32 %v4566, 0.0
    %v4579 = vmin.f32 %v4568, 0.0
    %v4580 = vmul.f32 %v4576, 1.442695
    %v4581 = vpow.pop %v4580
    %v4582 = vmul.f32 %v4577, 1.442695
    %v4583 = vpow.pop %v4582
    %v4584 = vmul.f32 %v4578, 1.442695
    %v4585 = vpow.pop %v4584
    %v4586 = vmul.f32 %v4579, 1.442695
    %v4587 = vpow.pop %v4586
    %v4588 = vsub.f32 %v4581, 1.0
    %v4589 = vsub.f32 %v4583, 1.0
    %v4590 = vsub.f32 %v4585, 1.0
    %v4591 = vsub.f32 %v4587, 1.0
    %v4592 = vsel %vm4572, %v4156, %v4588
    %v4593 = vsel %vm4573, %v4158, %v4589
    %v4594 = vsel %vm4574, %v4566, %v4590
    %v4595 = vsel %vm4575, %v4568, %v4591
    %v4596 = vpack.c.bf16 %v4592, %v4592
    %v4597 = vpack.c.bf16 %v4593, %v4593
    %v4598 = vpack.c.bf16 %v4594, %v4594
    %v4599 = vpack.c.bf16 %v4595, %v4595
    %v4600 = vld [vmem:[#allocation7] sm:$0xff]
    %v4601 = vld [vmem:[#allocation7 + $0x8] sm:$0xff]
    %v4602 = vld [vmem:[#allocation7 + $0x10] sm:$0xff]
    %v4603 = vld [vmem:[#allocation7 + $0x18] sm:$0xff]
    %v4604 = vld [vmem:[#allocation7 + $0x20] sm:$0xff]
    %v4605 = vld [vmem:[#allocation7 + $0x28] sm:$0xff]
    %v4606 = vld [vmem:[#allocation7 + $0x30] sm:$0xff]
    %v4607 = vld [vmem:[#allocation7 + $0x38] sm:$0xff]
    %v4608 = vld [vmem:[#allocation7 + $0x40] sm:$0xff]
    %v4609 = vld [vmem:[#allocation7 + $0x48] sm:$0xff]
    %v4610 = vld [vmem:[#allocation7 + $0x50] sm:$0xff]
    %v4611 = vld [vmem:[#allocation7 + $0x58] sm:$0xff]
    %v4612 = vld [vmem:[#allocation7 + $0x60] sm:$0xff]
    %v4613 = vld [vmem:[#allocation7 + $0x68] sm:$0xff]
    %v4614 = vld [vmem:[#allocation7 + $0x70] sm:$0xff]
    %v4615 = vld [vmem:[#allocation7 + $0x78] sm:$0xff]
    %v4616 = vld [vmem:[#allocation7 + $0x80] sm:$0xff]
    %v4617 = vld [vmem:[#allocation7 + $0x88] sm:$0xff]
    %v4618 = vld [vmem:[#allocation7 + $0x90] sm:$0xff]
    %v4619 = vld [vmem:[#allocation7 + $0x98] sm:$0xff]
    %v4620 = vld [vmem:[#allocation7 + $0xa0] sm:$0xff]
    %v4621 = vld [vmem:[#allocation7 + $0xa8] sm:$0xff]
    %v4622 = vld [vmem:[#allocation7 + $0xb0] sm:$0xff]
    %v4623 = vld [vmem:[#allocation7 + $0xb8] sm:$0xff]
    %v4624 = vld [vmem:[#allocation7 + $0xc0] sm:$0xff]
    %v4625 = vld [vmem:[#allocation7 + $0xc8] sm:$0xff]
    %v4626 = vld [vmem:[#allocation7 + $0xd0] sm:$0xff]
    %v4627 = vld [vmem:[#allocation7 + $0xd8] sm:$0xff]
    %v4628 = vld [vmem:[#allocation7 + $0xe0] sm:$0xff]
    %v4629 = vld [vmem:[#allocation7 + $0xe8] sm:$0xff]
    %v4630 = vld [vmem:[#allocation7 + $0xf0] sm:$0xff]
    %v4631 = vld [vmem:[#allocation7 + $0xf8] sm:$0xff]
    %v4632 = vld [vmem:[#allocation7 + $0x100] sm:$0xff]
    %v4633 = vld [vmem:[#allocation7 + $0x108] sm:$0xff]
    %v4634 = vld [vmem:[#allocation7 + $0x110] sm:$0xff]
    %v4635 = vld [vmem:[#allocation7 + $0x118] sm:$0xff]
    %v4636 = vld [vmem:[#allocation7 + $0x120] sm:$0xff]
    %v4637 = vld [vmem:[#allocation7 + $0x128] sm:$0xff]
    %v4638 = vld [vmem:[#allocation7 + $0x130] sm:$0xff]
    %v4639 = vld [vmem:[#allocation7 + $0x138] sm:$0xff]
    %v4640 = vld [vmem:[#allocation7 + $0x140] sm:$0xff]
    %v4641 = vld [vmem:[#allocation7 + $0x148] sm:$0xff]
    %v4642 = vld [vmem:[#allocation7 + $0x150] sm:$0xff]
    %v4643 = vld [vmem:[#allocation7 + $0x158] sm:$0xff]
    %v4644 = vld [vmem:[#allocation7 + $0x160] sm:$0xff]
    %v4645 = vld [vmem:[#allocation7 + $0x168] sm:$0xff]
    %v4646 = vld [vmem:[#allocation7 + $0x170] sm:$0xff]
    %v4647 = vld [vmem:[#allocation7 + $0x178] sm:$0xff]
    %v4648 = vld [vmem:[#allocation7 + $0x180] sm:$0xff]
    %v4649 = vld [vmem:[#allocation7 + $0x188] sm:$0xff]
    %v4650 = vld [vmem:[#allocation7 + $0x190] sm:$0xff]
    %v4651 = vld [vmem:[#allocation7 + $0x198] sm:$0xff]
    %v4652 = vld [vmem:[#allocation7 + $0x1a0] sm:$0xff]
    %v4653 = vld [vmem:[#allocation7 + $0x1a8] sm:$0xff]
    %v4654 = vld [vmem:[#allocation7 + $0x1b0] sm:$0xff]
    %v4655 = vld [vmem:[#allocation7 + $0x1b8] sm:$0xff]
    %v4656 = vld [vmem:[#allocation7 + $0x1c0] sm:$0xff]
    %v4657 = vld [vmem:[#allocation7 + $0x1c8] sm:$0xff]
    %v4658 = vld [vmem:[#allocation7 + $0x1d0] sm:$0xff]
    %v4659 = vld [vmem:[#allocation7 + $0x1d8] sm:$0xff]
    %v4660 = vld [vmem:[#allocation7 + $0x1e0] sm:$0xff]
    %v4661 = vld [vmem:[#allocation7 + $0x1e8] sm:$0xff]
    %v4662 = vld [vmem:[#allocation7 + $0x1f0] sm:$0xff]
    %v4663 = vld [vmem:[#allocation7 + $0x1f8] sm:$0xff]
    %v4664 = vld [vmem:[#allocation8] sm:$0x3]
    %v4666 = vlaneseq
    %v4667 = vshrl.u32 %v4666, 7
    %v4668 = vsub.s32 0, %v4667
    %v4669 = vrot.slane %v4664, %v4668
    %v4670 = vlaneseq
    %v4671 = vshrl.u32 %v4670, 7
    %v4672 = vsub.s32 1, %v4671
    %v4673 = vrot.slane %v4664, %v4672
    %v4740 = vunpack.c.l.b16 %v4600
    %v4741 = vunpack.c.h.b16 %v4600
    %v4742 = vunpack.c.l.b16 %v4601
    %v4743 = vunpack.c.h.b16 %v4601
    %v4744 = vunpack.c.l.b16 %v4602
    %v4745 = vunpack.c.h.b16 %v4602
    %v4746 = vunpack.c.l.b16 %v4603
    %v4747 = vunpack.c.h.b16 %v4603
    %v4748 = vunpack.c.l.b16 %v4604
    %v4749 = vunpack.c.h.b16 %v4604
    %v4750 = vunpack.c.l.b16 %v4605
    %v4751 = vunpack.c.h.b16 %v4605
    %v4752 = vunpack.c.l.b16 %v4606
    %v4753 = vunpack.c.h.b16 %v4606
    %v4754 = vunpack.c.l.b16 %v4607
    %v4755 = vunpack.c.h.b16 %v4607
    %v4756 = vunpack.c.l.b16 %v4608
    %v4757 = vunpack.c.h.b16 %v4608
    %v4758 = vunpack.c.l.b16 %v4609
    %v4759 = vunpack.c.h.b16 %v4609
    %v4760 = vunpack.c.l.b16 %v4610
    %v4761 = vunpack.c.h.b16 %v4610
    %v4762 = vunpack.c.l.b16 %v4611
    %v4763 = vunpack.c.h.b16 %v4611
    %v4764 = vunpack.c.l.b16 %v4612
    %v4765 = vunpack.c.h.b16 %v4612
    %v4766 = vunpack.c.l.b16 %v4613
    %v4767 = vunpack.c.h.b16 %v4613
    %v4768 = vunpack.c.l.b16 %v4614
    %v4769 = vunpack.c.h.b16 %v4614
    %v4770 = vunpack.c.l.b16 %v4615
    %v4771 = vunpack.c.h.b16 %v4615
    %v4772 = vunpack.c.l.b16 %v4616
    %v4773 = vunpack.c.h.b16 %v4616
    %v4774 = vunpack.c.l.b16 %v4617
    %v4775 = vunpack.c.h.b16 %v4617
    %v4776 = vunpack.c.l.b16 %v4618
    %v4777 = vunpack.c.h.b16 %v4618
    %v4778 = vunpack.c.l.b16 %v4619
    %v4779 = vunpack.c.h.b16 %v4619
    %v4780 = vunpack.c.l.b16 %v4620
    %v4781 = vunpack.c.h.b16 %v4620
    %v4782 = vunpack.c.l.b16 %v4621
    %v4783 = vunpack.c.h.b16 %v4621
    %v4784 = vunpack.c.l.b16 %v4622
    %v4785 = vunpack.c.h.b16 %v4622
    %v4786 = vunpack.c.l.b16 %v4623
    %v4787 = vunpack.c.h.b16 %v4623
    %v4788 = vunpack.c.l.b16 %v4624
    %v4789 = vunpack.c.h.b16 %v4624
    %v4790 = vunpack.c.l.b16 %v4625
    %v4791 = vunpack.c.h.b16 %v4625
    %v4792 = vunpack.c.l.b16 %v4626
    %v4793 = vunpack.c.h.b16 %v4626
    %v4794 = vunpack.c.l.b16 %v4627
    %v4795 = vunpack.c.h.b16 %v4627
    %v4796 = vunpack.c.l.b16 %v4628
    %v4797 = vunpack.c.h.b16 %v4628
    %v4798 = vunpack.c.l.b16 %v4629
    %v4799 = vunpack.c.h.b16 %v4629
    %v4800 = vunpack.c.l.b16 %v4630
    %v4801 = vunpack.c.h.b16 %v4630
    %v4802 = vunpack.c.l.b16 %v4631
    %v4803 = vunpack.c.h.b16 %v4631
    %v4804 = vunpack.c.l.b16 %v4632
    %v4805 = vunpack.c.h.b16 %v4632
    %v4806 = vunpack.c.l.b16 %v4633
    %v4807 = vunpack.c.h.b16 %v4633
    %v4808 = vunpack.c.l.b16 %v4634
    %v4809 = vunpack.c.h.b16 %v4634
    %v4810 = vunpack.c.l.b16 %v4635
    %v4811 = vunpack.c.h.b16 %v4635
    %v4812 = vunpack.c.l.b16 %v4636
    %v4813 = vunpack.c.h.b16 %v4636
    %v4814 = vunpack.c.l.b16 %v4637
    %v4815 = vunpack.c.h.b16 %v4637
    %v4816 = vunpack.c.l.b16 %v4638
    %v4817 = vunpack.c.h.b16 %v4638
    %v4818 = vunpack.c.l.b16 %v4639
    %v4819 = vunpack.c.h.b16 %v4639
    %v4820 = vunpack.c.l.b16 %v4640
    %v4821 = vunpack.c.h.b16 %v4640
    %v4822 = vunpack.c.l.b16 %v4641
    %v4823 = vunpack.c.h.b16 %v4641
    %v4824 = vunpack.c.l.b16 %v4642
    %v4825 = vunpack.c.h.b16 %v4642
    %v4826 = vunpack.c.l.b16 %v4643
    %v4827 = vunpack.c.h.b16 %v4643
    %v4828 = vunpack.c.l.b16 %v4644
    %v4829 = vunpack.c.h.b16 %v4644
    %v4830 = vunpack.c.l.b16 %v4645
    %v4831 = vunpack.c.h.b16 %v4645
    %v4832 = vunpack.c.l.b16 %v4646
    %v4833 = vunpack.c.h.b16 %v4646
    %v4834 = vunpack.c.l.b16 %v4647
    %v4835 = vunpack.c.h.b16 %v4647
    %v4836 = vunpack.c.l.b16 %v4648
    %v4837 = vunpack.c.h.b16 %v4648
    %v4838 = vunpack.c.l.b16 %v4649
    %v4839 = vunpack.c.h.b16 %v4649
    %v4840 = vunpack.c.l.b16 %v4650
    %v4841 = vunpack.c.h.b16 %v4650
    %v4842 = vunpack.c.l.b16 %v4651
    %v4843 = vunpack.c.h.b16 %v4651
    %v4844 = vunpack.c.l.b16 %v4652
    %v4845 = vunpack.c.h.b16 %v4652
    %v4846 = vunpack.c.l.b16 %v4653
    %v4847 = vunpack.c.h.b16 %v4653
    %v4848 = vunpack.c.l.b16 %v4654
    %v4849 = vunpack.c.h.b16 %v4654
    %v4850 = vunpack.c.l.b16 %v4655
    %v4851 = vunpack.c.h.b16 %v4655
    %v4852 = vunpack.c.l.b16 %v4656
    %v4853 = vunpack.c.h.b16 %v4656
    %v4854 = vunpack.c.l.b16 %v4657
    %v4855 = vunpack.c.h.b16 %v4657
    %v4856 = vunpack.c.l.b16 %v4658
    %v4857 = vunpack.c.h.b16 %v4658
    %v4858 = vunpack.c.l.b16 %v4659
    %v4859 = vunpack.c.h.b16 %v4659
    %v4860 = vunpack.c.l.b16 %v4660
    %v4861 = vunpack.c.h.b16 %v4660
    %v4862 = vunpack.c.l.b16 %v4661
    %v4863 = vunpack.c.h.b16 %v4661
    %v4864 = vunpack.c.l.b16 %v4662
    %v4865 = vunpack.c.h.b16 %v4662
    %v4866 = vunpack.c.l.b16 %v4663
    %v4867 = vunpack.c.h.b16 %v4663
    %v4868 = vpack.c.b16 %v4742, %v4740
    %v4869 = vpack.c.b16 %v4743, %v4741
    %v4870 = vpack.c.b16 %v4746, %v4744
    %v4871 = vpack.c.b16 %v4747, %v4745
    %v4872 = vpack.c.b16 %v4750, %v4748
    %v4873 = vpack.c.b16 %v4751, %v4749
    %v4874 = vpack.c.b16 %v4754, %v4752
    %v4875 = vpack.c.b16 %v4755, %v4753
    %v4876 = vpack.c.b16 %v4758, %v4756
    %v4877 = vpack.c.b16 %v4759, %v4757
    %v4878 = vpack.c.b16 %v4762, %v4760
    %v4879 = vpack.c.b16 %v4763, %v4761
    %v4880 = vpack.c.b16 %v4766, %v4764
    %v4881 = vpack.c.b16 %v4767, %v4765
    %v4882 = vpack.c.b16 %v4770, %v4768
    %v4883 = vpack.c.b16 %v4771, %v4769
    %v4884 = vpack.c.b16 %v4774, %v4772
    %v4885 = vpack.c.b16 %v4775, %v4773
    %v4886 = vpack.c.b16 %v4778, %v4776
    %v4887 = vpack.c.b16 %v4779, %v4777
    %v4888 = vpack.c.b16 %v4782, %v4780
    %v4889 = vpack.c.b16 %v4783, %v4781
    %v4890 = vpack.c.b16 %v4786, %v4784
    %v4891 = vpack.c.b16 %v4787, %v4785
    %v4892 = vpack.c.b16 %v4790, %v4788
    %v4893 = vpack.c.b16 %v4791, %v4789
    %v4894 = vpack.c.b16 %v4794, %v4792
    %v4895 = vpack.c.b16 %v4795, %v4793
    %v4896 = vpack.c.b16 %v4798, %v4796
    %v4897 = vpack.c.b16 %v4799, %v4797
    %v4898 = vpack.c.b16 %v4802, %v4800
    %v4899 = vpack.c.b16 %v4803, %v4801
    %v4900 = vpack.c.b16 %v4806, %v4804
    %v4901 = vpack.c.b16 %v4807, %v4805
    %v4902 = vpack.c.b16 %v4810, %v4808
    %v4903 = vpack.c.b16 %v4811, %v4809
    %v4904 = vpack.c.b16 %v4814, %v4812
    %v4905 = vpack.c.b16 %v4815, %v4813
    %v4906 = vpack.c.b16 %v4818, %v4816
    %v4907 = vpack.c.b16 %v4819, %v4817
    %v4908 = vpack.c.b16 %v4822, %v4820
    %v4909 = vpack.c.b16 %v4823, %v4821
    %v4910 = vpack.c.b16 %v4826, %v4824
    %v4911 = vpack.c.b16 %v4827, %v4825
    %v4912 = vpack.c.b16 %v4830, %v4828
    %v4913 = vpack.c.b16 %v4831, %v4829
    %v4914 = vpack.c.b16 %v4834, %v4832
    %v4915 = vpack.c.b16 %v4835, %v4833
    %v4916 = vpack.c.b16 %v4838, %v4836
    %v4917 = vpack.c.b16 %v4839, %v4837
    %v4918 = vpack.c.b16 %v4842, %v4840
    %v4919 = vpack.c.b16 %v4843, %v4841
    %v4920 = vpack.c.b16 %v4846, %v4844
    %v4921 = vpack.c.b16 %v4847, %v4845
    %v4922 = vpack.c.b16 %v4850, %v4848
    %v4923 = vpack.c.b16 %v4851, %v4849
    %v4924 = vpack.c.b16 %v4854, %v4852
    %v4925 = vpack.c.b16 %v4855, %v4853
    %v4926 = vpack.c.b16 %v4858, %v4856
    %v4927 = vpack.c.b16 %v4859, %v4857
    %v4928 = vpack.c.b16 %v4862, %v4860
    %v4929 = vpack.c.b16 %v4863, %v4861
    %v4930 = vpack.c.b16 %v4866, %v4864
    %v4931 = vpack.c.b16 %v4867, %v4865
    %4996 = vmatprep.subr.bf16.mxu0 %v4869
    %4997 = vmatpush1.bf16.msra.mxu0 %v4868
    %4998 = vmatprep.subr.bf16.mxu0 %v4871
    %4999 = vmatpush1.bf16.msra.mxu0 %v4870
    %5000 = vmatprep.subr.bf16.mxu0 %v4873
    %5001 = vmatpush1.bf16.msra.mxu0 %v4872
    %5002 = vmatprep.subr.bf16.mxu0 %v4875
    %5003 = vmatpush1.bf16.msra.mxu0 %v4874
    %5004 = vmatprep.subr.bf16.mxu0 %v4877
    %5005 = vmatpush1.bf16.msra.mxu0 %v4876
    %5006 = vmatprep.subr.bf16.mxu0 %v4879
    %5007 = vmatpush1.bf16.msra.mxu0 %v4878
    %5008 = vmatprep.subr.bf16.mxu0 %v4881
    %5009 = vmatpush1.bf16.msra.mxu0 %v4880
    %5010 = vmatprep.subr.bf16.mxu0 %v4883
    %5011 = vmatpush1.bf16.msra.mxu0 %v4882
    %5012 = vmatprep.subr.bf16.mxu0 %v4885
    %5013 = vmatpush1.bf16.msra.mxu0 %v4884
    %5014 = vmatprep.subr.bf16.mxu0 %v4887
    %5015 = vmatpush1.bf16.msra.mxu0 %v4886
    %5016 = vmatprep.subr.bf16.mxu0 %v4889
    %5017 = vmatpush1.bf16.msra.mxu0 %v4888
    %5018 = vmatprep.subr.bf16.mxu0 %v4891
    %5019 = vmatpush1.bf16.msra.mxu0 %v4890
    %5020 = vmatprep.subr.bf16.mxu0 %v4893
    %5021 = vmatpush1.bf16.msra.mxu0 %v4892
    %5022 = vmatprep.subr.bf16.mxu0 %v4895
    %5023 = vmatpush1.bf16.msra.mxu0 %v4894
    %5024 = vmatprep.subr.bf16.mxu0 %v4897
    %5025 = vmatpush1.bf16.msra.mxu0 %v4896
    %5026 = vmatprep.subr.bf16.mxu0 %v4899
    %5027 = vmatpush1.bf16.msra.mxu0 %v4898
    %5028 = vmatprep.mubr.bf16.mxu0 %v4597
    %5029 = vmatmul.mubr.bf16.gmra.mrb[0].mxu0 %v4596
    %v5030 = vpop.f32.mrb[0].mxu0
    %v5031 = vadd.f32 %v4669, %v5030
    %v5032 = vpop.f32.mrb[0].mxu0
    %v5033 = vadd.f32 %v4673, %v5032
    %v5034 = vpop.f32.mrb[0].mxu0
    %v5035 = vpop.f32.mrb[0].mxu0
    %5036 = vdwg.mxu0
    %5037 = vmatprep.subr.bf16.mxu0 %v4901
    %5038 = vmatpush1.bf16.msra.mxu0 %v4900
    %5039 = vmatprep.subr.bf16.mxu0 %v4903
    %5040 = vmatpush1.bf16.msra.mxu0 %v4902
    %5041 = vmatprep.subr.bf16.mxu0 %v4905
    %5042 = vmatpush1.bf16.msra.mxu0 %v4904
    %5043 = vmatprep.subr.bf16.mxu0 %v4907
    %5044 = vmatpush1.bf16.msra.mxu0 %v4906
    %5045 = vmatprep.subr.bf16.mxu0 %v4909
    %5046 = vmatpush1.bf16.msra.mxu0 %v4908
    %5047 = vmatprep.subr.bf16.mxu0 %v4911
    %5048 = vmatpush1.bf16.msra.mxu0 %v4910
    %5049 = vmatprep.subr.bf16.mxu0 %v4913
    %5050 = vmatpush1.bf16.msra.mxu0 %v4912
    %5051 = vmatprep.subr.bf16.mxu0 %v4915
    %5052 = vmatpush1.bf16.msra.mxu0 %v4914
    %5053 = vmatprep.subr.bf16.mxu0 %v4917
    %5054 = vmatpush1.bf16.msra.mxu0 %v4916
    %5055 = vmatprep.subr.bf16.mxu0 %v4919
    %5056 = vmatpush1.bf16.msra.mxu0 %v4918
    %5057 = vmatprep.subr.bf16.mxu0 %v4921
    %5058 = vmatpush1.bf16.msra.mxu0 %v4920
    %5059 = vmatprep.subr.bf16.mxu0 %v4923
    %5060 = vmatpush1.bf16.msra.mxu0 %v4922
    %5061 = vmatprep.subr.bf16.mxu0 %v4925
    %5062 = vmatpush1.bf16.msra.mxu0 %v4924
    %5063 = vmatprep.subr.bf16.mxu0 %v4927
    %5064 = vmatpush1.bf16.msra.mxu0 %v4926
    %5065 = vmatprep.subr.bf16.mxu0 %v4929
    %5066 = vmatpush1.bf16.msra.mxu0 %v4928
    %5067 = vmatprep.subr.bf16.mxu0 %v4931
    %5068 = vmatpush1.bf16.msra.mxu0 %v4930
    %5069 = vmatprep.mubr.bf16.mxu0 %v4599
    %5070 = vmatmul.mubr.bf16.gmra.mrb[0].mxu0 %v4598
    %v5071 = vpop.f32.mrb[0].mxu0
    %v5072 = vadd.f32 %v5031, %v5071
    %v5073 = vpop.f32.mrb[0].mxu0
    %v5074 = vadd.f32 %v5033, %v5073
    %v5075 = vpop.f32.mrb[0].mxu0
    %v5076 = vpop.f32.mrb[0].mxu0
    %5077 = vdwg.mxu0
    %vm5078 = vcmp.gt.f32.partialorder %v5072, 0.0
    %vm5079 = vcmp.gt.f32.partialorder %v5074, 0.0
    %v5080 = vmin.f32 %v5072, 0.0
    %v5081 = vmin.f32 %v5074, 0.0
    %v5082 = vmul.f32 %v5080, 1.442695
    %v5083 = vpow.pop %v5082
    %v5084 = vmul.f32 %v5081, 1.442695
    %v5085 = vpow.pop %v5084
    %v5086 = vsub.f32 %v5083, 1.0
    %v5087 = vsub.f32 %v5085, 1.0
    %v5088 = vsel %vm5078, %v5072, %v5086
    %v5089 = vsel %vm5079, %v5074, %v5087
    %v5090 = vpack.c.bf16 %v5088, %v5088
    %v5091 = vpack.c.bf16 %v5089, %v5089
    %v5092 = vld [vmem:[%s5] sm:$0xf]
    %v5093 = vld [vmem:[%s5 + $0x4] sm:$0xf]
    %v5094 = vld [vmem:[%s5 + $0x8] sm:$0xf]
    %v5095 = vld [vmem:[%s5 + $0xc] sm:$0xf]
    %v5096 = vld [vmem:[%s5 + $0x10] sm:$0xf]
    %v5097 = vld [vmem:[%s5 + $0x14] sm:$0xf]
    %v5098 = vld [vmem:[%s5 + $0x18] sm:$0xf]
    %v5099 = vld [vmem:[%s5 + $0x1c] sm:$0xf]
    %v5100 = vld [vmem:[%s5 + $0x20] sm:$0xf]
    %v5101 = vld [vmem:[%s5 + $0x24] sm:$0xf]
    %v5102 = vld [vmem:[%s5 + $0x28] sm:$0xf]
    %v5103 = vld [vmem:[%s5 + $0x2c] sm:$0xf]
    %v5104 = vld [vmem:[%s5 + $0x30] sm:$0xf]
    %v5105 = vld [vmem:[%s5 + $0x34] sm:$0xf]
    %v5106 = vld [vmem:[%s5 + $0x38] sm:$0xf]
    %v5107 = vld [vmem:[%s5 + $0x3c] sm:$0xf]
    %v5108 = vld [vmem:[%s5 + $0x40] sm:$0xf]
    %v5109 = vld [vmem:[%s5 + $0x44] sm:$0xf]
    %v5110 = vld [vmem:[%s5 + $0x48] sm:$0xf]
    %v5111 = vld [vmem:[%s5 + $0x4c] sm:$0xf]
    %v5112 = vld [vmem:[%s5 + $0x50] sm:$0xf]
    %v5113 = vld [vmem:[%s5 + $0x54] sm:$0xf]
    %v5114 = vld [vmem:[%s5 + $0x58] sm:$0xf]
    %v5115 = vld [vmem:[%s5 + $0x5c] sm:$0xf]
    %v5116 = vld [vmem:[%s5 + $0x60] sm:$0xf]
    %v5117 = vld [vmem:[%s5 + $0x64] sm:$0xf]
    %v5118 = vld [vmem:[%s5 + $0x68] sm:$0xf]
    %v5119 = vld [vmem:[%s5 + $0x6c] sm:$0xf]
    %v5120 = vld [vmem:[%s5 + $0x70] sm:$0xf]
    %v5121 = vld [vmem:[%s5 + $0x74] sm:$0xf]
    %v5122 = vld [vmem:[%s5 + $0x78] sm:$0xf]
    %v5123 = vld [vmem:[%s5 + $0x7c] sm:$0xf]
    %v5124 = vld [vmem:[#allocation10] sm:$0x1]
    %v5126 = vlaneseq
    %v5127 = vshrl.u32 %v5126, 7
    %v5128 = vsub.s32 0, %v5127
    %v5129 = vrot.slane %v5124, %v5128
    %v5163 = vunpack.c.l.b16 %v5092
    %v5164 = vunpack.c.l.b16 %v5093
    %v5165 = vunpack.c.l.b16 %v5094
    %v5166 = vunpack.c.l.b16 %v5095
    %v5167 = vunpack.c.l.b16 %v5096
    %v5168 = vunpack.c.l.b16 %v5097
    %v5169 = vunpack.c.l.b16 %v5098
    %v5170 = vunpack.c.l.b16 %v5099
    %v5171 = vunpack.c.l.b16 %v5100
    %v5172 = vunpack.c.l.b16 %v5101
    %v5173 = vunpack.c.l.b16 %v5102
    %v5174 = vunpack.c.l.b16 %v5103
    %v5175 = vunpack.c.l.b16 %v5104
    %v5176 = vunpack.c.l.b16 %v5105
    %v5177 = vunpack.c.l.b16 %v5106
    %v5178 = vunpack.c.l.b16 %v5107
    %v5179 = vunpack.c.l.b16 %v5108
    %v5180 = vunpack.c.l.b16 %v5109
    %v5181 = vunpack.c.l.b16 %v5110
    %v5182 = vunpack.c.l.b16 %v5111
    %v5183 = vunpack.c.l.b16 %v5112
    %v5184 = vunpack.c.l.b16 %v5113
    %v5185 = vunpack.c.l.b16 %v5114
    %v5186 = vunpack.c.l.b16 %v5115
    %v5187 = vunpack.c.l.b16 %v5116
    %v5188 = vunpack.c.l.b16 %v5117
    %v5189 = vunpack.c.l.b16 %v5118
    %v5190 = vunpack.c.l.b16 %v5119
    %v5191 = vunpack.c.l.b16 %v5120
    %v5192 = vunpack.c.l.b16 %v5121
    %v5193 = vunpack.c.l.b16 %v5122
    %v5194 = vunpack.c.l.b16 %v5123
    %v5195 = vpack.c.b16 %v5164, %v5163
    %v5196 = vpack.c.b16 %v5166, %v5165
    %v5197 = vpack.c.b16 %v5168, %v5167
    %v5198 = vpack.c.b16 %v5170, %v5169
    %v5199 = vpack.c.b16 %v5172, %v5171
    %v5200 = vpack.c.b16 %v5174, %v5173
    %v5201 = vpack.c.b16 %v5176, %v5175
    %v5202 = vpack.c.b16 %v5178, %v5177
    %v5203 = vpack.c.b16 %v5180, %v5179
    %v5204 = vpack.c.b16 %v5182, %v5181
    %v5205 = vpack.c.b16 %v5184, %v5183
    %v5206 = vpack.c.b16 %v5186, %v5185
    %v5207 = vpack.c.b16 %v5188, %v5187
    %v5208 = vpack.c.b16 %v5190, %v5189
    %v5209 = vpack.c.b16 %v5192, %v5191
    %v5210 = vpack.c.b16 %v5194, %v5193
    %5227 = vmatprep.subr.bf16.mxu0 0
    %5228 = vmatpush1.bf16.msra.mxu0 %v5195
    %5229 = vmatprep.subr.bf16.mxu0 0
    %5230 = vmatpush1.bf16.msra.mxu0 %v5196
    %5231 = vmatprep.subr.bf16.mxu0 0
    %5232 = vmatpush1.bf16.msra.mxu0 %v5197
    %5233 = vmatprep.subr.bf16.mxu0 0
    %5234 = vmatpush1.bf16.msra.mxu0 %v5198
    %5235 = vmatprep.subr.bf16.mxu0 0
    %5236 = vmatpush1.bf16.msra.mxu0 %v5199
    %5237 = vmatprep.subr.bf16.mxu0 0
    %5238 = vmatpush1.bf16.msra.mxu0 %v5200
    %5239 = vmatprep.subr.bf16.mxu0 0
    %5240 = vmatpush1.bf16.msra.mxu0 %v5201
    %5241 = vmatprep.subr.bf16.mxu0 0
    %5242 = vmatpush1.bf16.msra.mxu0 %v5202
    %5243 = vmatprep.subr.bf16.mxu0 0
    %5244 = vmatpush1.bf16.msra.mxu0 %v5203
    %5245 = vmatprep.subr.bf16.mxu0 0
    %5246 = vmatpush1.bf16.msra.mxu0 %v5204
    %5247 = vmatprep.subr.bf16.mxu0 0
    %5248 = vmatpush1.bf16.msra.mxu0 %v5205
    %5249 = vmatprep.subr.bf16.mxu0 0
    %5250 = vmatpush1.bf16.msra.mxu0 %v5206
    %5251 = vmatprep.subr.bf16.mxu0 0
    %5252 = vmatpush1.bf16.msra.mxu0 %v5207
    %5253 = vmatprep.subr.bf16.mxu0 0
    %5254 = vmatpush1.bf16.msra.mxu0 %v5208
    %5255 = vmatprep.subr.bf16.mxu0 0
    %5256 = vmatpush1.bf16.msra.mxu0 %v5209
    %5257 = vmatprep.subr.bf16.mxu0 0
    %5258 = vmatpush1.bf16.msra.mxu0 %v5210
    %5259 = vmatprep.mubr.bf16.mxu0 %v5091
    %5260 = vmatmul.mubr.bf16.gmra.mrb[0].mxu0 %v5090
    %v5261 = vpop.f32.mrb[0].mxu0
    %v5262 = vadd.f32 %v5129, %v5261
    %v5263 = vpop.f32.mrb[0].mxu0
    %v5264 = vpop.f32.mrb[0].mxu0
    %v5265 = vpop.f32.mrb[0].mxu0
    %5266 = vdwg.mxu0
    %vm5267 = vcmask 17408
    %5268 = vst.msk [vmem:[#allocation11] sm:$0x3] %vm5267, %v5262
    // Predicated region
    $region50: #{spectranet_forward.3} parent=1 // pred_check
      _
    $region51: #{spectranet_forward.3} parent=1 // pred_check_branch
      %5270 = sbr.rel (0) target = $region53
    $region52: #{spectranet_forward.3} parent=1 // pred_region
      %s5272 = ssub.s32 32, 32
      %5273 = vsyncadd [#allocation4], %s5272
      %s5275 = sshll.u32 [#allocation11], 4
      %s5276 = int_to_ptr.vmem [resolvable:$true] %s5275
      %5278 = dma.vmem_to_hbm [thread:$0]  %s5276, 32, %s7, [#allocation4]
    $region53: #{spectranet_forward.3} parent=1 // pred_fallthru
      _
    // Predicated region
    $region54: #{spectranet_forward.3} parent=1 // pred_check
      _
    $region55: #{spectranet_forward.3} parent=1 // pred_check_branch
      %5280 = sbr.rel (0) target = $region57
    $region56: #{spectranet_forward.3} parent=1 // pred_region
      %5281 = dma.done [#allocation4], 32
    $region57: #{spectranet_forward.3} parent=1 // pred_fallthru
      _
    %5282 = vsyncpa [#allocation3], 1
    %5283 = vsyncpa [#allocation6], 1
    %5284 = vsyncpa [#allocation9], 1
    %5285 = vsyncpa [#allocation4], 1

</llo_original>
